<compile_context>
chip_gen: v5e
topology: v5e:2x2
jax: 0.10.0
libtpu: 0.0.40
codegen_flags: <defaults>
</compile_context>

<pallas_src>
import functools
import math

import jax
import jax.numpy as jnp
from jax.experimental import pallas as pl
from jax.experimental.pallas import tpu as pltpu


def _sigmoid(x):
    return 1.0 / (1.0 + jnp.exp(-x))


def _softplus(x):
    return jnp.where(x > 20.0, x, jnp.log1p(jnp.exp(jnp.minimum(x, 20.0))))


def mamba_block_kernel(
    # ---- inputs -----------------------------------------------------------
    x_ref,        # (1, chunk_l, d_model)
    w_in_ref,     # (d_model, 2*d_inner)            fused in_proj  [x | res]
    conv_w_ref,   # (d_conv, d_inner)
    conv_b_ref,   # (1, d_inner)
    w_x_ref,      # (d_inner, dt_rank + 2*d_state)  fused x_proj   [delta | B | C]
    w_dt_ref,     # (dt_rank, d_inner)
    b_dt_ref,     # (1, d_inner)
    neg_a_t_ref,  # (d_state, d_inner)              A = -exp(A_log), transposed
    d_skip_ref,   # (1, d_inner)
    w_out_ref,    # (d_inner, d_model)
    # ---- outputs ----------------------------------------------------------
    out_ref,      # (1, chunk_l, d_model)
    # ---- scratch (persists across grid steps) ------------------------------
    state_ref,    # (d_state, d_inner)              SSM state carried across chunks
    xi_ext_ref,   # (chunk_l + d_conv - 1, d_inner) conv input; rows [0, d_conv-1)
                  #                                 carry previous chunk's tail
    du_ref,       # (chunk_l, d_inner)              delta * u
    y_ref,        # (chunk_l, d_inner)              per-step scan outputs
    dA_ref,       # (2, sub_l, d_state, d_inner)    exp(delta*A), double-buffered
    b_bc_ref,     # (2, sub_l, d_state, 1)          B rows (sublane layout)
    c_bc_ref,     # (2, sub_l, d_state, 1)          C rows (sublane layout)
    *,
    d_inner, dt_rank, d_state, d_conv, chunk_l, sub_l,
):
    cl, sl, n = chunk_l, sub_l, d_state
    j = pl.program_id(1)

    # -- reset carried state at the start of each batch element's sequence ---
    @pl.when(j == 0)
    def _():
        state_ref[...] = jnp.zeros_like(state_ref)
        xi_ext_ref[0:d_conv - 1, :] = jnp.zeros((d_conv - 1, d_inner), jnp.float32)

    x = x_ref[0]                                                         # (cl, d_model)

    # ---------------- in_proj: one fused MXU matmul --------------------------
    xr = jnp.dot(x, w_in_ref[...], preferred_element_type=jnp.float32)   # (cl, 2*d_inner)
    xi = xr[:, :d_inner]
    res = xr[:, d_inner:]

    # ---------------- depthwise causal conv1d (register accumulation) --------
    # xi_ext rows = [prev-chunk tail (d_conv-1 rows) ; this chunk's xi].
    xi_ext_ref[d_conv - 1:, :] = xi
    conv = conv_b_ref[...]                                               # (1, d_inner)
    for k in range(d_conv):
        conv = conv + conv_w_ref[k:k + 1, :] * xi_ext_ref[k:k + cl, :]
    # tail for the next chunk (read-before-write ordering is program order)
    xi_ext_ref[0:d_conv - 1, :] = xi[cl - (d_conv - 1):, :]
    u = conv * _sigmoid(conv)                                            # SiLU, (cl, d_inner)

    # ---------------- x_proj (fused) + dt_proj --------------------------------
    dbl = jnp.dot(u, w_x_ref[...], preferred_element_type=jnp.float32)   # (cl, dt_rank+2n)
    delta = _softplus(
        jnp.dot(dbl[:, :dt_rank], w_dt_ref[...],
                preferred_element_type=jnp.float32) + b_dt_ref[...])     # (cl, d_inner)
    Bm = dbl[:, dt_rank:dt_rank + n]                                     # (cl, n)
    Cm = dbl[:, dt_rank + n:dt_rank + 2 * n]                             # (cl, n)
    du_ref[...] = delta * u                                              # delta*u rows

    neg_a_t = neg_a_t_ref[...]                                           # (n, d_inner)
    state = state_ref[...]                                               # register carry

    # ---------------- selective scan, sub-chunked -----------------------------
    # Per sub-chunk: vectorized EUP exp precompute into a double-buffered slab
    # (no WAR dependence with the previous sub-chunk's scan), then a fully
    # unrolled serial recurrence with the state in registers; the C contraction
    # is fused per step (sublane reduce -> one lane-dense row store).
    n_sub = cl // sl
    for si in range(n_sub):
        t0 = si * sl
        slot = si % 2
        dA_ref[slot] = jnp.exp(delta[t0:t0 + sl, None, :] * neg_a_t[None, :, :])
        b_bc_ref[slot] = Bm[t0:t0 + sl][:, :, None]
        c_bc_ref[slot] = Cm[t0:t0 + sl][:, :, None]

        def scan_step(i, st, t0=t0, slot=slot):
            t = t0 + i
            st = (dA_ref[slot, i] * st
                  + b_bc_ref[slot, i] * du_ref[pl.ds(t, 1), :])
            y_ref[pl.ds(t, 1), :] = jnp.sum(st * c_bc_ref[slot, i],
                                            axis=0, keepdims=True)
            return st

        state = jax.lax.fori_loop(0, sl, scan_step, state, unroll=True)

    state_ref[...] = state                                               # carry to next chunk

    # ---------------- skip, gate, out_proj -------------------------------------
    y = y_ref[...] + u * d_skip_ref[...]
    y = y * (res * _sigmoid(res))
    out_ref[0] = jnp.dot(y, w_out_ref[...], preferred_element_type=jnp.float32)


def _weight_spec(arr, single_buffer):
    nd = arr.ndim
    index_map = lambda i, j, _nd=nd: (0,) * _nd
    if single_buffer:
        # Weights never change across grid steps: one resident VMEM buffer.
        return pl.BlockSpec(arr.shape, index_map, pipeline_mode=pl.Buffered(1))
    return pl.BlockSpec(arr.shape, index_map)


def _pick_vmem_limit_bytes():
    try:
        kind = jax.devices()[0].device_kind.lower()
    except Exception:
        return None
    if "v5" in kind or "v6" in kind:
        return 100 * 1024 * 1024      # 128 MiB physical VMEM: let bigger chunks fit
    if "7" in kind:
        return 48 * 1024 * 1024       # v7x: 64 MiB/TC, leave compiler headroom
    return None                       # unknown chip: keep the compiler default


def mamba_block(x, params, *, d_inner, dt_rank, d_state, d_conv,
                chunk_l=None, sub_l=None, vmem_limit_bytes=None):
    b, l, d_model = x.shape
    if vmem_limit_bytes is None:
        vmem_limit_bytes = _pick_vmem_limit_bytes()
    if chunk_l is None:
        big_vmem = vmem_limit_bytes is not None and vmem_limit_bytes > 64 * 1024 * 1024
        chunk_l = min(l, 256 if big_vmem else 128)
    if sub_l is None:
        sub_l = 16 if chunk_l % 16 == 0 else (8 if chunk_l % 8 == 0 else chunk_l)
    assert l % chunk_l == 0, "seq_len must be a multiple of chunk_l"
    assert chunk_l % sub_l == 0
    assert chunk_l >= d_conv - 1
    n_chunks = l // chunk_l

    # A = -exp(A_log) is input-independent: hoist it out of the kernel (one tiny
    # XLA op per call instead of d_state*d_inner EUP exps per grid step).
    neg_a_t = -jnp.exp(params["a_log"]).T                                # (d_state, d_inner)

    weights = [params["w_in"], params["conv_w"], params["conv_b"], params["w_x"],
               params["w_dt"], params["b_dt"], neg_a_t, params["d_skip"],
               params["w_out"]]

    kern = functools.partial(
        mamba_block_kernel,
        d_inner=d_inner, dt_rank=dt_rank, d_state=d_state, d_conv=d_conv,
        chunk_l=chunk_l, sub_l=sub_l)

    def build(single_buffer_weights):
        in_specs = [pl.BlockSpec((1, chunk_l, d_model), lambda i, j: (i, j, 0))]
        in_specs += [_weight_spec(w, single_buffer_weights) for w in weights]
        return pl.pallas_call(
            kern,
            out_shape=jax.ShapeDtypeStruct((b, l, d_model), jnp.float32),
            grid=(b, n_chunks),
            in_specs=in_specs,
            out_specs=pl.BlockSpec((1, chunk_l, d_model), lambda i, j: (i, j, 0)),
            scratch_shapes=[
                pltpu.VMEM((d_state, d_inner), jnp.float32),                   # SSM state
                pltpu.VMEM((chunk_l + d_conv - 1, d_inner), jnp.float32),      # conv staging
                pltpu.VMEM((chunk_l, d_inner), jnp.float32),                   # delta*u
                pltpu.VMEM((chunk_l, d_inner), jnp.float32),                   # scan outputs
                pltpu.VMEM((2, sub_l, d_state, d_inner), jnp.float32),         # exp(delta*A)
                pltpu.VMEM((2, sub_l, d_state, 1), jnp.float32),               # B rows
                pltpu.VMEM((2, sub_l, d_state, 1), jnp.float32),               # C rows
            ],
            compiler_params=pltpu.CompilerParams(
                dimension_semantics=("parallel", "arbitrary"),
                vmem_limit_bytes=vmem_limit_bytes),
        )

    try:
        return build(True)(x, *weights)
    except Exception:
        # pipeline_mode=pl.Buffered(1) is a pure VMEM-residency optimization;
        # fall back to default double-buffered weights if this JAX rejects it.
        return build(False)(x, *weights)


# ---------------------------------------------------------------------------
# Pure-JAX reference (mirrors the PyTorch MambaBlock.forward semantics).
# ---------------------------------------------------------------------------
def mamba_block_ref(x, p, *, d_inner, dt_rank, d_state, d_conv):
    b, l, _ = x.shape
    xr = x @ p["w_in"]
    xi, res = xr[..., :d_inner], xr[..., d_inner:]
    pad = jnp.zeros((b, d_conv - 1, d_inner), jnp.float32)
    xi_pad = jnp.concatenate([pad, xi], axis=1)
    conv = jnp.broadcast_to(p["conv_b"], (b, l, d_inner))
    for k in range(d_conv):
        conv = conv + p["conv_w"][k] * xi_pad[:, k:k + l, :]
    u = conv * _sigmoid(conv)

    dbl = u @ p["w_x"]
    delta_r = dbl[..., :dt_rank]
    Bm = dbl[..., dt_rank:dt_rank + d_state]
    Cm = dbl[..., dt_rank + d_state:]
    delta = _softplus(delta_r @ p["w_dt"] + p["b_dt"])
    A = -jnp.exp(p["a_log"])                              # (d_inner, n)

    deltaA = jnp.exp(jnp.einsum("bld,dn->bldn", delta, A))
    dBu = jnp.einsum("bld,bln->bldn", delta * u, Bm)

    def step(state, inp):
        dA_i, dBu_i, c_i = inp
        state = dA_i * state + dBu_i
        y_i = jnp.einsum("bdn,bn->bd", state, c_i)
        return state, y_i

    init = jnp.zeros((b, d_inner, d_state), jnp.float32)
    _, ys = jax.lax.scan(
        step, init,
        (deltaA.transpose(1, 0, 2, 3), dBu.transpose(1, 0, 2, 3), Cm.transpose(1, 0, 2)))
    y = ys.transpose(1, 0, 2)
    y = y + u * p["d_skip"]
    y = y * (res * _sigmoid(res))
    return y @ p["w_out"]


if __name__ == "__main__":
    # ModelArgs-consistent toy config:
    #   d_model=32, expand=2 -> d_inner=64, dt_rank=ceil(32/16)=2, d_state=16, d_conv=4
    b, l, d_model = 2, 32, 32
    d_inner = 2 * d_model
    dt_rank = math.ceil(d_model / 16)
    d_state = 16
    d_conv = 4
    chunk_l = 16   # two seq chunks  -> exercises the carried SSM state / conv tail
    sub_l = 8      # two sub-chunks  -> exercises the sub-chunked dA precompute

    key = jax.random.PRNGKey(0)
    keys = jax.random.split(key, 8)

    def init(k, shape, fan_in):
        return jax.random.normal(k, shape, jnp.float32) / jnp.sqrt(float(fan_in))

    a = jnp.broadcast_to(jnp.arange(1, d_state + 1, dtype=jnp.float32)[None, :],
                         (d_inner, d_state))
    params = {
        "w_in":   init(keys[0], (d_model, 2 * d_inner), d_model),      # [x | res]
        "conv_w": init(keys[1], (d_conv, d_inner), d_conv),
        "conv_b": 0.1 * init(keys[2], (1, d_inner), 1),
        "w_x":    init(keys[3], (d_inner, dt_rank + 2 * d_state), d_inner),  # [dlt|B|C]
        "w_dt":   init(keys[4], (dt_rank, d_inner), dt_rank),
        "b_dt":   0.1 * init(keys[5], (1, d_inner), 1),
        "a_log":  jnp.log(a),                                          # (d_inner, d_state)
        "d_skip": jnp.ones((1, d_inner), jnp.float32),
        "w_out":  init(keys[6], (d_inner, d_model), d_inner),
    }

    x = jax.random.normal(keys[7], (b, l, d_model), jnp.float32)

    out = mamba_block(x, params, d_inner=d_inner, dt_rank=dt_rank,
                      d_state=d_state, d_conv=d_conv, chunk_l=chunk_l, sub_l=sub_l)
    out = jax.block_until_ready(out)

    ref = mamba_block_ref(x, params, d_inner=d_inner, dt_rank=dt_rank,
                          d_state=d_state, d_conv=d_conv)
    ref = jax.block_until_ready(ref)

    assert out.shape == (b, l, d_model)
    max_err = float(jnp.max(jnp.abs(out - ref)))
    assert jnp.allclose(out, ref, rtol=2e-3, atol=2e-3), max_err

    print("KERNEL_OK")
</pallas_src>

<mosaic_0001>
module attributes {stable_mosaic.version = 11 : i64} {
  func.func @mamba_block_kernel(%arg0: i32, %arg1: i32, %arg2: memref<1x16x32xf32, #tpu.memory_space<vmem>>, %arg3: memref<32x128xf32, #tpu.memory_space<vmem>>, %arg4: memref<4x64xf32, #tpu.memory_space<vmem>>, %arg5: memref<1x64xf32, #tpu.memory_space<vmem>>, %arg6: memref<64x34xf32, #tpu.memory_space<vmem>>, %arg7: memref<2x64xf32, #tpu.memory_space<vmem>>, %arg8: memref<1x64xf32, #tpu.memory_space<vmem>>, %arg9: memref<16x64xf32, #tpu.memory_space<vmem>>, %arg10: memref<1x64xf32, #tpu.memory_space<vmem>>, %arg11: memref<64x32xf32, #tpu.memory_space<vmem>>, %arg12: memref<1x16x32xf32, #tpu.memory_space<vmem>>, %arg13: memref<16x64xf32, #tpu.memory_space<vmem>>, %arg14: memref<19x64xf32, #tpu.memory_space<vmem>>, %arg15: memref<16x64xf32, #tpu.memory_space<vmem>>, %arg16: memref<16x64xf32, #tpu.memory_space<vmem>>, %arg17: memref<2x8x16x64xf32, #tpu.memory_space<vmem>>, %arg18: memref<2x8x16x1xf32, #tpu.memory_space<vmem>>, %arg19: memref<2x8x16x1xf32, #tpu.memory_space<vmem>>) attributes {dimension_semantics = [#tpu.dimension_semantics<parallel>, #tpu.dimension_semantics<arbitrary>], iteration_bounds = array<i64: 2, 2>, scalar_prefetch = 0 : i64, scratch_operands = 7 : i64, tpu.core_type = #tpu.core_type<tc>, window_params = [{transform_indices = @transform_0, window_bounds = array<i64: 1, 16, 32>}, {pipeline_mode = #tpu.pipeline_mode<synchronous>, transform_indices = @transform_1, window_bounds = array<i64: 32, 128>}, {pipeline_mode = #tpu.pipeline_mode<synchronous>, transform_indices = @transform_2, window_bounds = array<i64: 4, 64>}, {pipeline_mode = #tpu.pipeline_mode<synchronous>, transform_indices = @transform_3, window_bounds = array<i64: 1, 64>}, {pipeline_mode = #tpu.pipeline_mode<synchronous>, transform_indices = @transform_4, window_bounds = array<i64: 64, 34>}, {pipeline_mode = #tpu.pipeline_mode<synchronous>, transform_indices = @transform_5, window_bounds = array<i64: 2, 64>}, {pipeline_mode = #tpu.pipeline_mode<synchronous>, transform_indices = @transform_6, window_bounds = array<i64: 1, 64>}, {pipeline_mode = #tpu.pipeline_mode<synchronous>, transform_indices = @transform_7, window_bounds = array<i64: 16, 64>}, {pipeline_mode = #tpu.pipeline_mode<synchronous>, transform_indices = @transform_8, window_bounds = array<i64: 1, 64>}, {pipeline_mode = #tpu.pipeline_mode<synchronous>, transform_indices = @transform_9, window_bounds = array<i64: 64, 32>}, {transform_indices = @transform_10, window_bounds = array<i64: 1, 16, 32>}]} {
    %c0_i32 = arith.constant 0 : i32
    %0 = arith.cmpi eq, %arg1, %c0_i32 : i32
    %1 = arith.extui %0 : i1 to i32
    %c0_i32_0 = arith.constant 0 : i32
    %2 = arith.cmpi ne, %1, %c0_i32_0 : i32
    scf.if %2 {
      %cst_300 = arith.constant 0.000000e+00 : f32
      %491 = vector.broadcast %cst_300 : f32 to vector<16x64xf32>
      %c0_301 = arith.constant 0 : index
      %c0_302 = arith.constant 0 : index
      %492 = vector.load %arg13[%c0_301, %c0_302] : memref<16x64xf32, #tpu.memory_space<vmem>>, vector<16x64xf32>
      tpu.vector_store %arg13[%c0_301, %c0_302], %491 {strides = array<i32>} : memref<16x64xf32, #tpu.memory_space<vmem>>, vector<16x64xf32>,
      %cst_303 = arith.constant 0.000000e+00 : f32
      %493 = vector.broadcast %cst_303 : f32 to vector<3x64xf32>
      %c0_304 = arith.constant 0 : index
      %c0_305 = arith.constant 0 : index
      %494 = vector.load %arg14[%c0_304, %c0_305] : memref<19x64xf32, #tpu.memory_space<vmem>>, vector<3x64xf32>
      tpu.vector_store %arg14[%c0_304, %c0_305], %493 {strides = array<i32>} : memref<19x64xf32, #tpu.memory_space<vmem>>, vector<3x64xf32>,
    } else {
    }
    %c0 = arith.constant 0 : index
    %c0_1 = arith.constant 0 : index
    %c0_2 = arith.constant 0 : index
    %3 = vector.load %arg2[%c0, %c0_1, %c0_2] : memref<1x16x32xf32, #tpu.memory_space<vmem>>, vector<1x16x32xf32>
    %4 = vector.shape_cast %3 : vector<1x16x32xf32> to vector<16x32xf32>
    %c0_3 = arith.constant 0 : index
    %c0_4 = arith.constant 0 : index
    %5 = vector.load %arg3[%c0_3, %c0_4] : memref<32x128xf32, #tpu.memory_space<vmem>>, vector<32x128xf32>
    %cst = arith.constant dense<0.000000e+00> : vector<16x128xf32>
    %6 = tpu.matmul %4, %5, %cst {dimension_numbers = #tpu.dot_dimension_numbers<[1], [0], [0], [1], [0, 0, 1, 1], [], []>} : vector<16x32xf32>, vector<32x128xf32>, vector<16x128xf32> -> vector<16x128xf32>
    %7 = vector.extract_strided_slice %6 {offsets = [0, 0], sizes = [16, 64], strides = [1, 1]} : vector<16x128xf32> to vector<16x64xf32>
    %8 = vector.extract_strided_slice %6 {offsets = [0, 64], sizes = [16, 64], strides = [1, 1]} : vector<16x128xf32> to vector<16x64xf32>
    %c3 = arith.constant 3 : index
    %c0_5 = arith.constant 0 : index
    %9 = vector.load %arg14[%c3, %c0_5] : memref<19x64xf32, #tpu.memory_space<vmem>>, vector<16x64xf32>
    tpu.vector_store %arg14[%c3, %c0_5], %7 {strides = array<i32>} : memref<19x64xf32, #tpu.memory_space<vmem>>, vector<16x64xf32>,
    %c0_6 = arith.constant 0 : index
    %c0_7 = arith.constant 0 : index
    %10 = vector.load %arg5[%c0_6, %c0_7] : memref<1x64xf32, #tpu.memory_space<vmem>>, vector<1x64xf32>
    %c0_8 = arith.constant 0 : index
    %c0_9 = arith.constant 0 : index
    %11 = vector.load %arg4[%c0_8, %c0_9] : memref<4x64xf32, #tpu.memory_space<vmem>>, vector<1x64xf32>
    %c0_10 = arith.constant 0 : index
    %c0_11 = arith.constant 0 : index
    %12 = vector.load %arg14[%c0_10, %c0_11] : memref<19x64xf32, #tpu.memory_space<vmem>>, vector<16x64xf32>
    %13 = vector.broadcast %11 : vector<1x64xf32> to vector<16x64xf32>
    %14 = arith.mulf %13, %12 : vector<16x64xf32>
    %15 = vector.broadcast %10 : vector<1x64xf32> to vector<16x64xf32>
    %16 = arith.addf %15, %14 : vector<16x64xf32>
    %c1 = arith.constant 1 : index
    %c0_12 = arith.constant 0 : index
    %17 = vector.load %arg4[%c1, %c0_12] : memref<4x64xf32, #tpu.memory_space<vmem>>, vector<1x64xf32>
    %c1_13 = arith.constant 1 : index
    %c0_14 = arith.constant 0 : index
    %18 = vector.load %arg14[%c1_13, %c0_14] : memref<19x64xf32, #tpu.memory_space<vmem>>, vector<16x64xf32>
    %19 = vector.broadcast %17 : vector<1x64xf32> to vector<16x64xf32>
    %20 = arith.mulf %19, %18 : vector<16x64xf32>
    %21 = arith.addf %16, %20 : vector<16x64xf32>
    %c2 = arith.constant 2 : index
    %c0_15 = arith.constant 0 : index
    %22 = vector.load %arg4[%c2, %c0_15] : memref<4x64xf32, #tpu.memory_space<vmem>>, vector<1x64xf32>
    %c2_16 = arith.constant 2 : index
    %c0_17 = arith.constant 0 : index
    %23 = vector.load %arg14[%c2_16, %c0_17] : memref<19x64xf32, #tpu.memory_space<vmem>>, vector<16x64xf32>
    %24 = vector.broadcast %22 : vector<1x64xf32> to vector<16x64xf32>
    %25 = arith.mulf %24, %23 : vector<16x64xf32>
    %26 = arith.addf %21, %25 : vector<16x64xf32>
    %c3_18 = arith.constant 3 : index
    %c0_19 = arith.constant 0 : index
    %27 = vector.load %arg4[%c3_18, %c0_19] : memref<4x64xf32, #tpu.memory_space<vmem>>, vector<1x64xf32>
    %c3_20 = arith.constant 3 : index
    %c0_21 = arith.constant 0 : index
    %28 = vector.load %arg14[%c3_20, %c0_21] : memref<19x64xf32, #tpu.memory_space<vmem>>, vector<16x64xf32>
    %29 = vector.broadcast %27 : vector<1x64xf32> to vector<16x64xf32>
    %30 = arith.mulf %29, %28 : vector<16x64xf32>
    %31 = arith.addf %26, %30 : vector<16x64xf32>
    %32 = vector.extract_strided_slice %7 {offsets = [13, 0], sizes = [3, 64], strides = [1, 1]} : vector<16x64xf32> to vector<3x64xf32>
    %c0_22 = arith.constant 0 : index
    %c0_23 = arith.constant 0 : index
    %33 = vector.load %arg14[%c0_22, %c0_23] : memref<19x64xf32, #tpu.memory_space<vmem>>, vector<3x64xf32>
    tpu.vector_store %arg14[%c0_22, %c0_23], %32 {strides = array<i32>} : memref<19x64xf32, #tpu.memory_space<vmem>>, vector<3x64xf32>,
    %cst_24 = arith.constant 0.000000e+00 : f32
    %34 = vector.broadcast %cst_24 : f32 to vector<16x64xf32>
    %35 = arith.subf %34, %31 : vector<16x64xf32>
    %36 = math.exp %35 : vector<16x64xf32>
    %cst_25 = arith.constant 1.000000e+00 : f32
    %37 = vector.broadcast %cst_25 : f32 to vector<16x64xf32>
    %38 = arith.addf %37, %36 : vector<16x64xf32>
    %cst_26 = arith.constant 1.000000e+00 : f32
    %39 = vector.broadcast %cst_26 : f32 to vector<16x64xf32>
    %40 = arith.divf %39, %38 : vector<16x64xf32>
    %41 = arith.mulf %31, %40 : vector<16x64xf32>
    %c0_27 = arith.constant 0 : index
    %c0_28 = arith.constant 0 : index
    %42 = vector.load %arg6[%c0_27, %c0_28] : memref<64x34xf32, #tpu.memory_space<vmem>>, vector<64x34xf32>
    %cst_29 = arith.constant dense<0.000000e+00> : vector<16x34xf32>
    %43 = tpu.matmul %41, %42, %cst_29 {dimension_numbers = #tpu.dot_dimension_numbers<[1], [0], [0], [1], [0, 0, 1, 1], [], []>} : vector<16x64xf32>, vector<64x34xf32>, vector<16x34xf32> -> vector<16x34xf32>
    %44 = vector.extract_strided_slice %43 {offsets = [0, 0], sizes = [16, 2], strides = [1, 1]} : vector<16x34xf32> to vector<16x2xf32>
    %c0_30 = arith.constant 0 : index
    %c0_31 = arith.constant 0 : index
    %45 = vector.load %arg7[%c0_30, %c0_31] : memref<2x64xf32, #tpu.memory_space<vmem>>, vector<2x64xf32>
    %cst_32 = arith.constant dense<0.000000e+00> : vector<16x64xf32>
    %46 = tpu.matmul %44, %45, %cst_32 {dimension_numbers = #tpu.dot_dimension_numbers<[1], [0], [0], [1], [0, 0, 1, 1], [], []>} : vector<16x2xf32>, vector<2x64xf32>, vector<16x64xf32> -> vector<16x64xf32>
    %c0_33 = arith.constant 0 : index
    %c0_34 = arith.constant 0 : index
    %47 = vector.load %arg8[%c0_33, %c0_34] : memref<1x64xf32, #tpu.memory_space<vmem>>, vector<1x64xf32>
    %48 = vector.broadcast %47 : vector<1x64xf32> to vector<16x64xf32>
    %49 = arith.addf %46, %48 : vector<16x64xf32>
    %cst_35 = arith.constant 2.000000e+01 : f32
    %50 = vector.broadcast %cst_35 : f32 to vector<16x64xf32>
    %51 = arith.cmpf ogt, %49, %50 : vector<16x64xf32>
    %cst_36 = arith.constant 2.000000e+01 : f32
    %52 = vector.broadcast %cst_36 : f32 to vector<16x64xf32>
    %53 = arith.minimumf %49, %52 : vector<16x64xf32>
    %54 = math.exp %53 : vector<16x64xf32>
    %55 = math.log1p %54 : vector<16x64xf32>
    %56 = arith.select %51, %49, %55 : vector<16x64xi1>, vector<16x64xf32>
    %57 = vector.extract_strided_slice %43 {offsets = [0, 2], sizes = [16, 16], strides = [1, 1]} : vector<16x34xf32> to vector<16x16xf32>
    %58 = vector.extract_strided_slice %43 {offsets = [0, 18], sizes = [16, 16], strides = [1, 1]} : vector<16x34xf32> to vector<16x16xf32>
    %59 = arith.mulf %56, %41 : vector<16x64xf32>
    %c0_37 = arith.constant 0 : index
    %c0_38 = arith.constant 0 : index
    %60 = vector.load %arg15[%c0_37, %c0_38] : memref<16x64xf32, #tpu.memory_space<vmem>>, vector<16x64xf32>
    tpu.vector_store %arg15[%c0_37, %c0_38], %59 {strides = array<i32>} : memref<16x64xf32, #tpu.memory_space<vmem>>, vector<16x64xf32>,
    %c0_39 = arith.constant 0 : index
    %c0_40 = arith.constant 0 : index
    %61 = vector.load %arg9[%c0_39, %c0_40] : memref<16x64xf32, #tpu.memory_space<vmem>>, vector<16x64xf32>
    %c0_41 = arith.constant 0 : index
    %c0_42 = arith.constant 0 : index
    %62 = vector.load %arg13[%c0_41, %c0_42] : memref<16x64xf32, #tpu.memory_space<vmem>>, vector<16x64xf32>
    %63 = vector.extract_strided_slice %56 {offsets = [0, 0], sizes = [8, 64], strides = [1, 1]} : vector<16x64xf32> to vector<8x64xf32>
    %64 = vector.shape_cast %63 : vector<8x64xf32> to vector<8x1x64xf32>
    %65 = vector.shape_cast %61 : vector<16x64xf32> to vector<1x16x64xf32>
    %66 = vector.broadcast %64 : vector<8x1x64xf32> to vector<8x16x64xf32>
    %67 = vector.broadcast %65 : vector<1x16x64xf32> to vector<8x16x64xf32>
    %68 = arith.mulf %66, %67 : vector<8x16x64xf32>
    %69 = math.exp %68 : vector<8x16x64xf32>
    %c0_43 = arith.constant 0 : index
    %c0_44 = arith.constant 0 : index
    %c0_45 = arith.constant 0 : index
    %c0_46 = arith.constant 0 : index
    %70 = vector.load %arg17[%c0_43, %c0_44, %c0_45, %c0_46] : memref<2x8x16x64xf32, #tpu.memory_space<vmem>>, vector<1x8x16x64xf32>
    %71 = vector.shape_cast %70 : vector<1x8x16x64xf32> to vector<8x16x64xf32>
    %72 = vector.shape_cast %69 : vector<8x16x64xf32> to vector<1x8x16x64xf32>
    tpu.vector_store %arg17[%c0_43, %c0_44, %c0_45, %c0_46], %72 {strides = array<i32>} : memref<2x8x16x64xf32, #tpu.memory_space<vmem>>, vector<1x8x16x64xf32>,
    %73 = vector.extract_strided_slice %57 {offsets = [0, 0], sizes = [8, 16], strides = [1, 1]} : vector<16x16xf32> to vector<8x16xf32>
    %74 = vector.shape_cast %73 : vector<8x16xf32> to vector<8x16x1xf32>
    %c0_47 = arith.constant 0 : index
    %c0_48 = arith.constant 0 : index
    %c0_49 = arith.constant 0 : index
    %c0_50 = arith.constant 0 : index
    %75 = vector.load %arg18[%c0_47, %c0_48, %c0_49, %c0_50] : memref<2x8x16x1xf32, #tpu.memory_space<vmem>>, vector<1x8x16x1xf32>
    %76 = vector.shape_cast %75 : vector<1x8x16x1xf32> to vector<8x16x1xf32>
    %77 = vector.shape_cast %74 : vector<8x16x1xf32> to vector<1x8x16x1xf32>
    tpu.vector_store %arg18[%c0_47, %c0_48, %c0_49, %c0_50], %77 {strides = array<i32>} : memref<2x8x16x1xf32, #tpu.memory_space<vmem>>, vector<1x8x16x1xf32>,
    %78 = vector.extract_strided_slice %58 {offsets = [0, 0], sizes = [8, 16], strides = [1, 1]} : vector<16x16xf32> to vector<8x16xf32>
    %79 = vector.shape_cast %78 : vector<8x16xf32> to vector<8x16x1xf32>
    %c0_51 = arith.constant 0 : index
    %c0_52 = arith.constant 0 : index
    %c0_53 = arith.constant 0 : index
    %c0_54 = arith.constant 0 : index
    %80 = vector.load %arg19[%c0_51, %c0_52, %c0_53, %c0_54] : memref<2x8x16x1xf32, #tpu.memory_space<vmem>>, vector<1x8x16x1xf32>
    %81 = vector.shape_cast %80 : vector<1x8x16x1xf32> to vector<8x16x1xf32>
    %82 = vector.shape_cast %79 : vector<8x16x1xf32> to vector<1x8x16x1xf32>
    tpu.vector_store %arg19[%c0_51, %c0_52, %c0_53, %c0_54], %82 {strides = array<i32>} : memref<2x8x16x1xf32, #tpu.memory_space<vmem>>, vector<1x8x16x1xf32>,
    %c0_i32_55 = arith.constant 0 : i32
    %c0_i32_56 = arith.constant 0 : i32
    %83 = arith.addi %c0_i32_56, %c0_i32_55 : i32
    %c0_57 = arith.constant 0 : index
    %84 = arith.index_cast %c0_i32_55 : i32 to index
    %c0_58 = arith.constant 0 : index
    %c0_59 = arith.constant 0 : index
    %85 = vector.load %arg17[%c0_57, %84, %c0_58, %c0_59] : memref<2x8x16x64xf32, #tpu.memory_space<vmem>>, vector<1x1x16x64xf32>
    %86 = vector.shape_cast %85 : vector<1x1x16x64xf32> to vector<16x64xf32>
    %87 = arith.mulf %86, %62 : vector<16x64xf32>
    %c0_60 = arith.constant 0 : index
    %88 = arith.index_cast %c0_i32_55 : i32 to index
    %c0_61 = arith.constant 0 : index
    %c0_62 = arith.constant 0 : index
    %89 = vector.load %arg18[%c0_60, %88, %c0_61, %c0_62] : memref<2x8x16x1xf32, #tpu.memory_space<vmem>>, vector<1x1x16x1xf32>
    %90 = vector.shape_cast %89 : vector<1x1x16x1xf32> to vector<16x1xf32>
    %91 = arith.index_cast %83 : i32 to index
    %c0_63 = arith.constant 0 : index
    %92 = vector.load %arg15[%91, %c0_63] : memref<16x64xf32, #tpu.memory_space<vmem>>, vector<1x64xf32>
    %93 = vector.broadcast %90 : vector<16x1xf32> to vector<16x64xf32>
    %94 = vector.broadcast %92 : vector<1x64xf32> to vector<16x64xf32>
    %95 = arith.mulf %93, %94 : vector<16x64xf32>
    %96 = arith.addf %87, %95 : vector<16x64xf32>
    %c0_64 = arith.constant 0 : index
    %97 = arith.index_cast %c0_i32_55 : i32 to index
    %c0_65 = arith.constant 0 : index
    %c0_66 = arith.constant 0 : index
    %98 = vector.load %arg19[%c0_64, %97, %c0_65, %c0_66] : memref<2x8x16x1xf32, #tpu.memory_space<vmem>>, vector<1x1x16x1xf32>
    %99 = vector.shape_cast %98 : vector<1x1x16x1xf32> to vector<16x1xf32>
    %100 = vector.broadcast %99 : vector<16x1xf32> to vector<16x64xf32>
    %101 = arith.mulf %96, %100 : vector<16x64xf32>
    %cst_67 = arith.constant dense<0.000000e+00> : vector<64xf32>
    %102 = vector.multi_reduction <add>, %101, %cst_67 [0] : vector<16x64xf32> to vector<64xf32>
    %103 = vector.shape_cast %102 : vector<64xf32> to vector<1x64xf32>
    %104 = arith.index_cast %83 : i32 to index
    %c0_68 = arith.constant 0 : index
    %105 = vector.load %arg16[%104, %c0_68] : memref<16x64xf32, #tpu.memory_space<vmem>>, vector<1x64xf32>
    tpu.vector_store %arg16[%104, %c0_68], %103 {strides = array<i32>} : memref<16x64xf32, #tpu.memory_space<vmem>>, vector<1x64xf32>,
    %c1_i32 = arith.constant 1 : i32
    %c0_i32_69 = arith.constant 0 : i32
    %106 = arith.addi %c0_i32_69, %c1_i32 : i32
    %c0_70 = arith.constant 0 : index
    %107 = arith.index_cast %c1_i32 : i32 to index
    %c0_71 = arith.constant 0 : index
    %c0_72 = arith.constant 0 : index
    %108 = vector.load %arg17[%c0_70, %107, %c0_71, %c0_72] : memref<2x8x16x64xf32, #tpu.memory_space<vmem>>, vector<1x1x16x64xf32>
    %109 = vector.shape_cast %108 : vector<1x1x16x64xf32> to vector<16x64xf32>
    %110 = arith.mulf %109, %96 : vector<16x64xf32>
    %c0_73 = arith.constant 0 : index
    %111 = arith.index_cast %c1_i32 : i32 to index
    %c0_74 = arith.constant 0 : index
    %c0_75 = arith.constant 0 : index
    %112 = vector.load %arg18[%c0_73, %111, %c0_74, %c0_75] : memref<2x8x16x1xf32, #tpu.memory_space<vmem>>, vector<1x1x16x1xf32>
    %113 = vector.shape_cast %112 : vector<1x1x16x1xf32> to vector<16x1xf32>
    %114 = arith.index_cast %106 : i32 to index
    %c0_76 = arith.constant 0 : index
    %115 = vector.load %arg15[%114, %c0_76] : memref<16x64xf32, #tpu.memory_space<vmem>>, vector<1x64xf32>
    %116 = vector.broadcast %113 : vector<16x1xf32> to vector<16x64xf32>
    %117 = vector.broadcast %115 : vector<1x64xf32> to vector<16x64xf32>
    %118 = arith.mulf %116, %117 : vector<16x64xf32>
    %119 = arith.addf %110, %118 : vector<16x64xf32>
    %c0_77 = arith.constant 0 : index
    %120 = arith.index_cast %c1_i32 : i32 to index
    %c0_78 = arith.constant 0 : index
    %c0_79 = arith.constant 0 : index
    %121 = vector.load %arg19[%c0_77, %120, %c0_78, %c0_79] : memref<2x8x16x1xf32, #tpu.memory_space<vmem>>, vector<1x1x16x1xf32>
    %122 = vector.shape_cast %121 : vector<1x1x16x1xf32> to vector<16x1xf32>
    %123 = vector.broadcast %122 : vector<16x1xf32> to vector<16x64xf32>
    %124 = arith.mulf %119, %123 : vector<16x64xf32>
    %cst_80 = arith.constant dense<0.000000e+00> : vector<64xf32>
    %125 = vector.multi_reduction <add>, %124, %cst_80 [0] : vector<16x64xf32> to vector<64xf32>
    %126 = vector.shape_cast %125 : vector<64xf32> to vector<1x64xf32>
    %127 = arith.index_cast %106 : i32 to index
    %c0_81 = arith.constant 0 : index
    %128 = vector.load %arg16[%127, %c0_81] : memref<16x64xf32, #tpu.memory_space<vmem>>, vector<1x64xf32>
    tpu.vector_store %arg16[%127, %c0_81], %126 {strides = array<i32>} : memref<16x64xf32, #tpu.memory_space<vmem>>, vector<1x64xf32>,
    %c2_i32 = arith.constant 2 : i32
    %c0_i32_82 = arith.constant 0 : i32
    %129 = arith.addi %c0_i32_82, %c2_i32 : i32
    %c0_83 = arith.constant 0 : index
    %130 = arith.index_cast %c2_i32 : i32 to index
    %c0_84 = arith.constant 0 : index
    %c0_85 = arith.constant 0 : index
    %131 = vector.load %arg17[%c0_83, %130, %c0_84, %c0_85] : memref<2x8x16x64xf32, #tpu.memory_space<vmem>>, vector<1x1x16x64xf32>
    %132 = vector.shape_cast %131 : vector<1x1x16x64xf32> to vector<16x64xf32>
    %133 = arith.mulf %132, %119 : vector<16x64xf32>
    %c0_86 = arith.constant 0 : index
    %134 = arith.index_cast %c2_i32 : i32 to index
    %c0_87 = arith.constant 0 : index
    %c0_88 = arith.constant 0 : index
    %135 = vector.load %arg18[%c0_86, %134, %c0_87, %c0_88] : memref<2x8x16x1xf32, #tpu.memory_space<vmem>>, vector<1x1x16x1xf32>
    %136 = vector.shape_cast %135 : vector<1x1x16x1xf32> to vector<16x1xf32>
    %137 = arith.index_cast %129 : i32 to index
    %c0_89 = arith.constant 0 : index
    %138 = vector.load %arg15[%137, %c0_89] : memref<16x64xf32, #tpu.memory_space<vmem>>, vector<1x64xf32>
    %139 = vector.broadcast %136 : vector<16x1xf32> to vector<16x64xf32>
    %140 = vector.broadcast %138 : vector<1x64xf32> to vector<16x64xf32>
    %141 = arith.mulf %139, %140 : vector<16x64xf32>
    %142 = arith.addf %133, %141 : vector<16x64xf32>
    %c0_90 = arith.constant 0 : index
    %143 = arith.index_cast %c2_i32 : i32 to index
    %c0_91 = arith.constant 0 : index
    %c0_92 = arith.constant 0 : index
    %144 = vector.load %arg19[%c0_90, %143, %c0_91, %c0_92] : memref<2x8x16x1xf32, #tpu.memory_space<vmem>>, vector<1x1x16x1xf32>
    %145 = vector.shape_cast %144 : vector<1x1x16x1xf32> to vector<16x1xf32>
    %146 = vector.broadcast %145 : vector<16x1xf32> to vector<16x64xf32>
    %147 = arith.mulf %142, %146 : vector<16x64xf32>
    %cst_93 = arith.constant dense<0.000000e+00> : vector<64xf32>
    %148 = vector.multi_reduction <add>, %147, %cst_93 [0] : vector<16x64xf32> to vector<64xf32>
    %149 = vector.shape_cast %148 : vector<64xf32> to vector<1x64xf32>
    %150 = arith.index_cast %129 : i32 to index
    %c0_94 = arith.constant 0 : index
    %151 = vector.load %arg16[%150, %c0_94] : memref<16x64xf32, #tpu.memory_space<vmem>>, vector<1x64xf32>
    tpu.vector_store %arg16[%150, %c0_94], %149 {strides = array<i32>} : memref<16x64xf32, #tpu.memory_space<vmem>>, vector<1x64xf32>,
    %c3_i32 = arith.constant 3 : i32
    %c0_i32_95 = arith.constant 0 : i32
    %152 = arith.addi %c0_i32_95, %c3_i32 : i32
    %c0_96 = arith.constant 0 : index
    %153 = arith.index_cast %c3_i32 : i32 to index
    %c0_97 = arith.constant 0 : index
    %c0_98 = arith.constant 0 : index
    %154 = vector.load %arg17[%c0_96, %153, %c0_97, %c0_98] : memref<2x8x16x64xf32, #tpu.memory_space<vmem>>, vector<1x1x16x64xf32>
    %155 = vector.shape_cast %154 : vector<1x1x16x64xf32> to vector<16x64xf32>
    %156 = arith.mulf %155, %142 : vector<16x64xf32>
    %c0_99 = arith.constant 0 : index
    %157 = arith.index_cast %c3_i32 : i32 to index
    %c0_100 = arith.constant 0 : index
    %c0_101 = arith.constant 0 : index
    %158 = vector.load %arg18[%c0_99, %157, %c0_100, %c0_101] : memref<2x8x16x1xf32, #tpu.memory_space<vmem>>, vector<1x1x16x1xf32>
    %159 = vector.shape_cast %158 : vector<1x1x16x1xf32> to vector<16x1xf32>
    %160 = arith.index_cast %152 : i32 to index
    %c0_102 = arith.constant 0 : index
    %161 = vector.load %arg15[%160, %c0_102] : memref<16x64xf32, #tpu.memory_space<vmem>>, vector<1x64xf32>
    %162 = vector.broadcast %159 : vector<16x1xf32> to vector<16x64xf32>
    %163 = vector.broadcast %161 : vector<1x64xf32> to vector<16x64xf32>
    %164 = arith.mulf %162, %163 : vector<16x64xf32>
    %165 = arith.addf %156, %164 : vector<16x64xf32>
    %c0_103 = arith.constant 0 : index
    %166 = arith.index_cast %c3_i32 : i32 to index
    %c0_104 = arith.constant 0 : index
    %c0_105 = arith.constant 0 : index
    %167 = vector.load %arg19[%c0_103, %166, %c0_104, %c0_105] : memref<2x8x16x1xf32, #tpu.memory_space<vmem>>, vector<1x1x16x1xf32>
    %168 = vector.shape_cast %167 : vector<1x1x16x1xf32> to vector<16x1xf32>
    %169 = vector.broadcast %168 : vector<16x1xf32> to vector<16x64xf32>
    %170 = arith.mulf %165, %169 : vector<16x64xf32>
    %cst_106 = arith.constant dense<0.000000e+00> : vector<64xf32>
    %171 = vector.multi_reduction <add>, %170, %cst_106 [0] : vector<16x64xf32> to vector<64xf32>
    %172 = vector.shape_cast %171 : vector<64xf32> to vector<1x64xf32>
    %173 = arith.index_cast %152 : i32 to index
    %c0_107 = arith.constant 0 : index
    %174 = vector.load %arg16[%173, %c0_107] : memref<16x64xf32, #tpu.memory_space<vmem>>, vector<1x64xf32>
    tpu.vector_store %arg16[%173, %c0_107], %172 {strides = array<i32>} : memref<16x64xf32, #tpu.memory_space<vmem>>, vector<1x64xf32>,
    %c4_i32 = arith.constant 4 : i32
    %c0_i32_108 = arith.constant 0 : i32
    %175 = arith.addi %c0_i32_108, %c4_i32 : i32
    %c0_109 = arith.constant 0 : index
    %176 = arith.index_cast %c4_i32 : i32 to index
    %c0_110 = arith.constant 0 : index
    %c0_111 = arith.constant 0 : index
    %177 = vector.load %arg17[%c0_109, %176, %c0_110, %c0_111] : memref<2x8x16x64xf32, #tpu.memory_space<vmem>>, vector<1x1x16x64xf32>
    %178 = vector.shape_cast %177 : vector<1x1x16x64xf32> to vector<16x64xf32>
    %179 = arith.mulf %178, %165 : vector<16x64xf32>
    %c0_112 = arith.constant 0 : index
    %180 = arith.index_cast %c4_i32 : i32 to index
    %c0_113 = arith.constant 0 : index
    %c0_114 = arith.constant 0 : index
    %181 = vector.load %arg18[%c0_112, %180, %c0_113, %c0_114] : memref<2x8x16x1xf32, #tpu.memory_space<vmem>>, vector<1x1x16x1xf32>
    %182 = vector.shape_cast %181 : vector<1x1x16x1xf32> to vector<16x1xf32>
    %183 = arith.index_cast %175 : i32 to index
    %c0_115 = arith.constant 0 : index
    %184 = vector.load %arg15[%183, %c0_115] : memref<16x64xf32, #tpu.memory_space<vmem>>, vector<1x64xf32>
    %185 = vector.broadcast %182 : vector<16x1xf32> to vector<16x64xf32>
    %186 = vector.broadcast %184 : vector<1x64xf32> to vector<16x64xf32>
    %187 = arith.mulf %185, %186 : vector<16x64xf32>
    %188 = arith.addf %179, %187 : vector<16x64xf32>
    %c0_116 = arith.constant 0 : index
    %189 = arith.index_cast %c4_i32 : i32 to index
    %c0_117 = arith.constant 0 : index
    %c0_118 = arith.constant 0 : index
    %190 = vector.load %arg19[%c0_116, %189, %c0_117, %c0_118] : memref<2x8x16x1xf32, #tpu.memory_space<vmem>>, vector<1x1x16x1xf32>
    %191 = vector.shape_cast %190 : vector<1x1x16x1xf32> to vector<16x1xf32>
    %192 = vector.broadcast %191 : vector<16x1xf32> to vector<16x64xf32>
    %193 = arith.mulf %188, %192 : vector<16x64xf32>
    %cst_119 = arith.constant dense<0.000000e+00> : vector<64xf32>
    %194 = vector.multi_reduction <add>, %193, %cst_119 [0] : vector<16x64xf32> to vector<64xf32>
    %195 = vector.shape_cast %194 : vector<64xf32> to vector<1x64xf32>
    %196 = arith.index_cast %175 : i32 to index
    %c0_120 = arith.constant 0 : index
    %197 = vector.load %arg16[%196, %c0_120] : memref<16x64xf32, #tpu.memory_space<vmem>>, vector<1x64xf32>
    tpu.vector_store %arg16[%196, %c0_120], %195 {strides = array<i32>} : memref<16x64xf32, #tpu.memory_space<vmem>>, vector<1x64xf32>,
    %c5_i32 = arith.constant 5 : i32
    %c0_i32_121 = arith.constant 0 : i32
    %198 = arith.addi %c0_i32_121, %c5_i32 : i32
    %c0_122 = arith.constant 0 : index
    %199 = arith.index_cast %c5_i32 : i32 to index
    %c0_123 = arith.constant 0 : index
    %c0_124 = arith.constant 0 : index
    %200 = vector.load %arg17[%c0_122, %199, %c0_123, %c0_124] : memref<2x8x16x64xf32, #tpu.memory_space<vmem>>, vector<1x1x16x64xf32>
    %201 = vector.shape_cast %200 : vector<1x1x16x64xf32> to vector<16x64xf32>
    %202 = arith.mulf %201, %188 : vector<16x64xf32>
    %c0_125 = arith.constant 0 : index
    %203 = arith.index_cast %c5_i32 : i32 to index
    %c0_126 = arith.constant 0 : index
    %c0_127 = arith.constant 0 : index
    %204 = vector.load %arg18[%c0_125, %203, %c0_126, %c0_127] : memref<2x8x16x1xf32, #tpu.memory_space<vmem>>, vector<1x1x16x1xf32>
    %205 = vector.shape_cast %204 : vector<1x1x16x1xf32> to vector<16x1xf32>
    %206 = arith.index_cast %198 : i32 to index
    %c0_128 = arith.constant 0 : index
    %207 = vector.load %arg15[%206, %c0_128] : memref<16x64xf32, #tpu.memory_space<vmem>>, vector<1x64xf32>
    %208 = vector.broadcast %205 : vector<16x1xf32> to vector<16x64xf32>
    %209 = vector.broadcast %207 : vector<1x64xf32> to vector<16x64xf32>
    %210 = arith.mulf %208, %209 : vector<16x64xf32>
    %211 = arith.addf %202, %210 : vector<16x64xf32>
    %c0_129 = arith.constant 0 : index
    %212 = arith.index_cast %c5_i32 : i32 to index
    %c0_130 = arith.constant 0 : index
    %c0_131 = arith.constant 0 : index
    %213 = vector.load %arg19[%c0_129, %212, %c0_130, %c0_131] : memref<2x8x16x1xf32, #tpu.memory_space<vmem>>, vector<1x1x16x1xf32>
    %214 = vector.shape_cast %213 : vector<1x1x16x1xf32> to vector<16x1xf32>
    %215 = vector.broadcast %214 : vector<16x1xf32> to vector<16x64xf32>
    %216 = arith.mulf %211, %215 : vector<16x64xf32>
    %cst_132 = arith.constant dense<0.000000e+00> : vector<64xf32>
    %217 = vector.multi_reduction <add>, %216, %cst_132 [0] : vector<16x64xf32> to vector<64xf32>
    %218 = vector.shape_cast %217 : vector<64xf32> to vector<1x64xf32>
    %219 = arith.index_cast %198 : i32 to index
    %c0_133 = arith.constant 0 : index
    %220 = vector.load %arg16[%219, %c0_133] : memref<16x64xf32, #tpu.memory_space<vmem>>, vector<1x64xf32>
    tpu.vector_store %arg16[%219, %c0_133], %218 {strides = array<i32>} : memref<16x64xf32, #tpu.memory_space<vmem>>, vector<1x64xf32>,
    %c6_i32 = arith.constant 6 : i32
    %c0_i32_134 = arith.constant 0 : i32
    %221 = arith.addi %c0_i32_134, %c6_i32 : i32
    %c0_135 = arith.constant 0 : index
    %222 = arith.index_cast %c6_i32 : i32 to index
    %c0_136 = arith.constant 0 : index
    %c0_137 = arith.constant 0 : index
    %223 = vector.load %arg17[%c0_135, %222, %c0_136, %c0_137] : memref<2x8x16x64xf32, #tpu.memory_space<vmem>>, vector<1x1x16x64xf32>
    %224 = vector.shape_cast %223 : vector<1x1x16x64xf32> to vector<16x64xf32>
    %225 = arith.mulf %224, %211 : vector<16x64xf32>
    %c0_138 = arith.constant 0 : index
    %226 = arith.index_cast %c6_i32 : i32 to index
    %c0_139 = arith.constant 0 : index
    %c0_140 = arith.constant 0 : index
    %227 = vector.load %arg18[%c0_138, %226, %c0_139, %c0_140] : memref<2x8x16x1xf32, #tpu.memory_space<vmem>>, vector<1x1x16x1xf32>
    %228 = vector.shape_cast %227 : vector<1x1x16x1xf32> to vector<16x1xf32>
    %229 = arith.index_cast %221 : i32 to index
    %c0_141 = arith.constant 0 : index
    %230 = vector.load %arg15[%229, %c0_141] : memref<16x64xf32, #tpu.memory_space<vmem>>, vector<1x64xf32>
    %231 = vector.broadcast %228 : vector<16x1xf32> to vector<16x64xf32>
    %232 = vector.broadcast %230 : vector<1x64xf32> to vector<16x64xf32>
    %233 = arith.mulf %231, %232 : vector<16x64xf32>
    %234 = arith.addf %225, %233 : vector<16x64xf32>
    %c0_142 = arith.constant 0 : index
    %235 = arith.index_cast %c6_i32 : i32 to index
    %c0_143 = arith.constant 0 : index
    %c0_144 = arith.constant 0 : index
    %236 = vector.load %arg19[%c0_142, %235, %c0_143, %c0_144] : memref<2x8x16x1xf32, #tpu.memory_space<vmem>>, vector<1x1x16x1xf32>
    %237 = vector.shape_cast %236 : vector<1x1x16x1xf32> to vector<16x1xf32>
    %238 = vector.broadcast %237 : vector<16x1xf32> to vector<16x64xf32>
    %239 = arith.mulf %234, %238 : vector<16x64xf32>
    %cst_145 = arith.constant dense<0.000000e+00> : vector<64xf32>
    %240 = vector.multi_reduction <add>, %239, %cst_145 [0] : vector<16x64xf32> to vector<64xf32>
    %241 = vector.shape_cast %240 : vector<64xf32> to vector<1x64xf32>
    %242 = arith.index_cast %221 : i32 to index
    %c0_146 = arith.constant 0 : index
    %243 = vector.load %arg16[%242, %c0_146] : memref<16x64xf32, #tpu.memory_space<vmem>>, vector<1x64xf32>
    tpu.vector_store %arg16[%242, %c0_146], %241 {strides = array<i32>} : memref<16x64xf32, #tpu.memory_space<vmem>>, vector<1x64xf32>,
    %c7_i32 = arith.constant 7 : i32
    %c0_i32_147 = arith.constant 0 : i32
    %244 = arith.addi %c0_i32_147, %c7_i32 : i32
    %c0_148 = arith.constant 0 : index
    %245 = arith.index_cast %c7_i32 : i32 to index
    %c0_149 = arith.constant 0 : index
    %c0_150 = arith.constant 0 : index
    %246 = vector.load %arg17[%c0_148, %245, %c0_149, %c0_150] : memref<2x8x16x64xf32, #tpu.memory_space<vmem>>, vector<1x1x16x64xf32>
    %247 = vector.shape_cast %246 : vector<1x1x16x64xf32> to vector<16x64xf32>
    %248 = arith.mulf %247, %234 : vector<16x64xf32>
    %c0_151 = arith.constant 0 : index
    %249 = arith.index_cast %c7_i32 : i32 to index
    %c0_152 = arith.constant 0 : index
    %c0_153 = arith.constant 0 : index
    %250 = vector.load %arg18[%c0_151, %249, %c0_152, %c0_153] : memref<2x8x16x1xf32, #tpu.memory_space<vmem>>, vector<1x1x16x1xf32>
    %251 = vector.shape_cast %250 : vector<1x1x16x1xf32> to vector<16x1xf32>
    %252 = arith.index_cast %244 : i32 to index
    %c0_154 = arith.constant 0 : index
    %253 = vector.load %arg15[%252, %c0_154] : memref<16x64xf32, #tpu.memory_space<vmem>>, vector<1x64xf32>
    %254 = vector.broadcast %251 : vector<16x1xf32> to vector<16x64xf32>
    %255 = vector.broadcast %253 : vector<1x64xf32> to vector<16x64xf32>
    %256 = arith.mulf %254, %255 : vector<16x64xf32>
    %257 = arith.addf %248, %256 : vector<16x64xf32>
    %c0_155 = arith.constant 0 : index
    %258 = arith.index_cast %c7_i32 : i32 to index
    %c0_156 = arith.constant 0 : index
    %c0_157 = arith.constant 0 : index
    %259 = vector.load %arg19[%c0_155, %258, %c0_156, %c0_157] : memref<2x8x16x1xf32, #tpu.memory_space<vmem>>, vector<1x1x16x1xf32>
    %260 = vector.shape_cast %259 : vector<1x1x16x1xf32> to vector<16x1xf32>
    %261 = vector.broadcast %260 : vector<16x1xf32> to vector<16x64xf32>
    %262 = arith.mulf %257, %261 : vector<16x64xf32>
    %cst_158 = arith.constant dense<0.000000e+00> : vector<64xf32>
    %263 = vector.multi_reduction <add>, %262, %cst_158 [0] : vector<16x64xf32> to vector<64xf32>
    %264 = vector.shape_cast %263 : vector<64xf32> to vector<1x64xf32>
    %265 = arith.index_cast %244 : i32 to index
    %c0_159 = arith.constant 0 : index
    %266 = vector.load %arg16[%265, %c0_159] : memref<16x64xf32, #tpu.memory_space<vmem>>, vector<1x64xf32>
    tpu.vector_store %arg16[%265, %c0_159], %264 {strides = array<i32>} : memref<16x64xf32, #tpu.memory_space<vmem>>, vector<1x64xf32>,
    %c8_i32 = arith.constant 8 : i32
    %267 = vector.extract_strided_slice %56 {offsets = [8, 0], sizes = [8, 64], strides = [1, 1]} : vector<16x64xf32> to vector<8x64xf32>
    %268 = vector.shape_cast %267 : vector<8x64xf32> to vector<8x1x64xf32>
    %269 = vector.shape_cast %61 : vector<16x64xf32> to vector<1x16x64xf32>
    %270 = vector.broadcast %268 : vector<8x1x64xf32> to vector<8x16x64xf32>
    %271 = vector.broadcast %269 : vector<1x16x64xf32> to vector<8x16x64xf32>
    %272 = arith.mulf %270, %271 : vector<8x16x64xf32>
    %273 = math.exp %272 : vector<8x16x64xf32>
    %c1_160 = arith.constant 1 : index
    %c0_161 = arith.constant 0 : index
    %c0_162 = arith.constant 0 : index
    %c0_163 = arith.constant 0 : index
    %274 = vector.load %arg17[%c1_160, %c0_161, %c0_162, %c0_163] : memref<2x8x16x64xf32, #tpu.memory_space<vmem>>, vector<1x8x16x64xf32>
    %275 = vector.shape_cast %274 : vector<1x8x16x64xf32> to vector<8x16x64xf32>
    %276 = vector.shape_cast %273 : vector<8x16x64xf32> to vector<1x8x16x64xf32>
    tpu.vector_store %arg17[%c1_160, %c0_161, %c0_162, %c0_163], %276 {strides = array<i32>} : memref<2x8x16x64xf32, #tpu.memory_space<vmem>>, vector<1x8x16x64xf32>,
    %277 = vector.extract_strided_slice %57 {offsets = [8, 0], sizes = [8, 16], strides = [1, 1]} : vector<16x16xf32> to vector<8x16xf32>
    %278 = vector.shape_cast %277 : vector<8x16xf32> to vector<8x16x1xf32>
    %c1_164 = arith.constant 1 : index
    %c0_165 = arith.constant 0 : index
    %c0_166 = arith.constant 0 : index
    %c0_167 = arith.constant 0 : index
    %279 = vector.load %arg18[%c1_164, %c0_165, %c0_166, %c0_167] : memref<2x8x16x1xf32, #tpu.memory_space<vmem>>, vector<1x8x16x1xf32>
    %280 = vector.shape_cast %279 : vector<1x8x16x1xf32> to vector<8x16x1xf32>
    %281 = vector.shape_cast %278 : vector<8x16x1xf32> to vector<1x8x16x1xf32>
    tpu.vector_store %arg18[%c1_164, %c0_165, %c0_166, %c0_167], %281 {strides = array<i32>} : memref<2x8x16x1xf32, #tpu.memory_space<vmem>>, vector<1x8x16x1xf32>,
    %282 = vector.extract_strided_slice %58 {offsets = [8, 0], sizes = [8, 16], strides = [1, 1]} : vector<16x16xf32> to vector<8x16xf32>
    %283 = vector.shape_cast %282 : vector<8x16xf32> to vector<8x16x1xf32>
    %c1_168 = arith.constant 1 : index
    %c0_169 = arith.constant 0 : index
    %c0_170 = arith.constant 0 : index
    %c0_171 = arith.constant 0 : index
    %284 = vector.load %arg19[%c1_168, %c0_169, %c0_170, %c0_171] : memref<2x8x16x1xf32, #tpu.memory_space<vmem>>, vector<1x8x16x1xf32>
    %285 = vector.shape_cast %284 : vector<1x8x16x1xf32> to vector<8x16x1xf32>
    %286 = vector.shape_cast %283 : vector<8x16x1xf32> to vector<1x8x16x1xf32>
    tpu.vector_store %arg19[%c1_168, %c0_169, %c0_170, %c0_171], %286 {strides = array<i32>} : memref<2x8x16x1xf32, #tpu.memory_space<vmem>>, vector<1x8x16x1xf32>,
    %c0_i32_172 = arith.constant 0 : i32
    %c8_i32_173 = arith.constant 8 : i32
    %287 = arith.addi %c8_i32_173, %c0_i32_172 : i32
    %c1_174 = arith.constant 1 : index
    %288 = arith.index_cast %c0_i32_172 : i32 to index
    %c0_175 = arith.constant 0 : index
    %c0_176 = arith.constant 0 : index
    %289 = vector.load %arg17[%c1_174, %288, %c0_175, %c0_176] : memref<2x8x16x64xf32, #tpu.memory_space<vmem>>, vector<1x1x16x64xf32>
    %290 = vector.shape_cast %289 : vector<1x1x16x64xf32> to vector<16x64xf32>
    %291 = arith.mulf %290, %257 : vector<16x64xf32>
    %c1_177 = arith.constant 1 : index
    %292 = arith.index_cast %c0_i32_172 : i32 to index
    %c0_178 = arith.constant 0 : index
    %c0_179 = arith.constant 0 : index
    %293 = vector.load %arg18[%c1_177, %292, %c0_178, %c0_179] : memref<2x8x16x1xf32, #tpu.memory_space<vmem>>, vector<1x1x16x1xf32>
    %294 = vector.shape_cast %293 : vector<1x1x16x1xf32> to vector<16x1xf32>
    %295 = arith.index_cast %287 : i32 to index
    %c0_180 = arith.constant 0 : index
    %296 = vector.load %arg15[%295, %c0_180] : memref<16x64xf32, #tpu.memory_space<vmem>>, vector<1x64xf32>
    %297 = vector.broadcast %294 : vector<16x1xf32> to vector<16x64xf32>
    %298 = vector.broadcast %296 : vector<1x64xf32> to vector<16x64xf32>
    %299 = arith.mulf %297, %298 : vector<16x64xf32>
    %300 = arith.addf %291, %299 : vector<16x64xf32>
    %c1_181 = arith.constant 1 : index
    %301 = arith.index_cast %c0_i32_172 : i32 to index
    %c0_182 = arith.constant 0 : index
    %c0_183 = arith.constant 0 : index
    %302 = vector.load %arg19[%c1_181, %301, %c0_182, %c0_183] : memref<2x8x16x1xf32, #tpu.memory_space<vmem>>, vector<1x1x16x1xf32>
    %303 = vector.shape_cast %302 : vector<1x1x16x1xf32> to vector<16x1xf32>
    %304 = vector.broadcast %303 : vector<16x1xf32> to vector<16x64xf32>
    %305 = arith.mulf %300, %304 : vector<16x64xf32>
    %cst_184 = arith.constant dense<0.000000e+00> : vector<64xf32>
    %306 = vector.multi_reduction <add>, %305, %cst_184 [0] : vector<16x64xf32> to vector<64xf32>
    %307 = vector.shape_cast %306 : vector<64xf32> to vector<1x64xf32>
    %308 = arith.index_cast %287 : i32 to index
    %c0_185 = arith.constant 0 : index
    %309 = vector.load %arg16[%308, %c0_185] : memref<16x64xf32, #tpu.memory_space<vmem>>, vector<1x64xf32>
    tpu.vector_store %arg16[%308, %c0_185], %307 {strides = array<i32>} : memref<16x64xf32, #tpu.memory_space<vmem>>, vector<1x64xf32>,
    %c1_i32_186 = arith.constant 1 : i32
    %c8_i32_187 = arith.constant 8 : i32
    %310 = arith.addi %c8_i32_187, %c1_i32_186 : i32
    %c1_188 = arith.constant 1 : index
    %311 = arith.index_cast %c1_i32_186 : i32 to index
    %c0_189 = arith.constant 0 : index
    %c0_190 = arith.constant 0 : index
    %312 = vector.load %arg17[%c1_188, %311, %c0_189, %c0_190] : memref<2x8x16x64xf32, #tpu.memory_space<vmem>>, vector<1x1x16x64xf32>
    %313 = vector.shape_cast %312 : vector<1x1x16x64xf32> to vector<16x64xf32>
    %314 = arith.mulf %313, %300 : vector<16x64xf32>
    %c1_191 = arith.constant 1 : index
    %315 = arith.index_cast %c1_i32_186 : i32 to index
    %c0_192 = arith.constant 0 : index
    %c0_193 = arith.constant 0 : index
    %316 = vector.load %arg18[%c1_191, %315, %c0_192, %c0_193] : memref<2x8x16x1xf32, #tpu.memory_space<vmem>>, vector<1x1x16x1xf32>
    %317 = vector.shape_cast %316 : vector<1x1x16x1xf32> to vector<16x1xf32>
    %318 = arith.index_cast %310 : i32 to index
    %c0_194 = arith.constant 0 : index
    %319 = vector.load %arg15[%318, %c0_194] : memref<16x64xf32, #tpu.memory_space<vmem>>, vector<1x64xf32>
    %320 = vector.broadcast %317 : vector<16x1xf32> to vector<16x64xf32>
    %321 = vector.broadcast %319 : vector<1x64xf32> to vector<16x64xf32>
    %322 = arith.mulf %320, %321 : vector<16x64xf32>
    %323 = arith.addf %314, %322 : vector<16x64xf32>
    %c1_195 = arith.constant 1 : index
    %324 = arith.index_cast %c1_i32_186 : i32 to index
    %c0_196 = arith.constant 0 : index
    %c0_197 = arith.constant 0 : index
    %325 = vector.load %arg19[%c1_195, %324, %c0_196, %c0_197] : memref<2x8x16x1xf32, #tpu.memory_space<vmem>>, vector<1x1x16x1xf32>
    %326 = vector.shape_cast %325 : vector<1x1x16x1xf32> to vector<16x1xf32>
    %327 = vector.broadcast %326 : vector<16x1xf32> to vector<16x64xf32>
    %328 = arith.mulf %323, %327 : vector<16x64xf32>
    %cst_198 = arith.constant dense<0.000000e+00> : vector<64xf32>
    %329 = vector.multi_reduction <add>, %328, %cst_198 [0] : vector<16x64xf32> to vector<64xf32>
    %330 = vector.shape_cast %329 : vector<64xf32> to vector<1x64xf32>
    %331 = arith.index_cast %310 : i32 to index
    %c0_199 = arith.constant 0 : index
    %332 = vector.load %arg16[%331, %c0_199] : memref<16x64xf32, #tpu.memory_space<vmem>>, vector<1x64xf32>
    tpu.vector_store %arg16[%331, %c0_199], %330 {strides = array<i32>} : memref<16x64xf32, #tpu.memory_space<vmem>>, vector<1x64xf32>,
    %c2_i32_200 = arith.constant 2 : i32
    %c8_i32_201 = arith.constant 8 : i32
    %333 = arith.addi %c8_i32_201, %c2_i32_200 : i32
    %c1_202 = arith.constant 1 : index
    %334 = arith.index_cast %c2_i32_200 : i32 to index
    %c0_203 = arith.constant 0 : index
    %c0_204 = arith.constant 0 : index
    %335 = vector.load %arg17[%c1_202, %334, %c0_203, %c0_204] : memref<2x8x16x64xf32, #tpu.memory_space<vmem>>, vector<1x1x16x64xf32>
    %336 = vector.shape_cast %335 : vector<1x1x16x64xf32> to vector<16x64xf32>
    %337 = arith.mulf %336, %323 : vector<16x64xf32>
    %c1_205 = arith.constant 1 : index
    %338 = arith.index_cast %c2_i32_200 : i32 to index
    %c0_206 = arith.constant 0 : index
    %c0_207 = arith.constant 0 : index
    %339 = vector.load %arg18[%c1_205, %338, %c0_206, %c0_207] : memref<2x8x16x1xf32, #tpu.memory_space<vmem>>, vector<1x1x16x1xf32>
    %340 = vector.shape_cast %339 : vector<1x1x16x1xf32> to vector<16x1xf32>
    %341 = arith.index_cast %333 : i32 to index
    %c0_208 = arith.constant 0 : index
    %342 = vector.load %arg15[%341, %c0_208] : memref<16x64xf32, #tpu.memory_space<vmem>>, vector<1x64xf32>
    %343 = vector.broadcast %340 : vector<16x1xf32> to vector<16x64xf32>
    %344 = vector.broadcast %342 : vector<1x64xf32> to vector<16x64xf32>
    %345 = arith.mulf %343, %344 : vector<16x64xf32>
    %346 = arith.addf %337, %345 : vector<16x64xf32>
    %c1_209 = arith.constant 1 : index
    %347 = arith.index_cast %c2_i32_200 : i32 to index
    %c0_210 = arith.constant 0 : index
    %c0_211 = arith.constant 0 : index
    %348 = vector.load %arg19[%c1_209, %347, %c0_210, %c0_211] : memref<2x8x16x1xf32, #tpu.memory_space<vmem>>, vector<1x1x16x1xf32>
    %349 = vector.shape_cast %348 : vector<1x1x16x1xf32> to vector<16x1xf32>
    %350 = vector.broadcast %349 : vector<16x1xf32> to vector<16x64xf32>
    %351 = arith.mulf %346, %350 : vector<16x64xf32>
    %cst_212 = arith.constant dense<0.000000e+00> : vector<64xf32>
    %352 = vector.multi_reduction <add>, %351, %cst_212 [0] : vector<16x64xf32> to vector<64xf32>
    %353 = vector.shape_cast %352 : vector<64xf32> to vector<1x64xf32>
    %354 = arith.index_cast %333 : i32 to index
    %c0_213 = arith.constant 0 : index
    %355 = vector.load %arg16[%354, %c0_213] : memref<16x64xf32, #tpu.memory_space<vmem>>, vector<1x64xf32>
    tpu.vector_store %arg16[%354, %c0_213], %353 {strides = array<i32>} : memref<16x64xf32, #tpu.memory_space<vmem>>, vector<1x64xf32>,
    %c3_i32_214 = arith.constant 3 : i32
    %c8_i32_215 = arith.constant 8 : i32
    %356 = arith.addi %c8_i32_215, %c3_i32_214 : i32
    %c1_216 = arith.constant 1 : index
    %357 = arith.index_cast %c3_i32_214 : i32 to index
    %c0_217 = arith.constant 0 : index
    %c0_218 = arith.constant 0 : index
    %358 = vector.load %arg17[%c1_216, %357, %c0_217, %c0_218] : memref<2x8x16x64xf32, #tpu.memory_space<vmem>>, vector<1x1x16x64xf32>
    %359 = vector.shape_cast %358 : vector<1x1x16x64xf32> to vector<16x64xf32>
    %360 = arith.mulf %359, %346 : vector<16x64xf32>
    %c1_219 = arith.constant 1 : index
    %361 = arith.index_cast %c3_i32_214 : i32 to index
    %c0_220 = arith.constant 0 : index
    %c0_221 = arith.constant 0 : index
    %362 = vector.load %arg18[%c1_219, %361, %c0_220, %c0_221] : memref<2x8x16x1xf32, #tpu.memory_space<vmem>>, vector<1x1x16x1xf32>
    %363 = vector.shape_cast %362 : vector<1x1x16x1xf32> to vector<16x1xf32>
    %364 = arith.index_cast %356 : i32 to index
    %c0_222 = arith.constant 0 : index
    %365 = vector.load %arg15[%364, %c0_222] : memref<16x64xf32, #tpu.memory_space<vmem>>, vector<1x64xf32>
    %366 = vector.broadcast %363 : vector<16x1xf32> to vector<16x64xf32>
    %367 = vector.broadcast %365 : vector<1x64xf32> to vector<16x64xf32>
    %368 = arith.mulf %366, %367 : vector<16x64xf32>
    %369 = arith.addf %360, %368 : vector<16x64xf32>
    %c1_223 = arith.constant 1 : index
    %370 = arith.index_cast %c3_i32_214 : i32 to index
    %c0_224 = arith.constant 0 : index
    %c0_225 = arith.constant 0 : index
    %371 = vector.load %arg19[%c1_223, %370, %c0_224, %c0_225] : memref<2x8x16x1xf32, #tpu.memory_space<vmem>>, vector<1x1x16x1xf32>
    %372 = vector.shape_cast %371 : vector<1x1x16x1xf32> to vector<16x1xf32>
    %373 = vector.broadcast %372 : vector<16x1xf32> to vector<16x64xf32>
    %374 = arith.mulf %369, %373 : vector<16x64xf32>
    %cst_226 = arith.constant dense<0.000000e+00> : vector<64xf32>
    %375 = vector.multi_reduction <add>, %374, %cst_226 [0] : vector<16x64xf32> to vector<64xf32>
    %376 = vector.shape_cast %375 : vector<64xf32> to vector<1x64xf32>
    %377 = arith.index_cast %356 : i32 to index
    %c0_227 = arith.constant 0 : index
    %378 = vector.load %arg16[%377, %c0_227] : memref<16x64xf32, #tpu.memory_space<vmem>>, vector<1x64xf32>
    tpu.vector_store %arg16[%377, %c0_227], %376 {strides = array<i32>} : memref<16x64xf32, #tpu.memory_space<vmem>>, vector<1x64xf32>,
    %c4_i32_228 = arith.constant 4 : i32
    %c8_i32_229 = arith.constant 8 : i32
    %379 = arith.addi %c8_i32_229, %c4_i32_228 : i32
    %c1_230 = arith.constant 1 : index
    %380 = arith.index_cast %c4_i32_228 : i32 to index
    %c0_231 = arith.constant 0 : index
    %c0_232 = arith.constant 0 : index
    %381 = vector.load %arg17[%c1_230, %380, %c0_231, %c0_232] : memref<2x8x16x64xf32, #tpu.memory_space<vmem>>, vector<1x1x16x64xf32>
    %382 = vector.shape_cast %381 : vector<1x1x16x64xf32> to vector<16x64xf32>
    %383 = arith.mulf %382, %369 : vector<16x64xf32>
    %c1_233 = arith.constant 1 : index
    %384 = arith.index_cast %c4_i32_228 : i32 to index
    %c0_234 = arith.constant 0 : index
    %c0_235 = arith.constant 0 : index
    %385 = vector.load %arg18[%c1_233, %384, %c0_234, %c0_235] : memref<2x8x16x1xf32, #tpu.memory_space<vmem>>, vector<1x1x16x1xf32>
    %386 = vector.shape_cast %385 : vector<1x1x16x1xf32> to vector<16x1xf32>
    %387 = arith.index_cast %379 : i32 to index
    %c0_236 = arith.constant 0 : index
    %388 = vector.load %arg15[%387, %c0_236] : memref<16x64xf32, #tpu.memory_space<vmem>>, vector<1x64xf32>
    %389 = vector.broadcast %386 : vector<16x1xf32> to vector<16x64xf32>
    %390 = vector.broadcast %388 : vector<1x64xf32> to vector<16x64xf32>
    %391 = arith.mulf %389, %390 : vector<16x64xf32>
    %392 = arith.addf %383, %391 : vector<16x64xf32>
    %c1_237 = arith.constant 1 : index
    %393 = arith.index_cast %c4_i32_228 : i32 to index
    %c0_238 = arith.constant 0 : index
    %c0_239 = arith.constant 0 : index
    %394 = vector.load %arg19[%c1_237, %393, %c0_238, %c0_239] : memref<2x8x16x1xf32, #tpu.memory_space<vmem>>, vector<1x1x16x1xf32>
    %395 = vector.shape_cast %394 : vector<1x1x16x1xf32> to vector<16x1xf32>
    %396 = vector.broadcast %395 : vector<16x1xf32> to vector<16x64xf32>
    %397 = arith.mulf %392, %396 : vector<16x64xf32>
    %cst_240 = arith.constant dense<0.000000e+00> : vector<64xf32>
    %398 = vector.multi_reduction <add>, %397, %cst_240 [0] : vector<16x64xf32> to vector<64xf32>
    %399 = vector.shape_cast %398 : vector<64xf32> to vector<1x64xf32>
    %400 = arith.index_cast %379 : i32 to index
    %c0_241 = arith.constant 0 : index
    %401 = vector.load %arg16[%400, %c0_241] : memref<16x64xf32, #tpu.memory_space<vmem>>, vector<1x64xf32>
    tpu.vector_store %arg16[%400, %c0_241], %399 {strides = array<i32>} : memref<16x64xf32, #tpu.memory_space<vmem>>, vector<1x64xf32>,
    %c5_i32_242 = arith.constant 5 : i32
    %c8_i32_243 = arith.constant 8 : i32
    %402 = arith.addi %c8_i32_243, %c5_i32_242 : i32
    %c1_244 = arith.constant 1 : index
    %403 = arith.index_cast %c5_i32_242 : i32 to index
    %c0_245 = arith.constant 0 : index
    %c0_246 = arith.constant 0 : index
    %404 = vector.load %arg17[%c1_244, %403, %c0_245, %c0_246] : memref<2x8x16x64xf32, #tpu.memory_space<vmem>>, vector<1x1x16x64xf32>
    %405 = vector.shape_cast %404 : vector<1x1x16x64xf32> to vector<16x64xf32>
    %406 = arith.mulf %405, %392 : vector<16x64xf32>
    %c1_247 = arith.constant 1 : index
    %407 = arith.index_cast %c5_i32_242 : i32 to index
    %c0_248 = arith.constant 0 : index
    %c0_249 = arith.constant 0 : index
    %408 = vector.load %arg18[%c1_247, %407, %c0_248, %c0_249] : memref<2x8x16x1xf32, #tpu.memory_space<vmem>>, vector<1x1x16x1xf32>
    %409 = vector.shape_cast %408 : vector<1x1x16x1xf32> to vector<16x1xf32>
    %410 = arith.index_cast %402 : i32 to index
    %c0_250 = arith.constant 0 : index
    %411 = vector.load %arg15[%410, %c0_250] : memref<16x64xf32, #tpu.memory_space<vmem>>, vector<1x64xf32>
    %412 = vector.broadcast %409 : vector<16x1xf32> to vector<16x64xf32>
    %413 = vector.broadcast %411 : vector<1x64xf32> to vector<16x64xf32>
    %414 = arith.mulf %412, %413 : vector<16x64xf32>
    %415 = arith.addf %406, %414 : vector<16x64xf32>
    %c1_251 = arith.constant 1 : index
    %416 = arith.index_cast %c5_i32_242 : i32 to index
    %c0_252 = arith.constant 0 : index
    %c0_253 = arith.constant 0 : index
    %417 = vector.load %arg19[%c1_251, %416, %c0_252, %c0_253] : memref<2x8x16x1xf32, #tpu.memory_space<vmem>>, vector<1x1x16x1xf32>
    %418 = vector.shape_cast %417 : vector<1x1x16x1xf32> to vector<16x1xf32>
    %419 = vector.broadcast %418 : vector<16x1xf32> to vector<16x64xf32>
    %420 = arith.mulf %415, %419 : vector<16x64xf32>
    %cst_254 = arith.constant dense<0.000000e+00> : vector<64xf32>
    %421 = vector.multi_reduction <add>, %420, %cst_254 [0] : vector<16x64xf32> to vector<64xf32>
    %422 = vector.shape_cast %421 : vector<64xf32> to vector<1x64xf32>
    %423 = arith.index_cast %402 : i32 to index
    %c0_255 = arith.constant 0 : index
    %424 = vector.load %arg16[%423, %c0_255] : memref<16x64xf32, #tpu.memory_space<vmem>>, vector<1x64xf32>
    tpu.vector_store %arg16[%423, %c0_255], %422 {strides = array<i32>} : memref<16x64xf32, #tpu.memory_space<vmem>>, vector<1x64xf32>,
    %c6_i32_256 = arith.constant 6 : i32
    %c8_i32_257 = arith.constant 8 : i32
    %425 = arith.addi %c8_i32_257, %c6_i32_256 : i32
    %c1_258 = arith.constant 1 : index
    %426 = arith.index_cast %c6_i32_256 : i32 to index
    %c0_259 = arith.constant 0 : index
    %c0_260 = arith.constant 0 : index
    %427 = vector.load %arg17[%c1_258, %426, %c0_259, %c0_260] : memref<2x8x16x64xf32, #tpu.memory_space<vmem>>, vector<1x1x16x64xf32>
    %428 = vector.shape_cast %427 : vector<1x1x16x64xf32> to vector<16x64xf32>
    %429 = arith.mulf %428, %415 : vector<16x64xf32>
    %c1_261 = arith.constant 1 : index
    %430 = arith.index_cast %c6_i32_256 : i32 to index
    %c0_262 = arith.constant 0 : index
    %c0_263 = arith.constant 0 : index
    %431 = vector.load %arg18[%c1_261, %430, %c0_262, %c0_263] : memref<2x8x16x1xf32, #tpu.memory_space<vmem>>, vector<1x1x16x1xf32>
    %432 = vector.shape_cast %431 : vector<1x1x16x1xf32> to vector<16x1xf32>
    %433 = arith.index_cast %425 : i32 to index
    %c0_264 = arith.constant 0 : index
    %434 = vector.load %arg15[%433, %c0_264] : memref<16x64xf32, #tpu.memory_space<vmem>>, vector<1x64xf32>
    %435 = vector.broadcast %432 : vector<16x1xf32> to vector<16x64xf32>
    %436 = vector.broadcast %434 : vector<1x64xf32> to vector<16x64xf32>
    %437 = arith.mulf %435, %436 : vector<16x64xf32>
    %438 = arith.addf %429, %437 : vector<16x64xf32>
    %c1_265 = arith.constant 1 : index
    %439 = arith.index_cast %c6_i32_256 : i32 to index
    %c0_266 = arith.constant 0 : index
    %c0_267 = arith.constant 0 : index
    %440 = vector.load %arg19[%c1_265, %439, %c0_266, %c0_267] : memref<2x8x16x1xf32, #tpu.memory_space<vmem>>, vector<1x1x16x1xf32>
    %441 = vector.shape_cast %440 : vector<1x1x16x1xf32> to vector<16x1xf32>
    %442 = vector.broadcast %441 : vector<16x1xf32> to vector<16x64xf32>
    %443 = arith.mulf %438, %442 : vector<16x64xf32>
    %cst_268 = arith.constant dense<0.000000e+00> : vector<64xf32>
    %444 = vector.multi_reduction <add>, %443, %cst_268 [0] : vector<16x64xf32> to vector<64xf32>
    %445 = vector.shape_cast %444 : vector<64xf32> to vector<1x64xf32>
    %446 = arith.index_cast %425 : i32 to index
    %c0_269 = arith.constant 0 : index
    %447 = vector.load %arg16[%446, %c0_269] : memref<16x64xf32, #tpu.memory_space<vmem>>, vector<1x64xf32>
    tpu.vector_store %arg16[%446, %c0_269], %445 {strides = array<i32>} : memref<16x64xf32, #tpu.memory_space<vmem>>, vector<1x64xf32>,
    %c7_i32_270 = arith.constant 7 : i32
    %c8_i32_271 = arith.constant 8 : i32
    %448 = arith.addi %c8_i32_271, %c7_i32_270 : i32
    %c1_272 = arith.constant 1 : index
    %449 = arith.index_cast %c7_i32_270 : i32 to index
    %c0_273 = arith.constant 0 : index
    %c0_274 = arith.constant 0 : index
    %450 = vector.load %arg17[%c1_272, %449, %c0_273, %c0_274] : memref<2x8x16x64xf32, #tpu.memory_space<vmem>>, vector<1x1x16x64xf32>
    %451 = vector.shape_cast %450 : vector<1x1x16x64xf32> to vector<16x64xf32>
    %452 = arith.mulf %451, %438 : vector<16x64xf32>
    %c1_275 = arith.constant 1 : index
    %453 = arith.index_cast %c7_i32_270 : i32 to index
    %c0_276 = arith.constant 0 : index
    %c0_277 = arith.constant 0 : index
    %454 = vector.load %arg18[%c1_275, %453, %c0_276, %c0_277] : memref<2x8x16x1xf32, #tpu.memory_space<vmem>>, vector<1x1x16x1xf32>
    %455 = vector.shape_cast %454 : vector<1x1x16x1xf32> to vector<16x1xf32>
    %456 = arith.index_cast %448 : i32 to index
    %c0_278 = arith.constant 0 : index
    %457 = vector.load %arg15[%456, %c0_278] : memref<16x64xf32, #tpu.memory_space<vmem>>, vector<1x64xf32>
    %458 = vector.broadcast %455 : vector<16x1xf32> to vector<16x64xf32>
    %459 = vector.broadcast %457 : vector<1x64xf32> to vector<16x64xf32>
    %460 = arith.mulf %458, %459 : vector<16x64xf32>
    %461 = arith.addf %452, %460 : vector<16x64xf32>
    %c1_279 = arith.constant 1 : index
    %462 = arith.index_cast %c7_i32_270 : i32 to index
    %c0_280 = arith.constant 0 : index
    %c0_281 = arith.constant 0 : index
    %463 = vector.load %arg19[%c1_279, %462, %c0_280, %c0_281] : memref<2x8x16x1xf32, #tpu.memory_space<vmem>>, vector<1x1x16x1xf32>
    %464 = vector.shape_cast %463 : vector<1x1x16x1xf32> to vector<16x1xf32>
    %465 = vector.broadcast %464 : vector<16x1xf32> to vector<16x64xf32>
    %466 = arith.mulf %461, %465 : vector<16x64xf32>
    %cst_282 = arith.constant dense<0.000000e+00> : vector<64xf32>
    %467 = vector.multi_reduction <add>, %466, %cst_282 [0] : vector<16x64xf32> to vector<64xf32>
    %468 = vector.shape_cast %467 : vector<64xf32> to vector<1x64xf32>
    %469 = arith.index_cast %448 : i32 to index
    %c0_283 = arith.constant 0 : index
    %470 = vector.load %arg16[%469, %c0_283] : memref<16x64xf32, #tpu.memory_space<vmem>>, vector<1x64xf32>
    tpu.vector_store %arg16[%469, %c0_283], %468 {strides = array<i32>} : memref<16x64xf32, #tpu.memory_space<vmem>>, vector<1x64xf32>,
    %c8_i32_284 = arith.constant 8 : i32
    %c0_285 = arith.constant 0 : index
    %c0_286 = arith.constant 0 : index
    %471 = vector.load %arg13[%c0_285, %c0_286] : memref<16x64xf32, #tpu.memory_space<vmem>>, vector<16x64xf32>
    tpu.vector_store %arg13[%c0_285, %c0_286], %461 {strides = array<i32>} : memref<16x64xf32, #tpu.memory_space<vmem>>, vector<16x64xf32>,
    %c0_287 = arith.constant 0 : index
    %c0_288 = arith.constant 0 : index
    %472 = vector.load %arg16[%c0_287, %c0_288] : memref<16x64xf32, #tpu.memory_space<vmem>>, vector<16x64xf32>
    %c0_289 = arith.constant 0 : index
    %c0_290 = arith.constant 0 : index
    %473 = vector.load %arg10[%c0_289, %c0_290] : memref<1x64xf32, #tpu.memory_space<vmem>>, vector<1x64xf32>
    %474 = vector.broadcast %473 : vector<1x64xf32> to vector<16x64xf32>
    %475 = arith.mulf %41, %474 : vector<16x64xf32>
    %476 = arith.addf %472, %475 : vector<16x64xf32>
    %cst_291 = arith.constant 0.000000e+00 : f32
    %477 = vector.broadcast %cst_291 : f32 to vector<16x64xf32>
    %478 = arith.subf %477, %8 : vector<16x64xf32>
    %479 = math.exp %478 : vector<16x64xf32>
    %cst_292 = arith.constant 1.000000e+00 : f32
    %480 = vector.broadcast %cst_292 : f32 to vector<16x64xf32>
    %481 = arith.addf %480, %479 : vector<16x64xf32>
    %cst_293 = arith.constant 1.000000e+00 : f32
    %482 = vector.broadcast %cst_293 : f32 to vector<16x64xf32>
    %483 = arith.divf %482, %481 : vector<16x64xf32>
    %484 = arith.mulf %8, %483 : vector<16x64xf32>
    %485 = arith.mulf %476, %484 : vector<16x64xf32>
    %c0_294 = arith.constant 0 : index
    %c0_295 = arith.constant 0 : index
    %486 = vector.load %arg11[%c0_294, %c0_295] : memref<64x32xf32, #tpu.memory_space<vmem>>, vector<64x32xf32>
    %cst_296 = arith.constant dense<0.000000e+00> : vector<16x32xf32>
    %487 = tpu.matmul %485, %486, %cst_296 {dimension_numbers = #tpu.dot_dimension_numbers<[1], [0], [0], [1], [0, 0, 1, 1], [], []>} : vector<16x64xf32>, vector<64x32xf32>, vector<16x32xf32> -> vector<16x32xf32>
    %c0_297 = arith.constant 0 : index
    %c0_298 = arith.constant 0 : index
    %c0_299 = arith.constant 0 : index
    %488 = vector.load %arg12[%c0_297, %c0_298, %c0_299] : memref<1x16x32xf32, #tpu.memory_space<vmem>>, vector<1x16x32xf32>
    %489 = vector.shape_cast %488 : vector<1x16x32xf32> to vector<16x32xf32>
    %490 = vector.shape_cast %487 : vector<16x32xf32> to vector<1x16x32xf32>
    tpu.vector_store %arg12[%c0_297, %c0_298, %c0_299], %490 {strides = array<i32>} : memref<1x16x32xf32, #tpu.memory_space<vmem>>, vector<1x16x32xf32>,
    return
  }
  func.func @transform_0(%arg0: i32, %arg1: i32) -> (i32, i32, i32) {
    %c0_i32 = arith.constant 0 : i32
    %c0_i32_0 = arith.constant 0 : i32
    return %arg0, %arg1, %c0_i32 : i32, i32, i32
  }
  func.func @transform_1(%arg0: i32, %arg1: i32) -> (i32, i32) {
    %c0_i32 = arith.constant 0 : i32
    %c0_i32_0 = arith.constant 0 : i32
    %c0_i32_1 = arith.constant 0 : i32
    return %c0_i32, %c0_i32_0 : i32, i32
  }
  func.func @transform_2(%arg0: i32, %arg1: i32) -> (i32, i32) {
    %c0_i32 = arith.constant 0 : i32
    %c0_i32_0 = arith.constant 0 : i32
    %c0_i32_1 = arith.constant 0 : i32
    return %c0_i32, %c0_i32_0 : i32, i32
  }
  func.func @transform_3(%arg0: i32, %arg1: i32) -> (i32, i32) {
    %c0_i32 = arith.constant 0 : i32
    %c0_i32_0 = arith.constant 0 : i32
    %c0_i32_1 = arith.constant 0 : i32
    return %c0_i32, %c0_i32_0 : i32, i32
  }
  func.func @transform_4(%arg0: i32, %arg1: i32) -> (i32, i32) {
    %c0_i32 = arith.constant 0 : i32
    %c0_i32_0 = arith.constant 0 : i32
    %c0_i32_1 = arith.constant 0 : i32
    return %c0_i32, %c0_i32_0 : i32, i32
  }
  func.func @transform_5(%arg0: i32, %arg1: i32) -> (i32, i32) {
    %c0_i32 = arith.constant 0 : i32
    %c0_i32_0 = arith.constant 0 : i32
    %c0_i32_1 = arith.constant 0 : i32
    return %c0_i32, %c0_i32_0 : i32, i32
  }
  func.func @transform_6(%arg0: i32, %arg1: i32) -> (i32, i32) {
    %c0_i32 = arith.constant 0 : i32
    %c0_i32_0 = arith.constant 0 : i32
    %c0_i32_1 = arith.constant 0 : i32
    return %c0_i32, %c0_i32_0 : i32, i32
  }
  func.func @transform_7(%arg0: i32, %arg1: i32) -> (i32, i32) {
    %c0_i32 = arith.constant 0 : i32
    %c0_i32_0 = arith.constant 0 : i32
    %c0_i32_1 = arith.constant 0 : i32
    return %c0_i32, %c0_i32_0 : i32, i32
  }
  func.func @transform_8(%arg0: i32, %arg1: i32) -> (i32, i32) {
    %c0_i32 = arith.constant 0 : i32
    %c0_i32_0 = arith.constant 0 : i32
    %c0_i32_1 = arith.constant 0 : i32
    return %c0_i32, %c0_i32_0 : i32, i32
  }
  func.func @transform_9(%arg0: i32, %arg1: i32) -> (i32, i32) {
    %c0_i32 = arith.constant 0 : i32
    %c0_i32_0 = arith.constant 0 : i32
    %c0_i32_1 = arith.constant 0 : i32
    return %c0_i32, %c0_i32_0 : i32, i32
  }
  func.func @transform_10(%arg0: i32, %arg1: i32) -> (i32, i32, i32) {
    %c0_i32 = arith.constant 0 : i32
    %c0_i32_0 = arith.constant 0 : i32
    return %arg0, %arg1, %c0_i32 : i32, i32, i32
  }
}

module attributes {stable_mosaic.version = 11 : i64} {
  func.func @mamba_block_kernel(%arg0: i32, %arg1: i32, %arg2: memref<1x16x32xf32, #tpu.memory_space<vmem>>, %arg3: memref<32x128xf32, #tpu.memory_space<vmem>>, %arg4: memref<4x64xf32, #tpu.memory_space<vmem>>, %arg5: memref<1x64xf32, #tpu.memory_space<vmem>>, %arg6: memref<64x34xf32, #tpu.memory_space<vmem>>, %arg7: memref<2x64xf32, #tpu.memory_space<vmem>>, %arg8: memref<1x64xf32, #tpu.memory_space<vmem>>, %arg9: memref<16x64xf32, #tpu.memory_space<vmem>>, %arg10: memref<1x64xf32, #tpu.memory_space<vmem>>, %arg11: memref<64x32xf32, #tpu.memory_space<vmem>>, %arg12: memref<1x16x32xf32, #tpu.memory_space<vmem>>, %arg13: memref<16x64xf32, #tpu.memory_space<vmem>>, %arg14: memref<19x64xf32, #tpu.memory_space<vmem>>, %arg15: memref<16x64xf32, #tpu.memory_space<vmem>>, %arg16: memref<16x64xf32, #tpu.memory_space<vmem>>, %arg17: memref<2x8x16x64xf32, #tpu.memory_space<vmem>>, %arg18: memref<2x8x16x1xf32, #tpu.memory_space<vmem>>, %arg19: memref<2x8x16x1xf32, #tpu.memory_space<vmem>>) attributes {dimension_semantics = [#tpu.dimension_semantics<parallel>, #tpu.dimension_semantics<arbitrary>], iteration_bounds = array<i64: 2, 2>, scalar_prefetch = 0 : i64, scratch_operands = 7 : i64, tpu.core_type = #tpu.core_type<tc>, window_params = [{transform_indices = @transform_0, window_bounds = array<i64: 1, 16, 32>}, {pipeline_mode = #tpu.pipeline_mode<synchronous>, transform_indices = @transform_1, window_bounds = array<i64: 32, 128>}, {pipeline_mode = #tpu.pipeline_mode<synchronous>, transform_indices = @transform_2, window_bounds = array<i64: 4, 64>}, {pipeline_mode = #tpu.pipeline_mode<synchronous>, transform_indices = @transform_3, window_bounds = array<i64: 1, 64>}, {pipeline_mode = #tpu.pipeline_mode<synchronous>, transform_indices = @transform_4, window_bounds = array<i64: 64, 34>}, {pipeline_mode = #tpu.pipeline_mode<synchronous>, transform_indices = @transform_5, window_bounds = array<i64: 2, 64>}, {pipeline_mode = #tpu.pipeline_mode<synchronous>, transform_indices = @transform_6, window_bounds = array<i64: 1, 64>}, {pipeline_mode = #tpu.pipeline_mode<synchronous>, transform_indices = @transform_7, window_bounds = array<i64: 16, 64>}, {pipeline_mode = #tpu.pipeline_mode<synchronous>, transform_indices = @transform_8, window_bounds = array<i64: 1, 64>}, {pipeline_mode = #tpu.pipeline_mode<synchronous>, transform_indices = @transform_9, window_bounds = array<i64: 64, 32>}, {transform_indices = @transform_10, window_bounds = array<i64: 1, 16, 32>}]} {
    %c0_i32 = arith.constant 0 : i32
    %0 = arith.cmpi eq, %arg1, %c0_i32 : i32
    %1 = arith.extui %0 : i1 to i32
    %c0_i32_0 = arith.constant 0 : i32
    %2 = arith.cmpi ne, %1, %c0_i32_0 : i32
    scf.if %2 {
      %cst_300 = arith.constant 0.000000e+00 : f32
      %491 = vector.broadcast %cst_300 : f32 to vector<16x64xf32>
      %c0_301 = arith.constant 0 : index
      %c0_302 = arith.constant 0 : index
      %492 = vector.load %arg13[%c0_301, %c0_302] : memref<16x64xf32, #tpu.memory_space<vmem>>, vector<16x64xf32>
      tpu.vector_store %arg13[%c0_301, %c0_302], %491 {strides = array<i32>} : memref<16x64xf32, #tpu.memory_space<vmem>>, vector<16x64xf32>,
      %cst_303 = arith.constant 0.000000e+00 : f32
      %493 = vector.broadcast %cst_303 : f32 to vector<3x64xf32>
      %c0_304 = arith.constant 0 : index
      %c0_305 = arith.constant 0 : index
      %494 = vector.load %arg14[%c0_304, %c0_305] : memref<19x64xf32, #tpu.memory_space<vmem>>, vector<3x64xf32>
      tpu.vector_store %arg14[%c0_304, %c0_305], %493 {strides = array<i32>} : memref<19x64xf32, #tpu.memory_space<vmem>>, vector<3x64xf32>,
    } else {
    }
    %c0 = arith.constant 0 : index
    %c0_1 = arith.constant 0 : index
    %c0_2 = arith.constant 0 : index
    %3 = vector.load %arg2[%c0, %c0_1, %c0_2] : memref<1x16x32xf32, #tpu.memory_space<vmem>>, vector<1x16x32xf32>
    %4 = vector.shape_cast %3 : vector<1x16x32xf32> to vector<16x32xf32>
    %c0_3 = arith.constant 0 : index
    %c0_4 = arith.constant 0 : index
    %5 = vector.load %arg3[%c0_3, %c0_4] : memref<32x128xf32, #tpu.memory_space<vmem>>, vector<32x128xf32>
    %cst = arith.constant dense<0.000000e+00> : vector<16x128xf32>
    %6 = tpu.matmul %4, %5, %cst {dimension_numbers = #tpu.dot_dimension_numbers<[1], [0], [0], [1], [0, 0, 1, 1], [], []>} : vector<16x32xf32>, vector<32x128xf32>, vector<16x128xf32> -> vector<16x128xf32>
    %7 = vector.extract_strided_slice %6 {offsets = [0, 0], sizes = [16, 64], strides = [1, 1]} : vector<16x128xf32> to vector<16x64xf32>
    %8 = vector.extract_strided_slice %6 {offsets = [0, 64], sizes = [16, 64], strides = [1, 1]} : vector<16x128xf32> to vector<16x64xf32>
    %c3 = arith.constant 3 : index
    %c0_5 = arith.constant 0 : index
    %9 = vector.load %arg14[%c3, %c0_5] : memref<19x64xf32, #tpu.memory_space<vmem>>, vector<16x64xf32>
    tpu.vector_store %arg14[%c3, %c0_5], %7 {strides = array<i32>} : memref<19x64xf32, #tpu.memory_space<vmem>>, vector<16x64xf32>,
    %c0_6 = arith.constant 0 : index
    %c0_7 = arith.constant 0 : index
    %10 = vector.load %arg5[%c0_6, %c0_7] : memref<1x64xf32, #tpu.memory_space<vmem>>, vector<1x64xf32>
    %c0_8 = arith.constant 0 : index
    %c0_9 = arith.constant 0 : index
    %11 = vector.load %arg4[%c0_8, %c0_9] : memref<4x64xf32, #tpu.memory_space<vmem>>, vector<1x64xf32>
    %c0_10 = arith.constant 0 : index
    %c0_11 = arith.constant 0 : index
    %12 = vector.load %arg14[%c0_10, %c0_11] : memref<19x64xf32, #tpu.memory_space<vmem>>, vector<16x64xf32>
    %13 = vector.broadcast %11 : vector<1x64xf32> to vector<16x64xf32>
    %14 = arith.mulf %13, %12 : vector<16x64xf32>
    %15 = vector.broadcast %10 : vector<1x64xf32> to vector<16x64xf32>
    %16 = arith.addf %15, %14 : vector<16x64xf32>
    %c1 = arith.constant 1 : index
    %c0_12 = arith.constant 0 : index
    %17 = vector.load %arg4[%c1, %c0_12] : memref<4x64xf32, #tpu.memory_space<vmem>>, vector<1x64xf32>
    %c1_13 = arith.constant 1 : index
    %c0_14 = arith.constant 0 : index
    %18 = vector.load %arg14[%c1_13, %c0_14] : memref<19x64xf32, #tpu.memory_space<vmem>>, vector<16x64xf32>
    %19 = vector.broadcast %17 : vector<1x64xf32> to vector<16x64xf32>
    %20 = arith.mulf %19, %18 : vector<16x64xf32>
    %21 = arith.addf %16, %20 : vector<16x64xf32>
    %c2 = arith.constant 2 : index
    %c0_15 = arith.constant 0 : index
    %22 = vector.load %arg4[%c2, %c0_15] : memref<4x64xf32, #tpu.memory_space<vmem>>, vector<1x64xf32>
    %c2_16 = arith.constant 2 : index
    %c0_17 = arith.constant 0 : index
    %23 = vector.load %arg14[%c2_16, %c0_17] : memref<19x64xf32, #tpu.memory_space<vmem>>, vector<16x64xf32>
    %24 = vector.broadcast %22 : vector<1x64xf32> to vector<16x64xf32>
    %25 = arith.mulf %24, %23 : vector<16x64xf32>
    %26 = arith.addf %21, %25 : vector<16x64xf32>
    %c3_18 = arith.constant 3 : index
    %c0_19 = arith.constant 0 : index
    %27 = vector.load %arg4[%c3_18, %c0_19] : memref<4x64xf32, #tpu.memory_space<vmem>>, vector<1x64xf32>
    %c3_20 = arith.constant 3 : index
    %c0_21 = arith.constant 0 : index
    %28 = vector.load %arg14[%c3_20, %c0_21] : memref<19x64xf32, #tpu.memory_space<vmem>>, vector<16x64xf32>
    %29 = vector.broadcast %27 : vector<1x64xf32> to vector<16x64xf32>
    %30 = arith.mulf %29, %28 : vector<16x64xf32>
    %31 = arith.addf %26, %30 : vector<16x64xf32>
    %32 = vector.extract_strided_slice %7 {offsets = [13, 0], sizes = [3, 64], strides = [1, 1]} : vector<16x64xf32> to vector<3x64xf32>
    %c0_22 = arith.constant 0 : index
    %c0_23 = arith.constant 0 : index
    %33 = vector.load %arg14[%c0_22, %c0_23] : memref<19x64xf32, #tpu.memory_space<vmem>>, vector<3x64xf32>
    tpu.vector_store %arg14[%c0_22, %c0_23], %32 {strides = array<i32>} : memref<19x64xf32, #tpu.memory_space<vmem>>, vector<3x64xf32>,
    %cst_24 = arith.constant 0.000000e+00 : f32
    %34 = vector.broadcast %cst_24 : f32 to vector<16x64xf32>
    %35 = arith.subf %34, %31 : vector<16x64xf32>
    %36 = math.exp %35 : vector<16x64xf32>
    %cst_25 = arith.constant 1.000000e+00 : f32
    %37 = vector.broadcast %cst_25 : f32 to vector<16x64xf32>
    %38 = arith.addf %37, %36 : vector<16x64xf32>
    %cst_26 = arith.constant 1.000000e+00 : f32
    %39 = vector.broadcast %cst_26 : f32 to vector<16x64xf32>
    %40 = arith.divf %39, %38 : vector<16x64xf32>
    %41 = arith.mulf %31, %40 : vector<16x64xf32>
    %c0_27 = arith.constant 0 : index
    %c0_28 = arith.constant 0 : index
    %42 = vector.load %arg6[%c0_27, %c0_28] : memref<64x34xf32, #tpu.memory_space<vmem>>, vector<64x34xf32>
    %cst_29 = arith.constant dense<0.000000e+00> : vector<16x34xf32>
    %43 = tpu.matmul %41, %42, %cst_29 {dimension_numbers = #tpu.dot_dimension_numbers<[1], [0], [0], [1], [0, 0, 1, 1], [], []>} : vector<16x64xf32>, vector<64x34xf32>, vector<16x34xf32> -> vector<16x34xf32>
    %44 = vector.extract_strided_slice %43 {offsets = [0, 0], sizes = [16, 2], strides = [1, 1]} : vector<16x34xf32> to vector<16x2xf32>
    %c0_30 = arith.constant 0 : index
    %c0_31 = arith.constant 0 : index
    %45 = vector.load %arg7[%c0_30, %c0_31] : memref<2x64xf32, #tpu.memory_space<vmem>>, vector<2x64xf32>
    %cst_32 = arith.constant dense<0.000000e+00> : vector<16x64xf32>
    %46 = tpu.matmul %44, %45, %cst_32 {dimension_numbers = #tpu.dot_dimension_numbers<[1], [0], [0], [1], [0, 0, 1, 1], [], []>} : vector<16x2xf32>, vector<2x64xf32>, vector<16x64xf32> -> vector<16x64xf32>
    %c0_33 = arith.constant 0 : index
    %c0_34 = arith.constant 0 : index
    %47 = vector.load %arg8[%c0_33, %c0_34] : memref<1x64xf32, #tpu.memory_space<vmem>>, vector<1x64xf32>
    %48 = vector.broadcast %47 : vector<1x64xf32> to vector<16x64xf32>
    %49 = arith.addf %46, %48 : vector<16x64xf32>
    %cst_35 = arith.constant 2.000000e+01 : f32
    %50 = vector.broadcast %cst_35 : f32 to vector<16x64xf32>
    %51 = arith.cmpf ogt, %49, %50 : vector<16x64xf32>
    %cst_36 = arith.constant 2.000000e+01 : f32
    %52 = vector.broadcast %cst_36 : f32 to vector<16x64xf32>
    %53 = arith.minimumf %49, %52 : vector<16x64xf32>
    %54 = math.exp %53 : vector<16x64xf32>
    %55 = math.log1p %54 : vector<16x64xf32>
    %56 = arith.select %51, %49, %55 : vector<16x64xi1>, vector<16x64xf32>
    %57 = vector.extract_strided_slice %43 {offsets = [0, 2], sizes = [16, 16], strides = [1, 1]} : vector<16x34xf32> to vector<16x16xf32>
    %58 = vector.extract_strided_slice %43 {offsets = [0, 18], sizes = [16, 16], strides = [1, 1]} : vector<16x34xf32> to vector<16x16xf32>
    %59 = arith.mulf %56, %41 : vector<16x64xf32>
    %c0_37 = arith.constant 0 : index
    %c0_38 = arith.constant 0 : index
    %60 = vector.load %arg15[%c0_37, %c0_38] : memref<16x64xf32, #tpu.memory_space<vmem>>, vector<16x64xf32>
    tpu.vector_store %arg15[%c0_37, %c0_38], %59 {strides = array<i32>} : memref<16x64xf32, #tpu.memory_space<vmem>>, vector<16x64xf32>,
    %c0_39 = arith.constant 0 : index
    %c0_40 = arith.constant 0 : index
    %61 = vector.load %arg9[%c0_39, %c0_40] : memref<16x64xf32, #tpu.memory_space<vmem>>, vector<16x64xf32>
    %c0_41 = arith.constant 0 : index
    %c0_42 = arith.constant 0 : index
    %62 = vector.load %arg13[%c0_41, %c0_42] : memref<16x64xf32, #tpu.memory_space<vmem>>, vector<16x64xf32>
    %63 = vector.extract_strided_slice %56 {offsets = [0, 0], sizes = [8, 64], strides = [1, 1]} : vector<16x64xf32> to vector<8x64xf32>
    %64 = vector.shape_cast %63 : vector<8x64xf32> to vector<8x1x64xf32>
    %65 = vector.shape_cast %61 : vector<16x64xf32> to vector<1x16x64xf32>
    %66 = vector.broadcast %64 : vector<8x1x64xf32> to vector<8x16x64xf32>
    %67 = vector.broadcast %65 : vector<1x16x64xf32> to vector<8x16x64xf32>
    %68 = arith.mulf %66, %67 : vector<8x16x64xf32>
    %69 = math.exp %68 : vector<8x16x64xf32>
    %c0_43 = arith.constant 0 : index
    %c0_44 = arith.constant 0 : index
    %c0_45 = arith.constant 0 : index
    %c0_46 = arith.constant 0 : index
    %70 = vector.load %arg17[%c0_43, %c0_44, %c0_45, %c0_46] : memref<2x8x16x64xf32, #tpu.memory_space<vmem>>, vector<1x8x16x64xf32>
    %71 = vector.shape_cast %70 : vector<1x8x16x64xf32> to vector<8x16x64xf32>
    %72 = vector.shape_cast %69 : vector<8x16x64xf32> to vector<1x8x16x64xf32>
    tpu.vector_store %arg17[%c0_43, %c0_44, %c0_45, %c0_46], %72 {strides = array<i32>} : memref<2x8x16x64xf32, #tpu.memory_space<vmem>>, vector<1x8x16x64xf32>,
    %73 = vector.extract_strided_slice %57 {offsets = [0, 0], sizes = [8, 16], strides = [1, 1]} : vector<16x16xf32> to vector<8x16xf32>
    %74 = vector.shape_cast %73 : vector<8x16xf32> to vector<8x16x1xf32>
    %c0_47 = arith.constant 0 : index
    %c0_48 = arith.constant 0 : index
    %c0_49 = arith.constant 0 : index
    %c0_50 = arith.constant 0 : index
    %75 = vector.load %arg18[%c0_47, %c0_48, %c0_49, %c0_50] : memref<2x8x16x1xf32, #tpu.memory_space<vmem>>, vector<1x8x16x1xf32>
    %76 = vector.shape_cast %75 : vector<1x8x16x1xf32> to vector<8x16x1xf32>
    %77 = vector.shape_cast %74 : vector<8x16x1xf32> to vector<1x8x16x1xf32>
    tpu.vector_store %arg18[%c0_47, %c0_48, %c0_49, %c0_50], %77 {strides = array<i32>} : memref<2x8x16x1xf32, #tpu.memory_space<vmem>>, vector<1x8x16x1xf32>,
    %78 = vector.extract_strided_slice %58 {offsets = [0, 0], sizes = [8, 16], strides = [1, 1]} : vector<16x16xf32> to vector<8x16xf32>
    %79 = vector.shape_cast %78 : vector<8x16xf32> to vector<8x16x1xf32>
    %c0_51 = arith.constant 0 : index
    %c0_52 = arith.constant 0 : index
    %c0_53 = arith.constant 0 : index
    %c0_54 = arith.constant 0 : index
    %80 = vector.load %arg19[%c0_51, %c0_52, %c0_53, %c0_54] : memref<2x8x16x1xf32, #tpu.memory_space<vmem>>, vector<1x8x16x1xf32>
    %81 = vector.shape_cast %80 : vector<1x8x16x1xf32> to vector<8x16x1xf32>
    %82 = vector.shape_cast %79 : vector<8x16x1xf32> to vector<1x8x16x1xf32>
    tpu.vector_store %arg19[%c0_51, %c0_52, %c0_53, %c0_54], %82 {strides = array<i32>} : memref<2x8x16x1xf32, #tpu.memory_space<vmem>>, vector<1x8x16x1xf32>,
    %c0_i32_55 = arith.constant 0 : i32
    %c0_i32_56 = arith.constant 0 : i32
    %83 = arith.addi %c0_i32_56, %c0_i32_55 : i32
    %c0_57 = arith.constant 0 : index
    %84 = arith.index_cast %c0_i32_55 : i32 to index
    %c0_58 = arith.constant 0 : index
    %c0_59 = arith.constant 0 : index
    %85 = vector.load %arg17[%c0_57, %84, %c0_58, %c0_59] : memref<2x8x16x64xf32, #tpu.memory_space<vmem>>, vector<1x1x16x64xf32>
    %86 = vector.shape_cast %85 : vector<1x1x16x64xf32> to vector<16x64xf32>
    %87 = arith.mulf %86, %62 : vector<16x64xf32>
    %c0_60 = arith.constant 0 : index
    %88 = arith.index_cast %c0_i32_55 : i32 to index
    %c0_61 = arith.constant 0 : index
    %c0_62 = arith.constant 0 : index
    %89 = vector.load %arg18[%c0_60, %88, %c0_61, %c0_62] : memref<2x8x16x1xf32, #tpu.memory_space<vmem>>, vector<1x1x16x1xf32>
    %90 = vector.shape_cast %89 : vector<1x1x16x1xf32> to vector<16x1xf32>
    %91 = arith.index_cast %83 : i32 to index
    %c0_63 = arith.constant 0 : index
    %92 = vector.load %arg15[%91, %c0_63] : memref<16x64xf32, #tpu.memory_space<vmem>>, vector<1x64xf32>
    %93 = vector.broadcast %90 : vector<16x1xf32> to vector<16x64xf32>
    %94 = vector.broadcast %92 : vector<1x64xf32> to vector<16x64xf32>
    %95 = arith.mulf %93, %94 : vector<16x64xf32>
    %96 = arith.addf %87, %95 : vector<16x64xf32>
    %c0_64 = arith.constant 0 : index
    %97 = arith.index_cast %c0_i32_55 : i32 to index
    %c0_65 = arith.constant 0 : index
    %c0_66 = arith.constant 0 : index
    %98 = vector.load %arg19[%c0_64, %97, %c0_65, %c0_66] : memref<2x8x16x1xf32, #tpu.memory_space<vmem>>, vector<1x1x16x1xf32>
    %99 = vector.shape_cast %98 : vector<1x1x16x1xf32> to vector<16x1xf32>
    %100 = vector.broadcast %99 : vector<16x1xf32> to vector<16x64xf32>
    %101 = arith.mulf %96, %100 : vector<16x64xf32>
    %cst_67 = arith.constant dense<0.000000e+00> : vector<64xf32>
    %102 = vector.multi_reduction <add>, %101, %cst_67 [0] : vector<16x64xf32> to vector<64xf32>
    %103 = vector.shape_cast %102 : vector<64xf32> to vector<1x64xf32>
    %104 = arith.index_cast %83 : i32 to index
    %c0_68 = arith.constant 0 : index
    %105 = vector.load %arg16[%104, %c0_68] : memref<16x64xf32, #tpu.memory_space<vmem>>, vector<1x64xf32>
    tpu.vector_store %arg16[%104, %c0_68], %103 {strides = array<i32>} : memref<16x64xf32, #tpu.memory_space<vmem>>, vector<1x64xf32>,
    %c1_i32 = arith.constant 1 : i32
    %c0_i32_69 = arith.constant 0 : i32
    %106 = arith.addi %c0_i32_69, %c1_i32 : i32
    %c0_70 = arith.constant 0 : index
    %107 = arith.index_cast %c1_i32 : i32 to index
    %c0_71 = arith.constant 0 : index
    %c0_72 = arith.constant 0 : index
    %108 = vector.load %arg17[%c0_70, %107, %c0_71, %c0_72] : memref<2x8x16x64xf32, #tpu.memory_space<vmem>>, vector<1x1x16x64xf32>
    %109 = vector.shape_cast %108 : vector<1x1x16x64xf32> to vector<16x64xf32>
    %110 = arith.mulf %109, %96 : vector<16x64xf32>
    %c0_73 = arith.constant 0 : index
    %111 = arith.index_cast %c1_i32 : i32 to index
    %c0_74 = arith.constant 0 : index
    %c0_75 = arith.constant 0 : index
    %112 = vector.load %arg18[%c0_73, %111, %c0_74, %c0_75] : memref<2x8x16x1xf32, #tpu.memory_space<vmem>>, vector<1x1x16x1xf32>
    %113 = vector.shape_cast %112 : vector<1x1x16x1xf32> to vector<16x1xf32>
    %114 = arith.index_cast %106 : i32 to index
    %c0_76 = arith.constant 0 : index
    %115 = vector.load %arg15[%114, %c0_76] : memref<16x64xf32, #tpu.memory_space<vmem>>, vector<1x64xf32>
    %116 = vector.broadcast %113 : vector<16x1xf32> to vector<16x64xf32>
    %117 = vector.broadcast %115 : vector<1x64xf32> to vector<16x64xf32>
    %118 = arith.mulf %116, %117 : vector<16x64xf32>
    %119 = arith.addf %110, %118 : vector<16x64xf32>
    %c0_77 = arith.constant 0 : index
    %120 = arith.index_cast %c1_i32 : i32 to index
    %c0_78 = arith.constant 0 : index
    %c0_79 = arith.constant 0 : index
    %121 = vector.load %arg19[%c0_77, %120, %c0_78, %c0_79] : memref<2x8x16x1xf32, #tpu.memory_space<vmem>>, vector<1x1x16x1xf32>
    %122 = vector.shape_cast %121 : vector<1x1x16x1xf32> to vector<16x1xf32>
    %123 = vector.broadcast %122 : vector<16x1xf32> to vector<16x64xf32>
    %124 = arith.mulf %119, %123 : vector<16x64xf32>
    %cst_80 = arith.constant dense<0.000000e+00> : vector<64xf32>
    %125 = vector.multi_reduction <add>, %124, %cst_80 [0] : vector<16x64xf32> to vector<64xf32>
    %126 = vector.shape_cast %125 : vector<64xf32> to vector<1x64xf32>
    %127 = arith.index_cast %106 : i32 to index
    %c0_81 = arith.constant 0 : index
    %128 = vector.load %arg16[%127, %c0_81] : memref<16x64xf32, #tpu.memory_space<vmem>>, vector<1x64xf32>
    tpu.vector_store %arg16[%127, %c0_81], %126 {strides = array<i32>} : memref<16x64xf32, #tpu.memory_space<vmem>>, vector<1x64xf32>,
    %c2_i32 = arith.constant 2 : i32
    %c0_i32_82 = arith.constant 0 : i32
    %129 = arith.addi %c0_i32_82, %c2_i32 : i32
    %c0_83 = arith.constant 0 : index
    %130 = arith.index_cast %c2_i32 : i32 to index
    %c0_84 = arith.constant 0 : index
    %c0_85 = arith.constant 0 : index
    %131 = vector.load %arg17[%c0_83, %130, %c0_84, %c0_85] : memref<2x8x16x64xf32, #tpu.memory_space<vmem>>, vector<1x1x16x64xf32>
    %132 = vector.shape_cast %131 : vector<1x1x16x64xf32> to vector<16x64xf32>
    %133 = arith.mulf %132, %119 : vector<16x64xf32>
    %c0_86 = arith.constant 0 : index
    %134 = arith.index_cast %c2_i32 : i32 to index
    %c0_87 = arith.constant 0 : index
    %c0_88 = arith.constant 0 : index
    %135 = vector.load %arg18[%c0_86, %134, %c0_87, %c0_88] : memref<2x8x16x1xf32, #tpu.memory_space<vmem>>, vector<1x1x16x1xf32>
    %136 = vector.shape_cast %135 : vector<1x1x16x1xf32> to vector<16x1xf32>
    %137 = arith.index_cast %129 : i32 to index
    %c0_89 = arith.constant 0 : index
    %138 = vector.load %arg15[%137, %c0_89] : memref<16x64xf32, #tpu.memory_space<vmem>>, vector<1x64xf32>
    %139 = vector.broadcast %136 : vector<16x1xf32> to vector<16x64xf32>
    %140 = vector.broadcast %138 : vector<1x64xf32> to vector<16x64xf32>
    %141 = arith.mulf %139, %140 : vector<16x64xf32>
    %142 = arith.addf %133, %141 : vector<16x64xf32>
    %c0_90 = arith.constant 0 : index
    %143 = arith.index_cast %c2_i32 : i32 to index
    %c0_91 = arith.constant 0 : index
    %c0_92 = arith.constant 0 : index
    %144 = vector.load %arg19[%c0_90, %143, %c0_91, %c0_92] : memref<2x8x16x1xf32, #tpu.memory_space<vmem>>, vector<1x1x16x1xf32>
    %145 = vector.shape_cast %144 : vector<1x1x16x1xf32> to vector<16x1xf32>
    %146 = vector.broadcast %145 : vector<16x1xf32> to vector<16x64xf32>
    %147 = arith.mulf %142, %146 : vector<16x64xf32>
    %cst_93 = arith.constant dense<0.000000e+00> : vector<64xf32>
    %148 = vector.multi_reduction <add>, %147, %cst_93 [0] : vector<16x64xf32> to vector<64xf32>
    %149 = vector.shape_cast %148 : vector<64xf32> to vector<1x64xf32>
    %150 = arith.index_cast %129 : i32 to index
    %c0_94 = arith.constant 0 : index
    %151 = vector.load %arg16[%150, %c0_94] : memref<16x64xf32, #tpu.memory_space<vmem>>, vector<1x64xf32>
    tpu.vector_store %arg16[%150, %c0_94], %149 {strides = array<i32>} : memref<16x64xf32, #tpu.memory_space<vmem>>, vector<1x64xf32>,
    %c3_i32 = arith.constant 3 : i32
    %c0_i32_95 = arith.constant 0 : i32
    %152 = arith.addi %c0_i32_95, %c3_i32 : i32
    %c0_96 = arith.constant 0 : index
    %153 = arith.index_cast %c3_i32 : i32 to index
    %c0_97 = arith.constant 0 : index
    %c0_98 = arith.constant 0 : index
    %154 = vector.load %arg17[%c0_96, %153, %c0_97, %c0_98] : memref<2x8x16x64xf32, #tpu.memory_space<vmem>>, vector<1x1x16x64xf32>
    %155 = vector.shape_cast %154 : vector<1x1x16x64xf32> to vector<16x64xf32>
    %156 = arith.mulf %155, %142 : vector<16x64xf32>
    %c0_99 = arith.constant 0 : index
    %157 = arith.index_cast %c3_i32 : i32 to index
    %c0_100 = arith.constant 0 : index
    %c0_101 = arith.constant 0 : index
    %158 = vector.load %arg18[%c0_99, %157, %c0_100, %c0_101] : memref<2x8x16x1xf32, #tpu.memory_space<vmem>>, vector<1x1x16x1xf32>
    %159 = vector.shape_cast %158 : vector<1x1x16x1xf32> to vector<16x1xf32>
    %160 = arith.index_cast %152 : i32 to index
    %c0_102 = arith.constant 0 : index
    %161 = vector.load %arg15[%160, %c0_102] : memref<16x64xf32, #tpu.memory_space<vmem>>, vector<1x64xf32>
    %162 = vector.broadcast %159 : vector<16x1xf32> to vector<16x64xf32>
    %163 = vector.broadcast %161 : vector<1x64xf32> to vector<16x64xf32>
    %164 = arith.mulf %162, %163 : vector<16x64xf32>
    %165 = arith.addf %156, %164 : vector<16x64xf32>
    %c0_103 = arith.constant 0 : index
    %166 = arith.index_cast %c3_i32 : i32 to index
    %c0_104 = arith.constant 0 : index
    %c0_105 = arith.constant 0 : index
    %167 = vector.load %arg19[%c0_103, %166, %c0_104, %c0_105] : memref<2x8x16x1xf32, #tpu.memory_space<vmem>>, vector<1x1x16x1xf32>
    %168 = vector.shape_cast %167 : vector<1x1x16x1xf32> to vector<16x1xf32>
    %169 = vector.broadcast %168 : vector<16x1xf32> to vector<16x64xf32>
    %170 = arith.mulf %165, %169 : vector<16x64xf32>
    %cst_106 = arith.constant dense<0.000000e+00> : vector<64xf32>
    %171 = vector.multi_reduction <add>, %170, %cst_106 [0] : vector<16x64xf32> to vector<64xf32>
    %172 = vector.shape_cast %171 : vector<64xf32> to vector<1x64xf32>
    %173 = arith.index_cast %152 : i32 to index
    %c0_107 = arith.constant 0 : index
    %174 = vector.load %arg16[%173, %c0_107] : memref<16x64xf32, #tpu.memory_space<vmem>>, vector<1x64xf32>
    tpu.vector_store %arg16[%173, %c0_107], %172 {strides = array<i32>} : memref<16x64xf32, #tpu.memory_space<vmem>>, vector<1x64xf32>,
    %c4_i32 = arith.constant 4 : i32
    %c0_i32_108 = arith.constant 0 : i32
    %175 = arith.addi %c0_i32_108, %c4_i32 : i32
    %c0_109 = arith.constant 0 : index
    %176 = arith.index_cast %c4_i32 : i32 to index
    %c0_110 = arith.constant 0 : index
    %c0_111 = arith.constant 0 : index
    %177 = vector.load %arg17[%c0_109, %176, %c0_110, %c0_111] : memref<2x8x16x64xf32, #tpu.memory_space<vmem>>, vector<1x1x16x64xf32>
    %178 = vector.shape_cast %177 : vector<1x1x16x64xf32> to vector<16x64xf32>
    %179 = arith.mulf %178, %165 : vector<16x64xf32>
    %c0_112 = arith.constant 0 : index
    %180 = arith.index_cast %c4_i32 : i32 to index
    %c0_113 = arith.constant 0 : index
    %c0_114 = arith.constant 0 : index
    %181 = vector.load %arg18[%c0_112, %180, %c0_113, %c0_114] : memref<2x8x16x1xf32, #tpu.memory_space<vmem>>, vector<1x1x16x1xf32>
    %182 = vector.shape_cast %181 : vector<1x1x16x1xf32> to vector<16x1xf32>
    %183 = arith.index_cast %175 : i32 to index
    %c0_115 = arith.constant 0 : index
    %184 = vector.load %arg15[%183, %c0_115] : memref<16x64xf32, #tpu.memory_space<vmem>>, vector<1x64xf32>
    %185 = vector.broadcast %182 : vector<16x1xf32> to vector<16x64xf32>
    %186 = vector.broadcast %184 : vector<1x64xf32> to vector<16x64xf32>
    %187 = arith.mulf %185, %186 : vector<16x64xf32>
    %188 = arith.addf %179, %187 : vector<16x64xf32>
    %c0_116 = arith.constant 0 : index
    %189 = arith.index_cast %c4_i32 : i32 to index
    %c0_117 = arith.constant 0 : index
    %c0_118 = arith.constant 0 : index
    %190 = vector.load %arg19[%c0_116, %189, %c0_117, %c0_118] : memref<2x8x16x1xf32, #tpu.memory_space<vmem>>, vector<1x1x16x1xf32>
    %191 = vector.shape_cast %190 : vector<1x1x16x1xf32> to vector<16x1xf32>
    %192 = vector.broadcast %191 : vector<16x1xf32> to vector<16x64xf32>
    %193 = arith.mulf %188, %192 : vector<16x64xf32>
    %cst_119 = arith.constant dense<0.000000e+00> : vector<64xf32>
    %194 = vector.multi_reduction <add>, %193, %cst_119 [0] : vector<16x64xf32> to vector<64xf32>
    %195 = vector.shape_cast %194 : vector<64xf32> to vector<1x64xf32>
    %196 = arith.index_cast %175 : i32 to index
    %c0_120 = arith.constant 0 : index
    %197 = vector.load %arg16[%196, %c0_120] : memref<16x64xf32, #tpu.memory_space<vmem>>, vector<1x64xf32>
    tpu.vector_store %arg16[%196, %c0_120], %195 {strides = array<i32>} : memref<16x64xf32, #tpu.memory_space<vmem>>, vector<1x64xf32>,
    %c5_i32 = arith.constant 5 : i32
    %c0_i32_121 = arith.constant 0 : i32
    %198 = arith.addi %c0_i32_121, %c5_i32 : i32
    %c0_122 = arith.constant 0 : index
    %199 = arith.index_cast %c5_i32 : i32 to index
    %c0_123 = arith.constant 0 : index
    %c0_124 = arith.constant 0 : index
    %200 = vector.load %arg17[%c0_122, %199, %c0_123, %c0_124] : memref<2x8x16x64xf32, #tpu.memory_space<vmem>>, vector<1x1x16x64xf32>
    %201 = vector.shape_cast %200 : vector<1x1x16x64xf32> to vector<16x64xf32>
    %202 = arith.mulf %201, %188 : vector<16x64xf32>
    %c0_125 = arith.constant 0 : index
    %203 = arith.index_cast %c5_i32 : i32 to index
    %c0_126 = arith.constant 0 : index
    %c0_127 = arith.constant 0 : index
    %204 = vector.load %arg18[%c0_125, %203, %c0_126, %c0_127] : memref<2x8x16x1xf32, #tpu.memory_space<vmem>>, vector<1x1x16x1xf32>
    %205 = vector.shape_cast %204 : vector<1x1x16x1xf32> to vector<16x1xf32>
    %206 = arith.index_cast %198 : i32 to index
    %c0_128 = arith.constant 0 : index
    %207 = vector.load %arg15[%206, %c0_128] : memref<16x64xf32, #tpu.memory_space<vmem>>, vector<1x64xf32>
    %208 = vector.broadcast %205 : vector<16x1xf32> to vector<16x64xf32>
    %209 = vector.broadcast %207 : vector<1x64xf32> to vector<16x64xf32>
    %210 = arith.mulf %208, %209 : vector<16x64xf32>
    %211 = arith.addf %202, %210 : vector<16x64xf32>
    %c0_129 = arith.constant 0 : index
    %212 = arith.index_cast %c5_i32 : i32 to index
    %c0_130 = arith.constant 0 : index
    %c0_131 = arith.constant 0 : index
    %213 = vector.load %arg19[%c0_129, %212, %c0_130, %c0_131] : memref<2x8x16x1xf32, #tpu.memory_space<vmem>>, vector<1x1x16x1xf32>
    %214 = vector.shape_cast %213 : vector<1x1x16x1xf32> to vector<16x1xf32>
    %215 = vector.broadcast %214 : vector<16x1xf32> to vector<16x64xf32>
    %216 = arith.mulf %211, %215 : vector<16x64xf32>
    %cst_132 = arith.constant dense<0.000000e+00> : vector<64xf32>
    %217 = vector.multi_reduction <add>, %216, %cst_132 [0] : vector<16x64xf32> to vector<64xf32>
    %218 = vector.shape_cast %217 : vector<64xf32> to vector<1x64xf32>
    %219 = arith.index_cast %198 : i32 to index
    %c0_133 = arith.constant 0 : index
    %220 = vector.load %arg16[%219, %c0_133] : memref<16x64xf32, #tpu.memory_space<vmem>>, vector<1x64xf32>
    tpu.vector_store %arg16[%219, %c0_133], %218 {strides = array<i32>} : memref<16x64xf32, #tpu.memory_space<vmem>>, vector<1x64xf32>,
    %c6_i32 = arith.constant 6 : i32
    %c0_i32_134 = arith.constant 0 : i32
    %221 = arith.addi %c0_i32_134, %c6_i32 : i32
    %c0_135 = arith.constant 0 : index
    %222 = arith.index_cast %c6_i32 : i32 to index
    %c0_136 = arith.constant 0 : index
    %c0_137 = arith.constant 0 : index
    %223 = vector.load %arg17[%c0_135, %222, %c0_136, %c0_137] : memref<2x8x16x64xf32, #tpu.memory_space<vmem>>, vector<1x1x16x64xf32>
    %224 = vector.shape_cast %223 : vector<1x1x16x64xf32> to vector<16x64xf32>
    %225 = arith.mulf %224, %211 : vector<16x64xf32>
    %c0_138 = arith.constant 0 : index
    %226 = arith.index_cast %c6_i32 : i32 to index
    %c0_139 = arith.constant 0 : index
    %c0_140 = arith.constant 0 : index
    %227 = vector.load %arg18[%c0_138, %226, %c0_139, %c0_140] : memref<2x8x16x1xf32, #tpu.memory_space<vmem>>, vector<1x1x16x1xf32>
    %228 = vector.shape_cast %227 : vector<1x1x16x1xf32> to vector<16x1xf32>
    %229 = arith.index_cast %221 : i32 to index
    %c0_141 = arith.constant 0 : index
    %230 = vector.load %arg15[%229, %c0_141] : memref<16x64xf32, #tpu.memory_space<vmem>>, vector<1x64xf32>
    %231 = vector.broadcast %228 : vector<16x1xf32> to vector<16x64xf32>
    %232 = vector.broadcast %230 : vector<1x64xf32> to vector<16x64xf32>
    %233 = arith.mulf %231, %232 : vector<16x64xf32>
    %234 = arith.addf %225, %233 : vector<16x64xf32>
    %c0_142 = arith.constant 0 : index
    %235 = arith.index_cast %c6_i32 : i32 to index
    %c0_143 = arith.constant 0 : index
    %c0_144 = arith.constant 0 : index
    %236 = vector.load %arg19[%c0_142, %235, %c0_143, %c0_144] : memref<2x8x16x1xf32, #tpu.memory_space<vmem>>, vector<1x1x16x1xf32>
    %237 = vector.shape_cast %236 : vector<1x1x16x1xf32> to vector<16x1xf32>
    %238 = vector.broadcast %237 : vector<16x1xf32> to vector<16x64xf32>
    %239 = arith.mulf %234, %238 : vector<16x64xf32>
    %cst_145 = arith.constant dense<0.000000e+00> : vector<64xf32>
    %240 = vector.multi_reduction <add>, %239, %cst_145 [0] : vector<16x64xf32> to vector<64xf32>
    %241 = vector.shape_cast %240 : vector<64xf32> to vector<1x64xf32>
    %242 = arith.index_cast %221 : i32 to index
    %c0_146 = arith.constant 0 : index
    %243 = vector.load %arg16[%242, %c0_146] : memref<16x64xf32, #tpu.memory_space<vmem>>, vector<1x64xf32>
    tpu.vector_store %arg16[%242, %c0_146], %241 {strides = array<i32>} : memref<16x64xf32, #tpu.memory_space<vmem>>, vector<1x64xf32>,
    %c7_i32 = arith.constant 7 : i32
    %c0_i32_147 = arith.constant 0 : i32
    %244 = arith.addi %c0_i32_147, %c7_i32 : i32
    %c0_148 = arith.constant 0 : index
    %245 = arith.index_cast %c7_i32 : i32 to index
    %c0_149 = arith.constant 0 : index
    %c0_150 = arith.constant 0 : index
    %246 = vector.load %arg17[%c0_148, %245, %c0_149, %c0_150] : memref<2x8x16x64xf32, #tpu.memory_space<vmem>>, vector<1x1x16x64xf32>
    %247 = vector.shape_cast %246 : vector<1x1x16x64xf32> to vector<16x64xf32>
    %248 = arith.mulf %247, %234 : vector<16x64xf32>
    %c0_151 = arith.constant 0 : index
    %249 = arith.index_cast %c7_i32 : i32 to index
    %c0_152 = arith.constant 0 : index
    %c0_153 = arith.constant 0 : index
    %250 = vector.load %arg18[%c0_151, %249, %c0_152, %c0_153] : memref<2x8x16x1xf32, #tpu.memory_space<vmem>>, vector<1x1x16x1xf32>
    %251 = vector.shape_cast %250 : vector<1x1x16x1xf32> to vector<16x1xf32>
    %252 = arith.index_cast %244 : i32 to index
    %c0_154 = arith.constant 0 : index
    %253 = vector.load %arg15[%252, %c0_154] : memref<16x64xf32, #tpu.memory_space<vmem>>, vector<1x64xf32>
    %254 = vector.broadcast %251 : vector<16x1xf32> to vector<16x64xf32>
    %255 = vector.broadcast %253 : vector<1x64xf32> to vector<16x64xf32>
    %256 = arith.mulf %254, %255 : vector<16x64xf32>
    %257 = arith.addf %248, %256 : vector<16x64xf32>
    %c0_155 = arith.constant 0 : index
    %258 = arith.index_cast %c7_i32 : i32 to index
    %c0_156 = arith.constant 0 : index
    %c0_157 = arith.constant 0 : index
    %259 = vector.load %arg19[%c0_155, %258, %c0_156, %c0_157] : memref<2x8x16x1xf32, #tpu.memory_space<vmem>>, vector<1x1x16x1xf32>
    %260 = vector.shape_cast %259 : vector<1x1x16x1xf32> to vector<16x1xf32>
    %261 = vector.broadcast %260 : vector<16x1xf32> to vector<16x64xf32>
    %262 = arith.mulf %257, %261 : vector<16x64xf32>
    %cst_158 = arith.constant dense<0.000000e+00> : vector<64xf32>
    %263 = vector.multi_reduction <add>, %262, %cst_158 [0] : vector<16x64xf32> to vector<64xf32>
    %264 = vector.shape_cast %263 : vector<64xf32> to vector<1x64xf32>
    %265 = arith.index_cast %244 : i32 to index
    %c0_159 = arith.constant 0 : index
    %266 = vector.load %arg16[%265, %c0_159] : memref<16x64xf32, #tpu.memory_space<vmem>>, vector<1x64xf32>
    tpu.vector_store %arg16[%265, %c0_159], %264 {strides = array<i32>} : memref<16x64xf32, #tpu.memory_space<vmem>>, vector<1x64xf32>,
    %c8_i32 = arith.constant 8 : i32
    %267 = vector.extract_strided_slice %56 {offsets = [8, 0], sizes = [8, 64], strides = [1, 1]} : vector<16x64xf32> to vector<8x64xf32>
    %268 = vector.shape_cast %267 : vector<8x64xf32> to vector<8x1x64xf32>
    %269 = vector.shape_cast %61 : vector<16x64xf32> to vector<1x16x64xf32>
    %270 = vector.broadcast %268 : vector<8x1x64xf32> to vector<8x16x64xf32>
    %271 = vector.broadcast %269 : vector<1x16x64xf32> to vector<8x16x64xf32>
    %272 = arith.mulf %270, %271 : vector<8x16x64xf32>
    %273 = math.exp %272 : vector<8x16x64xf32>
    %c1_160 = arith.constant 1 : index
    %c0_161 = arith.constant 0 : index
    %c0_162 = arith.constant 0 : index
    %c0_163 = arith.constant 0 : index
    %274 = vector.load %arg17[%c1_160, %c0_161, %c0_162, %c0_163] : memref<2x8x16x64xf32, #tpu.memory_space<vmem>>, vector<1x8x16x64xf32>
    %275 = vector.shape_cast %274 : vector<1x8x16x64xf32> to vector<8x16x64xf32>
    %276 = vector.shape_cast %273 : vector<8x16x64xf32> to vector<1x8x16x64xf32>
    tpu.vector_store %arg17[%c1_160, %c0_161, %c0_162, %c0_163], %276 {strides = array<i32>} : memref<2x8x16x64xf32, #tpu.memory_space<vmem>>, vector<1x8x16x64xf32>,
    %277 = vector.extract_strided_slice %57 {offsets = [8, 0], sizes = [8, 16], strides = [1, 1]} : vector<16x16xf32> to vector<8x16xf32>
    %278 = vector.shape_cast %277 : vector<8x16xf32> to vector<8x16x1xf32>
    %c1_164 = arith.constant 1 : index
    %c0_165 = arith.constant 0 : index
    %c0_166 = arith.constant 0 : index
    %c0_167 = arith.constant 0 : index
    %279 = vector.load %arg18[%c1_164, %c0_165, %c0_166, %c0_167] : memref<2x8x16x1xf32, #tpu.memory_space<vmem>>, vector<1x8x16x1xf32>
    %280 = vector.shape_cast %279 : vector<1x8x16x1xf32> to vector<8x16x1xf32>
    %281 = vector.shape_cast %278 : vector<8x16x1xf32> to vector<1x8x16x1xf32>
    tpu.vector_store %arg18[%c1_164, %c0_165, %c0_166, %c0_167], %281 {strides = array<i32>} : memref<2x8x16x1xf32, #tpu.memory_space<vmem>>, vector<1x8x16x1xf32>,
    %282 = vector.extract_strided_slice %58 {offsets = [8, 0], sizes = [8, 16], strides = [1, 1]} : vector<16x16xf32> to vector<8x16xf32>
    %283 = vector.shape_cast %282 : vector<8x16xf32> to vector<8x16x1xf32>
    %c1_168 = arith.constant 1 : index
    %c0_169 = arith.constant 0 : index
    %c0_170 = arith.constant 0 : index
    %c0_171 = arith.constant 0 : index
    %284 = vector.load %arg19[%c1_168, %c0_169, %c0_170, %c0_171] : memref<2x8x16x1xf32, #tpu.memory_space<vmem>>, vector<1x8x16x1xf32>
    %285 = vector.shape_cast %284 : vector<1x8x16x1xf32> to vector<8x16x1xf32>
    %286 = vector.shape_cast %283 : vector<8x16x1xf32> to vector<1x8x16x1xf32>
    tpu.vector_store %arg19[%c1_168, %c0_169, %c0_170, %c0_171], %286 {strides = array<i32>} : memref<2x8x16x1xf32, #tpu.memory_space<vmem>>, vector<1x8x16x1xf32>,
    %c0_i32_172 = arith.constant 0 : i32
    %c8_i32_173 = arith.constant 8 : i32
    %287 = arith.addi %c8_i32_173, %c0_i32_172 : i32
    %c1_174 = arith.constant 1 : index
    %288 = arith.index_cast %c0_i32_172 : i32 to index
    %c0_175 = arith.constant 0 : index
    %c0_176 = arith.constant 0 : index
    %289 = vector.load %arg17[%c1_174, %288, %c0_175, %c0_176] : memref<2x8x16x64xf32, #tpu.memory_space<vmem>>, vector<1x1x16x64xf32>
    %290 = vector.shape_cast %289 : vector<1x1x16x64xf32> to vector<16x64xf32>
    %291 = arith.mulf %290, %257 : vector<16x64xf32>
    %c1_177 = arith.constant 1 : index
    %292 = arith.index_cast %c0_i32_172 : i32 to index
    %c0_178 = arith.constant 0 : index
    %c0_179 = arith.constant 0 : index
    %293 = vector.load %arg18[%c1_177, %292, %c0_178, %c0_179] : memref<2x8x16x1xf32, #tpu.memory_space<vmem>>, vector<1x1x16x1xf32>
    %294 = vector.shape_cast %293 : vector<1x1x16x1xf32> to vector<16x1xf32>
    %295 = arith.index_cast %287 : i32 to index
    %c0_180 = arith.constant 0 : index
    %296 = vector.load %arg15[%295, %c0_180] : memref<16x64xf32, #tpu.memory_space<vmem>>, vector<1x64xf32>
    %297 = vector.broadcast %294 : vector<16x1xf32> to vector<16x64xf32>
    %298 = vector.broadcast %296 : vector<1x64xf32> to vector<16x64xf32>
    %299 = arith.mulf %297, %298 : vector<16x64xf32>
    %300 = arith.addf %291, %299 : vector<16x64xf32>
    %c1_181 = arith.constant 1 : index
    %301 = arith.index_cast %c0_i32_172 : i32 to index
    %c0_182 = arith.constant 0 : index
    %c0_183 = arith.constant 0 : index
    %302 = vector.load %arg19[%c1_181, %301, %c0_182, %c0_183] : memref<2x8x16x1xf32, #tpu.memory_space<vmem>>, vector<1x1x16x1xf32>
    %303 = vector.shape_cast %302 : vector<1x1x16x1xf32> to vector<16x1xf32>
    %304 = vector.broadcast %303 : vector<16x1xf32> to vector<16x64xf32>
    %305 = arith.mulf %300, %304 : vector<16x64xf32>
    %cst_184 = arith.constant dense<0.000000e+00> : vector<64xf32>
    %306 = vector.multi_reduction <add>, %305, %cst_184 [0] : vector<16x64xf32> to vector<64xf32>
    %307 = vector.shape_cast %306 : vector<64xf32> to vector<1x64xf32>
    %308 = arith.index_cast %287 : i32 to index
    %c0_185 = arith.constant 0 : index
    %309 = vector.load %arg16[%308, %c0_185] : memref<16x64xf32, #tpu.memory_space<vmem>>, vector<1x64xf32>
    tpu.vector_store %arg16[%308, %c0_185], %307 {strides = array<i32>} : memref<16x64xf32, #tpu.memory_space<vmem>>, vector<1x64xf32>,
    %c1_i32_186 = arith.constant 1 : i32
    %c8_i32_187 = arith.constant 8 : i32
    %310 = arith.addi %c8_i32_187, %c1_i32_186 : i32
    %c1_188 = arith.constant 1 : index
    %311 = arith.index_cast %c1_i32_186 : i32 to index
    %c0_189 = arith.constant 0 : index
    %c0_190 = arith.constant 0 : index
    %312 = vector.load %arg17[%c1_188, %311, %c0_189, %c0_190] : memref<2x8x16x64xf32, #tpu.memory_space<vmem>>, vector<1x1x16x64xf32>
    %313 = vector.shape_cast %312 : vector<1x1x16x64xf32> to vector<16x64xf32>
    %314 = arith.mulf %313, %300 : vector<16x64xf32>
    %c1_191 = arith.constant 1 : index
    %315 = arith.index_cast %c1_i32_186 : i32 to index
    %c0_192 = arith.constant 0 : index
    %c0_193 = arith.constant 0 : index
    %316 = vector.load %arg18[%c1_191, %315, %c0_192, %c0_193] : memref<2x8x16x1xf32, #tpu.memory_space<vmem>>, vector<1x1x16x1xf32>
    %317 = vector.shape_cast %316 : vector<1x1x16x1xf32> to vector<16x1xf32>
    %318 = arith.index_cast %310 : i32 to index
    %c0_194 = arith.constant 0 : index
    %319 = vector.load %arg15[%318, %c0_194] : memref<16x64xf32, #tpu.memory_space<vmem>>, vector<1x64xf32>
    %320 = vector.broadcast %317 : vector<16x1xf32> to vector<16x64xf32>
    %321 = vector.broadcast %319 : vector<1x64xf32> to vector<16x64xf32>
    %322 = arith.mulf %320, %321 : vector<16x64xf32>
    %323 = arith.addf %314, %322 : vector<16x64xf32>
    %c1_195 = arith.constant 1 : index
    %324 = arith.index_cast %c1_i32_186 : i32 to index
    %c0_196 = arith.constant 0 : index
    %c0_197 = arith.constant 0 : index
    %325 = vector.load %arg19[%c1_195, %324, %c0_196, %c0_197] : memref<2x8x16x1xf32, #tpu.memory_space<vmem>>, vector<1x1x16x1xf32>
    %326 = vector.shape_cast %325 : vector<1x1x16x1xf32> to vector<16x1xf32>
    %327 = vector.broadcast %326 : vector<16x1xf32> to vector<16x64xf32>
    %328 = arith.mulf %323, %327 : vector<16x64xf32>
    %cst_198 = arith.constant dense<0.000000e+00> : vector<64xf32>
    %329 = vector.multi_reduction <add>, %328, %cst_198 [0] : vector<16x64xf32> to vector<64xf32>
    %330 = vector.shape_cast %329 : vector<64xf32> to vector<1x64xf32>
    %331 = arith.index_cast %310 : i32 to index
    %c0_199 = arith.constant 0 : index
    %332 = vector.load %arg16[%331, %c0_199] : memref<16x64xf32, #tpu.memory_space<vmem>>, vector<1x64xf32>
    tpu.vector_store %arg16[%331, %c0_199], %330 {strides = array<i32>} : memref<16x64xf32, #tpu.memory_space<vmem>>, vector<1x64xf32>,
    %c2_i32_200 = arith.constant 2 : i32
    %c8_i32_201 = arith.constant 8 : i32
    %333 = arith.addi %c8_i32_201, %c2_i32_200 : i32
    %c1_202 = arith.constant 1 : index
    %334 = arith.index_cast %c2_i32_200 : i32 to index
    %c0_203 = arith.constant 0 : index
    %c0_204 = arith.constant 0 : index
    %335 = vector.load %arg17[%c1_202, %334, %c0_203, %c0_204] : memref<2x8x16x64xf32, #tpu.memory_space<vmem>>, vector<1x1x16x64xf32>
    %336 = vector.shape_cast %335 : vector<1x1x16x64xf32> to vector<16x64xf32>
    %337 = arith.mulf %336, %323 : vector<16x64xf32>
    %c1_205 = arith.constant 1 : index
    %338 = arith.index_cast %c2_i32_200 : i32 to index
    %c0_206 = arith.constant 0 : index
    %c0_207 = arith.constant 0 : index
    %339 = vector.load %arg18[%c1_205, %338, %c0_206, %c0_207] : memref<2x8x16x1xf32, #tpu.memory_space<vmem>>, vector<1x1x16x1xf32>
    %340 = vector.shape_cast %339 : vector<1x1x16x1xf32> to vector<16x1xf32>
    %341 = arith.index_cast %333 : i32 to index
    %c0_208 = arith.constant 0 : index
    %342 = vector.load %arg15[%341, %c0_208] : memref<16x64xf32, #tpu.memory_space<vmem>>, vector<1x64xf32>
    %343 = vector.broadcast %340 : vector<16x1xf32> to vector<16x64xf32>
    %344 = vector.broadcast %342 : vector<1x64xf32> to vector<16x64xf32>
    %345 = arith.mulf %343, %344 : vector<16x64xf32>
    %346 = arith.addf %337, %345 : vector<16x64xf32>
    %c1_209 = arith.constant 1 : index
    %347 = arith.index_cast %c2_i32_200 : i32 to index
    %c0_210 = arith.constant 0 : index
    %c0_211 = arith.constant 0 : index
    %348 = vector.load %arg19[%c1_209, %347, %c0_210, %c0_211] : memref<2x8x16x1xf32, #tpu.memory_space<vmem>>, vector<1x1x16x1xf32>
    %349 = vector.shape_cast %348 : vector<1x1x16x1xf32> to vector<16x1xf32>
    %350 = vector.broadcast %349 : vector<16x1xf32> to vector<16x64xf32>
    %351 = arith.mulf %346, %350 : vector<16x64xf32>
    %cst_212 = arith.constant dense<0.000000e+00> : vector<64xf32>
    %352 = vector.multi_reduction <add>, %351, %cst_212 [0] : vector<16x64xf32> to vector<64xf32>
    %353 = vector.shape_cast %352 : vector<64xf32> to vector<1x64xf32>
    %354 = arith.index_cast %333 : i32 to index
    %c0_213 = arith.constant 0 : index
    %355 = vector.load %arg16[%354, %c0_213] : memref<16x64xf32, #tpu.memory_space<vmem>>, vector<1x64xf32>
    tpu.vector_store %arg16[%354, %c0_213], %353 {strides = array<i32>} : memref<16x64xf32, #tpu.memory_space<vmem>>, vector<1x64xf32>,
    %c3_i32_214 = arith.constant 3 : i32
    %c8_i32_215 = arith.constant 8 : i32
    %356 = arith.addi %c8_i32_215, %c3_i32_214 : i32
    %c1_216 = arith.constant 1 : index
    %357 = arith.index_cast %c3_i32_214 : i32 to index
    %c0_217 = arith.constant 0 : index
    %c0_218 = arith.constant 0 : index
    %358 = vector.load %arg17[%c1_216, %357, %c0_217, %c0_218] : memref<2x8x16x64xf32, #tpu.memory_space<vmem>>, vector<1x1x16x64xf32>
    %359 = vector.shape_cast %358 : vector<1x1x16x64xf32> to vector<16x64xf32>
    %360 = arith.mulf %359, %346 : vector<16x64xf32>
    %c1_219 = arith.constant 1 : index
    %361 = arith.index_cast %c3_i32_214 : i32 to index
    %c0_220 = arith.constant 0 : index
    %c0_221 = arith.constant 0 : index
    %362 = vector.load %arg18[%c1_219, %361, %c0_220, %c0_221] : memref<2x8x16x1xf32, #tpu.memory_space<vmem>>, vector<1x1x16x1xf32>
    %363 = vector.shape_cast %362 : vector<1x1x16x1xf32> to vector<16x1xf32>
    %364 = arith.index_cast %356 : i32 to index
    %c0_222 = arith.constant 0 : index
    %365 = vector.load %arg15[%364, %c0_222] : memref<16x64xf32, #tpu.memory_space<vmem>>, vector<1x64xf32>
    %366 = vector.broadcast %363 : vector<16x1xf32> to vector<16x64xf32>
    %367 = vector.broadcast %365 : vector<1x64xf32> to vector<16x64xf32>
    %368 = arith.mulf %366, %367 : vector<16x64xf32>
    %369 = arith.addf %360, %368 : vector<16x64xf32>
    %c1_223 = arith.constant 1 : index
    %370 = arith.index_cast %c3_i32_214 : i32 to index
    %c0_224 = arith.constant 0 : index
    %c0_225 = arith.constant 0 : index
    %371 = vector.load %arg19[%c1_223, %370, %c0_224, %c0_225] : memref<2x8x16x1xf32, #tpu.memory_space<vmem>>, vector<1x1x16x1xf32>
    %372 = vector.shape_cast %371 : vector<1x1x16x1xf32> to vector<16x1xf32>
    %373 = vector.broadcast %372 : vector<16x1xf32> to vector<16x64xf32>
    %374 = arith.mulf %369, %373 : vector<16x64xf32>
    %cst_226 = arith.constant dense<0.000000e+00> : vector<64xf32>
    %375 = vector.multi_reduction <add>, %374, %cst_226 [0] : vector<16x64xf32> to vector<64xf32>
    %376 = vector.shape_cast %375 : vector<64xf32> to vector<1x64xf32>
    %377 = arith.index_cast %356 : i32 to index
    %c0_227 = arith.constant 0 : index
    %378 = vector.load %arg16[%377, %c0_227] : memref<16x64xf32, #tpu.memory_space<vmem>>, vector<1x64xf32>
    tpu.vector_store %arg16[%377, %c0_227], %376 {strides = array<i32>} : memref<16x64xf32, #tpu.memory_space<vmem>>, vector<1x64xf32>,
    %c4_i32_228 = arith.constant 4 : i32
    %c8_i32_229 = arith.constant 8 : i32
    %379 = arith.addi %c8_i32_229, %c4_i32_228 : i32
    %c1_230 = arith.constant 1 : index
    %380 = arith.index_cast %c4_i32_228 : i32 to index
    %c0_231 = arith.constant 0 : index
    %c0_232 = arith.constant 0 : index
    %381 = vector.load %arg17[%c1_230, %380, %c0_231, %c0_232] : memref<2x8x16x64xf32, #tpu.memory_space<vmem>>, vector<1x1x16x64xf32>
    %382 = vector.shape_cast %381 : vector<1x1x16x64xf32> to vector<16x64xf32>
    %383 = arith.mulf %382, %369 : vector<16x64xf32>
    %c1_233 = arith.constant 1 : index
    %384 = arith.index_cast %c4_i32_228 : i32 to index
    %c0_234 = arith.constant 0 : index
    %c0_235 = arith.constant 0 : index
    %385 = vector.load %arg18[%c1_233, %384, %c0_234, %c0_235] : memref<2x8x16x1xf32, #tpu.memory_space<vmem>>, vector<1x1x16x1xf32>
    %386 = vector.shape_cast %385 : vector<1x1x16x1xf32> to vector<16x1xf32>
    %387 = arith.index_cast %379 : i32 to index
    %c0_236 = arith.constant 0 : index
    %388 = vector.load %arg15[%387, %c0_236] : memref<16x64xf32, #tpu.memory_space<vmem>>, vector<1x64xf32>
    %389 = vector.broadcast %386 : vector<16x1xf32> to vector<16x64xf32>
    %390 = vector.broadcast %388 : vector<1x64xf32> to vector<16x64xf32>
    %391 = arith.mulf %389, %390 : vector<16x64xf32>
    %392 = arith.addf %383, %391 : vector<16x64xf32>
    %c1_237 = arith.constant 1 : index
    %393 = arith.index_cast %c4_i32_228 : i32 to index
    %c0_238 = arith.constant 0 : index
    %c0_239 = arith.constant 0 : index
    %394 = vector.load %arg19[%c1_237, %393, %c0_238, %c0_239] : memref<2x8x16x1xf32, #tpu.memory_space<vmem>>, vector<1x1x16x1xf32>
    %395 = vector.shape_cast %394 : vector<1x1x16x1xf32> to vector<16x1xf32>
    %396 = vector.broadcast %395 : vector<16x1xf32> to vector<16x64xf32>
    %397 = arith.mulf %392, %396 : vector<16x64xf32>
    %cst_240 = arith.constant dense<0.000000e+00> : vector<64xf32>
    %398 = vector.multi_reduction <add>, %397, %cst_240 [0] : vector<16x64xf32> to vector<64xf32>
    %399 = vector.shape_cast %398 : vector<64xf32> to vector<1x64xf32>
    %400 = arith.index_cast %379 : i32 to index
    %c0_241 = arith.constant 0 : index
    %401 = vector.load %arg16[%400, %c0_241] : memref<16x64xf32, #tpu.memory_space<vmem>>, vector<1x64xf32>
    tpu.vector_store %arg16[%400, %c0_241], %399 {strides = array<i32>} : memref<16x64xf32, #tpu.memory_space<vmem>>, vector<1x64xf32>,
    %c5_i32_242 = arith.constant 5 : i32
    %c8_i32_243 = arith.constant 8 : i32
    %402 = arith.addi %c8_i32_243, %c5_i32_242 : i32
    %c1_244 = arith.constant 1 : index
    %403 = arith.index_cast %c5_i32_242 : i32 to index
    %c0_245 = arith.constant 0 : index
    %c0_246 = arith.constant 0 : index
    %404 = vector.load %arg17[%c1_244, %403, %c0_245, %c0_246] : memref<2x8x16x64xf32, #tpu.memory_space<vmem>>, vector<1x1x16x64xf32>
    %405 = vector.shape_cast %404 : vector<1x1x16x64xf32> to vector<16x64xf32>
    %406 = arith.mulf %405, %392 : vector<16x64xf32>
    %c1_247 = arith.constant 1 : index
    %407 = arith.index_cast %c5_i32_242 : i32 to index
    %c0_248 = arith.constant 0 : index
    %c0_249 = arith.constant 0 : index
    %408 = vector.load %arg18[%c1_247, %407, %c0_248, %c0_249] : memref<2x8x16x1xf32, #tpu.memory_space<vmem>>, vector<1x1x16x1xf32>
    %409 = vector.shape_cast %408 : vector<1x1x16x1xf32> to vector<16x1xf32>
    %410 = arith.index_cast %402 : i32 to index
    %c0_250 = arith.constant 0 : index
    %411 = vector.load %arg15[%410, %c0_250] : memref<16x64xf32, #tpu.memory_space<vmem>>, vector<1x64xf32>
    %412 = vector.broadcast %409 : vector<16x1xf32> to vector<16x64xf32>
    %413 = vector.broadcast %411 : vector<1x64xf32> to vector<16x64xf32>
    %414 = arith.mulf %412, %413 : vector<16x64xf32>
    %415 = arith.addf %406, %414 : vector<16x64xf32>
    %c1_251 = arith.constant 1 : index
    %416 = arith.index_cast %c5_i32_242 : i32 to index
    %c0_252 = arith.constant 0 : index
    %c0_253 = arith.constant 0 : index
    %417 = vector.load %arg19[%c1_251, %416, %c0_252, %c0_253] : memref<2x8x16x1xf32, #tpu.memory_space<vmem>>, vector<1x1x16x1xf32>
    %418 = vector.shape_cast %417 : vector<1x1x16x1xf32> to vector<16x1xf32>
    %419 = vector.broadcast %418 : vector<16x1xf32> to vector<16x64xf32>
    %420 = arith.mulf %415, %419 : vector<16x64xf32>
    %cst_254 = arith.constant dense<0.000000e+00> : vector<64xf32>
    %421 = vector.multi_reduction <add>, %420, %cst_254 [0] : vector<16x64xf32> to vector<64xf32>
    %422 = vector.shape_cast %421 : vector<64xf32> to vector<1x64xf32>
    %423 = arith.index_cast %402 : i32 to index
    %c0_255 = arith.constant 0 : index
    %424 = vector.load %arg16[%423, %c0_255] : memref<16x64xf32, #tpu.memory_space<vmem>>, vector<1x64xf32>
    tpu.vector_store %arg16[%423, %c0_255], %422 {strides = array<i32>} : memref<16x64xf32, #tpu.memory_space<vmem>>, vector<1x64xf32>,
    %c6_i32_256 = arith.constant 6 : i32
    %c8_i32_257 = arith.constant 8 : i32
    %425 = arith.addi %c8_i32_257, %c6_i32_256 : i32
    %c1_258 = arith.constant 1 : index
    %426 = arith.index_cast %c6_i32_256 : i32 to index
    %c0_259 = arith.constant 0 : index
    %c0_260 = arith.constant 0 : index
    %427 = vector.load %arg17[%c1_258, %426, %c0_259, %c0_260] : memref<2x8x16x64xf32, #tpu.memory_space<vmem>>, vector<1x1x16x64xf32>
    %428 = vector.shape_cast %427 : vector<1x1x16x64xf32> to vector<16x64xf32>
    %429 = arith.mulf %428, %415 : vector<16x64xf32>
    %c1_261 = arith.constant 1 : index
    %430 = arith.index_cast %c6_i32_256 : i32 to index
    %c0_262 = arith.constant 0 : index
    %c0_263 = arith.constant 0 : index
    %431 = vector.load %arg18[%c1_261, %430, %c0_262, %c0_263] : memref<2x8x16x1xf32, #tpu.memory_space<vmem>>, vector<1x1x16x1xf32>
    %432 = vector.shape_cast %431 : vector<1x1x16x1xf32> to vector<16x1xf32>
    %433 = arith.index_cast %425 : i32 to index
    %c0_264 = arith.constant 0 : index
    %434 = vector.load %arg15[%433, %c0_264] : memref<16x64xf32, #tpu.memory_space<vmem>>, vector<1x64xf32>
    %435 = vector.broadcast %432 : vector<16x1xf32> to vector<16x64xf32>
    %436 = vector.broadcast %434 : vector<1x64xf32> to vector<16x64xf32>
    %437 = arith.mulf %435, %436 : vector<16x64xf32>
    %438 = arith.addf %429, %437 : vector<16x64xf32>
    %c1_265 = arith.constant 1 : index
    %439 = arith.index_cast %c6_i32_256 : i32 to index
    %c0_266 = arith.constant 0 : index
    %c0_267 = arith.constant 0 : index
    %440 = vector.load %arg19[%c1_265, %439, %c0_266, %c0_267] : memref<2x8x16x1xf32, #tpu.memory_space<vmem>>, vector<1x1x16x1xf32>
    %441 = vector.shape_cast %440 : vector<1x1x16x1xf32> to vector<16x1xf32>
    %442 = vector.broadcast %441 : vector<16x1xf32> to vector<16x64xf32>
    %443 = arith.mulf %438, %442 : vector<16x64xf32>
    %cst_268 = arith.constant dense<0.000000e+00> : vector<64xf32>
    %444 = vector.multi_reduction <add>, %443, %cst_268 [0] : vector<16x64xf32> to vector<64xf32>
    %445 = vector.shape_cast %444 : vector<64xf32> to vector<1x64xf32>
    %446 = arith.index_cast %425 : i32 to index
    %c0_269 = arith.constant 0 : index
    %447 = vector.load %arg16[%446, %c0_269] : memref<16x64xf32, #tpu.memory_space<vmem>>, vector<1x64xf32>
    tpu.vector_store %arg16[%446, %c0_269], %445 {strides = array<i32>} : memref<16x64xf32, #tpu.memory_space<vmem>>, vector<1x64xf32>,
    %c7_i32_270 = arith.constant 7 : i32
    %c8_i32_271 = arith.constant 8 : i32
    %448 = arith.addi %c8_i32_271, %c7_i32_270 : i32
    %c1_272 = arith.constant 1 : index
    %449 = arith.index_cast %c7_i32_270 : i32 to index
    %c0_273 = arith.constant 0 : index
    %c0_274 = arith.constant 0 : index
    %450 = vector.load %arg17[%c1_272, %449, %c0_273, %c0_274] : memref<2x8x16x64xf32, #tpu.memory_space<vmem>>, vector<1x1x16x64xf32>
    %451 = vector.shape_cast %450 : vector<1x1x16x64xf32> to vector<16x64xf32>
    %452 = arith.mulf %451, %438 : vector<16x64xf32>
    %c1_275 = arith.constant 1 : index
    %453 = arith.index_cast %c7_i32_270 : i32 to index
    %c0_276 = arith.constant 0 : index
    %c0_277 = arith.constant 0 : index
    %454 = vector.load %arg18[%c1_275, %453, %c0_276, %c0_277] : memref<2x8x16x1xf32, #tpu.memory_space<vmem>>, vector<1x1x16x1xf32>
    %455 = vector.shape_cast %454 : vector<1x1x16x1xf32> to vector<16x1xf32>
    %456 = arith.index_cast %448 : i32 to index
    %c0_278 = arith.constant 0 : index
    %457 = vector.load %arg15[%456, %c0_278] : memref<16x64xf32, #tpu.memory_space<vmem>>, vector<1x64xf32>
    %458 = vector.broadcast %455 : vector<16x1xf32> to vector<16x64xf32>
    %459 = vector.broadcast %457 : vector<1x64xf32> to vector<16x64xf32>
    %460 = arith.mulf %458, %459 : vector<16x64xf32>
    %461 = arith.addf %452, %460 : vector<16x64xf32>
    %c1_279 = arith.constant 1 : index
    %462 = arith.index_cast %c7_i32_270 : i32 to index
    %c0_280 = arith.constant 0 : index
    %c0_281 = arith.constant 0 : index
    %463 = vector.load %arg19[%c1_279, %462, %c0_280, %c0_281] : memref<2x8x16x1xf32, #tpu.memory_space<vmem>>, vector<1x1x16x1xf32>
    %464 = vector.shape_cast %463 : vector<1x1x16x1xf32> to vector<16x1xf32>
    %465 = vector.broadcast %464 : vector<16x1xf32> to vector<16x64xf32>
    %466 = arith.mulf %461, %465 : vector<16x64xf32>
    %cst_282 = arith.constant dense<0.000000e+00> : vector<64xf32>
    %467 = vector.multi_reduction <add>, %466, %cst_282 [0] : vector<16x64xf32> to vector<64xf32>
    %468 = vector.shape_cast %467 : vector<64xf32> to vector<1x64xf32>
    %469 = arith.index_cast %448 : i32 to index
    %c0_283 = arith.constant 0 : index
    %470 = vector.load %arg16[%469, %c0_283] : memref<16x64xf32, #tpu.memory_space<vmem>>, vector<1x64xf32>
    tpu.vector_store %arg16[%469, %c0_283], %468 {strides = array<i32>} : memref<16x64xf32, #tpu.memory_space<vmem>>, vector<1x64xf32>,
    %c8_i32_284 = arith.constant 8 : i32
    %c0_285 = arith.constant 0 : index
    %c0_286 = arith.constant 0 : index
    %471 = vector.load %arg13[%c0_285, %c0_286] : memref<16x64xf32, #tpu.memory_space<vmem>>, vector<16x64xf32>
    tpu.vector_store %arg13[%c0_285, %c0_286], %461 {strides = array<i32>} : memref<16x64xf32, #tpu.memory_space<vmem>>, vector<16x64xf32>,
    %c0_287 = arith.constant 0 : index
    %c0_288 = arith.constant 0 : index
    %472 = vector.load %arg16[%c0_287, %c0_288] : memref<16x64xf32, #tpu.memory_space<vmem>>, vector<16x64xf32>
    %c0_289 = arith.constant 0 : index
    %c0_290 = arith.constant 0 : index
    %473 = vector.load %arg10[%c0_289, %c0_290] : memref<1x64xf32, #tpu.memory_space<vmem>>, vector<1x64xf32>
    %474 = vector.broadcast %473 : vector<1x64xf32> to vector<16x64xf32>
    %475 = arith.mulf %41, %474 : vector<16x64xf32>
    %476 = arith.addf %472, %475 : vector<16x64xf32>
    %cst_291 = arith.constant 0.000000e+00 : f32
    %477 = vector.broadcast %cst_291 : f32 to vector<16x64xf32>
    %478 = arith.subf %477, %8 : vector<16x64xf32>
    %479 = math.exp %478 : vector<16x64xf32>
    %cst_292 = arith.constant 1.000000e+00 : f32
    %480 = vector.broadcast %cst_292 : f32 to vector<16x64xf32>
    %481 = arith.addf %480, %479 : vector<16x64xf32>
    %cst_293 = arith.constant 1.000000e+00 : f32
    %482 = vector.broadcast %cst_293 : f32 to vector<16x64xf32>
    %483 = arith.divf %482, %481 : vector<16x64xf32>
    %484 = arith.mulf %8, %483 : vector<16x64xf32>
    %485 = arith.mulf %476, %484 : vector<16x64xf32>
    %c0_294 = arith.constant 0 : index
    %c0_295 = arith.constant 0 : index
    %486 = vector.load %arg11[%c0_294, %c0_295] : memref<64x32xf32, #tpu.memory_space<vmem>>, vector<64x32xf32>
    %cst_296 = arith.constant dense<0.000000e+00> : vector<16x32xf32>
    %487 = tpu.matmul %485, %486, %cst_296 {dimension_numbers = #tpu.dot_dimension_numbers<[1], [0], [0], [1], [0, 0, 1, 1], [], []>} : vector<16x64xf32>, vector<64x32xf32>, vector<16x32xf32> -> vector<16x32xf32>
    %c0_297 = arith.constant 0 : index
    %c0_298 = arith.constant 0 : index
    %c0_299 = arith.constant 0 : index
    %488 = vector.load %arg12[%c0_297, %c0_298, %c0_299] : memref<1x16x32xf32, #tpu.memory_space<vmem>>, vector<1x16x32xf32>
    %489 = vector.shape_cast %488 : vector<1x16x32xf32> to vector<16x32xf32>
    %490 = vector.shape_cast %487 : vector<16x32xf32> to vector<1x16x32xf32>
    tpu.vector_store %arg12[%c0_297, %c0_298, %c0_299], %490 {strides = array<i32>} : memref<1x16x32xf32, #tpu.memory_space<vmem>>, vector<1x16x32xf32>,
    return
  }
  func.func @transform_0(%arg0: i32, %arg1: i32) -> (i32, i32, i32) {
    %c0_i32 = arith.constant 0 : i32
    %c0_i32_0 = arith.constant 0 : i32
    return %arg0, %arg1, %c0_i32 : i32, i32, i32
  }
  func.func @transform_1(%arg0: i32, %arg1: i32) -> (i32, i32) {
    %c0_i32 = arith.constant 0 : i32
    %c0_i32_0 = arith.constant 0 : i32
    %c0_i32_1 = arith.constant 0 : i32
    return %c0_i32, %c0_i32_0 : i32, i32
  }
  func.func @transform_2(%arg0: i32, %arg1: i32) -> (i32, i32) {
    %c0_i32 = arith.constant 0 : i32
    %c0_i32_0 = arith.constant 0 : i32
    %c0_i32_1 = arith.constant 0 : i32
    return %c0_i32, %c0_i32_0 : i32, i32
  }
  func.func @transform_3(%arg0: i32, %arg1: i32) -> (i32, i32) {
    %c0_i32 = arith.constant 0 : i32
    %c0_i32_0 = arith.constant 0 : i32
    %c0_i32_1 = arith.constant 0 : i32
    return %c0_i32, %c0_i32_0 : i32, i32
  }
  func.func @transform_4(%arg0: i32, %arg1: i32) -> (i32, i32) {
    %c0_i32 = arith.constant 0 : i32
    %c0_i32_0 = arith.constant 0 : i32
    %c0_i32_1 = arith.constant 0 : i32
    return %c0_i32, %c0_i32_0 : i32, i32
  }
  func.func @transform_5(%arg0: i32, %arg1: i32) -> (i32, i32) {
    %c0_i32 = arith.constant 0 : i32
    %c0_i32_0 = arith.constant 0 : i32
    %c0_i32_1 = arith.constant 0 : i32
    return %c0_i32, %c0_i32_0 : i32, i32
  }
  func.func @transform_6(%arg0: i32, %arg1: i32) -> (i32, i32) {
    %c0_i32 = arith.constant 0 : i32
    %c0_i32_0 = arith.constant 0 : i32
    %c0_i32_1 = arith.constant 0 : i32
    return %c0_i32, %c0_i32_0 : i32, i32
  }
  func.func @transform_7(%arg0: i32, %arg1: i32) -> (i32, i32) {
    %c0_i32 = arith.constant 0 : i32
    %c0_i32_0 = arith.constant 0 : i32
    %c0_i32_1 = arith.constant 0 : i32
    return %c0_i32, %c0_i32_0 : i32, i32
  }
  func.func @transform_8(%arg0: i32, %arg1: i32) -> (i32, i32) {
    %c0_i32 = arith.constant 0 : i32
    %c0_i32_0 = arith.constant 0 : i32
    %c0_i32_1 = arith.constant 0 : i32
    return %c0_i32, %c0_i32_0 : i32, i32
  }
  func.func @transform_9(%arg0: i32, %arg1: i32) -> (i32, i32) {
    %c0_i32 = arith.constant 0 : i32
    %c0_i32_0 = arith.constant 0 : i32
    %c0_i32_1 = arith.constant 0 : i32
    return %c0_i32, %c0_i32_0 : i32, i32
  }
  func.func @transform_10(%arg0: i32, %arg1: i32) -> (i32, i32, i32) {
    %c0_i32 = arith.constant 0 : i32
    %c0_i32_0 = arith.constant 0 : i32
    return %arg0, %arg1, %c0_i32 : i32, i32, i32
  }
}

</mosaic_0001>

<llo_original>
// kernel: tpu_custom_call.1
$region0: #{tpu_custom_call.1}
  #allocation0 [shape = 'u32[]', space=smem, size = 0x4, offset = 0x4, fixed_abs, tag = 'smem constant byte address 0x4 - core index']
  #allocation1 [shape = 'u32[72,128]{1,0:T(1,128)}', space=vmem, size = 0x9000, scoped, tag = 'internal scratch']
  #allocation2 [shape = 'f32[16,64]{1,0:T(8,128)}', space=vmem, size = 0x2000, scoped, tag = 'scratch operand']
  #allocation3 [shape = 'f32[19,64]{1,0:T(8,128)}', space=vmem, size = 0x3000, scoped, tag = 'scratch operand']
  #allocation4 [shape = 'f32[16,64]{1,0:T(8,128)}', space=vmem, size = 0x2000, scoped, tag = 'scratch operand']
  #allocation5 [shape = 'f32[16,64]{1,0:T(8,128)}', space=vmem, size = 0x2000, scoped, tag = 'scratch operand']
  #allocation6 [shape = 'f32[2,8,16,64]{3,2,1,0:T(8,128)}', space=vmem, size = 0x20000, scoped, tag = 'scratch operand']
  #allocation7 [shape = 'f32[2,8,16,1]{3,2,1,0:T(8,128)}', space=vmem, size = 0x20000, scoped, tag = 'scratch operand']
  #allocation8 [shape = 'f32[2,8,16,1]{3,2,1,0:T(8,128)}', space=vmem, size = 0x20000, scoped, tag = 'scratch operand']
  %s0 = inlined_call_operand.vmem [shape: f32[2,32,32], index: 0, kind: input, shape index: {}]
  %s1 = inlined_call_operand.vmem [shape: f32[32,128], index: 1, kind: input, shape index: {}]
  %s2 = inlined_call_operand.vmem [shape: f32[4,64], index: 2, kind: input, shape index: {}]
  %s3 = inlined_call_operand.vmem [shape: f32[1,64], index: 3, kind: input, shape index: {}]
  %s4 = inlined_call_operand.vmem [shape: f32[64,34], index: 4, kind: input, shape index: {}]
  %s5 = inlined_call_operand.vmem [shape: f32[2,64], index: 5, kind: input, shape index: {}]
  %s6 = inlined_call_operand.vmem [shape: f32[1,64], index: 6, kind: input, shape index: {}]
  %s7 = inlined_call_operand.vmem [shape: f32[16,64], index: 7, kind: input, shape index: {}]
  %s8 = inlined_call_operand.vmem [shape: f32[1,64], index: 8, kind: input, shape index: {}]
  %s9 = inlined_call_operand.vmem [shape: f32[64,32], index: 9, kind: input, shape index: {}]
  %s10 = inlined_call_operand.hbm [shape: f32[2,32,32], index: 10, kind: output, shape index: {}]
  %s11 = sld [smem:[#allocation0]]
  $region77: #{tpu_custom_call.1} parent=0
    _
  %s13 = ssub.s32 1, %s11
  %s14 = scalar_select 0, %s13, %s11
  $region1: #{tpu_custom_call.1} parent=0
    #allocation9 [shape = 'u8[16384]{0}', space=vmem, size = 0x4000, scoped, tag = 'output window, operand 0']
    #allocation10 [shape = 's32[2]{0}', space=sflag, size = 0x8, scoped, tag = 'scoped memory for tpu_custom_call.1']
    %15 = vsyncpa [#allocation10], 0
    %s16 = scalar_lea.sflag [#allocation10], 1
    %17 = vsyncpa %s16, 0
    loop: start=0, step=1, limit=6
    $region2: #{tpu_custom_call.1} parent=1 // loop_pre_header
      _
    $region3: #{tpu_custom_call.1} parent=1 // loop_header
      %s19 = sphi 0, %s23
      %p20 = scmp.ge.s32.totalorder %s19, 6
      %s26 = sphi 0, %s38
      %s27 = sphi 0, %s34
      %s28 = sphi 0, %s26
      %s29 = sphi 0, %s27
      %s30 = sphi 0, %s28
      %s31 = sphi 0, %s29
      %s43 = sphi 0, %s45
      %s46 = sphi 0, %s43
      %s47 = sphi 0, %s46
      %s63 = sphi 0, %s47
      %s67 = sphi 0, %s67
      %s69 = sphi 0, %s67
      %s70 = sphi 0, %s69
      %s84 = sphi 0, %s70
      %s88 = sphi 0, %s88
      %s90 = sphi 0, %s88
      %s91 = sphi 0, %s90
      %s105 = sphi 0, %s91
      %s109 = sphi 0, %s109
      %s111 = sphi 0, %s109
      %s112 = sphi 0, %s111
      %s126 = sphi 0, %s112
      %s130 = sphi 0, %s130
      %s132 = sphi 0, %s130
      %s133 = sphi 0, %s132
      %s147 = sphi 0, %s133
      %s151 = sphi 0, %s151
      %s153 = sphi 0, %s151
      %s154 = sphi 0, %s153
      %s168 = sphi 0, %s154
      %s172 = sphi 0, %s172
      %s174 = sphi 0, %s172
      %s175 = sphi 0, %s174
      %s189 = sphi 0, %s175
      %s193 = sphi 0, %s193
      %s195 = sphi 0, %s193
      %s196 = sphi 0, %s195
      %s210 = sphi 0, %s196
      %s214 = sphi 0, %s214
      %s216 = sphi 0, %s214
      %s217 = sphi 0, %s216
      %s231 = sphi 0, %s217
      %s235 = sphi 0, %s235
      %s237 = sphi 0, %s235
      %s238 = sphi 0, %s237
      %s252 = sphi 0, %s238
      %s260 = sphi 0, %s262
      %s263 = sphi 0, %s260
      %s264 = sphi 0, %s263
      %s280 = sphi 0, %s264
    $region4: #{tpu_custom_call.1} parent=1 // loop_header_branch
      %22 = sbr.rel (%p20) target = $region8
    $region5: #{tpu_custom_call.1} parent=1 // loop_body
      %s24 = ssub.s32 %s19, 1
      %s25 = ssub.s32 %s19, 2
      %s32 = sadd.s32 1, %s27
      %p33 = scmp.ge.s32.totalorder %s32, 2
      %s34 = scalar_select %p33, 0, %s32
      %s35 = sadd.s32 1, %s26
      %s36 = scalar_select %p33, %s35, %s26
      %p37 = scmp.ge.s32.totalorder %s36, 2
      %s38 = scalar_select %p37, 0, %s36
      %s39 = ssub.s32 %s26, %s38
      %s40 = ssub.s32 %s27, %s34
      %s41 = sor.u32 %s39, %s40
      %p42 = scmp.eq.s32.totalorder %s41, 0
      %s44 = sadd.s32 %s43, 1
      %s45 = scalar_select %p42, %s43, %s44
      %p48 = pneg %p42
      %p49 = scmp.eq.s32.totalorder %s19, 3
      %p50 = por %p48, %p49
      %p51 = scmp.ne.s32.totalorder %s43, %s46
      %p52 = scmp.eq.s32.totalorder %s19, 0
      %p53 = por %p51, %p52
      %p54 = scmp.ne.s32.totalorder %s43, %s46
      %p55 = scmp.eq.s32.totalorder %s24, 3
      %p56 = por %p54, %p55
      %p57 = scmp.ne.s32.totalorder %s46, %s47
      %p58 = scmp.eq.s32.totalorder %s24, 0
      %p59 = por %p57, %p58
      %p60 = scmp.ne.s32.totalorder %s46, %s47
      %p61 = scmp.eq.s32.totalorder %s25, 3
      %p62 = por %p60, %p61
      %p64 = scmp.ne.s32.totalorder %s47, %s63
      %p65 = scmp.eq.s32.totalorder %s25, 0
      %p66 = por %p64, %p65
      %s68 = sadd.s32 %s67, 1
      %p71 = scmp.eq.s32.totalorder %s19, 3
      %p72 = scmp.ne.s32.totalorder %s67, %s69
      %p73 = scmp.eq.s32.totalorder %s19, 0
      %p74 = por %p72, %p73
      %p75 = scmp.ne.s32.totalorder %s67, %s69
      %p76 = scmp.eq.s32.totalorder %s24, 3
      %p77 = por %p75, %p76
      %p78 = scmp.ne.s32.totalorder %s69, %s70
      %p79 = scmp.eq.s32.totalorder %s24, 0
      %p80 = por %p78, %p79
      %p81 = scmp.ne.s32.totalorder %s69, %s70
      %p82 = scmp.eq.s32.totalorder %s25, 3
      %p83 = por %p81, %p82
      %p85 = scmp.ne.s32.totalorder %s70, %s84
      %p86 = scmp.eq.s32.totalorder %s25, 0
      %p87 = por %p85, %p86
      %s89 = sadd.s32 %s88, 1
      %p92 = scmp.eq.s32.totalorder %s19, 3
      %p93 = scmp.ne.s32.totalorder %s88, %s90
      %p94 = scmp.eq.s32.totalorder %s19, 0
      %p95 = por %p93, %p94
      %p96 = scmp.ne.s32.totalorder %s88, %s90
      %p97 = scmp.eq.s32.totalorder %s24, 3
      %p98 = por %p96, %p97
      %p99 = scmp.ne.s32.totalorder %s90, %s91
      %p100 = scmp.eq.s32.totalorder %s24, 0
      %p101 = por %p99, %p100
      %p102 = scmp.ne.s32.totalorder %s90, %s91
      %p103 = scmp.eq.s32.totalorder %s25, 3
      %p104 = por %p102, %p103
      %p106 = scmp.ne.s32.totalorder %s91, %s105
      %p107 = scmp.eq.s32.totalorder %s25, 0
      %p108 = por %p106, %p107
      %s110 = sadd.s32 %s109, 1
      %p113 = scmp.eq.s32.totalorder %s19, 3
      %p114 = scmp.ne.s32.totalorder %s109, %s111
      %p115 = scmp.eq.s32.totalorder %s19, 0
      %p116 = por %p114, %p115
      %p117 = scmp.ne.s32.totalorder %s109, %s111
      %p118 = scmp.eq.s32.totalorder %s24, 3
      %p119 = por %p117, %p118
      %p120 = scmp.ne.s32.totalorder %s111, %s112
      %p121 = scmp.eq.s32.totalorder %s24, 0
      %p122 = por %p120, %p121
      %p123 = scmp.ne.s32.totalorder %s111, %s112
      %p124 = scmp.eq.s32.totalorder %s25, 3
      %p125 = por %p123, %p124
      %p127 = scmp.ne.s32.totalorder %s112, %s126
      %p128 = scmp.eq.s32.totalorder %s25, 0
      %p129 = por %p127, %p128
      %s131 = sadd.s32 %s130, 1
      %p134 = scmp.eq.s32.totalorder %s19, 3
      %p135 = scmp.ne.s32.totalorder %s130, %s132
      %p136 = scmp.eq.s32.totalorder %s19, 0
      %p137 = por %p135, %p136
      %p138 = scmp.ne.s32.totalorder %s130, %s132
      %p139 = scmp.eq.s32.totalorder %s24, 3
      %p140 = por %p138, %p139
      %p141 = scmp.ne.s32.totalorder %s132, %s133
      %p142 = scmp.eq.s32.totalorder %s24, 0
      %p143 = por %p141, %p142
      %p144 = scmp.ne.s32.totalorder %s132, %s133
      %p145 = scmp.eq.s32.totalorder %s25, 3
      %p146 = por %p144, %p145
      %p148 = scmp.ne.s32.totalorder %s133, %s147
      %p149 = scmp.eq.s32.totalorder %s25, 0
      %p150 = por %p148, %p149
      %s152 = sadd.s32 %s151, 1
      %p155 = scmp.eq.s32.totalorder %s19, 3
      %p156 = scmp.ne.s32.totalorder %s151, %s153
      %p157 = scmp.eq.s32.totalorder %s19, 0
      %p158 = por %p156, %p157
      %p159 = scmp.ne.s32.totalorder %s151, %s153
      %p160 = scmp.eq.s32.totalorder %s24, 3
      %p161 = por %p159, %p160
      %p162 = scmp.ne.s32.totalorder %s153, %s154
      %p163 = scmp.eq.s32.totalorder %s24, 0
      %p164 = por %p162, %p163
      %p165 = scmp.ne.s32.totalorder %s153, %s154
      %p166 = scmp.eq.s32.totalorder %s25, 3
      %p167 = por %p165, %p166
      %p169 = scmp.ne.s32.totalorder %s154, %s168
      %p170 = scmp.eq.s32.totalorder %s25, 0
      %p171 = por %p169, %p170
      %s173 = sadd.s32 %s172, 1
      %p176 = scmp.eq.s32.totalorder %s19, 3
      %p177 = scmp.ne.s32.totalorder %s172, %s174
      %p178 = scmp.eq.s32.totalorder %s19, 0
      %p179 = por %p177, %p178
      %p180 = scmp.ne.s32.totalorder %s172, %s174
      %p181 = scmp.eq.s32.totalorder %s24, 3
      %p182 = por %p180, %p181
      %p183 = scmp.ne.s32.totalorder %s174, %s175
      %p184 = scmp.eq.s32.totalorder %s24, 0
      %p185 = por %p183, %p184
      %p186 = scmp.ne.s32.totalorder %s174, %s175
      %p187 = scmp.eq.s32.totalorder %s25, 3
      %p188 = por %p186, %p187
      %p190 = scmp.ne.s32.totalorder %s175, %s189
      %p191 = scmp.eq.s32.totalorder %s25, 0
      %p192 = por %p190, %p191
      %s194 = sadd.s32 %s193, 1
      %p197 = scmp.eq.s32.totalorder %s19, 3
      %p198 = scmp.ne.s32.totalorder %s193, %s195
      %p199 = scmp.eq.s32.totalorder %s19, 0
      %p200 = por %p198, %p199
      %p201 = scmp.ne.s32.totalorder %s193, %s195
      %p202 = scmp.eq.s32.totalorder %s24, 3
      %p203 = por %p201, %p202
      %p204 = scmp.ne.s32.totalorder %s195, %s196
      %p205 = scmp.eq.s32.totalorder %s24, 0
      %p206 = por %p204, %p205
      %p207 = scmp.ne.s32.totalorder %s195, %s196
      %p208 = scmp.eq.s32.totalorder %s25, 3
      %p209 = por %p207, %p208
      %p211 = scmp.ne.s32.totalorder %s196, %s210
      %p212 = scmp.eq.s32.totalorder %s25, 0
      %p213 = por %p211, %p212
      %s215 = sadd.s32 %s214, 1
      %p218 = scmp.eq.s32.totalorder %s19, 3
      %p219 = scmp.ne.s32.totalorder %s214, %s216
      %p220 = scmp.eq.s32.totalorder %s19, 0
      %p221 = por %p219, %p220
      %p222 = scmp.ne.s32.totalorder %s214, %s216
      %p223 = scmp.eq.s32.totalorder %s24, 3
      %p224 = por %p222, %p223
      %p225 = scmp.ne.s32.totalorder %s216, %s217
      %p226 = scmp.eq.s32.totalorder %s24, 0
      %p227 = por %p225, %p226
      %p228 = scmp.ne.s32.totalorder %s216, %s217
      %p229 = scmp.eq.s32.totalorder %s25, 3
      %p230 = por %p228, %p229
      %p232 = scmp.ne.s32.totalorder %s217, %s231
      %p233 = scmp.eq.s32.totalorder %s25, 0
      %p234 = por %p232, %p233
      %s236 = sadd.s32 %s235, 1
      %p239 = scmp.eq.s32.totalorder %s19, 3
      %p240 = scmp.ne.s32.totalorder %s235, %s237
      %p241 = scmp.eq.s32.totalorder %s19, 0
      %p242 = por %p240, %p241
      %p243 = scmp.ne.s32.totalorder %s235, %s237
      %p244 = scmp.eq.s32.totalorder %s24, 3
      %p245 = por %p243, %p244
      %p246 = scmp.ne.s32.totalorder %s237, %s238
      %p247 = scmp.eq.s32.totalorder %s24, 0
      %p248 = por %p246, %p247
      %p249 = scmp.ne.s32.totalorder %s237, %s238
      %p250 = scmp.eq.s32.totalorder %s25, 3
      %p251 = por %p249, %p250
      %p253 = scmp.ne.s32.totalorder %s238, %s252
      %p254 = scmp.eq.s32.totalorder %s25, 0
      %p255 = por %p253, %p254
      %s256 = ssub.s32 %s26, %s38
      %s257 = ssub.s32 %s27, %s34
      %s258 = sor.u32 %s256, %s257
      %p259 = scmp.eq.s32.totalorder %s258, 0
      %s261 = sadd.s32 %s260, 1
      %s262 = scalar_select %p259, %s260, %s261
      %p265 = pneg %p259
      %p266 = scmp.eq.s32.totalorder %s19, 3
      %p267 = por %p265, %p266
      %p268 = scmp.ne.s32.totalorder %s260, %s263
      %p269 = scmp.eq.s32.totalorder %s19, 0
      %p270 = por %p268, %p269
      %p271 = scmp.ne.s32.totalorder %s260, %s263
      %p272 = scmp.eq.s32.totalorder %s24, 3
      %p273 = por %p271, %p272
      %p274 = scmp.ne.s32.totalorder %s263, %s264
      %p275 = scmp.eq.s32.totalorder %s24, 0
      %p276 = por %p274, %p275
      %p277 = scmp.ne.s32.totalorder %s263, %s264
      %p278 = scmp.eq.s32.totalorder %s25, 3
      %p279 = por %p277, %p278
      %p281 = scmp.ne.s32.totalorder %s264, %s280
      %p282 = scmp.eq.s32.totalorder %s25, 0
      %p283 = por %p281, %p282
      %p284 = scmp.le.s32.totalorder 1, %s19
      %p285 = scmp.lt.s32.totalorder %s19, 5
      %p286 = pnand %p284, %p285
      %p287 = pneg %p286
      // Predicated region
      $region9: #{tpu_custom_call.1} parent=5 // pred_check
        _
      $region10: #{tpu_custom_call.1} parent=5 // pred_check_branch
        %289 = sbr.rel (%p286) target = $region12
      $region11: #{tpu_custom_call.1} parent=5 // pred_region
        %s290 = ssub.s32 %s19, 1
        // Predicated region
        $region13: #{tpu_custom_call.1} parent=11 // pred_check
          %p291 = pneg %p80
        $region14: #{tpu_custom_call.1} parent=11 // pred_check_branch
          %293 = sbr.rel (%p291) target = $region16
        $region15: #{tpu_custom_call.1} parent=11 // pred_region
          _
        $region16: #{tpu_custom_call.1} parent=11 // pred_fallthru
          _
        // Predicated region
        $region17: #{tpu_custom_call.1} parent=11 // pred_check
          %p294 = pneg %p101
        $region18: #{tpu_custom_call.1} parent=11 // pred_check_branch
          %296 = sbr.rel (%p294) target = $region20
        $region19: #{tpu_custom_call.1} parent=11 // pred_region
          _
        $region20: #{tpu_custom_call.1} parent=11 // pred_fallthru
          _
        // Predicated region
        $region21: #{tpu_custom_call.1} parent=11 // pred_check
          %p297 = pneg %p122
        $region22: #{tpu_custom_call.1} parent=11 // pred_check_branch
          %299 = sbr.rel (%p297) target = $region24
        $region23: #{tpu_custom_call.1} parent=11 // pred_region
          _
        $region24: #{tpu_custom_call.1} parent=11 // pred_fallthru
          _
        // Predicated region
        $region25: #{tpu_custom_call.1} parent=11 // pred_check
          %p300 = pneg %p143
        $region26: #{tpu_custom_call.1} parent=11 // pred_check_branch
          %302 = sbr.rel (%p300) target = $region28
        $region27: #{tpu_custom_call.1} parent=11 // pred_region
          _
        $region28: #{tpu_custom_call.1} parent=11 // pred_fallthru
          _
        // Predicated region
        $region29: #{tpu_custom_call.1} parent=11 // pred_check
          %p303 = pneg %p164
        $region30: #{tpu_custom_call.1} parent=11 // pred_check_branch
          %305 = sbr.rel (%p303) target = $region32
        $region31: #{tpu_custom_call.1} parent=11 // pred_region
          _
        $region32: #{tpu_custom_call.1} parent=11 // pred_fallthru
          _
        // Predicated region
        $region33: #{tpu_custom_call.1} parent=11 // pred_check
          %p306 = pneg %p185
        $region34: #{tpu_custom_call.1} parent=11 // pred_check_branch
          %308 = sbr.rel (%p306) target = $region36
        $region35: #{tpu_custom_call.1} parent=11 // pred_region
          _
        $region36: #{tpu_custom_call.1} parent=11 // pred_fallthru
          _
        // Predicated region
        $region37: #{tpu_custom_call.1} parent=11 // pred_check
          %p309 = pneg %p206
        $region38: #{tpu_custom_call.1} parent=11 // pred_check_branch
          %311 = sbr.rel (%p309) target = $region40
        $region39: #{tpu_custom_call.1} parent=11 // pred_region
          _
        $region40: #{tpu_custom_call.1} parent=11 // pred_fallthru
          _
        // Predicated region
        $region41: #{tpu_custom_call.1} parent=11 // pred_check
          %p312 = pneg %p227
        $region42: #{tpu_custom_call.1} parent=11 // pred_check_branch
          %314 = sbr.rel (%p312) target = $region44
        $region43: #{tpu_custom_call.1} parent=11 // pred_region
          _
        $region44: #{tpu_custom_call.1} parent=11 // pred_fallthru
          _
        // Predicated region
        $region45: #{tpu_custom_call.1} parent=11 // pred_check
          %p315 = pneg %p248
        $region46: #{tpu_custom_call.1} parent=11 // pred_check_branch
          %317 = sbr.rel (%p315) target = $region48
        $region47: #{tpu_custom_call.1} parent=11 // pred_region
          _
        $region48: #{tpu_custom_call.1} parent=11 // pred_fallthru
          _
      $region12: #{tpu_custom_call.1} parent=5 // pred_fallthru
        _
      %p318 = scmp.lt.s32.totalorder %s19, 4
      // Predicated region
      $region49: #{tpu_custom_call.1} parent=5 // pred_check
        %p319 = pneg %p318
      $region50: #{tpu_custom_call.1} parent=5 // pred_check_branch
        %321 = sbr.rel (%p319) target = $region52
      $region51: #{tpu_custom_call.1} parent=5 // pred_region
        // Predicated region
        $region53: #{tpu_custom_call.1} parent=51 // pred_check
          %p322 = pneg %p53
        $region54: #{tpu_custom_call.1} parent=51 // pred_check_branch
          %324 = sbr.rel (%p322) target = $region56
        $region55: #{tpu_custom_call.1} parent=51 // pred_region
          %s325 = smul.u32 2, %s27
          %p326 = scmp.lt.s32.totalorder %s26, 1
          %s327 = scalar_select %p326, %s26, 1
          %p328 = scmp.lt.s32.totalorder %s325, 3
          %s329 = scalar_select %p328, %s325, 3
          %s330 = smul.addr %s327, 4
          %s331 = sadd.s32 %s329, %s330
          %s332 = smul.addr %s331, 8
          %s333 = scalar_lea.vmem %s0, %s332
          %s334 = smul.u32 2, %s27
        $region56: #{tpu_custom_call.1} parent=51 // pred_fallthru
          _
      $region52: #{tpu_custom_call.1} parent=5 // pred_fallthru
        _
      %p335 = scmp.le.s32.totalorder 1, %s19
      %p336 = scmp.lt.s32.totalorder %s19, 5
      %p337 = pnand %p335, %p336
      %p338 = pneg %p337
      // Predicated region
      $region57: #{tpu_custom_call.1} parent=5 // pred_check
        _
      $region58: #{tpu_custom_call.1} parent=5 // pred_check_branch
        %340 = sbr.rel (%p337) target = $region60
      $region59: #{tpu_custom_call.1} parent=5 // pred_region
        %s341 = ssub.s32 %s19, 1
        %s342 = smul.u32 2, %s29
        %p343 = scmp.lt.s32.totalorder %s28, 1
        %s344 = scalar_select %p343, %s28, 1
        %p345 = scmp.lt.s32.totalorder %s342, 3
        %s346 = scalar_select %p345, %s342, 3
        %s347 = smul.addr %s344, 4
        %s348 = sadd.s32 %s346, %s347
        %s349 = smul.addr %s348, 8
        %s350 = scalar_lea.vmem %s0, %s349
        %p351 = pneg %p59
        %p352 = pneg %p56
        %p353 = pneg %p80
        %p354 = pneg %p77
        %p355 = pneg %p101
        %p356 = pneg %p98
        %p357 = pneg %p122
        %p358 = pneg %p119
        %p359 = pneg %p143
        %p360 = pneg %p140
        %p361 = pneg %p164
        %p362 = pneg %p161
        %p363 = pneg %p185
        %p364 = pneg %p182
        %p365 = pneg %p206
        %p366 = pneg %p203
        %p367 = pneg %p227
        %p368 = pneg %p224
        %p369 = pneg %p248
        %p370 = pneg %p245
        %p371 = pneg %p276
        %p372 = pneg %p273
        %s373 = sand.u32 %s263, 1
        %s374 = scalar_lea.sflag [#allocation10], %s373
        %s375 = sand.u32 %s263, 1
        %s376 = smul.addr %s375, 16
        %s377 = scalar_lea.vmem [#allocation9], %s376
        %s378 = smul.u32 2, %s29
        %p379 = scmp.lt.s32.totalorder %s28, 1
        %s380 = scalar_select %p379, %s28, 1
        %p381 = scmp.lt.s32.totalorder %s378, 3
        %s382 = scalar_select %p381, %s378, 3
        %s383 = smul.addr %s380, 4
        %s384 = sadd.s32 %s382, %s383
        %s385 = smul.addr %s384, 8
        %s386 = scalar_lea.vmem %s0, %s385
        %s387 = smul.u32 2, %s29
        %s388 = smul.u32 2, %s29
        %p389 = scmp.eq.s32.totalorder %s29, 0
        // Predicated region
        $region61: #{tpu_custom_call.1} parent=59 // pred_check
          %p390 = pneg %p389
        $region62: #{tpu_custom_call.1} parent=59 // pred_check_branch
          %392 = sbr.rel (%p390) target = $region64
        $region63: #{tpu_custom_call.1} parent=59 // pred_region
          %vm393 = vcmask 523264
          %394 = vst.msk [vmem:[#allocation2] sm:$0xff] %vm393, 0.0
          %395 = vst.msk [vmem:[#allocation2 + $0x8] sm:$0xff] %vm393, 0.0
          %vm396 = vcmask 518144
          %397 = vst.msk [vmem:[#allocation3] sm:$0x7] %vm396, 0.0
        $region64: #{tpu_custom_call.1} parent=59 // pred_fallthru
          _
        %v398 = vld [vmem:[%s386] sm:$0xff]
        %v399 = vld [vmem:[%s386 + $0x8] sm:$0xff]
        %v400 = vld [vmem:[%s1] sm:$0xff]
        %v401 = vld [vmem:[%s1 + $0x8] sm:$0xff]
        %v402 = vld [vmem:[%s1 + $0x10] sm:$0xff]
        %v403 = vld [vmem:[%s1 + $0x18] sm:$0xff]
        %vm404 = vcmask 261120
        %v406 = vsel %vm404, %v398, 0
        %v409 = vsel %vm404, %v399, 0
        %411 = vmatpush.msra.mxu0 0.0
        %412 = vmatpush.msra.mxu0 0.0
        %413 = vmatpush.msra.mxu0 0.0
        %414 = vmatpush.msra.mxu0 0.0
        %415 = vmatpush.msra.mxu0 0.0
        %416 = vmatpush.msra.mxu0 0.0
        %417 = vmatpush.msra.mxu0 0.0
        %418 = vmatpush.msra.mxu0 0.0
        %419 = vmatpush.msra.mxu0 0.0
        %420 = vmatpush.msra.mxu0 0.0
        %421 = vmatpush.msra.mxu0 0.0
        %422 = vmatpush.msra.mxu0 0.0
        %423 = vmatpush.msra.mxu0 %v403
        %424 = vmatpush.msra.mxu0 %v402
        %425 = vmatpush.msra.mxu0 %v401
        %426 = vmatpush.msra.mxu0 %v400
        %427 = vmatmul.f32.gmra.mxu0 %v406
        %v428 = vpop.f32.mrf.mxu0
        %v429 = vadd.f32 0.0, %v428
        %430 = vmatmul.f32.gmra.mxu0 %v409
        %v431 = vpop.f32.mrf.mxu0
        %v432 = vadd.f32 0.0, %v431
        %433 = vdwg.mxu0
        %vm434 = vcmask 523264
        %435 = vst.msk [vmem:[#allocation3 + $0x3] sm:$0xff] %vm434, %v429
        %436 = vst.msk [vmem:[#allocation3 + $0xb] sm:$0xff] %vm434, %v432
        %v437 = vld [vmem:[%s3] sm:$0x1]
        %v438 = vld [vmem:[%s2] sm:$0x1]
        %v439 = vld [vmem:[#allocation3] sm:$0xff]
        %v440 = vld [vmem:[#allocation3 + $0x8] sm:$0xff]
        %v441 = vperm.slane %v438, 0
        %v442 = vmul.f32 %v441, %v439
        %v443 = vmul.f32 %v441, %v440
        %v445 = vperm.slane %v437, 0
        %v447 = vadd.f32 %v445, %v442
        %v448 = vadd.f32 %v445, %v443
        %v449 = vld [vmem:[%s2 + $0x1] sm:$0x1]
        %v450 = vld [vmem:[#allocation3 + $0x1] sm:$0xff]
        %v451 = vld [vmem:[#allocation3 + $0x9] sm:$0xff]
        %v452 = vperm.slane %v449, 0
        %v453 = vmul.f32 %v452, %v450
        %v454 = vmul.f32 %v452, %v451
        %v455 = vadd.f32 %v447, %v453
        %v456 = vadd.f32 %v448, %v454
        %v457 = vld [vmem:[%s2 + $0x2] sm:$0x1]
        %v458 = vld [vmem:[#allocation3 + $0x2] sm:$0xff]
        %v459 = vld [vmem:[#allocation3 + $0xa] sm:$0xff]
        %v460 = vperm.slane %v457, 0
        %v461 = vmul.f32 %v460, %v458
        %v462 = vmul.f32 %v460, %v459
        %v463 = vadd.f32 %v455, %v461
        %v464 = vadd.f32 %v456, %v462
        %v465 = vld [vmem:[%s2 + $0x3] sm:$0x1]
        %v466 = vld [vmem:[#allocation3 + $0x3] sm:$0xff]
        %v467 = vld [vmem:[#allocation3 + $0xb] sm:$0xff]
        %v468 = vperm.slane %v465, 0
        %v469 = vmul.f32 %v468, %v466
        %v470 = vmul.f32 %v468, %v467
        %v471 = vadd.f32 %v463, %v469
        %v472 = vadd.f32 %v464, %v470
        %vm473 = vcmask 523269
        %474 = vst.msk [vmem:[#allocation3 - $0x5] sm:$0xe0] %vm473, %v432
        %v475 = vsub.f32 0.0, %v471
        %v476 = vsub.f32 0.0, %v472
        %v477 = vmul.f32 %v475, 1.442695
        %v478 = vpow.pop %v477
        %v479 = vmul.f32 %v476, 1.442695
        %v480 = vpow.pop %v479
        %v481 = vadd.f32 %v478, 1.0
        %v482 = vadd.f32 %v480, 1.0
        %v483 = vrcp.pop %v481
        %v484 = vmul.f32 %v481, %v483
        %v485 = vsub.f32 1.0, %v484
        %v486 = vmul.f32 %v483, %v485
        %v487 = vadd.f32 %v483, %v486
        %vm488 = vweird.f32 %v481
        %vm489 = vweird.f32 %v483
        %vm490 = vmor %vm488, %vm489
        %v491 = vsel %vm490, %v483, %v487
        %v492 = vand.u32 2147483647, %v481
        %vm493 = vcmp.eq.f32.partialorder %v492, 8.507059e+37
        %v494 = vand.u32 %v481, 2147483648
        %v495 = vor.u32 1.1754944e-38, %v494
        %v496 = vsel %vm493, %v495, %v491
        %v497 = vmul.f32 1.0, %v496
        %v498 = vrcp.pop %v482
        %v499 = vmul.f32 %v482, %v498
        %v500 = vsub.f32 1.0, %v499
        %v501 = vmul.f32 %v498, %v500
        %v502 = vadd.f32 %v498, %v501
        %vm503 = vweird.f32 %v482
        %vm504 = vweird.f32 %v498
        %vm505 = vmor %vm503, %vm504
        %v506 = vsel %vm505, %v498, %v502
        %v507 = vand.u32 2147483647, %v482
        %vm508 = vcmp.eq.f32.partialorder %v507, 8.507059e+37
        %v509 = vand.u32 %v482, 2147483648
        %v510 = vor.u32 1.1754944e-38, %v509
        %v511 = vsel %vm508, %v510, %v506
        %v512 = vmul.f32 1.0, %v511
        %v513 = vmul.f32 %v471, %v497
        %v514 = vmul.f32 %v472, %v512
        %v515 = vld [vmem:[%s4] sm:$0xff]
        %v516 = vld [vmem:[%s4 + $0x8] sm:$0xff]
        %v517 = vld [vmem:[%s4 + $0x10] sm:$0xff]
        %v518 = vld [vmem:[%s4 + $0x18] sm:$0xff]
        %v519 = vld [vmem:[%s4 + $0x20] sm:$0xff]
        %v520 = vld [vmem:[%s4 + $0x28] sm:$0xff]
        %v521 = vld [vmem:[%s4 + $0x30] sm:$0xff]
        %v522 = vld [vmem:[%s4 + $0x38] sm:$0xff]
        %v524 = vsel %vm434, %v513, 0
        %v527 = vsel %vm434, %v514, 0
        %529 = vmatpush.msra.mxu0 0.0
        %530 = vmatpush.msra.mxu0 0.0
        %531 = vmatpush.msra.mxu0 0.0
        %532 = vmatpush.msra.mxu0 0.0
        %533 = vmatpush.msra.mxu0 0.0
        %534 = vmatpush.msra.mxu0 0.0
        %535 = vmatpush.msra.mxu0 0.0
        %536 = vmatpush.msra.mxu0 0.0
        %537 = vmatpush.msra.mxu0 %v522
        %538 = vmatpush.msra.mxu0 %v521
        %539 = vmatpush.msra.mxu0 %v520
        %540 = vmatpush.msra.mxu0 %v519
        %541 = vmatpush.msra.mxu0 %v518
        %542 = vmatpush.msra.mxu0 %v517
        %543 = vmatpush.msra.mxu0 %v516
        %544 = vmatpush.msra.mxu0 %v515
        %545 = vmatmul.f32.gmra.mxu0 %v524
        %v546 = vpop.f32.mrf.mxu0
        %v547 = vadd.f32 0.0, %v546
        %548 = vmatmul.f32.gmra.mxu0 %v527
        %v549 = vpop.f32.mrf.mxu0
        %v550 = vadd.f32 0.0, %v549
        %551 = vdwg.mxu0
        %v552 = vld [vmem:[%s5] sm:$0x3]
        %v553 = vld [vmem:[%s6] sm:$0x1]
        %v555 = vperm.slane %v553, 0
        %vm557 = vcmask 15360
        %v559 = vsel %vm557, %v547, 0
        %v562 = vsel %vm557, %v550, 0
        %vm564 = vcmask 1041408
        %v566 = vsel %vm564, %v552, 0
        %568 = vmatpush.msra.mxu0 0.0
        %569 = vmatpush.msra.mxu0 0.0
        %570 = vmatpush.msra.mxu0 0.0
        %571 = vmatpush.msra.mxu0 0.0
        %572 = vmatpush.msra.mxu0 0.0
        %573 = vmatpush.msra.mxu0 0.0
        %574 = vmatpush.msra.mxu0 0.0
        %575 = vmatpush.msra.mxu0 0.0
        %576 = vmatpush.msra.mxu0 0.0
        %577 = vmatpush.msra.mxu0 0.0
        %578 = vmatpush.msra.mxu0 0.0
        %579 = vmatpush.msra.mxu0 0.0
        %580 = vmatpush.msra.mxu0 0.0
        %581 = vmatpush.msra.mxu0 0.0
        %582 = vmatpush.msra.mxu0 0.0
        %583 = vmatpush.msra.mxu0 %v566
        %584 = vmatmul.f32.gmra.mxu0 %v559
        %v585 = vpop.f32.mrf.mxu0
        %v586 = vadd.f32 %v555, %v585
        %587 = vmatmul.f32.gmra.mxu0 %v562
        %v588 = vpop.f32.mrf.mxu0
        %v589 = vadd.f32 %v555, %v588
        %590 = vdwg.mxu0
        %vm591 = vcmp.gt.f32.partialorder %v586, 20.0
        %vm592 = vcmp.gt.f32.partialorder %v589, 20.0
        %v593 = vmin.f32 %v586, 20.0
        %v594 = vmin.f32 %v589, 20.0
        %v595 = vmul.f32 %v593, 1.442695
        %v596 = vpow.pop %v595
        %v597 = vmul.f32 %v594, 1.442695
        %v598 = vpow.pop %v597
        %v599 = vadd.f32 %v596, 1.0
        %v600 = vlog2.pop %v599
        %v601 = vmul.f32 %v600, 0.6931472
        %v602 = vmul.f32 -0.5, %v596
        %v603 = vadd.f32 %v602, 1.0
        %v604 = vmul.f32 %v603, %v596
        %v605 = vand.u32 2147483647, %v596
        %vm606 = vcmp.lt.f32.partialorder %v605, 0.0004427343
        %v607 = vsel %vm606, %v604, %v601
        %v608 = vadd.f32 %v598, 1.0
        %v609 = vlog2.pop %v608
        %v610 = vmul.f32 %v609, 0.6931472
        %v611 = vmul.f32 -0.5, %v598
        %v612 = vadd.f32 %v611, 1.0
        %v613 = vmul.f32 %v612, %v598
        %v614 = vand.u32 2147483647, %v598
        %vm615 = vcmp.lt.f32.partialorder %v614, 0.0004427343
        %v616 = vsel %vm615, %v613, %v610
        %v617 = vsel %vm591, %v586, %v607
        %v618 = vsel %vm592, %v589, %v616
        %v619 = vmul.f32 %v617, %v513
        %v620 = vmul.f32 %v618, %v514
        %621 = vst.msk [vmem:[#allocation4] sm:$0xff] %vm434, %v619
        %622 = vst.msk [vmem:[#allocation4 + $0x8] sm:$0xff] %vm434, %v620
        %v623 = vld [vmem:[%s7] sm:$0xff]
        %v624 = vld [vmem:[%s7 + $0x8] sm:$0xff]
        %v625 = vld [vmem:[#allocation2] sm:$0xff]
        %v626 = vld [vmem:[#allocation2 + $0x8] sm:$0xff]
        %v628 = vrot.slane %v617, 1
        %v629 = vrot.slane %v617, 2
        %v630 = vrot.slane %v617, 3
        %v631 = vrot.slane %v617, 4
        %v632 = vrot.slane %v617, 5
        %v633 = vrot.slane %v617, 6
        %v634 = vrot.slane %v617, 7
        %v635 = vperm.slane %v617, 0
        %v636 = vperm.slane %v628, 0
        %v637 = vperm.slane %v629, 0
        %v638 = vperm.slane %v630, 0
        %v639 = vperm.slane %v631, 0
        %v640 = vperm.slane %v632, 0
        %v641 = vperm.slane %v633, 0
        %v642 = vperm.slane %v634, 0
        %v651 = vmul.f32 %v635, %v623
        %v652 = vmul.f32 %v635, %v624
        %v653 = vmul.f32 %v636, %v623
        %v654 = vmul.f32 %v636, %v624
        %v655 = vmul.f32 %v637, %v623
        %v656 = vmul.f32 %v637, %v624
        %v657 = vmul.f32 %v638, %v623
        %v658 = vmul.f32 %v638, %v624
        %v659 = vmul.f32 %v639, %v623
        %v660 = vmul.f32 %v639, %v624
        %v661 = vmul.f32 %v640, %v623
        %v662 = vmul.f32 %v640, %v624
        %v663 = vmul.f32 %v641, %v623
        %v664 = vmul.f32 %v641, %v624
        %v665 = vmul.f32 %v642, %v623
        %v666 = vmul.f32 %v642, %v624
        %v667 = vmul.f32 %v651, 1.442695
        %v668 = vpow.pop %v667
        %v669 = vmul.f32 %v652, 1.442695
        %v670 = vpow.pop %v669
        %v671 = vmul.f32 %v653, 1.442695
        %v672 = vpow.pop %v671
        %v673 = vmul.f32 %v654, 1.442695
        %v674 = vpow.pop %v673
        %v675 = vmul.f32 %v655, 1.442695
        %v676 = vpow.pop %v675
        %v677 = vmul.f32 %v656, 1.442695
        %v678 = vpow.pop %v677
        %v679 = vmul.f32 %v657, 1.442695
        %v680 = vpow.pop %v679
        %v681 = vmul.f32 %v658, 1.442695
        %v682 = vpow.pop %v681
        %v683 = vmul.f32 %v659, 1.442695
        %v684 = vpow.pop %v683
        %v685 = vmul.f32 %v660, 1.442695
        %v686 = vpow.pop %v685
        %v687 = vmul.f32 %v661, 1.442695
        %v688 = vpow.pop %v687
        %v689 = vmul.f32 %v662, 1.442695
        %v690 = vpow.pop %v689
        %v691 = vmul.f32 %v663, 1.442695
        %v692 = vpow.pop %v691
        %v693 = vmul.f32 %v664, 1.442695
        %v694 = vpow.pop %v693
        %v695 = vmul.f32 %v665, 1.442695
        %v696 = vpow.pop %v695
        %v697 = vmul.f32 %v666, 1.442695
        %v698 = vpow.pop %v697
        %699 = vst.msk [vmem:[#allocation6] sm:$0xff] %vm434, %v668
        %700 = vst.msk [vmem:[#allocation6 + $0x8] sm:$0xff] %vm434, %v670
        %701 = vst.msk [vmem:[#allocation6 + $0x10] sm:$0xff] %vm434, %v672
        %702 = vst.msk [vmem:[#allocation6 + $0x18] sm:$0xff] %vm434, %v674
        %703 = vst.msk [vmem:[#allocation6 + $0x20] sm:$0xff] %vm434, %v676
        %704 = vst.msk [vmem:[#allocation6 + $0x28] sm:$0xff] %vm434, %v678
        %705 = vst.msk [vmem:[#allocation6 + $0x30] sm:$0xff] %vm434, %v680
        %706 = vst.msk [vmem:[#allocation6 + $0x38] sm:$0xff] %vm434, %v682
        %707 = vst.msk [vmem:[#allocation6 + $0x40] sm:$0xff] %vm434, %v684
        %708 = vst.msk [vmem:[#allocation6 + $0x48] sm:$0xff] %vm434, %v686
        %709 = vst.msk [vmem:[#allocation6 + $0x50] sm:$0xff] %vm434, %v688
        %710 = vst.msk [vmem:[#allocation6 + $0x58] sm:$0xff] %vm434, %v690
        %711 = vst.msk [vmem:[#allocation6 + $0x60] sm:$0xff] %vm434, %v692
        %712 = vst.msk [vmem:[#allocation6 + $0x68] sm:$0xff] %vm434, %v694
        %713 = vst.msk [vmem:[#allocation6 + $0x70] sm:$0xff] %vm434, %v696
        %714 = vst.msk [vmem:[#allocation6 + $0x78] sm:$0xff] %vm434, %v698
        %v715 = vperm.slane %v547, 0
        %v716 = vlaneseq
        %v717 = vshrl.u32 %v716, 7
        %v718 = vadd.s32 %v717, 2
        %719 = vset.pattern.permute.xlu0 %v718
        %720 = vperm.xlu0 %719, %v715
        %v721 = vpop.permute.xlu0 %720
        %v722 = vlaneseq
        %v723 = vshrl.u32 %v722, 7
        %v724 = vadd.s32 %v723, 10
        %725 = vset.pattern.permute.xlu0 %v724
        %726 = vperm.xlu0 %725, %v715
        %v727 = vpop.permute.xlu0 %726
        %v728 = vperm.slane %v547, 1
        %v729 = vlaneseq
        %v730 = vshrl.u32 %v729, 7
        %v731 = vadd.s32 %v730, 2
        %732 = vset.pattern.permute.xlu0 %v731
        %733 = vperm.xlu0 %732, %v728
        %v734 = vpop.permute.xlu0 %733
        %v735 = vlaneseq
        %v736 = vshrl.u32 %v735, 7
        %v737 = vadd.s32 %v736, 10
        %738 = vset.pattern.permute.xlu0 %v737
        %739 = vperm.xlu0 %738, %v728
        %v740 = vpop.permute.xlu0 %739
        %v741 = vperm.slane %v547, 2
        %v742 = vlaneseq
        %v743 = vshrl.u32 %v742, 7
        %v744 = vadd.s32 %v743, 2
        %745 = vset.pattern.permute.xlu0 %v744
        %746 = vperm.xlu0 %745, %v741
        %v747 = vpop.permute.xlu0 %746
        %v748 = vlaneseq
        %v749 = vshrl.u32 %v748, 7
        %v750 = vadd.s32 %v749, 10
        %751 = vset.pattern.permute.xlu0 %v750
        %752 = vperm.xlu0 %751, %v741
        %v753 = vpop.permute.xlu0 %752
        %v754 = vperm.slane %v547, 3
        %v755 = vlaneseq
        %v756 = vshrl.u32 %v755, 7
        %v757 = vadd.s32 %v756, 2
        %758 = vset.pattern.permute.xlu0 %v757
        %759 = vperm.xlu0 %758, %v754
        %v760 = vpop.permute.xlu0 %759
        %v761 = vlaneseq
        %v762 = vshrl.u32 %v761, 7
        %v763 = vadd.s32 %v762, 10
        %764 = vset.pattern.permute.xlu0 %v763
        %765 = vperm.xlu0 %764, %v754
        %v766 = vpop.permute.xlu0 %765
        %v767 = vperm.slane %v547, 4
        %v768 = vlaneseq
        %v769 = vshrl.u32 %v768, 7
        %v770 = vadd.s32 %v769, 2
        %771 = vset.pattern.permute.xlu0 %v770
        %772 = vperm.xlu0 %771, %v767
        %v773 = vpop.permute.xlu0 %772
        %v774 = vlaneseq
        %v775 = vshrl.u32 %v774, 7
        %v776 = vadd.s32 %v775, 10
        %777 = vset.pattern.permute.xlu0 %v776
        %778 = vperm.xlu0 %777, %v767
        %v779 = vpop.permute.xlu0 %778
        %v780 = vperm.slane %v547, 5
        %v781 = vlaneseq
        %v782 = vshrl.u32 %v781, 7
        %v783 = vadd.s32 %v782, 2
        %784 = vset.pattern.permute.xlu0 %v783
        %785 = vperm.xlu0 %784, %v780
        %v786 = vpop.permute.xlu0 %785
        %v787 = vlaneseq
        %v788 = vshrl.u32 %v787, 7
        %v789 = vadd.s32 %v788, 10
        %790 = vset.pattern.permute.xlu0 %v789
        %791 = vperm.xlu0 %790, %v780
        %v792 = vpop.permute.xlu0 %791
        %v793 = vperm.slane %v547, 6
        %v794 = vlaneseq
        %v795 = vshrl.u32 %v794, 7
        %v796 = vadd.s32 %v795, 2
        %797 = vset.pattern.permute.xlu0 %v796
        %798 = vperm.xlu0 %797, %v793
        %v799 = vpop.permute.xlu0 %798
        %v800 = vlaneseq
        %v801 = vshrl.u32 %v800, 7
        %v802 = vadd.s32 %v801, 10
        %803 = vset.pattern.permute.xlu0 %v802
        %804 = vperm.xlu0 %803, %v793
        %v805 = vpop.permute.xlu0 %804
        %v806 = vperm.slane %v547, 7
        %v807 = vlaneseq
        %v808 = vshrl.u32 %v807, 7
        %v809 = vadd.s32 %v808, 2
        %810 = vset.pattern.permute.xlu0 %v809
        %811 = vperm.xlu0 %810, %v806
        %v812 = vpop.permute.xlu0 %811
        %v813 = vlaneseq
        %v814 = vshrl.u32 %v813, 7
        %v815 = vadd.s32 %v814, 10
        %816 = vset.pattern.permute.xlu0 %v815
        %817 = vperm.xlu0 %816, %v806
        %v818 = vpop.permute.xlu0 %817
        %vm819 = vcmask 7168
        %820 = vst.msk [vmem:[#allocation7] sm:$0xff] %vm819, %v721
        %821 = vst.msk [vmem:[#allocation7 + $0x8] sm:$0xff] %vm819, %v727
        %822 = vst.msk [vmem:[#allocation7 + $0x10] sm:$0xff] %vm819, %v734
        %823 = vst.msk [vmem:[#allocation7 + $0x18] sm:$0xff] %vm819, %v740
        %824 = vst.msk [vmem:[#allocation7 + $0x20] sm:$0xff] %vm819, %v747
        %825 = vst.msk [vmem:[#allocation7 + $0x28] sm:$0xff] %vm819, %v753
        %826 = vst.msk [vmem:[#allocation7 + $0x30] sm:$0xff] %vm819, %v760
        %827 = vst.msk [vmem:[#allocation7 + $0x38] sm:$0xff] %vm819, %v766
        %828 = vst.msk [vmem:[#allocation7 + $0x40] sm:$0xff] %vm819, %v773
        %829 = vst.msk [vmem:[#allocation7 + $0x48] sm:$0xff] %vm819, %v779
        %830 = vst.msk [vmem:[#allocation7 + $0x50] sm:$0xff] %vm819, %v786
        %831 = vst.msk [vmem:[#allocation7 + $0x58] sm:$0xff] %vm819, %v792
        %832 = vst.msk [vmem:[#allocation7 + $0x60] sm:$0xff] %vm819, %v799
        %833 = vst.msk [vmem:[#allocation7 + $0x68] sm:$0xff] %vm819, %v805
        %834 = vst.msk [vmem:[#allocation7 + $0x70] sm:$0xff] %vm819, %v812
        %835 = vst.msk [vmem:[#allocation7 + $0x78] sm:$0xff] %vm819, %v818
        %v836 = vlaneseq
        %v837 = vshrl.u32 %v836, 7
        %v838 = vadd.s32 %v837, 18
        %839 = vset.pattern.permute.xlu0 %v838
        %840 = vperm.xlu0 %839, %v715
        %v841 = vpop.permute.xlu0 %840
        %v842 = vlaneseq
        %v843 = vshrl.u32 %v842, 7
        %v844 = vadd.s32 %v843, 26
        %845 = vset.pattern.permute.xlu0 %v844
        %846 = vperm.xlu0 %845, %v715
        %v847 = vpop.permute.xlu0 %846
        %v848 = vlaneseq
        %v849 = vshrl.u32 %v848, 7
        %v850 = vadd.s32 %v849, 18
        %851 = vset.pattern.permute.xlu0 %v850
        %852 = vperm.xlu0 %851, %v728
        %v853 = vpop.permute.xlu0 %852
        %v854 = vlaneseq
        %v855 = vshrl.u32 %v854, 7
        %v856 = vadd.s32 %v855, 26
        %857 = vset.pattern.permute.xlu0 %v856
        %858 = vperm.xlu0 %857, %v728
        %v859 = vpop.permute.xlu0 %858
        %v860 = vlaneseq
        %v861 = vshrl.u32 %v860, 7
        %v862 = vadd.s32 %v861, 18
        %863 = vset.pattern.permute.xlu0 %v862
        %864 = vperm.xlu0 %863, %v741
        %v865 = vpop.permute.xlu0 %864
        %v866 = vlaneseq
        %v867 = vshrl.u32 %v866, 7
        %v868 = vadd.s32 %v867, 26
        %869 = vset.pattern.permute.xlu0 %v868
        %870 = vperm.xlu0 %869, %v741
        %v871 = vpop.permute.xlu0 %870
        %v872 = vlaneseq
        %v873 = vshrl.u32 %v872, 7
        %v874 = vadd.s32 %v873, 18
        %875 = vset.pattern.permute.xlu0 %v874
        %876 = vperm.xlu0 %875, %v754
        %v877 = vpop.permute.xlu0 %876
        %v878 = vlaneseq
        %v879 = vshrl.u32 %v878, 7
        %v880 = vadd.s32 %v879, 26
        %881 = vset.pattern.permute.xlu0 %v880
        %882 = vperm.xlu0 %881, %v754
        %v883 = vpop.permute.xlu0 %882
        %v884 = vlaneseq
        %v885 = vshrl.u32 %v884, 7
        %v886 = vadd.s32 %v885, 18
        %887 = vset.pattern.permute.xlu0 %v886
        %888 = vperm.xlu0 %887, %v767
        %v889 = vpop.permute.xlu0 %888
        %v890 = vlaneseq
        %v891 = vshrl.u32 %v890, 7
        %v892 = vadd.s32 %v891, 26
        %893 = vset.pattern.permute.xlu0 %v892
        %894 = vperm.xlu0 %893, %v767
        %v895 = vpop.permute.xlu0 %894
        %v896 = vlaneseq
        %v897 = vshrl.u32 %v896, 7
        %v898 = vadd.s32 %v897, 18
        %899 = vset.pattern.permute.xlu0 %v898
        %900 = vperm.xlu0 %899, %v780
        %v901 = vpop.permute.xlu0 %900
        %v902 = vlaneseq
        %v903 = vshrl.u32 %v902, 7
        %v904 = vadd.s32 %v903, 26
        %905 = vset.pattern.permute.xlu0 %v904
        %906 = vperm.xlu0 %905, %v780
        %v907 = vpop.permute.xlu0 %906
        %v908 = vlaneseq
        %v909 = vshrl.u32 %v908, 7
        %v910 = vadd.s32 %v909, 18
        %911 = vset.pattern.permute.xlu0 %v910
        %912 = vperm.xlu0 %911, %v793
        %v913 = vpop.permute.xlu0 %912
        %v914 = vlaneseq
        %v915 = vshrl.u32 %v914, 7
        %v916 = vadd.s32 %v915, 26
        %917 = vset.pattern.permute.xlu0 %v916
        %918 = vperm.xlu0 %917, %v793
        %v919 = vpop.permute.xlu0 %918
        %v920 = vlaneseq
        %v921 = vshrl.u32 %v920, 7
        %v922 = vadd.s32 %v921, 18
        %923 = vset.pattern.permute.xlu0 %v922
        %924 = vperm.xlu0 %923, %v806
        %v925 = vpop.permute.xlu0 %924
        %v926 = vlaneseq
        %v927 = vshrl.u32 %v926, 7
        %v928 = vadd.s32 %v927, 26
        %929 = vset.pattern.permute.xlu0 %v928
        %930 = vperm.xlu0 %929, %v806
        %v931 = vpop.permute.xlu0 %930
        %932 = vst.msk [vmem:[#allocation8] sm:$0xff] %vm819, %v841
        %933 = vst.msk [vmem:[#allocation8 + $0x8] sm:$0xff] %vm819, %v847
        %934 = vst.msk [vmem:[#allocation8 + $0x10] sm:$0xff] %vm819, %v853
        %935 = vst.msk [vmem:[#allocation8 + $0x18] sm:$0xff] %vm819, %v859
        %936 = vst.msk [vmem:[#allocation8 + $0x20] sm:$0xff] %vm819, %v865
        %937 = vst.msk [vmem:[#allocation8 + $0x28] sm:$0xff] %vm819, %v871
        %938 = vst.msk [vmem:[#allocation8 + $0x30] sm:$0xff] %vm819, %v877
        %939 = vst.msk [vmem:[#allocation8 + $0x38] sm:$0xff] %vm819, %v883
        %940 = vst.msk [vmem:[#allocation8 + $0x40] sm:$0xff] %vm819, %v889
        %941 = vst.msk [vmem:[#allocation8 + $0x48] sm:$0xff] %vm819, %v895
        %942 = vst.msk [vmem:[#allocation8 + $0x50] sm:$0xff] %vm819, %v901
        %943 = vst.msk [vmem:[#allocation8 + $0x58] sm:$0xff] %vm819, %v907
        %944 = vst.msk [vmem:[#allocation8 + $0x60] sm:$0xff] %vm819, %v913
        %945 = vst.msk [vmem:[#allocation8 + $0x68] sm:$0xff] %vm819, %v919
        %946 = vst.msk [vmem:[#allocation8 + $0x70] sm:$0xff] %vm819, %v925
        %947 = vst.msk [vmem:[#allocation8 + $0x78] sm:$0xff] %vm819, %v931
        %v948 = vld [vmem:[#allocation6] sm:$0xff]
        %v949 = vld [vmem:[#allocation6 + $0x8] sm:$0xff]
        %v950 = vmul.f32 %v948, %v625
        %v951 = vmul.f32 %v949, %v626
        %v952 = vld [vmem:[#allocation7] sm:$0xff]
        %v953 = vld [vmem:[#allocation7 + $0x8] sm:$0xff]
        %v954 = vld [vmem:[#allocation4] sm:$0x1]
        %956 = vset.pattern.permute.xlu0 0
        %957 = vperm.xlu0 %956, %v952
        %v958 = vpop.permute.xlu0 %957
        %961 = vset.pattern.permute.xlu0 0
        %962 = vperm.xlu0 %961, %v953
        %v963 = vpop.permute.xlu0 %962
        %v965 = vperm.slane %v954, 0
        %v966 = vmul.f32 %v958, %v965
        %v967 = vmul.f32 %v963, %v965
        %v968 = vadd.f32 %v950, %v966
        %v969 = vadd.f32 %v951, %v967
        %v970 = vld [vmem:[#allocation8] sm:$0xff]
        %v971 = vld [vmem:[#allocation8 + $0x8] sm:$0xff]
        %973 = vset.pattern.permute.xlu0 0
        %974 = vperm.xlu0 %973, %v970
        %v975 = vpop.permute.xlu0 %974
        %978 = vset.pattern.permute.xlu0 0
        %979 = vperm.xlu0 %978, %v971
        %v980 = vpop.permute.xlu0 %979
        %v982 = vmul.f32 %v968, %v975
        %v983 = vmul.f32 %v969, %v980
        %v984 = vsel %vm434, %v982, 0.0
        %v985 = vsel %vm434, %v983, 0.0
        %v986 = vadd.f32 %v984, %v985
        %v987 = vrot.slane %v986, 4
        %v988 = vadd.f32 %v986, %v987
        %v989 = vrot.slane %v988, 2
        %v990 = vadd.f32 %v988, %v989
        %v991 = vrot.slane %v990, 1
        %v992 = vadd.f32 %v990, %v991
        %vm993 = vcmask 516096
        %994 = vst.msk [vmem:[#allocation5] sm:$0x1] %vm993, %v992
        %s995 = scalar_lea.vmem [#allocation6], 16
        %v996 = vld [vmem:[%s995] sm:$0xff]
        %v997 = vld [vmem:[%s995 + $0x8] sm:$0xff]
        %v998 = vmul.f32 %v996, %v968
        %v999 = vmul.f32 %v997, %v969
        %s1000 = scalar_lea.vmem [#allocation7], 16
        %v1001 = vld [vmem:[%s1000] sm:$0xff]
        %v1002 = vld [vmem:[%s1000 + $0x8] sm:$0xff]
        %v1003 = vld [vmem:[#allocation4 + $0x1] sm:$0x1]
        %1005 = vset.pattern.permute.xlu0 0
        %1006 = vperm.xlu0 %1005, %v1001
        %v1007 = vpop.permute.xlu0 %1006
        %1010 = vset.pattern.permute.xlu0 0
        %1011 = vperm.xlu0 %1010, %v1002
        %v1012 = vpop.permute.xlu0 %1011
        %v1014 = vperm.slane %v1003, 0
        %v1015 = vmul.f32 %v1007, %v1014
        %v1016 = vmul.f32 %v1012, %v1014
        %v1017 = vadd.f32 %v998, %v1015
        %v1018 = vadd.f32 %v999, %v1016
        %s1019 = scalar_lea.vmem [#allocation8], 16
        %v1020 = vld [vmem:[%s1019] sm:$0xff]
        %v1021 = vld [vmem:[%s1019 + $0x8] sm:$0xff]
        %1023 = vset.pattern.permute.xlu0 0
        %1024 = vperm.xlu0 %1023, %v1020
        %v1025 = vpop.permute.xlu0 %1024
        %1028 = vset.pattern.permute.xlu0 0
        %1029 = vperm.xlu0 %1028, %v1021
        %v1030 = vpop.permute.xlu0 %1029
        %v1032 = vmul.f32 %v1017, %v1025
        %v1033 = vmul.f32 %v1018, %v1030
        %v1034 = vsel %vm434, %v1032, 0.0
        %v1035 = vsel %vm434, %v1033, 0.0
        %v1036 = vadd.f32 %v1034, %v1035
        %v1037 = vrot.slane %v1036, 4
        %v1038 = vadd.f32 %v1036, %v1037
        %v1039 = vrot.slane %v1038, 2
        %v1040 = vadd.f32 %v1038, %v1039
        %v1041 = vrot.slane %v1040, 1
        %v1042 = vadd.f32 %v1040, %v1041
        %1043 = vst.msk [vmem:[#allocation5 + $0x1] sm:$0x1] %vm993, %v1042
        %s1044 = scalar_lea.vmem [#allocation6], 32
        %v1045 = vld [vmem:[%s1044] sm:$0xff]
        %v1046 = vld [vmem:[%s1044 + $0x8] sm:$0xff]
        %v1047 = vmul.f32 %v1045, %v1017
        %v1048 = vmul.f32 %v1046, %v1018
        %s1049 = scalar_lea.vmem [#allocation7], 32
        %v1050 = vld [vmem:[%s1049] sm:$0xff]
        %v1051 = vld [vmem:[%s1049 + $0x8] sm:$0xff]
        %v1052 = vld [vmem:[#allocation4 + $0x2] sm:$0x1]
        %1054 = vset.pattern.permute.xlu0 0
        %1055 = vperm.xlu0 %1054, %v1050
        %v1056 = vpop.permute.xlu0 %1055
        %1059 = vset.pattern.permute.xlu0 0
        %1060 = vperm.xlu0 %1059, %v1051
        %v1061 = vpop.permute.xlu0 %1060
        %v1063 = vperm.slane %v1052, 0
        %v1064 = vmul.f32 %v1056, %v1063
        %v1065 = vmul.f32 %v1061, %v1063
        %v1066 = vadd.f32 %v1047, %v1064
        %v1067 = vadd.f32 %v1048, %v1065
        %s1068 = scalar_lea.vmem [#allocation8], 32
        %v1069 = vld [vmem:[%s1068] sm:$0xff]
        %v1070 = vld [vmem:[%s1068 + $0x8] sm:$0xff]
        %1072 = vset.pattern.permute.xlu0 0
        %1073 = vperm.xlu0 %1072, %v1069
        %v1074 = vpop.permute.xlu0 %1073
        %1077 = vset.pattern.permute.xlu0 0
        %1078 = vperm.xlu0 %1077, %v1070
        %v1079 = vpop.permute.xlu0 %1078
        %v1081 = vmul.f32 %v1066, %v1074
        %v1082 = vmul.f32 %v1067, %v1079
        %v1083 = vsel %vm434, %v1081, 0.0
        %v1084 = vsel %vm434, %v1082, 0.0
        %v1085 = vadd.f32 %v1083, %v1084
        %v1086 = vrot.slane %v1085, 4
        %v1087 = vadd.f32 %v1085, %v1086
        %v1088 = vrot.slane %v1087, 2
        %v1089 = vadd.f32 %v1087, %v1088
        %v1090 = vrot.slane %v1089, 1
        %v1091 = vadd.f32 %v1089, %v1090
        %1092 = vst.msk [vmem:[#allocation5 + $0x2] sm:$0x1] %vm993, %v1091
        %s1093 = scalar_lea.vmem [#allocation6], 48
        %v1094 = vld [vmem:[%s1093] sm:$0xff]
        %v1095 = vld [vmem:[%s1093 + $0x8] sm:$0xff]
        %v1096 = vmul.f32 %v1094, %v1066
        %v1097 = vmul.f32 %v1095, %v1067
        %s1098 = scalar_lea.vmem [#allocation7], 48
        %v1099 = vld [vmem:[%s1098] sm:$0xff]
        %v1100 = vld [vmem:[%s1098 + $0x8] sm:$0xff]
        %v1101 = vld [vmem:[#allocation4 + $0x3] sm:$0x1]
        %1103 = vset.pattern.permute.xlu0 0
        %1104 = vperm.xlu0 %1103, %v1099
        %v1105 = vpop.permute.xlu0 %1104
        %1108 = vset.pattern.permute.xlu0 0
        %1109 = vperm.xlu0 %1108, %v1100
        %v1110 = vpop.permute.xlu0 %1109
        %v1112 = vperm.slane %v1101, 0
        %v1113 = vmul.f32 %v1105, %v1112
        %v1114 = vmul.f32 %v1110, %v1112
        %v1115 = vadd.f32 %v1096, %v1113
        %v1116 = vadd.f32 %v1097, %v1114
        %s1117 = scalar_lea.vmem [#allocation8], 48
        %v1118 = vld [vmem:[%s1117] sm:$0xff]
        %v1119 = vld [vmem:[%s1117 + $0x8] sm:$0xff]
        %1121 = vset.pattern.permute.xlu0 0
        %1122 = vperm.xlu0 %1121, %v1118
        %v1123 = vpop.permute.xlu0 %1122
        %1126 = vset.pattern.permute.xlu0 0
        %1127 = vperm.xlu0 %1126, %v1119
        %v1128 = vpop.permute.xlu0 %1127
        %v1130 = vmul.f32 %v1115, %v1123
        %v1131 = vmul.f32 %v1116, %v1128
        %v1132 = vsel %vm434, %v1130, 0.0
        %v1133 = vsel %vm434, %v1131, 0.0
        %v1134 = vadd.f32 %v1132, %v1133
        %v1135 = vrot.slane %v1134, 4
        %v1136 = vadd.f32 %v1134, %v1135
        %v1137 = vrot.slane %v1136, 2
        %v1138 = vadd.f32 %v1136, %v1137
        %v1139 = vrot.slane %v1138, 1
        %v1140 = vadd.f32 %v1138, %v1139
        %1141 = vst.msk [vmem:[#allocation5 + $0x3] sm:$0x1] %vm993, %v1140
        %s1142 = scalar_lea.vmem [#allocation6], 64
        %v1143 = vld [vmem:[%s1142] sm:$0xff]
        %v1144 = vld [vmem:[%s1142 + $0x8] sm:$0xff]
        %v1145 = vmul.f32 %v1143, %v1115
        %v1146 = vmul.f32 %v1144, %v1116
        %s1147 = scalar_lea.vmem [#allocation7], 64
        %v1148 = vld [vmem:[%s1147] sm:$0xff]
        %v1149 = vld [vmem:[%s1147 + $0x8] sm:$0xff]
        %v1150 = vld [vmem:[#allocation4 + $0x4] sm:$0x1]
        %1152 = vset.pattern.permute.xlu0 0
        %1153 = vperm.xlu0 %1152, %v1148
        %v1154 = vpop.permute.xlu0 %1153
        %1157 = vset.pattern.permute.xlu0 0
        %1158 = vperm.xlu0 %1157, %v1149
        %v1159 = vpop.permute.xlu0 %1158
        %v1161 = vperm.slane %v1150, 0
        %v1162 = vmul.f32 %v1154, %v1161
        %v1163 = vmul.f32 %v1159, %v1161
        %v1164 = vadd.f32 %v1145, %v1162
        %v1165 = vadd.f32 %v1146, %v1163
        %s1166 = scalar_lea.vmem [#allocation8], 64
        %v1167 = vld [vmem:[%s1166] sm:$0xff]
        %v1168 = vld [vmem:[%s1166 + $0x8] sm:$0xff]
        %1170 = vset.pattern.permute.xlu0 0
        %1171 = vperm.xlu0 %1170, %v1167
        %v1172 = vpop.permute.xlu0 %1171
        %1175 = vset.pattern.permute.xlu0 0
        %1176 = vperm.xlu0 %1175, %v1168
        %v1177 = vpop.permute.xlu0 %1176
        %v1179 = vmul.f32 %v1164, %v1172
        %v1180 = vmul.f32 %v1165, %v1177
        %v1181 = vsel %vm434, %v1179, 0.0
        %v1182 = vsel %vm434, %v1180, 0.0
        %v1183 = vadd.f32 %v1181, %v1182
        %v1184 = vrot.slane %v1183, 4
        %v1185 = vadd.f32 %v1183, %v1184
        %v1186 = vrot.slane %v1185, 2
        %v1187 = vadd.f32 %v1185, %v1186
        %v1188 = vrot.slane %v1187, 1
        %v1189 = vadd.f32 %v1187, %v1188
        %1190 = vst.msk [vmem:[#allocation5 + $0x4] sm:$0x1] %vm993, %v1189
        %s1191 = scalar_lea.vmem [#allocation6], 80
        %v1192 = vld [vmem:[%s1191] sm:$0xff]
        %v1193 = vld [vmem:[%s1191 + $0x8] sm:$0xff]
        %v1194 = vmul.f32 %v1192, %v1164
        %v1195 = vmul.f32 %v1193, %v1165
        %s1196 = scalar_lea.vmem [#allocation7], 80
        %v1197 = vld [vmem:[%s1196] sm:$0xff]
        %v1198 = vld [vmem:[%s1196 + $0x8] sm:$0xff]
        %v1199 = vld [vmem:[#allocation4 + $0x5] sm:$0x1]
        %1201 = vset.pattern.permute.xlu0 0
        %1202 = vperm.xlu0 %1201, %v1197
        %v1203 = vpop.permute.xlu0 %1202
        %1206 = vset.pattern.permute.xlu0 0
        %1207 = vperm.xlu0 %1206, %v1198
        %v1208 = vpop.permute.xlu0 %1207
        %v1210 = vperm.slane %v1199, 0
        %v1211 = vmul.f32 %v1203, %v1210
        %v1212 = vmul.f32 %v1208, %v1210
        %v1213 = vadd.f32 %v1194, %v1211
        %v1214 = vadd.f32 %v1195, %v1212
        %s1215 = scalar_lea.vmem [#allocation8], 80
        %v1216 = vld [vmem:[%s1215] sm:$0xff]
        %v1217 = vld [vmem:[%s1215 + $0x8] sm:$0xff]
        %1219 = vset.pattern.permute.xlu0 0
        %1220 = vperm.xlu0 %1219, %v1216
        %v1221 = vpop.permute.xlu0 %1220
        %1224 = vset.pattern.permute.xlu0 0
        %1225 = vperm.xlu0 %1224, %v1217
        %v1226 = vpop.permute.xlu0 %1225
        %v1228 = vmul.f32 %v1213, %v1221
        %v1229 = vmul.f32 %v1214, %v1226
        %v1230 = vsel %vm434, %v1228, 0.0
        %v1231 = vsel %vm434, %v1229, 0.0
        %v1232 = vadd.f32 %v1230, %v1231
        %v1233 = vrot.slane %v1232, 4
        %v1234 = vadd.f32 %v1232, %v1233
        %v1235 = vrot.slane %v1234, 2
        %v1236 = vadd.f32 %v1234, %v1235
        %v1237 = vrot.slane %v1236, 1
        %v1238 = vadd.f32 %v1236, %v1237
        %1239 = vst.msk [vmem:[#allocation5 + $0x5] sm:$0x1] %vm993, %v1238
        %s1240 = scalar_lea.vmem [#allocation6], 96
        %v1241 = vld [vmem:[%s1240] sm:$0xff]
        %v1242 = vld [vmem:[%s1240 + $0x8] sm:$0xff]
        %v1243 = vmul.f32 %v1241, %v1213
        %v1244 = vmul.f32 %v1242, %v1214
        %s1245 = scalar_lea.vmem [#allocation7], 96
        %v1246 = vld [vmem:[%s1245] sm:$0xff]
        %v1247 = vld [vmem:[%s1245 + $0x8] sm:$0xff]
        %v1248 = vld [vmem:[#allocation4 + $0x6] sm:$0x1]
        %1250 = vset.pattern.permute.xlu0 0
        %1251 = vperm.xlu0 %1250, %v1246
        %v1252 = vpop.permute.xlu0 %1251
        %1255 = vset.pattern.permute.xlu0 0
        %1256 = vperm.xlu0 %1255, %v1247
        %v1257 = vpop.permute.xlu0 %1256
        %v1259 = vperm.slane %v1248, 0
        %v1260 = vmul.f32 %v1252, %v1259
        %v1261 = vmul.f32 %v1257, %v1259
        %v1262 = vadd.f32 %v1243, %v1260
        %v1263 = vadd.f32 %v1244, %v1261
        %s1264 = scalar_lea.vmem [#allocation8], 96
        %v1265 = vld [vmem:[%s1264] sm:$0xff]
        %v1266 = vld [vmem:[%s1264 + $0x8] sm:$0xff]
        %1268 = vset.pattern.permute.xlu0 0
        %1269 = vperm.xlu0 %1268, %v1265
        %v1270 = vpop.permute.xlu0 %1269
        %1273 = vset.pattern.permute.xlu0 0
        %1274 = vperm.xlu0 %1273, %v1266
        %v1275 = vpop.permute.xlu0 %1274
        %v1277 = vmul.f32 %v1262, %v1270
        %v1278 = vmul.f32 %v1263, %v1275
        %v1279 = vsel %vm434, %v1277, 0.0
        %v1280 = vsel %vm434, %v1278, 0.0
        %v1281 = vadd.f32 %v1279, %v1280
        %v1282 = vrot.slane %v1281, 4
        %v1283 = vadd.f32 %v1281, %v1282
        %v1284 = vrot.slane %v1283, 2
        %v1285 = vadd.f32 %v1283, %v1284
        %v1286 = vrot.slane %v1285, 1
        %v1287 = vadd.f32 %v1285, %v1286
        %1288 = vst.msk [vmem:[#allocation5 + $0x6] sm:$0x1] %vm993, %v1287
        %s1289 = scalar_lea.vmem [#allocation6], 112
        %v1290 = vld [vmem:[%s1289] sm:$0xff]
        %v1291 = vld [vmem:[%s1289 + $0x8] sm:$0xff]
        %v1292 = vmul.f32 %v1290, %v1262
        %v1293 = vmul.f32 %v1291, %v1263
        %s1294 = scalar_lea.vmem [#allocation7], 112
        %v1295 = vld [vmem:[%s1294] sm:$0xff]
        %v1296 = vld [vmem:[%s1294 + $0x8] sm:$0xff]
        %v1297 = vld [vmem:[#allocation4 + $0x7] sm:$0x1]
        %1299 = vset.pattern.permute.xlu0 0
        %1300 = vperm.xlu0 %1299, %v1295
        %v1301 = vpop.permute.xlu0 %1300
        %1304 = vset.pattern.permute.xlu0 0
        %1305 = vperm.xlu0 %1304, %v1296
        %v1306 = vpop.permute.xlu0 %1305
        %v1308 = vperm.slane %v1297, 0
        %v1309 = vmul.f32 %v1301, %v1308
        %v1310 = vmul.f32 %v1306, %v1308
        %v1311 = vadd.f32 %v1292, %v1309
        %v1312 = vadd.f32 %v1293, %v1310
        %s1313 = scalar_lea.vmem [#allocation8], 112
        %v1314 = vld [vmem:[%s1313] sm:$0xff]
        %v1315 = vld [vmem:[%s1313 + $0x8] sm:$0xff]
        %1317 = vset.pattern.permute.xlu0 0
        %1318 = vperm.xlu0 %1317, %v1314
        %v1319 = vpop.permute.xlu0 %1318
        %1322 = vset.pattern.permute.xlu0 0
        %1323 = vperm.xlu0 %1322, %v1315
        %v1324 = vpop.permute.xlu0 %1323
        %v1326 = vmul.f32 %v1311, %v1319
        %v1327 = vmul.f32 %v1312, %v1324
        %v1328 = vsel %vm434, %v1326, 0.0
        %v1329 = vsel %vm434, %v1327, 0.0
        %v1330 = vadd.f32 %v1328, %v1329
        %v1331 = vrot.slane %v1330, 4
        %v1332 = vadd.f32 %v1330, %v1331
        %v1333 = vrot.slane %v1332, 2
        %v1334 = vadd.f32 %v1332, %v1333
        %v1335 = vrot.slane %v1334, 1
        %v1336 = vadd.f32 %v1334, %v1335
        %1337 = vst.msk [vmem:[#allocation5 + $0x7] sm:$0x1] %vm993, %v1336
        %v1339 = vrot.slane %v618, 1
        %v1340 = vrot.slane %v618, 2
        %v1341 = vrot.slane %v618, 3
        %v1342 = vrot.slane %v618, 4
        %v1343 = vrot.slane %v618, 5
        %v1344 = vrot.slane %v618, 6
        %v1345 = vrot.slane %v618, 7
        %v1346 = vperm.slane %v618, 0
        %v1347 = vperm.slane %v1339, 0
        %v1348 = vperm.slane %v1340, 0
        %v1349 = vperm.slane %v1341, 0
        %v1350 = vperm.slane %v1342, 0
        %v1351 = vperm.slane %v1343, 0
        %v1352 = vperm.slane %v1344, 0
        %v1353 = vperm.slane %v1345, 0
        %v1362 = vmul.f32 %v1346, %v623
        %v1363 = vmul.f32 %v1346, %v624
        %v1364 = vmul.f32 %v1347, %v623
        %v1365 = vmul.f32 %v1347, %v624
        %v1366 = vmul.f32 %v1348, %v623
        %v1367 = vmul.f32 %v1348, %v624
        %v1368 = vmul.f32 %v1349, %v623
        %v1369 = vmul.f32 %v1349, %v624
        %v1370 = vmul.f32 %v1350, %v623
        %v1371 = vmul.f32 %v1350, %v624
        %v1372 = vmul.f32 %v1351, %v623
        %v1373 = vmul.f32 %v1351, %v624
        %v1374 = vmul.f32 %v1352, %v623
        %v1375 = vmul.f32 %v1352, %v624
        %v1376 = vmul.f32 %v1353, %v623
        %v1377 = vmul.f32 %v1353, %v624
        %v1378 = vmul.f32 %v1362, 1.442695
        %v1379 = vpow.pop %v1378
        %v1380 = vmul.f32 %v1363, 1.442695
        %v1381 = vpow.pop %v1380
        %v1382 = vmul.f32 %v1364, 1.442695
        %v1383 = vpow.pop %v1382
        %v1384 = vmul.f32 %v1365, 1.442695
        %v1385 = vpow.pop %v1384
        %v1386 = vmul.f32 %v1366, 1.442695
        %v1387 = vpow.pop %v1386
        %v1388 = vmul.f32 %v1367, 1.442695
        %v1389 = vpow.pop %v1388
        %v1390 = vmul.f32 %v1368, 1.442695
        %v1391 = vpow.pop %v1390
        %v1392 = vmul.f32 %v1369, 1.442695
        %v1393 = vpow.pop %v1392
        %v1394 = vmul.f32 %v1370, 1.442695
        %v1395 = vpow.pop %v1394
        %v1396 = vmul.f32 %v1371, 1.442695
        %v1397 = vpow.pop %v1396
        %v1398 = vmul.f32 %v1372, 1.442695
        %v1399 = vpow.pop %v1398
        %v1400 = vmul.f32 %v1373, 1.442695
        %v1401 = vpow.pop %v1400
        %v1402 = vmul.f32 %v1374, 1.442695
        %v1403 = vpow.pop %v1402
        %v1404 = vmul.f32 %v1375, 1.442695
        %v1405 = vpow.pop %v1404
        %v1406 = vmul.f32 %v1376, 1.442695
        %v1407 = vpow.pop %v1406
        %v1408 = vmul.f32 %v1377, 1.442695
        %v1409 = vpow.pop %v1408
        %s1410 = scalar_lea.vmem [#allocation6], 128
        %1411 = vst.msk [vmem:[%s1410] sm:$0xff] %vm434, %v1379
        %1412 = vst.msk [vmem:[%s1410 + $0x8] sm:$0xff] %vm434, %v1381
        %1413 = vst.msk [vmem:[%s1410 + $0x10] sm:$0xff] %vm434, %v1383
        %1414 = vst.msk [vmem:[%s1410 + $0x18] sm:$0xff] %vm434, %v1385
        %1415 = vst.msk [vmem:[%s1410 + $0x20] sm:$0xff] %vm434, %v1387
        %1416 = vst.msk [vmem:[%s1410 + $0x28] sm:$0xff] %vm434, %v1389
        %1417 = vst.msk [vmem:[%s1410 + $0x30] sm:$0xff] %vm434, %v1391
        %1418 = vst.msk [vmem:[%s1410 + $0x38] sm:$0xff] %vm434, %v1393
        %1419 = vst.msk [vmem:[%s1410 + $0x40] sm:$0xff] %vm434, %v1395
        %1420 = vst.msk [vmem:[%s1410 + $0x48] sm:$0xff] %vm434, %v1397
        %1421 = vst.msk [vmem:[%s1410 + $0x50] sm:$0xff] %vm434, %v1399
        %1422 = vst.msk [vmem:[%s1410 + $0x58] sm:$0xff] %vm434, %v1401
        %1423 = vst.msk [vmem:[%s1410 + $0x60] sm:$0xff] %vm434, %v1403
        %1424 = vst.msk [vmem:[%s1410 + $0x68] sm:$0xff] %vm434, %v1405
        %1425 = vst.msk [vmem:[%s1410 + $0x70] sm:$0xff] %vm434, %v1407
        %1426 = vst.msk [vmem:[%s1410 + $0x78] sm:$0xff] %vm434, %v1409
        %v1427 = vperm.slane %v550, 0
        %v1428 = vlaneseq
        %v1429 = vshrl.u32 %v1428, 7
        %v1430 = vadd.s32 %v1429, 2
        %1431 = vset.pattern.permute.xlu0 %v1430
        %1432 = vperm.xlu0 %1431, %v1427
        %v1433 = vpop.permute.xlu0 %1432
        %v1434 = vlaneseq
        %v1435 = vshrl.u32 %v1434, 7
        %v1436 = vadd.s32 %v1435, 10
        %1437 = vset.pattern.permute.xlu0 %v1436
        %1438 = vperm.xlu0 %1437, %v1427
        %v1439 = vpop.permute.xlu0 %1438
        %v1440 = vperm.slane %v550, 1
        %v1441 = vlaneseq
        %v1442 = vshrl.u32 %v1441, 7
        %v1443 = vadd.s32 %v1442, 2
        %1444 = vset.pattern.permute.xlu0 %v1443
        %1445 = vperm.xlu0 %1444, %v1440
        %v1446 = vpop.permute.xlu0 %1445
        %v1447 = vlaneseq
        %v1448 = vshrl.u32 %v1447, 7
        %v1449 = vadd.s32 %v1448, 10
        %1450 = vset.pattern.permute.xlu0 %v1449
        %1451 = vperm.xlu0 %1450, %v1440
        %v1452 = vpop.permute.xlu0 %1451
        %v1453 = vperm.slane %v550, 2
        %v1454 = vlaneseq
        %v1455 = vshrl.u32 %v1454, 7
        %v1456 = vadd.s32 %v1455, 2
        %1457 = vset.pattern.permute.xlu0 %v1456
        %1458 = vperm.xlu0 %1457, %v1453
        %v1459 = vpop.permute.xlu0 %1458
        %v1460 = vlaneseq
        %v1461 = vshrl.u32 %v1460, 7
        %v1462 = vadd.s32 %v1461, 10
        %1463 = vset.pattern.permute.xlu0 %v1462
        %1464 = vperm.xlu0 %1463, %v1453
        %v1465 = vpop.permute.xlu0 %1464
        %v1466 = vperm.slane %v550, 3
        %v1467 = vlaneseq
        %v1468 = vshrl.u32 %v1467, 7
        %v1469 = vadd.s32 %v1468, 2
        %1470 = vset.pattern.permute.xlu0 %v1469
        %1471 = vperm.xlu0 %1470, %v1466
        %v1472 = vpop.permute.xlu0 %1471
        %v1473 = vlaneseq
        %v1474 = vshrl.u32 %v1473, 7
        %v1475 = vadd.s32 %v1474, 10
        %1476 = vset.pattern.permute.xlu0 %v1475
        %1477 = vperm.xlu0 %1476, %v1466
        %v1478 = vpop.permute.xlu0 %1477
        %v1479 = vperm.slane %v550, 4
        %v1480 = vlaneseq
        %v1481 = vshrl.u32 %v1480, 7
        %v1482 = vadd.s32 %v1481, 2
        %1483 = vset.pattern.permute.xlu0 %v1482
        %1484 = vperm.xlu0 %1483, %v1479
        %v1485 = vpop.permute.xlu0 %1484
        %v1486 = vlaneseq
        %v1487 = vshrl.u32 %v1486, 7
        %v1488 = vadd.s32 %v1487, 10
        %1489 = vset.pattern.permute.xlu0 %v1488
        %1490 = vperm.xlu0 %1489, %v1479
        %v1491 = vpop.permute.xlu0 %1490
        %v1492 = vperm.slane %v550, 5
        %v1493 = vlaneseq
        %v1494 = vshrl.u32 %v1493, 7
        %v1495 = vadd.s32 %v1494, 2
        %1496 = vset.pattern.permute.xlu0 %v1495
        %1497 = vperm.xlu0 %1496, %v1492
        %v1498 = vpop.permute.xlu0 %1497
        %v1499 = vlaneseq
        %v1500 = vshrl.u32 %v1499, 7
        %v1501 = vadd.s32 %v1500, 10
        %1502 = vset.pattern.permute.xlu0 %v1501
        %1503 = vperm.xlu0 %1502, %v1492
        %v1504 = vpop.permute.xlu0 %1503
        %v1505 = vperm.slane %v550, 6
        %v1506 = vlaneseq
        %v1507 = vshrl.u32 %v1506, 7
        %v1508 = vadd.s32 %v1507, 2
        %1509 = vset.pattern.permute.xlu0 %v1508
        %1510 = vperm.xlu0 %1509, %v1505
        %v1511 = vpop.permute.xlu0 %1510
        %v1512 = vlaneseq
        %v1513 = vshrl.u32 %v1512, 7
        %v1514 = vadd.s32 %v1513, 10
        %1515 = vset.pattern.permute.xlu0 %v1514
        %1516 = vperm.xlu0 %1515, %v1505
        %v1517 = vpop.permute.xlu0 %1516
        %v1518 = vperm.slane %v550, 7
        %v1519 = vlaneseq
        %v1520 = vshrl.u32 %v1519, 7
        %v1521 = vadd.s32 %v1520, 2
        %1522 = vset.pattern.permute.xlu0 %v1521
        %1523 = vperm.xlu0 %1522, %v1518
        %v1524 = vpop.permute.xlu0 %1523
        %v1525 = vlaneseq
        %v1526 = vshrl.u32 %v1525, 7
        %v1527 = vadd.s32 %v1526, 10
        %1528 = vset.pattern.permute.xlu0 %v1527
        %1529 = vperm.xlu0 %1528, %v1518
        %v1530 = vpop.permute.xlu0 %1529
        %s1531 = scalar_lea.vmem [#allocation7], 128
        %1532 = vst.msk [vmem:[%s1531] sm:$0xff] %vm819, %v1433
        %1533 = vst.msk [vmem:[%s1531 + $0x8] sm:$0xff] %vm819, %v1439
        %1534 = vst.msk [vmem:[%s1531 + $0x10] sm:$0xff] %vm819, %v1446
        %1535 = vst.msk [vmem:[%s1531 + $0x18] sm:$0xff] %vm819, %v1452
        %1536 = vst.msk [vmem:[%s1531 + $0x20] sm:$0xff] %vm819, %v1459
        %1537 = vst.msk [vmem:[%s1531 + $0x28] sm:$0xff] %vm819, %v1465
        %1538 = vst.msk [vmem:[%s1531 + $0x30] sm:$0xff] %vm819, %v1472
        %1539 = vst.msk [vmem:[%s1531 + $0x38] sm:$0xff] %vm819, %v1478
        %1540 = vst.msk [vmem:[%s1531 + $0x40] sm:$0xff] %vm819, %v1485
        %1541 = vst.msk [vmem:[%s1531 + $0x48] sm:$0xff] %vm819, %v1491
        %1542 = vst.msk [vmem:[%s1531 + $0x50] sm:$0xff] %vm819, %v1498
        %1543 = vst.msk [vmem:[%s1531 + $0x58] sm:$0xff] %vm819, %v1504
        %1544 = vst.msk [vmem:[%s1531 + $0x60] sm:$0xff] %vm819, %v1511
        %1545 = vst.msk [vmem:[%s1531 + $0x68] sm:$0xff] %vm819, %v1517
        %1546 = vst.msk [vmem:[%s1531 + $0x70] sm:$0xff] %vm819, %v1524
        %1547 = vst.msk [vmem:[%s1531 + $0x78] sm:$0xff] %vm819, %v1530
        %v1548 = vlaneseq
        %v1549 = vshrl.u32 %v1548, 7
        %v1550 = vadd.s32 %v1549, 18
        %1551 = vset.pattern.permute.xlu0 %v1550
        %1552 = vperm.xlu0 %1551, %v1427
        %v1553 = vpop.permute.xlu0 %1552
        %v1554 = vlaneseq
        %v1555 = vshrl.u32 %v1554, 7
        %v1556 = vadd.s32 %v1555, 26
        %1557 = vset.pattern.permute.xlu0 %v1556
        %1558 = vperm.xlu0 %1557, %v1427
        %v1559 = vpop.permute.xlu0 %1558
        %v1560 = vlaneseq
        %v1561 = vshrl.u32 %v1560, 7
        %v1562 = vadd.s32 %v1561, 18
        %1563 = vset.pattern.permute.xlu0 %v1562
        %1564 = vperm.xlu0 %1563, %v1440
        %v1565 = vpop.permute.xlu0 %1564
        %v1566 = vlaneseq
        %v1567 = vshrl.u32 %v1566, 7
        %v1568 = vadd.s32 %v1567, 26
        %1569 = vset.pattern.permute.xlu0 %v1568
        %1570 = vperm.xlu0 %1569, %v1440
        %v1571 = vpop.permute.xlu0 %1570
        %v1572 = vlaneseq
        %v1573 = vshrl.u32 %v1572, 7
        %v1574 = vadd.s32 %v1573, 18
        %1575 = vset.pattern.permute.xlu0 %v1574
        %1576 = vperm.xlu0 %1575, %v1453
        %v1577 = vpop.permute.xlu0 %1576
        %v1578 = vlaneseq
        %v1579 = vshrl.u32 %v1578, 7
        %v1580 = vadd.s32 %v1579, 26
        %1581 = vset.pattern.permute.xlu0 %v1580
        %1582 = vperm.xlu0 %1581, %v1453
        %v1583 = vpop.permute.xlu0 %1582
        %v1584 = vlaneseq
        %v1585 = vshrl.u32 %v1584, 7
        %v1586 = vadd.s32 %v1585, 18
        %1587 = vset.pattern.permute.xlu0 %v1586
        %1588 = vperm.xlu0 %1587, %v1466
        %v1589 = vpop.permute.xlu0 %1588
        %v1590 = vlaneseq
        %v1591 = vshrl.u32 %v1590, 7
        %v1592 = vadd.s32 %v1591, 26
        %1593 = vset.pattern.permute.xlu0 %v1592
        %1594 = vperm.xlu0 %1593, %v1466
        %v1595 = vpop.permute.xlu0 %1594
        %v1596 = vlaneseq
        %v1597 = vshrl.u32 %v1596, 7
        %v1598 = vadd.s32 %v1597, 18
        %1599 = vset.pattern.permute.xlu0 %v1598
        %1600 = vperm.xlu0 %1599, %v1479
        %v1601 = vpop.permute.xlu0 %1600
        %v1602 = vlaneseq
        %v1603 = vshrl.u32 %v1602, 7
        %v1604 = vadd.s32 %v1603, 26
        %1605 = vset.pattern.permute.xlu0 %v1604
        %1606 = vperm.xlu0 %1605, %v1479
        %v1607 = vpop.permute.xlu0 %1606
        %v1608 = vlaneseq
        %v1609 = vshrl.u32 %v1608, 7
        %v1610 = vadd.s32 %v1609, 18
        %1611 = vset.pattern.permute.xlu0 %v1610
        %1612 = vperm.xlu0 %1611, %v1492
        %v1613 = vpop.permute.xlu0 %1612
        %v1614 = vlaneseq
        %v1615 = vshrl.u32 %v1614, 7
        %v1616 = vadd.s32 %v1615, 26
        %1617 = vset.pattern.permute.xlu0 %v1616
        %1618 = vperm.xlu0 %1617, %v1492
        %v1619 = vpop.permute.xlu0 %1618
        %v1620 = vlaneseq
        %v1621 = vshrl.u32 %v1620, 7
        %v1622 = vadd.s32 %v1621, 18
        %1623 = vset.pattern.permute.xlu0 %v1622
        %1624 = vperm.xlu0 %1623, %v1505
        %v1625 = vpop.permute.xlu0 %1624
        %v1626 = vlaneseq
        %v1627 = vshrl.u32 %v1626, 7
        %v1628 = vadd.s32 %v1627, 26
        %1629 = vset.pattern.permute.xlu0 %v1628
        %1630 = vperm.xlu0 %1629, %v1505
        %v1631 = vpop.permute.xlu0 %1630
        %v1632 = vlaneseq
        %v1633 = vshrl.u32 %v1632, 7
        %v1634 = vadd.s32 %v1633, 18
        %1635 = vset.pattern.permute.xlu0 %v1634
        %1636 = vperm.xlu0 %1635, %v1518
        %v1637 = vpop.permute.xlu0 %1636
        %v1638 = vlaneseq
        %v1639 = vshrl.u32 %v1638, 7
        %v1640 = vadd.s32 %v1639, 26
        %1641 = vset.pattern.permute.xlu0 %v1640
        %1642 = vperm.xlu0 %1641, %v1518
        %v1643 = vpop.permute.xlu0 %1642
        %s1644 = scalar_lea.vmem [#allocation8], 128
        %1645 = vst.msk [vmem:[%s1644] sm:$0xff] %vm819, %v1553
        %1646 = vst.msk [vmem:[%s1644 + $0x8] sm:$0xff] %vm819, %v1559
        %1647 = vst.msk [vmem:[%s1644 + $0x10] sm:$0xff] %vm819, %v1565
        %1648 = vst.msk [vmem:[%s1644 + $0x18] sm:$0xff] %vm819, %v1571
        %1649 = vst.msk [vmem:[%s1644 + $0x20] sm:$0xff] %vm819, %v1577
        %1650 = vst.msk [vmem:[%s1644 + $0x28] sm:$0xff] %vm819, %v1583
        %1651 = vst.msk [vmem:[%s1644 + $0x30] sm:$0xff] %vm819, %v1589
        %1652 = vst.msk [vmem:[%s1644 + $0x38] sm:$0xff] %vm819, %v1595
        %1653 = vst.msk [vmem:[%s1644 + $0x40] sm:$0xff] %vm819, %v1601
        %1654 = vst.msk [vmem:[%s1644 + $0x48] sm:$0xff] %vm819, %v1607
        %1655 = vst.msk [vmem:[%s1644 + $0x50] sm:$0xff] %vm819, %v1613
        %1656 = vst.msk [vmem:[%s1644 + $0x58] sm:$0xff] %vm819, %v1619
        %1657 = vst.msk [vmem:[%s1644 + $0x60] sm:$0xff] %vm819, %v1625
        %1658 = vst.msk [vmem:[%s1644 + $0x68] sm:$0xff] %vm819, %v1631
        %1659 = vst.msk [vmem:[%s1644 + $0x70] sm:$0xff] %vm819, %v1637
        %1660 = vst.msk [vmem:[%s1644 + $0x78] sm:$0xff] %vm819, %v1643
        %v1661 = vld [vmem:[%s1410] sm:$0xff]
        %v1662 = vld [vmem:[%s1410 + $0x8] sm:$0xff]
        %v1663 = vmul.f32 %v1661, %v1311
        %v1664 = vmul.f32 %v1662, %v1312
        %v1665 = vld [vmem:[%s1531] sm:$0xff]
        %v1666 = vld [vmem:[%s1531 + $0x8] sm:$0xff]
        %v1667 = vld [vmem:[#allocation4 + $0x8] sm:$0x1]
        %1669 = vset.pattern.permute.xlu0 0
        %1670 = vperm.xlu0 %1669, %v1665
        %v1671 = vpop.permute.xlu0 %1670
        %1674 = vset.pattern.permute.xlu0 0
        %1675 = vperm.xlu0 %1674, %v1666
        %v1676 = vpop.permute.xlu0 %1675
        %v1678 = vperm.slane %v1667, 0
        %v1679 = vmul.f32 %v1671, %v1678
        %v1680 = vmul.f32 %v1676, %v1678
        %v1681 = vadd.f32 %v1663, %v1679
        %v1682 = vadd.f32 %v1664, %v1680
        %v1683 = vld [vmem:[%s1644] sm:$0xff]
        %v1684 = vld [vmem:[%s1644 + $0x8] sm:$0xff]
        %1686 = vset.pattern.permute.xlu0 0
        %1687 = vperm.xlu0 %1686, %v1683
        %v1688 = vpop.permute.xlu0 %1687
        %1691 = vset.pattern.permute.xlu0 0
        %1692 = vperm.xlu0 %1691, %v1684
        %v1693 = vpop.permute.xlu0 %1692
        %v1695 = vmul.f32 %v1681, %v1688
        %v1696 = vmul.f32 %v1682, %v1693
        %v1697 = vsel %vm434, %v1695, 0.0
        %v1698 = vsel %vm434, %v1696, 0.0
        %v1699 = vadd.f32 %v1697, %v1698
        %v1700 = vrot.slane %v1699, 4
        %v1701 = vadd.f32 %v1699, %v1700
        %v1702 = vrot.slane %v1701, 2
        %v1703 = vadd.f32 %v1701, %v1702
        %v1704 = vrot.slane %v1703, 1
        %v1705 = vadd.f32 %v1703, %v1704
        %1706 = vst.msk [vmem:[#allocation5 + $0x8] sm:$0x1] %vm993, %v1705
        %s1707 = scalar_lea.vmem [#allocation6], 144
        %v1708 = vld [vmem:[%s1707] sm:$0xff]
        %v1709 = vld [vmem:[%s1707 + $0x8] sm:$0xff]
        %v1710 = vmul.f32 %v1708, %v1681
        %v1711 = vmul.f32 %v1709, %v1682
        %s1712 = scalar_lea.vmem [#allocation7], 144
        %v1713 = vld [vmem:[%s1712] sm:$0xff]
        %v1714 = vld [vmem:[%s1712 + $0x8] sm:$0xff]
        %v1715 = vld [vmem:[#allocation4 + $0x9] sm:$0x1]
        %1717 = vset.pattern.permute.xlu0 0
        %1718 = vperm.xlu0 %1717, %v1713
        %v1719 = vpop.permute.xlu0 %1718
        %1722 = vset.pattern.permute.xlu0 0
        %1723 = vperm.xlu0 %1722, %v1714
        %v1724 = vpop.permute.xlu0 %1723
        %v1726 = vperm.slane %v1715, 0
        %v1727 = vmul.f32 %v1719, %v1726
        %v1728 = vmul.f32 %v1724, %v1726
        %v1729 = vadd.f32 %v1710, %v1727
        %v1730 = vadd.f32 %v1711, %v1728
        %s1731 = scalar_lea.vmem [#allocation8], 144
        %v1732 = vld [vmem:[%s1731] sm:$0xff]
        %v1733 = vld [vmem:[%s1731 + $0x8] sm:$0xff]
        %1735 = vset.pattern.permute.xlu0 0
        %1736 = vperm.xlu0 %1735, %v1732
        %v1737 = vpop.permute.xlu0 %1736
        %1740 = vset.pattern.permute.xlu0 0
        %1741 = vperm.xlu0 %1740, %v1733
        %v1742 = vpop.permute.xlu0 %1741
        %v1744 = vmul.f32 %v1729, %v1737
        %v1745 = vmul.f32 %v1730, %v1742
        %v1746 = vsel %vm434, %v1744, 0.0
        %v1747 = vsel %vm434, %v1745, 0.0
        %v1748 = vadd.f32 %v1746, %v1747
        %v1749 = vrot.slane %v1748, 4
        %v1750 = vadd.f32 %v1748, %v1749
        %v1751 = vrot.slane %v1750, 2
        %v1752 = vadd.f32 %v1750, %v1751
        %v1753 = vrot.slane %v1752, 1
        %v1754 = vadd.f32 %v1752, %v1753
        %1755 = vst.msk [vmem:[#allocation5 + $0x9] sm:$0x1] %vm993, %v1754
        %s1756 = scalar_lea.vmem [#allocation6], 160
        %v1757 = vld [vmem:[%s1756] sm:$0xff]
        %v1758 = vld [vmem:[%s1756 + $0x8] sm:$0xff]
        %v1759 = vmul.f32 %v1757, %v1729
        %v1760 = vmul.f32 %v1758, %v1730
        %s1761 = scalar_lea.vmem [#allocation7], 160
        %v1762 = vld [vmem:[%s1761] sm:$0xff]
        %v1763 = vld [vmem:[%s1761 + $0x8] sm:$0xff]
        %v1764 = vld [vmem:[#allocation4 + $0xa] sm:$0x1]
        %1766 = vset.pattern.permute.xlu0 0
        %1767 = vperm.xlu0 %1766, %v1762
        %v1768 = vpop.permute.xlu0 %1767
        %1771 = vset.pattern.permute.xlu0 0
        %1772 = vperm.xlu0 %1771, %v1763
        %v1773 = vpop.permute.xlu0 %1772
        %v1775 = vperm.slane %v1764, 0
        %v1776 = vmul.f32 %v1768, %v1775
        %v1777 = vmul.f32 %v1773, %v1775
        %v1778 = vadd.f32 %v1759, %v1776
        %v1779 = vadd.f32 %v1760, %v1777
        %s1780 = scalar_lea.vmem [#allocation8], 160
        %v1781 = vld [vmem:[%s1780] sm:$0xff]
        %v1782 = vld [vmem:[%s1780 + $0x8] sm:$0xff]
        %1784 = vset.pattern.permute.xlu0 0
        %1785 = vperm.xlu0 %1784, %v1781
        %v1786 = vpop.permute.xlu0 %1785
        %1789 = vset.pattern.permute.xlu0 0
        %1790 = vperm.xlu0 %1789, %v1782
        %v1791 = vpop.permute.xlu0 %1790
        %v1793 = vmul.f32 %v1778, %v1786
        %v1794 = vmul.f32 %v1779, %v1791
        %v1795 = vsel %vm434, %v1793, 0.0
        %v1796 = vsel %vm434, %v1794, 0.0
        %v1797 = vadd.f32 %v1795, %v1796
        %v1798 = vrot.slane %v1797, 4
        %v1799 = vadd.f32 %v1797, %v1798
        %v1800 = vrot.slane %v1799, 2
        %v1801 = vadd.f32 %v1799, %v1800
        %v1802 = vrot.slane %v1801, 1
        %v1803 = vadd.f32 %v1801, %v1802
        %1804 = vst.msk [vmem:[#allocation5 + $0xa] sm:$0x1] %vm993, %v1803
        %s1805 = scalar_lea.vmem [#allocation6], 176
        %v1806 = vld [vmem:[%s1805] sm:$0xff]
        %v1807 = vld [vmem:[%s1805 + $0x8] sm:$0xff]
        %v1808 = vmul.f32 %v1806, %v1778
        %v1809 = vmul.f32 %v1807, %v1779
        %s1810 = scalar_lea.vmem [#allocation7], 176
        %v1811 = vld [vmem:[%s1810] sm:$0xff]
        %v1812 = vld [vmem:[%s1810 + $0x8] sm:$0xff]
        %v1813 = vld [vmem:[#allocation4 + $0xb] sm:$0x1]
        %1815 = vset.pattern.permute.xlu0 0
        %1816 = vperm.xlu0 %1815, %v1811
        %v1817 = vpop.permute.xlu0 %1816
        %1820 = vset.pattern.permute.xlu0 0
        %1821 = vperm.xlu0 %1820, %v1812
        %v1822 = vpop.permute.xlu0 %1821
        %v1824 = vperm.slane %v1813, 0
        %v1825 = vmul.f32 %v1817, %v1824
        %v1826 = vmul.f32 %v1822, %v1824
        %v1827 = vadd.f32 %v1808, %v1825
        %v1828 = vadd.f32 %v1809, %v1826
        %s1829 = scalar_lea.vmem [#allocation8], 176
        %v1830 = vld [vmem:[%s1829] sm:$0xff]
        %v1831 = vld [vmem:[%s1829 + $0x8] sm:$0xff]
        %1833 = vset.pattern.permute.xlu0 0
        %1834 = vperm.xlu0 %1833, %v1830
        %v1835 = vpop.permute.xlu0 %1834
        %1838 = vset.pattern.permute.xlu0 0
        %1839 = vperm.xlu0 %1838, %v1831
        %v1840 = vpop.permute.xlu0 %1839
        %v1842 = vmul.f32 %v1827, %v1835
        %v1843 = vmul.f32 %v1828, %v1840
        %v1844 = vsel %vm434, %v1842, 0.0
        %v1845 = vsel %vm434, %v1843, 0.0
        %v1846 = vadd.f32 %v1844, %v1845
        %v1847 = vrot.slane %v1846, 4
        %v1848 = vadd.f32 %v1846, %v1847
        %v1849 = vrot.slane %v1848, 2
        %v1850 = vadd.f32 %v1848, %v1849
        %v1851 = vrot.slane %v1850, 1
        %v1852 = vadd.f32 %v1850, %v1851
        %1853 = vst.msk [vmem:[#allocation5 + $0xb] sm:$0x1] %vm993, %v1852
        %s1854 = scalar_lea.vmem [#allocation6], 192
        %v1855 = vld [vmem:[%s1854] sm:$0xff]
        %v1856 = vld [vmem:[%s1854 + $0x8] sm:$0xff]
        %v1857 = vmul.f32 %v1855, %v1827
        %v1858 = vmul.f32 %v1856, %v1828
        %s1859 = scalar_lea.vmem [#allocation7], 192
        %v1860 = vld [vmem:[%s1859] sm:$0xff]
        %v1861 = vld [vmem:[%s1859 + $0x8] sm:$0xff]
        %v1862 = vld [vmem:[#allocation4 + $0xc] sm:$0x1]
        %1864 = vset.pattern.permute.xlu0 0
        %1865 = vperm.xlu0 %1864, %v1860
        %v1866 = vpop.permute.xlu0 %1865
        %1869 = vset.pattern.permute.xlu0 0
        %1870 = vperm.xlu0 %1869, %v1861
        %v1871 = vpop.permute.xlu0 %1870
        %v1873 = vperm.slane %v1862, 0
        %v1874 = vmul.f32 %v1866, %v1873
        %v1875 = vmul.f32 %v1871, %v1873
        %v1876 = vadd.f32 %v1857, %v1874
        %v1877 = vadd.f32 %v1858, %v1875
        %s1878 = scalar_lea.vmem [#allocation8], 192
        %v1879 = vld [vmem:[%s1878] sm:$0xff]
        %v1880 = vld [vmem:[%s1878 + $0x8] sm:$0xff]
        %1882 = vset.pattern.permute.xlu0 0
        %1883 = vperm.xlu0 %1882, %v1879
        %v1884 = vpop.permute.xlu0 %1883
        %1887 = vset.pattern.permute.xlu0 0
        %1888 = vperm.xlu0 %1887, %v1880
        %v1889 = vpop.permute.xlu0 %1888
        %v1891 = vmul.f32 %v1876, %v1884
        %v1892 = vmul.f32 %v1877, %v1889
        %v1893 = vsel %vm434, %v1891, 0.0
        %v1894 = vsel %vm434, %v1892, 0.0
        %v1895 = vadd.f32 %v1893, %v1894
        %v1896 = vrot.slane %v1895, 4
        %v1897 = vadd.f32 %v1895, %v1896
        %v1898 = vrot.slane %v1897, 2
        %v1899 = vadd.f32 %v1897, %v1898
        %v1900 = vrot.slane %v1899, 1
        %v1901 = vadd.f32 %v1899, %v1900
        %1902 = vst.msk [vmem:[#allocation5 + $0xc] sm:$0x1] %vm993, %v1901
        %s1903 = scalar_lea.vmem [#allocation6], 208
        %v1904 = vld [vmem:[%s1903] sm:$0xff]
        %v1905 = vld [vmem:[%s1903 + $0x8] sm:$0xff]
        %v1906 = vmul.f32 %v1904, %v1876
        %v1907 = vmul.f32 %v1905, %v1877
        %s1908 = scalar_lea.vmem [#allocation7], 208
        %v1909 = vld [vmem:[%s1908] sm:$0xff]
        %v1910 = vld [vmem:[%s1908 + $0x8] sm:$0xff]
        %v1911 = vld [vmem:[#allocation4 + $0xd] sm:$0x1]
        %1913 = vset.pattern.permute.xlu0 0
        %1914 = vperm.xlu0 %1913, %v1909
        %v1915 = vpop.permute.xlu0 %1914
        %1918 = vset.pattern.permute.xlu0 0
        %1919 = vperm.xlu0 %1918, %v1910
        %v1920 = vpop.permute.xlu0 %1919
        %v1922 = vperm.slane %v1911, 0
        %v1923 = vmul.f32 %v1915, %v1922
        %v1924 = vmul.f32 %v1920, %v1922
        %v1925 = vadd.f32 %v1906, %v1923
        %v1926 = vadd.f32 %v1907, %v1924
        %s1927 = scalar_lea.vmem [#allocation8], 208
        %v1928 = vld [vmem:[%s1927] sm:$0xff]
        %v1929 = vld [vmem:[%s1927 + $0x8] sm:$0xff]
        %1931 = vset.pattern.permute.xlu0 0
        %1932 = vperm.xlu0 %1931, %v1928
        %v1933 = vpop.permute.xlu0 %1932
        %1936 = vset.pattern.permute.xlu0 0
        %1937 = vperm.xlu0 %1936, %v1929
        %v1938 = vpop.permute.xlu0 %1937
        %v1940 = vmul.f32 %v1925, %v1933
        %v1941 = vmul.f32 %v1926, %v1938
        %v1942 = vsel %vm434, %v1940, 0.0
        %v1943 = vsel %vm434, %v1941, 0.0
        %v1944 = vadd.f32 %v1942, %v1943
        %v1945 = vrot.slane %v1944, 4
        %v1946 = vadd.f32 %v1944, %v1945
        %v1947 = vrot.slane %v1946, 2
        %v1948 = vadd.f32 %v1946, %v1947
        %v1949 = vrot.slane %v1948, 1
        %v1950 = vadd.f32 %v1948, %v1949
        %1951 = vst.msk [vmem:[#allocation5 + $0xd] sm:$0x1] %vm993, %v1950
        %s1952 = scalar_lea.vmem [#allocation6], 224
        %v1953 = vld [vmem:[%s1952] sm:$0xff]
        %v1954 = vld [vmem:[%s1952 + $0x8] sm:$0xff]
        %v1955 = vmul.f32 %v1953, %v1925
        %v1956 = vmul.f32 %v1954, %v1926
        %s1957 = scalar_lea.vmem [#allocation7], 224
        %v1958 = vld [vmem:[%s1957] sm:$0xff]
        %v1959 = vld [vmem:[%s1957 + $0x8] sm:$0xff]
        %v1960 = vld [vmem:[#allocation4 + $0xe] sm:$0x1]
        %1962 = vset.pattern.permute.xlu0 0
        %1963 = vperm.xlu0 %1962, %v1958
        %v1964 = vpop.permute.xlu0 %1963
        %1967 = vset.pattern.permute.xlu0 0
        %1968 = vperm.xlu0 %1967, %v1959
        %v1969 = vpop.permute.xlu0 %1968
        %v1971 = vperm.slane %v1960, 0
        %v1972 = vmul.f32 %v1964, %v1971
        %v1973 = vmul.f32 %v1969, %v1971
        %v1974 = vadd.f32 %v1955, %v1972
        %v1975 = vadd.f32 %v1956, %v1973
        %s1976 = scalar_lea.vmem [#allocation8], 224
        %v1977 = vld [vmem:[%s1976] sm:$0xff]
        %v1978 = vld [vmem:[%s1976 + $0x8] sm:$0xff]
        %1980 = vset.pattern.permute.xlu0 0
        %1981 = vperm.xlu0 %1980, %v1977
        %v1982 = vpop.permute.xlu0 %1981
        %1985 = vset.pattern.permute.xlu0 0
        %1986 = vperm.xlu0 %1985, %v1978
        %v1987 = vpop.permute.xlu0 %1986
        %v1989 = vmul.f32 %v1974, %v1982
        %v1990 = vmul.f32 %v1975, %v1987
        %v1991 = vsel %vm434, %v1989, 0.0
        %v1992 = vsel %vm434, %v1990, 0.0
        %v1993 = vadd.f32 %v1991, %v1992
        %v1994 = vrot.slane %v1993, 4
        %v1995 = vadd.f32 %v1993, %v1994
        %v1996 = vrot.slane %v1995, 2
        %v1997 = vadd.f32 %v1995, %v1996
        %v1998 = vrot.slane %v1997, 1
        %v1999 = vadd.f32 %v1997, %v1998
        %2000 = vst.msk [vmem:[#allocation5 + $0xe] sm:$0x1] %vm993, %v1999
        %s2001 = scalar_lea.vmem [#allocation6], 240
        %v2002 = vld [vmem:[%s2001] sm:$0xff]
        %v2003 = vld [vmem:[%s2001 + $0x8] sm:$0xff]
        %v2004 = vmul.f32 %v2002, %v1974
        %v2005 = vmul.f32 %v2003, %v1975
        %s2006 = scalar_lea.vmem [#allocation7], 240
        %v2007 = vld [vmem:[%s2006] sm:$0xff]
        %v2008 = vld [vmem:[%s2006 + $0x8] sm:$0xff]
        %v2009 = vld [vmem:[#allocation4 + $0xf] sm:$0x1]
        %2011 = vset.pattern.permute.xlu0 0
        %2012 = vperm.xlu0 %2011, %v2007
        %v2013 = vpop.permute.xlu0 %2012
        %2016 = vset.pattern.permute.xlu0 0
        %2017 = vperm.xlu0 %2016, %v2008
        %v2018 = vpop.permute.xlu0 %2017
        %v2020 = vperm.slane %v2009, 0
        %v2021 = vmul.f32 %v2013, %v2020
        %v2022 = vmul.f32 %v2018, %v2020
        %v2023 = vadd.f32 %v2004, %v2021
        %v2024 = vadd.f32 %v2005, %v2022
        %s2025 = scalar_lea.vmem [#allocation8], 240
        %v2026 = vld [vmem:[%s2025] sm:$0xff]
        %v2027 = vld [vmem:[%s2025 + $0x8] sm:$0xff]
        %2029 = vset.pattern.permute.xlu0 0
        %2030 = vperm.xlu0 %2029, %v2026
        %v2031 = vpop.permute.xlu0 %2030
        %2034 = vset.pattern.permute.xlu0 0
        %2035 = vperm.xlu0 %2034, %v2027
        %v2036 = vpop.permute.xlu0 %2035
        %v2038 = vmul.f32 %v2023, %v2031
        %v2039 = vmul.f32 %v2024, %v2036
        %v2040 = vsel %vm434, %v2038, 0.0
        %v2041 = vsel %vm434, %v2039, 0.0
        %v2042 = vadd.f32 %v2040, %v2041
        %v2043 = vrot.slane %v2042, 4
        %v2044 = vadd.f32 %v2042, %v2043
        %v2045 = vrot.slane %v2044, 2
        %v2046 = vadd.f32 %v2044, %v2045
        %v2047 = vrot.slane %v2046, 1
        %v2048 = vadd.f32 %v2046, %v2047
        %2049 = vst.msk [vmem:[#allocation5 + $0xf] sm:$0x1] %vm993, %v2048
        %2050 = vst.msk [vmem:[#allocation2] sm:$0xff] %vm434, %v2023
        %2051 = vst.msk [vmem:[#allocation2 + $0x8] sm:$0xff] %vm434, %v2024
        %v2052 = vld [vmem:[#allocation5] sm:$0xff]
        %v2053 = vld [vmem:[#allocation5 + $0x8] sm:$0xff]
        %v2054 = vld [vmem:[%s8] sm:$0x1]
        %v2056 = vperm.slane %v2054, 0
        %v2058 = vmul.f32 %v513, %v2056
        %v2059 = vmul.f32 %v514, %v2056
        %v2060 = vadd.f32 %v2052, %v2058
        %v2061 = vadd.f32 %v2053, %v2059
        %v2062 = vsub.f32 0.0, %v429
        %v2063 = vsub.f32 0.0, %v432
        %v2064 = vmul.f32 %v2062, 1.442695
        %v2065 = vpow.pop %v2064
        %v2066 = vmul.f32 %v2063, 1.442695
        %v2067 = vpow.pop %v2066
        %v2068 = vadd.f32 %v2065, 1.0
        %v2069 = vadd.f32 %v2067, 1.0
        %v2070 = vrcp.pop %v2068
        %v2071 = vmul.f32 %v2068, %v2070
        %v2072 = vsub.f32 1.0, %v2071
        %v2073 = vmul.f32 %v2070, %v2072
        %v2074 = vadd.f32 %v2070, %v2073
        %vm2075 = vweird.f32 %v2068
        %vm2076 = vweird.f32 %v2070
        %vm2077 = vmor %vm2075, %vm2076
        %v2078 = vsel %vm2077, %v2070, %v2074
        %v2079 = vand.u32 2147483647, %v2068
        %vm2080 = vcmp.eq.f32.partialorder %v2079, 8.507059e+37
        %v2081 = vand.u32 %v2068, 2147483648
        %v2082 = vor.u32 1.1754944e-38, %v2081
        %v2083 = vsel %vm2080, %v2082, %v2078
        %v2084 = vmul.f32 1.0, %v2083
        %v2085 = vrcp.pop %v2069
        %v2086 = vmul.f32 %v2069, %v2085
        %v2087 = vsub.f32 1.0, %v2086
        %v2088 = vmul.f32 %v2085, %v2087
        %v2089 = vadd.f32 %v2085, %v2088
        %vm2090 = vweird.f32 %v2069
        %vm2091 = vweird.f32 %v2085
        %vm2092 = vmor %vm2090, %vm2091
        %v2093 = vsel %vm2092, %v2085, %v2089
        %v2094 = vand.u32 2147483647, %v2069
        %vm2095 = vcmp.eq.f32.partialorder %v2094, 8.507059e+37
        %v2096 = vand.u32 %v2069, 2147483648
        %v2097 = vor.u32 1.1754944e-38, %v2096
        %v2098 = vsel %vm2095, %v2097, %v2093
        %v2099 = vmul.f32 1.0, %v2098
        %v2100 = vmul.f32 %v429, %v2084
        %v2101 = vmul.f32 %v432, %v2099
        %2104 = vrot.lane.b32.xlu0 %v2100, 64
        %v2105 = vpop.permute.xlu0 %2104
        %2106 = vrot.lane.b32.xlu0 %v2101, 64
        %v2107 = vpop.permute.xlu0 %2106
        %v2110 = vmul.f32 %v2060, %v2105
        %v2111 = vmul.f32 %v2061, %v2107
        %v2112 = vld [vmem:[%s9] sm:$0xff]
        %v2113 = vld [vmem:[%s9 + $0x8] sm:$0xff]
        %v2114 = vld [vmem:[%s9 + $0x10] sm:$0xff]
        %v2115 = vld [vmem:[%s9 + $0x18] sm:$0xff]
        %v2116 = vld [vmem:[%s9 + $0x20] sm:$0xff]
        %v2117 = vld [vmem:[%s9 + $0x28] sm:$0xff]
        %v2118 = vld [vmem:[%s9 + $0x30] sm:$0xff]
        %v2119 = vld [vmem:[%s9 + $0x38] sm:$0xff]
        %v2121 = vsel %vm434, %v2110, 0
        %v2124 = vsel %vm434, %v2111, 0
        %2126 = vmatpush.msra.mxu0 0.0
        %2127 = vmatpush.msra.mxu0 0.0
        %2128 = vmatpush.msra.mxu0 0.0
        %2129 = vmatpush.msra.mxu0 0.0
        %2130 = vmatpush.msra.mxu0 0.0
        %2131 = vmatpush.msra.mxu0 0.0
        %2132 = vmatpush.msra.mxu0 0.0
        %2133 = vmatpush.msra.mxu0 0.0
        %2134 = vmatpush.msra.mxu0 %v2119
        %2135 = vmatpush.msra.mxu0 %v2118
        %2136 = vmatpush.msra.mxu0 %v2117
        %2137 = vmatpush.msra.mxu0 %v2116
        %2138 = vmatpush.msra.mxu0 %v2115
        %2139 = vmatpush.msra.mxu0 %v2114
        %2140 = vmatpush.msra.mxu0 %v2113
        %2141 = vmatpush.msra.mxu0 %v2112
        %2142 = vmatmul.f32.gmra.mxu0 %v2121
        %v2143 = vpop.f32.mrf.mxu0
        %v2144 = vadd.f32 0.0, %v2143
        %2145 = vmatmul.f32.gmra.mxu0 %v2124
        %v2146 = vpop.f32.mrf.mxu0
        %v2147 = vadd.f32 0.0, %v2146
        %2148 = vdwg.mxu0
        %2149 = vst.msk [vmem:[%s377] sm:$0xff] %vm404, %v2144
        %2150 = vst.msk [vmem:[%s377 + $0x8] sm:$0xff] %vm404, %v2147
        %s2151 = sand.u32 %s263, 1
        %s2152 = scalar_lea.sflag [#allocation10], %s2151
        %s2153 = sand.u32 %s263, 1
        %s2154 = smul.addr %s2153, 16
        %s2155 = scalar_lea.vmem [#allocation9], %s2154
        // Predicated region
        $region65: #{tpu_custom_call.1} parent=59 // pred_check
          %p2156 = pneg %p273
        $region66: #{tpu_custom_call.1} parent=59 // pred_check_branch
          %2158 = sbr.rel (%p2156) target = $region68
        $region67: #{tpu_custom_call.1} parent=59 // pred_region
          %s2159 = smul.u32 2, %s29
          %2161 = vsyncadd %s2152, 0
          %s2162 = smul.addr %s28, 4
          %s2163 = sadd.s32 %s2159, %s2162
          %s2164 = smul.addr %s2163, 8
          %s2165 = scalar_lea.hbm %s10, %s2164
          %s2166 = sshll.u32 %s2155, 4
          %s2167 = int_to_ptr.vmem [resolvable:$true] %s2166
          %s2168 = sshll.u32 %s2165, 4
          %s2169 = int_to_ptr.hbm [resolvable:$true] %s2168
          %2174 = dma.vmem_to_hbm [thread:$0]  %s2167, 256, %s2169, %s2152, 128, 128, 8
        $region68: #{tpu_custom_call.1} parent=59 // pred_fallthru
          _
      $region60: #{tpu_custom_call.1} parent=5 // pred_fallthru
        _
      %p2175 = scmp.le.s32.totalorder 2, %s19
      // Predicated region
      $region69: #{tpu_custom_call.1} parent=5 // pred_check
        %p2176 = pneg %p2175
      $region70: #{tpu_custom_call.1} parent=5 // pred_check_branch
        %2178 = sbr.rel (%p2176) target = $region72
      $region71: #{tpu_custom_call.1} parent=5 // pred_region
        %s2179 = ssub.s32 %s19, 2
        // Predicated region
        $region73: #{tpu_custom_call.1} parent=71 // pred_check
          %p2180 = pneg %p279
        $region74: #{tpu_custom_call.1} parent=71 // pred_check_branch
          %2182 = sbr.rel (%p2180) target = $region76
        $region75: #{tpu_custom_call.1} parent=71 // pred_region
          %s2183 = sand.u32 %s264, 1
          %s2184 = scalar_lea.sflag [#allocation10], %s2183
          %s2185 = sand.u32 %s264, 1
          %s2186 = smul.addr %s2185, 16
          %s2187 = scalar_lea.vmem [#allocation9], %s2186
          %2189 = dma.done %s2184, 256
        $region76: #{tpu_custom_call.1} parent=71 // pred_fallthru
          _
      $region72: #{tpu_custom_call.1} parent=5 // pred_fallthru
        _
    $region6: #{tpu_custom_call.1} parent=1 // loop_footer
      %s23 = sadd.s32 1, %s19
    $region7: #{tpu_custom_call.1} parent=1 // loop_footer_branch
      %18 = sbr.rel target = $region3
    $region8: #{tpu_custom_call.1} parent=1 // loop_exit
      _
    %2190 = vsyncpa [#allocation10], 1
    %s2191 = scalar_lea.sflag [#allocation10], 1
    %2192 = vsyncpa %s2191, 1

// kernel: tpu_custom_call.1
$region0: #{tpu_custom_call.1}
  #allocation0 [shape = 'u32[]', space=smem, size = 0x4, offset = 0x4, fixed_abs, tag = 'smem constant byte address 0x4 - core index']
  #allocation1 [shape = 'u32[72,128]{1,0:T(1,128)}', space=vmem, size = 0x9000, scoped, tag = 'internal scratch']
  #allocation2 [shape = 'f32[16,64]{1,0:T(8,128)}', space=vmem, size = 0x2000, scoped, tag = 'scratch operand']
  #allocation3 [shape = 'f32[19,64]{1,0:T(8,128)}', space=vmem, size = 0x3000, scoped, tag = 'scratch operand']
  #allocation4 [shape = 'f32[16,64]{1,0:T(8,128)}', space=vmem, size = 0x2000, scoped, tag = 'scratch operand']
  #allocation5 [shape = 'f32[16,64]{1,0:T(8,128)}', space=vmem, size = 0x2000, scoped, tag = 'scratch operand']
  #allocation6 [shape = 'f32[2,8,16,64]{3,2,1,0:T(8,128)}', space=vmem, size = 0x20000, scoped, tag = 'scratch operand']
  #allocation7 [shape = 'f32[2,8,16,1]{3,2,1,0:T(8,128)}', space=vmem, size = 0x20000, scoped, tag = 'scratch operand']
  #allocation8 [shape = 'f32[2,8,16,1]{3,2,1,0:T(8,128)}', space=vmem, size = 0x20000, scoped, tag = 'scratch operand']
  %s0 = inlined_call_operand.vmem [shape: f32[2,32,32], index: 0, kind: input, shape index: {}]
  %s1 = inlined_call_operand.vmem [shape: f32[32,128], index: 1, kind: input, shape index: {}]
  %s2 = inlined_call_operand.vmem [shape: f32[4,64], index: 2, kind: input, shape index: {}]
  %s3 = inlined_call_operand.vmem [shape: f32[1,64], index: 3, kind: input, shape index: {}]
  %s4 = inlined_call_operand.vmem [shape: f32[64,34], index: 4, kind: input, shape index: {}]
  %s5 = inlined_call_operand.vmem [shape: f32[2,64], index: 5, kind: input, shape index: {}]
  %s6 = inlined_call_operand.vmem [shape: f32[1,64], index: 6, kind: input, shape index: {}]
  %s7 = inlined_call_operand.vmem [shape: f32[16,64], index: 7, kind: input, shape index: {}]
  %s8 = inlined_call_operand.vmem [shape: f32[1,64], index: 8, kind: input, shape index: {}]
  %s9 = inlined_call_operand.vmem [shape: f32[64,32], index: 9, kind: input, shape index: {}]
  %s10 = inlined_call_operand.hbm [shape: f32[2,32,32], index: 10, kind: output, shape index: {}]
  %s11 = sld [smem:[#allocation0]]
  $region77: #{tpu_custom_call.1} parent=0
    _
  %s13 = ssub.s32 1, %s11
  %s14 = scalar_select 0, %s13, %s11
  $region1: #{tpu_custom_call.1} parent=0
    #allocation9 [shape = 'u8[16384]{0}', space=vmem, size = 0x4000, scoped, tag = 'output window, operand 0']
    #allocation10 [shape = 's32[2]{0}', space=sflag, size = 0x8, scoped, tag = 'scoped memory for tpu_custom_call.1']
    %15 = vsyncpa [#allocation10], 0
    %s16 = scalar_lea.sflag [#allocation10], 1
    %17 = vsyncpa %s16, 0
    loop: start=0, step=1, limit=6
    $region2: #{tpu_custom_call.1} parent=1 // loop_pre_header
      _
    $region3: #{tpu_custom_call.1} parent=1 // loop_header
      %s19 = sphi 0, %s23
      %p20 = scmp.ge.s32.totalorder %s19, 6
      %s26 = sphi 0, %s38
      %s27 = sphi 0, %s34
      %s28 = sphi 0, %s26
      %s29 = sphi 0, %s27
      %s30 = sphi 0, %s28
      %s31 = sphi 0, %s29
      %s43 = sphi 0, %s45
      %s46 = sphi 0, %s43
      %s47 = sphi 0, %s46
      %s63 = sphi 0, %s47
      %s67 = sphi 0, %s67
      %s69 = sphi 0, %s67
      %s70 = sphi 0, %s69
      %s84 = sphi 0, %s70
      %s88 = sphi 0, %s88
      %s90 = sphi 0, %s88
      %s91 = sphi 0, %s90
      %s105 = sphi 0, %s91
      %s109 = sphi 0, %s109
      %s111 = sphi 0, %s109
      %s112 = sphi 0, %s111
      %s126 = sphi 0, %s112
      %s130 = sphi 0, %s130
      %s132 = sphi 0, %s130
      %s133 = sphi 0, %s132
      %s147 = sphi 0, %s133
      %s151 = sphi 0, %s151
      %s153 = sphi 0, %s151
      %s154 = sphi 0, %s153
      %s168 = sphi 0, %s154
      %s172 = sphi 0, %s172
      %s174 = sphi 0, %s172
      %s175 = sphi 0, %s174
      %s189 = sphi 0, %s175
      %s193 = sphi 0, %s193
      %s195 = sphi 0, %s193
      %s196 = sphi 0, %s195
      %s210 = sphi 0, %s196
      %s214 = sphi 0, %s214
      %s216 = sphi 0, %s214
      %s217 = sphi 0, %s216
      %s231 = sphi 0, %s217
      %s235 = sphi 0, %s235
      %s237 = sphi 0, %s235
      %s238 = sphi 0, %s237
      %s252 = sphi 0, %s238
      %s260 = sphi 0, %s262
      %s263 = sphi 0, %s260
      %s264 = sphi 0, %s263
      %s280 = sphi 0, %s264
    $region4: #{tpu_custom_call.1} parent=1 // loop_header_branch
      %22 = sbr.rel (%p20) target = $region8
    $region5: #{tpu_custom_call.1} parent=1 // loop_body
      %s24 = ssub.s32 %s19, 1
      %s25 = ssub.s32 %s19, 2
      %s32 = sadd.s32 1, %s27
      %p33 = scmp.ge.s32.totalorder %s32, 2
      %s34 = scalar_select %p33, 0, %s32
      %s35 = sadd.s32 1, %s26
      %s36 = scalar_select %p33, %s35, %s26
      %p37 = scmp.ge.s32.totalorder %s36, 2
      %s38 = scalar_select %p37, 0, %s36
      %s39 = ssub.s32 %s26, %s38
      %s40 = ssub.s32 %s27, %s34
      %s41 = sor.u32 %s39, %s40
      %p42 = scmp.eq.s32.totalorder %s41, 0
      %s44 = sadd.s32 %s43, 1
      %s45 = scalar_select %p42, %s43, %s44
      %p48 = pneg %p42
      %p49 = scmp.eq.s32.totalorder %s19, 3
      %p50 = por %p48, %p49
      %p51 = scmp.ne.s32.totalorder %s43, %s46
      %p52 = scmp.eq.s32.totalorder %s19, 0
      %p53 = por %p51, %p52
      %p54 = scmp.ne.s32.totalorder %s43, %s46
      %p55 = scmp.eq.s32.totalorder %s24, 3
      %p56 = por %p54, %p55
      %p57 = scmp.ne.s32.totalorder %s46, %s47
      %p58 = scmp.eq.s32.totalorder %s24, 0
      %p59 = por %p57, %p58
      %p60 = scmp.ne.s32.totalorder %s46, %s47
      %p61 = scmp.eq.s32.totalorder %s25, 3
      %p62 = por %p60, %p61
      %p64 = scmp.ne.s32.totalorder %s47, %s63
      %p65 = scmp.eq.s32.totalorder %s25, 0
      %p66 = por %p64, %p65
      %s68 = sadd.s32 %s67, 1
      %p71 = scmp.eq.s32.totalorder %s19, 3
      %p72 = scmp.ne.s32.totalorder %s67, %s69
      %p73 = scmp.eq.s32.totalorder %s19, 0
      %p74 = por %p72, %p73
      %p75 = scmp.ne.s32.totalorder %s67, %s69
      %p76 = scmp.eq.s32.totalorder %s24, 3
      %p77 = por %p75, %p76
      %p78 = scmp.ne.s32.totalorder %s69, %s70
      %p79 = scmp.eq.s32.totalorder %s24, 0
      %p80 = por %p78, %p79
      %p81 = scmp.ne.s32.totalorder %s69, %s70
      %p82 = scmp.eq.s32.totalorder %s25, 3
      %p83 = por %p81, %p82
      %p85 = scmp.ne.s32.totalorder %s70, %s84
      %p86 = scmp.eq.s32.totalorder %s25, 0
      %p87 = por %p85, %p86
      %s89 = sadd.s32 %s88, 1
      %p92 = scmp.eq.s32.totalorder %s19, 3
      %p93 = scmp.ne.s32.totalorder %s88, %s90
      %p94 = scmp.eq.s32.totalorder %s19, 0
      %p95 = por %p93, %p94
      %p96 = scmp.ne.s32.totalorder %s88, %s90
      %p97 = scmp.eq.s32.totalorder %s24, 3
      %p98 = por %p96, %p97
      %p99 = scmp.ne.s32.totalorder %s90, %s91
      %p100 = scmp.eq.s32.totalorder %s24, 0
      %p101 = por %p99, %p100
      %p102 = scmp.ne.s32.totalorder %s90, %s91
      %p103 = scmp.eq.s32.totalorder %s25, 3
      %p104 = por %p102, %p103
      %p106 = scmp.ne.s32.totalorder %s91, %s105
      %p107 = scmp.eq.s32.totalorder %s25, 0
      %p108 = por %p106, %p107
      %s110 = sadd.s32 %s109, 1
      %p113 = scmp.eq.s32.totalorder %s19, 3
      %p114 = scmp.ne.s32.totalorder %s109, %s111
      %p115 = scmp.eq.s32.totalorder %s19, 0
      %p116 = por %p114, %p115
      %p117 = scmp.ne.s32.totalorder %s109, %s111
      %p118 = scmp.eq.s32.totalorder %s24, 3
      %p119 = por %p117, %p118
      %p120 = scmp.ne.s32.totalorder %s111, %s112
      %p121 = scmp.eq.s32.totalorder %s24, 0
      %p122 = por %p120, %p121
      %p123 = scmp.ne.s32.totalorder %s111, %s112
      %p124 = scmp.eq.s32.totalorder %s25, 3
      %p125 = por %p123, %p124
      %p127 = scmp.ne.s32.totalorder %s112, %s126
      %p128 = scmp.eq.s32.totalorder %s25, 0
      %p129 = por %p127, %p128
      %s131 = sadd.s32 %s130, 1
      %p134 = scmp.eq.s32.totalorder %s19, 3
      %p135 = scmp.ne.s32.totalorder %s130, %s132
      %p136 = scmp.eq.s32.totalorder %s19, 0
      %p137 = por %p135, %p136
      %p138 = scmp.ne.s32.totalorder %s130, %s132
      %p139 = scmp.eq.s32.totalorder %s24, 3
      %p140 = por %p138, %p139
      %p141 = scmp.ne.s32.totalorder %s132, %s133
      %p142 = scmp.eq.s32.totalorder %s24, 0
      %p143 = por %p141, %p142
      %p144 = scmp.ne.s32.totalorder %s132, %s133
      %p145 = scmp.eq.s32.totalorder %s25, 3
      %p146 = por %p144, %p145
      %p148 = scmp.ne.s32.totalorder %s133, %s147
      %p149 = scmp.eq.s32.totalorder %s25, 0
      %p150 = por %p148, %p149
      %s152 = sadd.s32 %s151, 1
      %p155 = scmp.eq.s32.totalorder %s19, 3
      %p156 = scmp.ne.s32.totalorder %s151, %s153
      %p157 = scmp.eq.s32.totalorder %s19, 0
      %p158 = por %p156, %p157
      %p159 = scmp.ne.s32.totalorder %s151, %s153
      %p160 = scmp.eq.s32.totalorder %s24, 3
      %p161 = por %p159, %p160
      %p162 = scmp.ne.s32.totalorder %s153, %s154
      %p163 = scmp.eq.s32.totalorder %s24, 0
      %p164 = por %p162, %p163
      %p165 = scmp.ne.s32.totalorder %s153, %s154
      %p166 = scmp.eq.s32.totalorder %s25, 3
      %p167 = por %p165, %p166
      %p169 = scmp.ne.s32.totalorder %s154, %s168
      %p170 = scmp.eq.s32.totalorder %s25, 0
      %p171 = por %p169, %p170
      %s173 = sadd.s32 %s172, 1
      %p176 = scmp.eq.s32.totalorder %s19, 3
      %p177 = scmp.ne.s32.totalorder %s172, %s174
      %p178 = scmp.eq.s32.totalorder %s19, 0
      %p179 = por %p177, %p178
      %p180 = scmp.ne.s32.totalorder %s172, %s174
      %p181 = scmp.eq.s32.totalorder %s24, 3
      %p182 = por %p180, %p181
      %p183 = scmp.ne.s32.totalorder %s174, %s175
      %p184 = scmp.eq.s32.totalorder %s24, 0
      %p185 = por %p183, %p184
      %p186 = scmp.ne.s32.totalorder %s174, %s175
      %p187 = scmp.eq.s32.totalorder %s25, 3
      %p188 = por %p186, %p187
      %p190 = scmp.ne.s32.totalorder %s175, %s189
      %p191 = scmp.eq.s32.totalorder %s25, 0
      %p192 = por %p190, %p191
      %s194 = sadd.s32 %s193, 1
      %p197 = scmp.eq.s32.totalorder %s19, 3
      %p198 = scmp.ne.s32.totalorder %s193, %s195
      %p199 = scmp.eq.s32.totalorder %s19, 0
      %p200 = por %p198, %p199
      %p201 = scmp.ne.s32.totalorder %s193, %s195
      %p202 = scmp.eq.s32.totalorder %s24, 3
      %p203 = por %p201, %p202
      %p204 = scmp.ne.s32.totalorder %s195, %s196
      %p205 = scmp.eq.s32.totalorder %s24, 0
      %p206 = por %p204, %p205
      %p207 = scmp.ne.s32.totalorder %s195, %s196
      %p208 = scmp.eq.s32.totalorder %s25, 3
      %p209 = por %p207, %p208
      %p211 = scmp.ne.s32.totalorder %s196, %s210
      %p212 = scmp.eq.s32.totalorder %s25, 0
      %p213 = por %p211, %p212
      %s215 = sadd.s32 %s214, 1
      %p218 = scmp.eq.s32.totalorder %s19, 3
      %p219 = scmp.ne.s32.totalorder %s214, %s216
      %p220 = scmp.eq.s32.totalorder %s19, 0
      %p221 = por %p219, %p220
      %p222 = scmp.ne.s32.totalorder %s214, %s216
      %p223 = scmp.eq.s32.totalorder %s24, 3
      %p224 = por %p222, %p223
      %p225 = scmp.ne.s32.totalorder %s216, %s217
      %p226 = scmp.eq.s32.totalorder %s24, 0
      %p227 = por %p225, %p226
      %p228 = scmp.ne.s32.totalorder %s216, %s217
      %p229 = scmp.eq.s32.totalorder %s25, 3
      %p230 = por %p228, %p229
      %p232 = scmp.ne.s32.totalorder %s217, %s231
      %p233 = scmp.eq.s32.totalorder %s25, 0
      %p234 = por %p232, %p233
      %s236 = sadd.s32 %s235, 1
      %p239 = scmp.eq.s32.totalorder %s19, 3
      %p240 = scmp.ne.s32.totalorder %s235, %s237
      %p241 = scmp.eq.s32.totalorder %s19, 0
      %p242 = por %p240, %p241
      %p243 = scmp.ne.s32.totalorder %s235, %s237
      %p244 = scmp.eq.s32.totalorder %s24, 3
      %p245 = por %p243, %p244
      %p246 = scmp.ne.s32.totalorder %s237, %s238
      %p247 = scmp.eq.s32.totalorder %s24, 0
      %p248 = por %p246, %p247
      %p249 = scmp.ne.s32.totalorder %s237, %s238
      %p250 = scmp.eq.s32.totalorder %s25, 3
      %p251 = por %p249, %p250
      %p253 = scmp.ne.s32.totalorder %s238, %s252
      %p254 = scmp.eq.s32.totalorder %s25, 0
      %p255 = por %p253, %p254
      %s256 = ssub.s32 %s26, %s38
      %s257 = ssub.s32 %s27, %s34
      %s258 = sor.u32 %s256, %s257
      %p259 = scmp.eq.s32.totalorder %s258, 0
      %s261 = sadd.s32 %s260, 1
      %s262 = scalar_select %p259, %s260, %s261
      %p265 = pneg %p259
      %p266 = scmp.eq.s32.totalorder %s19, 3
      %p267 = por %p265, %p266
      %p268 = scmp.ne.s32.totalorder %s260, %s263
      %p269 = scmp.eq.s32.totalorder %s19, 0
      %p270 = por %p268, %p269
      %p271 = scmp.ne.s32.totalorder %s260, %s263
      %p272 = scmp.eq.s32.totalorder %s24, 3
      %p273 = por %p271, %p272
      %p274 = scmp.ne.s32.totalorder %s263, %s264
      %p275 = scmp.eq.s32.totalorder %s24, 0
      %p276 = por %p274, %p275
      %p277 = scmp.ne.s32.totalorder %s263, %s264
      %p278 = scmp.eq.s32.totalorder %s25, 3
      %p279 = por %p277, %p278
      %p281 = scmp.ne.s32.totalorder %s264, %s280
      %p282 = scmp.eq.s32.totalorder %s25, 0
      %p283 = por %p281, %p282
      %p284 = scmp.le.s32.totalorder 1, %s19
      %p285 = scmp.lt.s32.totalorder %s19, 5
      %p286 = pnand %p284, %p285
      %p287 = pneg %p286
      // Predicated region
      $region9: #{tpu_custom_call.1} parent=5 // pred_check
        _
      $region10: #{tpu_custom_call.1} parent=5 // pred_check_branch
        %289 = sbr.rel (%p286) target = $region12
      $region11: #{tpu_custom_call.1} parent=5 // pred_region
        %s290 = ssub.s32 %s19, 1
        // Predicated region
        $region13: #{tpu_custom_call.1} parent=11 // pred_check
          %p291 = pneg %p80
        $region14: #{tpu_custom_call.1} parent=11 // pred_check_branch
          %293 = sbr.rel (%p291) target = $region16
        $region15: #{tpu_custom_call.1} parent=11 // pred_region
          _
        $region16: #{tpu_custom_call.1} parent=11 // pred_fallthru
          _
        // Predicated region
        $region17: #{tpu_custom_call.1} parent=11 // pred_check
          %p294 = pneg %p101
        $region18: #{tpu_custom_call.1} parent=11 // pred_check_branch
          %296 = sbr.rel (%p294) target = $region20
        $region19: #{tpu_custom_call.1} parent=11 // pred_region
          _
        $region20: #{tpu_custom_call.1} parent=11 // pred_fallthru
          _
        // Predicated region
        $region21: #{tpu_custom_call.1} parent=11 // pred_check
          %p297 = pneg %p122
        $region22: #{tpu_custom_call.1} parent=11 // pred_check_branch
          %299 = sbr.rel (%p297) target = $region24
        $region23: #{tpu_custom_call.1} parent=11 // pred_region
          _
        $region24: #{tpu_custom_call.1} parent=11 // pred_fallthru
          _
        // Predicated region
        $region25: #{tpu_custom_call.1} parent=11 // pred_check
          %p300 = pneg %p143
        $region26: #{tpu_custom_call.1} parent=11 // pred_check_branch
          %302 = sbr.rel (%p300) target = $region28
        $region27: #{tpu_custom_call.1} parent=11 // pred_region
          _
        $region28: #{tpu_custom_call.1} parent=11 // pred_fallthru
          _
        // Predicated region
        $region29: #{tpu_custom_call.1} parent=11 // pred_check
          %p303 = pneg %p164
        $region30: #{tpu_custom_call.1} parent=11 // pred_check_branch
          %305 = sbr.rel (%p303) target = $region32
        $region31: #{tpu_custom_call.1} parent=11 // pred_region
          _
        $region32: #{tpu_custom_call.1} parent=11 // pred_fallthru
          _
        // Predicated region
        $region33: #{tpu_custom_call.1} parent=11 // pred_check
          %p306 = pneg %p185
        $region34: #{tpu_custom_call.1} parent=11 // pred_check_branch
          %308 = sbr.rel (%p306) target = $region36
        $region35: #{tpu_custom_call.1} parent=11 // pred_region
          _
        $region36: #{tpu_custom_call.1} parent=11 // pred_fallthru
          _
        // Predicated region
        $region37: #{tpu_custom_call.1} parent=11 // pred_check
          %p309 = pneg %p206
        $region38: #{tpu_custom_call.1} parent=11 // pred_check_branch
          %311 = sbr.rel (%p309) target = $region40
        $region39: #{tpu_custom_call.1} parent=11 // pred_region
          _
        $region40: #{tpu_custom_call.1} parent=11 // pred_fallthru
          _
        // Predicated region
        $region41: #{tpu_custom_call.1} parent=11 // pred_check
          %p312 = pneg %p227
        $region42: #{tpu_custom_call.1} parent=11 // pred_check_branch
          %314 = sbr.rel (%p312) target = $region44
        $region43: #{tpu_custom_call.1} parent=11 // pred_region
          _
        $region44: #{tpu_custom_call.1} parent=11 // pred_fallthru
          _
        // Predicated region
        $region45: #{tpu_custom_call.1} parent=11 // pred_check
          %p315 = pneg %p248
        $region46: #{tpu_custom_call.1} parent=11 // pred_check_branch
          %317 = sbr.rel (%p315) target = $region48
        $region47: #{tpu_custom_call.1} parent=11 // pred_region
          _
        $region48: #{tpu_custom_call.1} parent=11 // pred_fallthru
          _
      $region12: #{tpu_custom_call.1} parent=5 // pred_fallthru
        _
      %p318 = scmp.lt.s32.totalorder %s19, 4
      // Predicated region
      $region49: #{tpu_custom_call.1} parent=5 // pred_check
        %p319 = pneg %p318
      $region50: #{tpu_custom_call.1} parent=5 // pred_check_branch
        %321 = sbr.rel (%p319) target = $region52
      $region51: #{tpu_custom_call.1} parent=5 // pred_region
        // Predicated region
        $region53: #{tpu_custom_call.1} parent=51 // pred_check
          %p322 = pneg %p53
        $region54: #{tpu_custom_call.1} parent=51 // pred_check_branch
          %324 = sbr.rel (%p322) target = $region56
        $region55: #{tpu_custom_call.1} parent=51 // pred_region
          %s325 = smul.u32 2, %s27
          %p326 = scmp.lt.s32.totalorder %s26, 1
          %s327 = scalar_select %p326, %s26, 1
          %p328 = scmp.lt.s32.totalorder %s325, 3
          %s329 = scalar_select %p328, %s325, 3
          %s330 = smul.addr %s327, 4
          %s331 = sadd.s32 %s329, %s330
          %s332 = smul.addr %s331, 8
          %s333 = scalar_lea.vmem %s0, %s332
          %s334 = smul.u32 2, %s27
        $region56: #{tpu_custom_call.1} parent=51 // pred_fallthru
          _
      $region52: #{tpu_custom_call.1} parent=5 // pred_fallthru
        _
      %p335 = scmp.le.s32.totalorder 1, %s19
      %p336 = scmp.lt.s32.totalorder %s19, 5
      %p337 = pnand %p335, %p336
      %p338 = pneg %p337
      // Predicated region
      $region57: #{tpu_custom_call.1} parent=5 // pred_check
        _
      $region58: #{tpu_custom_call.1} parent=5 // pred_check_branch
        %340 = sbr.rel (%p337) target = $region60
      $region59: #{tpu_custom_call.1} parent=5 // pred_region
        %s341 = ssub.s32 %s19, 1
        %s342 = smul.u32 2, %s29
        %p343 = scmp.lt.s32.totalorder %s28, 1
        %s344 = scalar_select %p343, %s28, 1
        %p345 = scmp.lt.s32.totalorder %s342, 3
        %s346 = scalar_select %p345, %s342, 3
        %s347 = smul.addr %s344, 4
        %s348 = sadd.s32 %s346, %s347
        %s349 = smul.addr %s348, 8
        %s350 = scalar_lea.vmem %s0, %s349
        %p351 = pneg %p59
        %p352 = pneg %p56
        %p353 = pneg %p80
        %p354 = pneg %p77
        %p355 = pneg %p101
        %p356 = pneg %p98
        %p357 = pneg %p122
        %p358 = pneg %p119
        %p359 = pneg %p143
        %p360 = pneg %p140
        %p361 = pneg %p164
        %p362 = pneg %p161
        %p363 = pneg %p185
        %p364 = pneg %p182
        %p365 = pneg %p206
        %p366 = pneg %p203
        %p367 = pneg %p227
        %p368 = pneg %p224
        %p369 = pneg %p248
        %p370 = pneg %p245
        %p371 = pneg %p276
        %p372 = pneg %p273
        %s373 = sand.u32 %s263, 1
        %s374 = scalar_lea.sflag [#allocation10], %s373
        %s375 = sand.u32 %s263, 1
        %s376 = smul.addr %s375, 16
        %s377 = scalar_lea.vmem [#allocation9], %s376
        %s378 = smul.u32 2, %s29
        %p379 = scmp.lt.s32.totalorder %s28, 1
        %s380 = scalar_select %p379, %s28, 1
        %p381 = scmp.lt.s32.totalorder %s378, 3
        %s382 = scalar_select %p381, %s378, 3
        %s383 = smul.addr %s380, 4
        %s384 = sadd.s32 %s382, %s383
        %s385 = smul.addr %s384, 8
        %s386 = scalar_lea.vmem %s0, %s385
        %s387 = smul.u32 2, %s29
        %s388 = smul.u32 2, %s29
        %p389 = scmp.eq.s32.totalorder %s29, 0
        // Predicated region
        $region61: #{tpu_custom_call.1} parent=59 // pred_check
          %p390 = pneg %p389
        $region62: #{tpu_custom_call.1} parent=59 // pred_check_branch
          %392 = sbr.rel (%p390) target = $region64
        $region63: #{tpu_custom_call.1} parent=59 // pred_region
          %vm393 = vcmask 523264
          %394 = vst.msk [vmem:[#allocation2] sm:$0xff] %vm393, 0.0
          %395 = vst.msk [vmem:[#allocation2 + $0x8] sm:$0xff] %vm393, 0.0
          %vm396 = vcmask 518144
          %397 = vst.msk [vmem:[#allocation3] sm:$0x7] %vm396, 0.0
        $region64: #{tpu_custom_call.1} parent=59 // pred_fallthru
          _
        %v398 = vld [vmem:[%s386] sm:$0xff]
        %v399 = vld [vmem:[%s386 + $0x8] sm:$0xff]
        %v400 = vld [vmem:[%s1] sm:$0xff]
        %v401 = vld [vmem:[%s1 + $0x8] sm:$0xff]
        %v402 = vld [vmem:[%s1 + $0x10] sm:$0xff]
        %v403 = vld [vmem:[%s1 + $0x18] sm:$0xff]
        %vm404 = vcmask 261120
        %v406 = vsel %vm404, %v398, 0
        %v409 = vsel %vm404, %v399, 0
        %411 = vmatpush.msra.mxu0 0.0
        %412 = vmatpush.msra.mxu0 0.0
        %413 = vmatpush.msra.mxu0 0.0
        %414 = vmatpush.msra.mxu0 0.0
        %415 = vmatpush.msra.mxu0 0.0
        %416 = vmatpush.msra.mxu0 0.0
        %417 = vmatpush.msra.mxu0 0.0
        %418 = vmatpush.msra.mxu0 0.0
        %419 = vmatpush.msra.mxu0 0.0
        %420 = vmatpush.msra.mxu0 0.0
        %421 = vmatpush.msra.mxu0 0.0
        %422 = vmatpush.msra.mxu0 0.0
        %423 = vmatpush.msra.mxu0 %v403
        %424 = vmatpush.msra.mxu0 %v402
        %425 = vmatpush.msra.mxu0 %v401
        %426 = vmatpush.msra.mxu0 %v400
        %427 = vmatmul.f32.gmra.mxu0 %v406
        %v428 = vpop.f32.mrf.mxu0
        %v429 = vadd.f32 0.0, %v428
        %430 = vmatmul.f32.gmra.mxu0 %v409
        %v431 = vpop.f32.mrf.mxu0
        %v432 = vadd.f32 0.0, %v431
        %433 = vdwg.mxu0
        %vm434 = vcmask 523264
        %435 = vst.msk [vmem:[#allocation3 + $0x3] sm:$0xff] %vm434, %v429
        %436 = vst.msk [vmem:[#allocation3 + $0xb] sm:$0xff] %vm434, %v432
        %v437 = vld [vmem:[%s3] sm:$0x1]
        %v438 = vld [vmem:[%s2] sm:$0x1]
        %v439 = vld [vmem:[#allocation3] sm:$0xff]
        %v440 = vld [vmem:[#allocation3 + $0x8] sm:$0xff]
        %v441 = vperm.slane %v438, 0
        %v442 = vmul.f32 %v441, %v439
        %v443 = vmul.f32 %v441, %v440
        %v445 = vperm.slane %v437, 0
        %v447 = vadd.f32 %v445, %v442
        %v448 = vadd.f32 %v445, %v443
        %v449 = vld [vmem:[%s2 + $0x1] sm:$0x1]
        %v450 = vld [vmem:[#allocation3 + $0x1] sm:$0xff]
        %v451 = vld [vmem:[#allocation3 + $0x9] sm:$0xff]
        %v452 = vperm.slane %v449, 0
        %v453 = vmul.f32 %v452, %v450
        %v454 = vmul.f32 %v452, %v451
        %v455 = vadd.f32 %v447, %v453
        %v456 = vadd.f32 %v448, %v454
        %v457 = vld [vmem:[%s2 + $0x2] sm:$0x1]
        %v458 = vld [vmem:[#allocation3 + $0x2] sm:$0xff]
        %v459 = vld [vmem:[#allocation3 + $0xa] sm:$0xff]
        %v460 = vperm.slane %v457, 0
        %v461 = vmul.f32 %v460, %v458
        %v462 = vmul.f32 %v460, %v459
        %v463 = vadd.f32 %v455, %v461
        %v464 = vadd.f32 %v456, %v462
        %v465 = vld [vmem:[%s2 + $0x3] sm:$0x1]
        %v466 = vld [vmem:[#allocation3 + $0x3] sm:$0xff]
        %v467 = vld [vmem:[#allocation3 + $0xb] sm:$0xff]
        %v468 = vperm.slane %v465, 0
        %v469 = vmul.f32 %v468, %v466
        %v470 = vmul.f32 %v468, %v467
        %v471 = vadd.f32 %v463, %v469
        %v472 = vadd.f32 %v464, %v470
        %vm473 = vcmask 523269
        %474 = vst.msk [vmem:[#allocation3 - $0x5] sm:$0xe0] %vm473, %v432
        %v475 = vsub.f32 0.0, %v471
        %v476 = vsub.f32 0.0, %v472
        %v477 = vmul.f32 %v475, 1.442695
        %v478 = vpow.pop %v477
        %v479 = vmul.f32 %v476, 1.442695
        %v480 = vpow.pop %v479
        %v481 = vadd.f32 %v478, 1.0
        %v482 = vadd.f32 %v480, 1.0
        %v483 = vrcp.pop %v481
        %v484 = vmul.f32 %v481, %v483
        %v485 = vsub.f32 1.0, %v484
        %v486 = vmul.f32 %v483, %v485
        %v487 = vadd.f32 %v483, %v486
        %vm488 = vweird.f32 %v481
        %vm489 = vweird.f32 %v483
        %vm490 = vmor %vm488, %vm489
        %v491 = vsel %vm490, %v483, %v487
        %v492 = vand.u32 2147483647, %v481
        %vm493 = vcmp.eq.f32.partialorder %v492, 8.507059e+37
        %v494 = vand.u32 %v481, 2147483648
        %v495 = vor.u32 1.1754944e-38, %v494
        %v496 = vsel %vm493, %v495, %v491
        %v497 = vmul.f32 1.0, %v496
        %v498 = vrcp.pop %v482
        %v499 = vmul.f32 %v482, %v498
        %v500 = vsub.f32 1.0, %v499
        %v501 = vmul.f32 %v498, %v500
        %v502 = vadd.f32 %v498, %v501
        %vm503 = vweird.f32 %v482
        %vm504 = vweird.f32 %v498
        %vm505 = vmor %vm503, %vm504
        %v506 = vsel %vm505, %v498, %v502
        %v507 = vand.u32 2147483647, %v482
        %vm508 = vcmp.eq.f32.partialorder %v507, 8.507059e+37
        %v509 = vand.u32 %v482, 2147483648
        %v510 = vor.u32 1.1754944e-38, %v509
        %v511 = vsel %vm508, %v510, %v506
        %v512 = vmul.f32 1.0, %v511
        %v513 = vmul.f32 %v471, %v497
        %v514 = vmul.f32 %v472, %v512
        %v515 = vld [vmem:[%s4] sm:$0xff]
        %v516 = vld [vmem:[%s4 + $0x8] sm:$0xff]
        %v517 = vld [vmem:[%s4 + $0x10] sm:$0xff]
        %v518 = vld [vmem:[%s4 + $0x18] sm:$0xff]
        %v519 = vld [vmem:[%s4 + $0x20] sm:$0xff]
        %v520 = vld [vmem:[%s4 + $0x28] sm:$0xff]
        %v521 = vld [vmem:[%s4 + $0x30] sm:$0xff]
        %v522 = vld [vmem:[%s4 + $0x38] sm:$0xff]
        %v524 = vsel %vm434, %v513, 0
        %v527 = vsel %vm434, %v514, 0
        %529 = vmatpush.msra.mxu0 0.0
        %530 = vmatpush.msra.mxu0 0.0
        %531 = vmatpush.msra.mxu0 0.0
        %532 = vmatpush.msra.mxu0 0.0
        %533 = vmatpush.msra.mxu0 0.0
        %534 = vmatpush.msra.mxu0 0.0
        %535 = vmatpush.msra.mxu0 0.0
        %536 = vmatpush.msra.mxu0 0.0
        %537 = vmatpush.msra.mxu0 %v522
        %538 = vmatpush.msra.mxu0 %v521
        %539 = vmatpush.msra.mxu0 %v520
        %540 = vmatpush.msra.mxu0 %v519
        %541 = vmatpush.msra.mxu0 %v518
        %542 = vmatpush.msra.mxu0 %v517
        %543 = vmatpush.msra.mxu0 %v516
        %544 = vmatpush.msra.mxu0 %v515
        %545 = vmatmul.f32.gmra.mxu0 %v524
        %v546 = vpop.f32.mrf.mxu0
        %v547 = vadd.f32 0.0, %v546
        %548 = vmatmul.f32.gmra.mxu0 %v527
        %v549 = vpop.f32.mrf.mxu0
        %v550 = vadd.f32 0.0, %v549
        %551 = vdwg.mxu0
        %v552 = vld [vmem:[%s5] sm:$0x3]
        %v553 = vld [vmem:[%s6] sm:$0x1]
        %v555 = vperm.slane %v553, 0
        %vm557 = vcmask 15360
        %v559 = vsel %vm557, %v547, 0
        %v562 = vsel %vm557, %v550, 0
        %vm564 = vcmask 1041408
        %v566 = vsel %vm564, %v552, 0
        %568 = vmatpush.msra.mxu0 0.0
        %569 = vmatpush.msra.mxu0 0.0
        %570 = vmatpush.msra.mxu0 0.0
        %571 = vmatpush.msra.mxu0 0.0
        %572 = vmatpush.msra.mxu0 0.0
        %573 = vmatpush.msra.mxu0 0.0
        %574 = vmatpush.msra.mxu0 0.0
        %575 = vmatpush.msra.mxu0 0.0
        %576 = vmatpush.msra.mxu0 0.0
        %577 = vmatpush.msra.mxu0 0.0
        %578 = vmatpush.msra.mxu0 0.0
        %579 = vmatpush.msra.mxu0 0.0
        %580 = vmatpush.msra.mxu0 0.0
        %581 = vmatpush.msra.mxu0 0.0
        %582 = vmatpush.msra.mxu0 0.0
        %583 = vmatpush.msra.mxu0 %v566
        %584 = vmatmul.f32.gmra.mxu0 %v559
        %v585 = vpop.f32.mrf.mxu0
        %v586 = vadd.f32 %v555, %v585
        %587 = vmatmul.f32.gmra.mxu0 %v562
        %v588 = vpop.f32.mrf.mxu0
        %v589 = vadd.f32 %v555, %v588
        %590 = vdwg.mxu0
        %vm591 = vcmp.gt.f32.partialorder %v586, 20.0
        %vm592 = vcmp.gt.f32.partialorder %v589, 20.0
        %v593 = vmin.f32 %v586, 20.0
        %v594 = vmin.f32 %v589, 20.0
        %v595 = vmul.f32 %v593, 1.442695
        %v596 = vpow.pop %v595
        %v597 = vmul.f32 %v594, 1.442695
        %v598 = vpow.pop %v597
        %v599 = vadd.f32 %v596, 1.0
        %v600 = vlog2.pop %v599
        %v601 = vmul.f32 %v600, 0.6931472
        %v602 = vmul.f32 -0.5, %v596
        %v603 = vadd.f32 %v602, 1.0
        %v604 = vmul.f32 %v603, %v596
        %v605 = vand.u32 2147483647, %v596
        %vm606 = vcmp.lt.f32.partialorder %v605, 0.0004427343
        %v607 = vsel %vm606, %v604, %v601
        %v608 = vadd.f32 %v598, 1.0
        %v609 = vlog2.pop %v608
        %v610 = vmul.f32 %v609, 0.6931472
        %v611 = vmul.f32 -0.5, %v598
        %v612 = vadd.f32 %v611, 1.0
        %v613 = vmul.f32 %v612, %v598
        %v614 = vand.u32 2147483647, %v598
        %vm615 = vcmp.lt.f32.partialorder %v614, 0.0004427343
        %v616 = vsel %vm615, %v613, %v610
        %v617 = vsel %vm591, %v586, %v607
        %v618 = vsel %vm592, %v589, %v616
        %v619 = vmul.f32 %v617, %v513
        %v620 = vmul.f32 %v618, %v514
        %621 = vst.msk [vmem:[#allocation4] sm:$0xff] %vm434, %v619
        %622 = vst.msk [vmem:[#allocation4 + $0x8] sm:$0xff] %vm434, %v620
        %v623 = vld [vmem:[%s7] sm:$0xff]
        %v624 = vld [vmem:[%s7 + $0x8] sm:$0xff]
        %v625 = vld [vmem:[#allocation2] sm:$0xff]
        %v626 = vld [vmem:[#allocation2 + $0x8] sm:$0xff]
        %v628 = vrot.slane %v617, 1
        %v629 = vrot.slane %v617, 2
        %v630 = vrot.slane %v617, 3
        %v631 = vrot.slane %v617, 4
        %v632 = vrot.slane %v617, 5
        %v633 = vrot.slane %v617, 6
        %v634 = vrot.slane %v617, 7
        %v635 = vperm.slane %v617, 0
        %v636 = vperm.slane %v628, 0
        %v637 = vperm.slane %v629, 0
        %v638 = vperm.slane %v630, 0
        %v639 = vperm.slane %v631, 0
        %v640 = vperm.slane %v632, 0
        %v641 = vperm.slane %v633, 0
        %v642 = vperm.slane %v634, 0
        %v651 = vmul.f32 %v635, %v623
        %v652 = vmul.f32 %v635, %v624
        %v653 = vmul.f32 %v636, %v623
        %v654 = vmul.f32 %v636, %v624
        %v655 = vmul.f32 %v637, %v623
        %v656 = vmul.f32 %v637, %v624
        %v657 = vmul.f32 %v638, %v623
        %v658 = vmul.f32 %v638, %v624
        %v659 = vmul.f32 %v639, %v623
        %v660 = vmul.f32 %v639, %v624
        %v661 = vmul.f32 %v640, %v623
        %v662 = vmul.f32 %v640, %v624
        %v663 = vmul.f32 %v641, %v623
        %v664 = vmul.f32 %v641, %v624
        %v665 = vmul.f32 %v642, %v623
        %v666 = vmul.f32 %v642, %v624
        %v667 = vmul.f32 %v651, 1.442695
        %v668 = vpow.pop %v667
        %v669 = vmul.f32 %v652, 1.442695
        %v670 = vpow.pop %v669
        %v671 = vmul.f32 %v653, 1.442695
        %v672 = vpow.pop %v671
        %v673 = vmul.f32 %v654, 1.442695
        %v674 = vpow.pop %v673
        %v675 = vmul.f32 %v655, 1.442695
        %v676 = vpow.pop %v675
        %v677 = vmul.f32 %v656, 1.442695
        %v678 = vpow.pop %v677
        %v679 = vmul.f32 %v657, 1.442695
        %v680 = vpow.pop %v679
        %v681 = vmul.f32 %v658, 1.442695
        %v682 = vpow.pop %v681
        %v683 = vmul.f32 %v659, 1.442695
        %v684 = vpow.pop %v683
        %v685 = vmul.f32 %v660, 1.442695
        %v686 = vpow.pop %v685
        %v687 = vmul.f32 %v661, 1.442695
        %v688 = vpow.pop %v687
        %v689 = vmul.f32 %v662, 1.442695
        %v690 = vpow.pop %v689
        %v691 = vmul.f32 %v663, 1.442695
        %v692 = vpow.pop %v691
        %v693 = vmul.f32 %v664, 1.442695
        %v694 = vpow.pop %v693
        %v695 = vmul.f32 %v665, 1.442695
        %v696 = vpow.pop %v695
        %v697 = vmul.f32 %v666, 1.442695
        %v698 = vpow.pop %v697
        %699 = vst.msk [vmem:[#allocation6] sm:$0xff] %vm434, %v668
        %700 = vst.msk [vmem:[#allocation6 + $0x8] sm:$0xff] %vm434, %v670
        %701 = vst.msk [vmem:[#allocation6 + $0x10] sm:$0xff] %vm434, %v672
        %702 = vst.msk [vmem:[#allocation6 + $0x18] sm:$0xff] %vm434, %v674
        %703 = vst.msk [vmem:[#allocation6 + $0x20] sm:$0xff] %vm434, %v676
        %704 = vst.msk [vmem:[#allocation6 + $0x28] sm:$0xff] %vm434, %v678
        %705 = vst.msk [vmem:[#allocation6 + $0x30] sm:$0xff] %vm434, %v680
        %706 = vst.msk [vmem:[#allocation6 + $0x38] sm:$0xff] %vm434, %v682
        %707 = vst.msk [vmem:[#allocation6 + $0x40] sm:$0xff] %vm434, %v684
        %708 = vst.msk [vmem:[#allocation6 + $0x48] sm:$0xff] %vm434, %v686
        %709 = vst.msk [vmem:[#allocation6 + $0x50] sm:$0xff] %vm434, %v688
        %710 = vst.msk [vmem:[#allocation6 + $0x58] sm:$0xff] %vm434, %v690
        %711 = vst.msk [vmem:[#allocation6 + $0x60] sm:$0xff] %vm434, %v692
        %712 = vst.msk [vmem:[#allocation6 + $0x68] sm:$0xff] %vm434, %v694
        %713 = vst.msk [vmem:[#allocation6 + $0x70] sm:$0xff] %vm434, %v696
        %714 = vst.msk [vmem:[#allocation6 + $0x78] sm:$0xff] %vm434, %v698
        %v715 = vperm.slane %v547, 0
        %v716 = vlaneseq
        %v717 = vshrl.u32 %v716, 7
        %v718 = vadd.s32 %v717, 2
        %719 = vset.pattern.permute.xlu0 %v718
        %720 = vperm.xlu0 %719, %v715
        %v721 = vpop.permute.xlu0 %720
        %v722 = vlaneseq
        %v723 = vshrl.u32 %v722, 7
        %v724 = vadd.s32 %v723, 10
        %725 = vset.pattern.permute.xlu0 %v724
        %726 = vperm.xlu0 %725, %v715
        %v727 = vpop.permute.xlu0 %726
        %v728 = vperm.slane %v547, 1
        %v729 = vlaneseq
        %v730 = vshrl.u32 %v729, 7
        %v731 = vadd.s32 %v730, 2
        %732 = vset.pattern.permute.xlu0 %v731
        %733 = vperm.xlu0 %732, %v728
        %v734 = vpop.permute.xlu0 %733
        %v735 = vlaneseq
        %v736 = vshrl.u32 %v735, 7
        %v737 = vadd.s32 %v736, 10
        %738 = vset.pattern.permute.xlu0 %v737
        %739 = vperm.xlu0 %738, %v728
        %v740 = vpop.permute.xlu0 %739
        %v741 = vperm.slane %v547, 2
        %v742 = vlaneseq
        %v743 = vshrl.u32 %v742, 7
        %v744 = vadd.s32 %v743, 2
        %745 = vset.pattern.permute.xlu0 %v744
        %746 = vperm.xlu0 %745, %v741
        %v747 = vpop.permute.xlu0 %746
        %v748 = vlaneseq
        %v749 = vshrl.u32 %v748, 7
        %v750 = vadd.s32 %v749, 10
        %751 = vset.pattern.permute.xlu0 %v750
        %752 = vperm.xlu0 %751, %v741
        %v753 = vpop.permute.xlu0 %752
        %v754 = vperm.slane %v547, 3
        %v755 = vlaneseq
        %v756 = vshrl.u32 %v755, 7
        %v757 = vadd.s32 %v756, 2
        %758 = vset.pattern.permute.xlu0 %v757
        %759 = vperm.xlu0 %758, %v754
        %v760 = vpop.permute.xlu0 %759
        %v761 = vlaneseq
        %v762 = vshrl.u32 %v761, 7
        %v763 = vadd.s32 %v762, 10
        %764 = vset.pattern.permute.xlu0 %v763
        %765 = vperm.xlu0 %764, %v754
        %v766 = vpop.permute.xlu0 %765
        %v767 = vperm.slane %v547, 4
        %v768 = vlaneseq
        %v769 = vshrl.u32 %v768, 7
        %v770 = vadd.s32 %v769, 2
        %771 = vset.pattern.permute.xlu0 %v770
        %772 = vperm.xlu0 %771, %v767
        %v773 = vpop.permute.xlu0 %772
        %v774 = vlaneseq
        %v775 = vshrl.u32 %v774, 7
        %v776 = vadd.s32 %v775, 10
        %777 = vset.pattern.permute.xlu0 %v776
        %778 = vperm.xlu0 %777, %v767
        %v779 = vpop.permute.xlu0 %778
        %v780 = vperm.slane %v547, 5
        %v781 = vlaneseq
        %v782 = vshrl.u32 %v781, 7
        %v783 = vadd.s32 %v782, 2
        %784 = vset.pattern.permute.xlu0 %v783
        %785 = vperm.xlu0 %784, %v780
        %v786 = vpop.permute.xlu0 %785
        %v787 = vlaneseq
        %v788 = vshrl.u32 %v787, 7
        %v789 = vadd.s32 %v788, 10
        %790 = vset.pattern.permute.xlu0 %v789
        %791 = vperm.xlu0 %790, %v780
        %v792 = vpop.permute.xlu0 %791
        %v793 = vperm.slane %v547, 6
        %v794 = vlaneseq
        %v795 = vshrl.u32 %v794, 7
        %v796 = vadd.s32 %v795, 2
        %797 = vset.pattern.permute.xlu0 %v796
        %798 = vperm.xlu0 %797, %v793
        %v799 = vpop.permute.xlu0 %798
        %v800 = vlaneseq
        %v801 = vshrl.u32 %v800, 7
        %v802 = vadd.s32 %v801, 10
        %803 = vset.pattern.permute.xlu0 %v802
        %804 = vperm.xlu0 %803, %v793
        %v805 = vpop.permute.xlu0 %804
        %v806 = vperm.slane %v547, 7
        %v807 = vlaneseq
        %v808 = vshrl.u32 %v807, 7
        %v809 = vadd.s32 %v808, 2
        %810 = vset.pattern.permute.xlu0 %v809
        %811 = vperm.xlu0 %810, %v806
        %v812 = vpop.permute.xlu0 %811
        %v813 = vlaneseq
        %v814 = vshrl.u32 %v813, 7
        %v815 = vadd.s32 %v814, 10
        %816 = vset.pattern.permute.xlu0 %v815
        %817 = vperm.xlu0 %816, %v806
        %v818 = vpop.permute.xlu0 %817
        %vm819 = vcmask 7168
        %820 = vst.msk [vmem:[#allocation7] sm:$0xff] %vm819, %v721
        %821 = vst.msk [vmem:[#allocation7 + $0x8] sm:$0xff] %vm819, %v727
        %822 = vst.msk [vmem:[#allocation7 + $0x10] sm:$0xff] %vm819, %v734
        %823 = vst.msk [vmem:[#allocation7 + $0x18] sm:$0xff] %vm819, %v740
        %824 = vst.msk [vmem:[#allocation7 + $0x20] sm:$0xff] %vm819, %v747
        %825 = vst.msk [vmem:[#allocation7 + $0x28] sm:$0xff] %vm819, %v753
        %826 = vst.msk [vmem:[#allocation7 + $0x30] sm:$0xff] %vm819, %v760
        %827 = vst.msk [vmem:[#allocation7 + $0x38] sm:$0xff] %vm819, %v766
        %828 = vst.msk [vmem:[#allocation7 + $0x40] sm:$0xff] %vm819, %v773
        %829 = vst.msk [vmem:[#allocation7 + $0x48] sm:$0xff] %vm819, %v779
        %830 = vst.msk [vmem:[#allocation7 + $0x50] sm:$0xff] %vm819, %v786
        %831 = vst.msk [vmem:[#allocation7 + $0x58] sm:$0xff] %vm819, %v792
        %832 = vst.msk [vmem:[#allocation7 + $0x60] sm:$0xff] %vm819, %v799
        %833 = vst.msk [vmem:[#allocation7 + $0x68] sm:$0xff] %vm819, %v805
        %834 = vst.msk [vmem:[#allocation7 + $0x70] sm:$0xff] %vm819, %v812
        %835 = vst.msk [vmem:[#allocation7 + $0x78] sm:$0xff] %vm819, %v818
        %v836 = vlaneseq
        %v837 = vshrl.u32 %v836, 7
        %v838 = vadd.s32 %v837, 18
        %839 = vset.pattern.permute.xlu0 %v838
        %840 = vperm.xlu0 %839, %v715
        %v841 = vpop.permute.xlu0 %840
        %v842 = vlaneseq
        %v843 = vshrl.u32 %v842, 7
        %v844 = vadd.s32 %v843, 26
        %845 = vset.pattern.permute.xlu0 %v844
        %846 = vperm.xlu0 %845, %v715
        %v847 = vpop.permute.xlu0 %846
        %v848 = vlaneseq
        %v849 = vshrl.u32 %v848, 7
        %v850 = vadd.s32 %v849, 18
        %851 = vset.pattern.permute.xlu0 %v850
        %852 = vperm.xlu0 %851, %v728
        %v853 = vpop.permute.xlu0 %852
        %v854 = vlaneseq
        %v855 = vshrl.u32 %v854, 7
        %v856 = vadd.s32 %v855, 26
        %857 = vset.pattern.permute.xlu0 %v856
        %858 = vperm.xlu0 %857, %v728
        %v859 = vpop.permute.xlu0 %858
        %v860 = vlaneseq
        %v861 = vshrl.u32 %v860, 7
        %v862 = vadd.s32 %v861, 18
        %863 = vset.pattern.permute.xlu0 %v862
        %864 = vperm.xlu0 %863, %v741
        %v865 = vpop.permute.xlu0 %864
        %v866 = vlaneseq
        %v867 = vshrl.u32 %v866, 7
        %v868 = vadd.s32 %v867, 26
        %869 = vset.pattern.permute.xlu0 %v868
        %870 = vperm.xlu0 %869, %v741
        %v871 = vpop.permute.xlu0 %870
        %v872 = vlaneseq
        %v873 = vshrl.u32 %v872, 7
        %v874 = vadd.s32 %v873, 18
        %875 = vset.pattern.permute.xlu0 %v874
        %876 = vperm.xlu0 %875, %v754
        %v877 = vpop.permute.xlu0 %876
        %v878 = vlaneseq
        %v879 = vshrl.u32 %v878, 7
        %v880 = vadd.s32 %v879, 26
        %881 = vset.pattern.permute.xlu0 %v880
        %882 = vperm.xlu0 %881, %v754
        %v883 = vpop.permute.xlu0 %882
        %v884 = vlaneseq
        %v885 = vshrl.u32 %v884, 7
        %v886 = vadd.s32 %v885, 18
        %887 = vset.pattern.permute.xlu0 %v886
        %888 = vperm.xlu0 %887, %v767
        %v889 = vpop.permute.xlu0 %888
        %v890 = vlaneseq
        %v891 = vshrl.u32 %v890, 7
        %v892 = vadd.s32 %v891, 26
        %893 = vset.pattern.permute.xlu0 %v892
        %894 = vperm.xlu0 %893, %v767
        %v895 = vpop.permute.xlu0 %894
        %v896 = vlaneseq
        %v897 = vshrl.u32 %v896, 7
        %v898 = vadd.s32 %v897, 18
        %899 = vset.pattern.permute.xlu0 %v898
        %900 = vperm.xlu0 %899, %v780
        %v901 = vpop.permute.xlu0 %900
        %v902 = vlaneseq
        %v903 = vshrl.u32 %v902, 7
        %v904 = vadd.s32 %v903, 26
        %905 = vset.pattern.permute.xlu0 %v904
        %906 = vperm.xlu0 %905, %v780
        %v907 = vpop.permute.xlu0 %906
        %v908 = vlaneseq
        %v909 = vshrl.u32 %v908, 7
        %v910 = vadd.s32 %v909, 18
        %911 = vset.pattern.permute.xlu0 %v910
        %912 = vperm.xlu0 %911, %v793
        %v913 = vpop.permute.xlu0 %912
        %v914 = vlaneseq
        %v915 = vshrl.u32 %v914, 7
        %v916 = vadd.s32 %v915, 26
        %917 = vset.pattern.permute.xlu0 %v916
        %918 = vperm.xlu0 %917, %v793
        %v919 = vpop.permute.xlu0 %918
        %v920 = vlaneseq
        %v921 = vshrl.u32 %v920, 7
        %v922 = vadd.s32 %v921, 18
        %923 = vset.pattern.permute.xlu0 %v922
        %924 = vperm.xlu0 %923, %v806
        %v925 = vpop.permute.xlu0 %924
        %v926 = vlaneseq
        %v927 = vshrl.u32 %v926, 7
        %v928 = vadd.s32 %v927, 26
        %929 = vset.pattern.permute.xlu0 %v928
        %930 = vperm.xlu0 %929, %v806
        %v931 = vpop.permute.xlu0 %930
        %932 = vst.msk [vmem:[#allocation8] sm:$0xff] %vm819, %v841
        %933 = vst.msk [vmem:[#allocation8 + $0x8] sm:$0xff] %vm819, %v847
        %934 = vst.msk [vmem:[#allocation8 + $0x10] sm:$0xff] %vm819, %v853
        %935 = vst.msk [vmem:[#allocation8 + $0x18] sm:$0xff] %vm819, %v859
        %936 = vst.msk [vmem:[#allocation8 + $0x20] sm:$0xff] %vm819, %v865
        %937 = vst.msk [vmem:[#allocation8 + $0x28] sm:$0xff] %vm819, %v871
        %938 = vst.msk [vmem:[#allocation8 + $0x30] sm:$0xff] %vm819, %v877
        %939 = vst.msk [vmem:[#allocation8 + $0x38] sm:$0xff] %vm819, %v883
        %940 = vst.msk [vmem:[#allocation8 + $0x40] sm:$0xff] %vm819, %v889
        %941 = vst.msk [vmem:[#allocation8 + $0x48] sm:$0xff] %vm819, %v895
        %942 = vst.msk [vmem:[#allocation8 + $0x50] sm:$0xff] %vm819, %v901
        %943 = vst.msk [vmem:[#allocation8 + $0x58] sm:$0xff] %vm819, %v907
        %944 = vst.msk [vmem:[#allocation8 + $0x60] sm:$0xff] %vm819, %v913
        %945 = vst.msk [vmem:[#allocation8 + $0x68] sm:$0xff] %vm819, %v919
        %946 = vst.msk [vmem:[#allocation8 + $0x70] sm:$0xff] %vm819, %v925
        %947 = vst.msk [vmem:[#allocation8 + $0x78] sm:$0xff] %vm819, %v931
        %v948 = vld [vmem:[#allocation6] sm:$0xff]
        %v949 = vld [vmem:[#allocation6 + $0x8] sm:$0xff]
        %v950 = vmul.f32 %v948, %v625
        %v951 = vmul.f32 %v949, %v626
        %v952 = vld [vmem:[#allocation7] sm:$0xff]
        %v953 = vld [vmem:[#allocation7 + $0x8] sm:$0xff]
        %v954 = vld [vmem:[#allocation4] sm:$0x1]
        %956 = vset.pattern.permute.xlu0 0
        %957 = vperm.xlu0 %956, %v952
        %v958 = vpop.permute.xlu0 %957
        %961 = vset.pattern.permute.xlu0 0
        %962 = vperm.xlu0 %961, %v953
        %v963 = vpop.permute.xlu0 %962
        %v965 = vperm.slane %v954, 0
        %v966 = vmul.f32 %v958, %v965
        %v967 = vmul.f32 %v963, %v965
        %v968 = vadd.f32 %v950, %v966
        %v969 = vadd.f32 %v951, %v967
        %v970 = vld [vmem:[#allocation8] sm:$0xff]
        %v971 = vld [vmem:[#allocation8 + $0x8] sm:$0xff]
        %973 = vset.pattern.permute.xlu0 0
        %974 = vperm.xlu0 %973, %v970
        %v975 = vpop.permute.xlu0 %974
        %978 = vset.pattern.permute.xlu0 0
        %979 = vperm.xlu0 %978, %v971
        %v980 = vpop.permute.xlu0 %979
        %v982 = vmul.f32 %v968, %v975
        %v983 = vmul.f32 %v969, %v980
        %v984 = vsel %vm434, %v982, 0.0
        %v985 = vsel %vm434, %v983, 0.0
        %v986 = vadd.f32 %v984, %v985
        %v987 = vrot.slane %v986, 4
        %v988 = vadd.f32 %v986, %v987
        %v989 = vrot.slane %v988, 2
        %v990 = vadd.f32 %v988, %v989
        %v991 = vrot.slane %v990, 1
        %v992 = vadd.f32 %v990, %v991
        %vm993 = vcmask 516096
        %994 = vst.msk [vmem:[#allocation5] sm:$0x1] %vm993, %v992
        %s995 = scalar_lea.vmem [#allocation6], 16
        %v996 = vld [vmem:[%s995] sm:$0xff]
        %v997 = vld [vmem:[%s995 + $0x8] sm:$0xff]
        %v998 = vmul.f32 %v996, %v968
        %v999 = vmul.f32 %v997, %v969
        %s1000 = scalar_lea.vmem [#allocation7], 16
        %v1001 = vld [vmem:[%s1000] sm:$0xff]
        %v1002 = vld [vmem:[%s1000 + $0x8] sm:$0xff]
        %v1003 = vld [vmem:[#allocation4 + $0x1] sm:$0x1]
        %1005 = vset.pattern.permute.xlu0 0
        %1006 = vperm.xlu0 %1005, %v1001
        %v1007 = vpop.permute.xlu0 %1006
        %1010 = vset.pattern.permute.xlu0 0
        %1011 = vperm.xlu0 %1010, %v1002
        %v1012 = vpop.permute.xlu0 %1011
        %v1014 = vperm.slane %v1003, 0
        %v1015 = vmul.f32 %v1007, %v1014
        %v1016 = vmul.f32 %v1012, %v1014
        %v1017 = vadd.f32 %v998, %v1015
        %v1018 = vadd.f32 %v999, %v1016
        %s1019 = scalar_lea.vmem [#allocation8], 16
        %v1020 = vld [vmem:[%s1019] sm:$0xff]
        %v1021 = vld [vmem:[%s1019 + $0x8] sm:$0xff]
        %1023 = vset.pattern.permute.xlu0 0
        %1024 = vperm.xlu0 %1023, %v1020
        %v1025 = vpop.permute.xlu0 %1024
        %1028 = vset.pattern.permute.xlu0 0
        %1029 = vperm.xlu0 %1028, %v1021
        %v1030 = vpop.permute.xlu0 %1029
        %v1032 = vmul.f32 %v1017, %v1025
        %v1033 = vmul.f32 %v1018, %v1030
        %v1034 = vsel %vm434, %v1032, 0.0
        %v1035 = vsel %vm434, %v1033, 0.0
        %v1036 = vadd.f32 %v1034, %v1035
        %v1037 = vrot.slane %v1036, 4
        %v1038 = vadd.f32 %v1036, %v1037
        %v1039 = vrot.slane %v1038, 2
        %v1040 = vadd.f32 %v1038, %v1039
        %v1041 = vrot.slane %v1040, 1
        %v1042 = vadd.f32 %v1040, %v1041
        %1043 = vst.msk [vmem:[#allocation5 + $0x1] sm:$0x1] %vm993, %v1042
        %s1044 = scalar_lea.vmem [#allocation6], 32
        %v1045 = vld [vmem:[%s1044] sm:$0xff]
        %v1046 = vld [vmem:[%s1044 + $0x8] sm:$0xff]
        %v1047 = vmul.f32 %v1045, %v1017
        %v1048 = vmul.f32 %v1046, %v1018
        %s1049 = scalar_lea.vmem [#allocation7], 32
        %v1050 = vld [vmem:[%s1049] sm:$0xff]
        %v1051 = vld [vmem:[%s1049 + $0x8] sm:$0xff]
        %v1052 = vld [vmem:[#allocation4 + $0x2] sm:$0x1]
        %1054 = vset.pattern.permute.xlu0 0
        %1055 = vperm.xlu0 %1054, %v1050
        %v1056 = vpop.permute.xlu0 %1055
        %1059 = vset.pattern.permute.xlu0 0
        %1060 = vperm.xlu0 %1059, %v1051
        %v1061 = vpop.permute.xlu0 %1060
        %v1063 = vperm.slane %v1052, 0
        %v1064 = vmul.f32 %v1056, %v1063
        %v1065 = vmul.f32 %v1061, %v1063
        %v1066 = vadd.f32 %v1047, %v1064
        %v1067 = vadd.f32 %v1048, %v1065
        %s1068 = scalar_lea.vmem [#allocation8], 32
        %v1069 = vld [vmem:[%s1068] sm:$0xff]
        %v1070 = vld [vmem:[%s1068 + $0x8] sm:$0xff]
        %1072 = vset.pattern.permute.xlu0 0
        %1073 = vperm.xlu0 %1072, %v1069
        %v1074 = vpop.permute.xlu0 %1073
        %1077 = vset.pattern.permute.xlu0 0
        %1078 = vperm.xlu0 %1077, %v1070
        %v1079 = vpop.permute.xlu0 %1078
        %v1081 = vmul.f32 %v1066, %v1074
        %v1082 = vmul.f32 %v1067, %v1079
        %v1083 = vsel %vm434, %v1081, 0.0
        %v1084 = vsel %vm434, %v1082, 0.0
        %v1085 = vadd.f32 %v1083, %v1084
        %v1086 = vrot.slane %v1085, 4
        %v1087 = vadd.f32 %v1085, %v1086
        %v1088 = vrot.slane %v1087, 2
        %v1089 = vadd.f32 %v1087, %v1088
        %v1090 = vrot.slane %v1089, 1
        %v1091 = vadd.f32 %v1089, %v1090
        %1092 = vst.msk [vmem:[#allocation5 + $0x2] sm:$0x1] %vm993, %v1091
        %s1093 = scalar_lea.vmem [#allocation6], 48
        %v1094 = vld [vmem:[%s1093] sm:$0xff]
        %v1095 = vld [vmem:[%s1093 + $0x8] sm:$0xff]
        %v1096 = vmul.f32 %v1094, %v1066
        %v1097 = vmul.f32 %v1095, %v1067
        %s1098 = scalar_lea.vmem [#allocation7], 48
        %v1099 = vld [vmem:[%s1098] sm:$0xff]
        %v1100 = vld [vmem:[%s1098 + $0x8] sm:$0xff]
        %v1101 = vld [vmem:[#allocation4 + $0x3] sm:$0x1]
        %1103 = vset.pattern.permute.xlu0 0
        %1104 = vperm.xlu0 %1103, %v1099
        %v1105 = vpop.permute.xlu0 %1104
        %1108 = vset.pattern.permute.xlu0 0
        %1109 = vperm.xlu0 %1108, %v1100
        %v1110 = vpop.permute.xlu0 %1109
        %v1112 = vperm.slane %v1101, 0
        %v1113 = vmul.f32 %v1105, %v1112
        %v1114 = vmul.f32 %v1110, %v1112
        %v1115 = vadd.f32 %v1096, %v1113
        %v1116 = vadd.f32 %v1097, %v1114
        %s1117 = scalar_lea.vmem [#allocation8], 48
        %v1118 = vld [vmem:[%s1117] sm:$0xff]
        %v1119 = vld [vmem:[%s1117 + $0x8] sm:$0xff]
        %1121 = vset.pattern.permute.xlu0 0
        %1122 = vperm.xlu0 %1121, %v1118
        %v1123 = vpop.permute.xlu0 %1122
        %1126 = vset.pattern.permute.xlu0 0
        %1127 = vperm.xlu0 %1126, %v1119
        %v1128 = vpop.permute.xlu0 %1127
        %v1130 = vmul.f32 %v1115, %v1123
        %v1131 = vmul.f32 %v1116, %v1128
        %v1132 = vsel %vm434, %v1130, 0.0
        %v1133 = vsel %vm434, %v1131, 0.0
        %v1134 = vadd.f32 %v1132, %v1133
        %v1135 = vrot.slane %v1134, 4
        %v1136 = vadd.f32 %v1134, %v1135
        %v1137 = vrot.slane %v1136, 2
        %v1138 = vadd.f32 %v1136, %v1137
        %v1139 = vrot.slane %v1138, 1
        %v1140 = vadd.f32 %v1138, %v1139
        %1141 = vst.msk [vmem:[#allocation5 + $0x3] sm:$0x1] %vm993, %v1140
        %s1142 = scalar_lea.vmem [#allocation6], 64
        %v1143 = vld [vmem:[%s1142] sm:$0xff]
        %v1144 = vld [vmem:[%s1142 + $0x8] sm:$0xff]
        %v1145 = vmul.f32 %v1143, %v1115
        %v1146 = vmul.f32 %v1144, %v1116
        %s1147 = scalar_lea.vmem [#allocation7], 64
        %v1148 = vld [vmem:[%s1147] sm:$0xff]
        %v1149 = vld [vmem:[%s1147 + $0x8] sm:$0xff]
        %v1150 = vld [vmem:[#allocation4 + $0x4] sm:$0x1]
        %1152 = vset.pattern.permute.xlu0 0
        %1153 = vperm.xlu0 %1152, %v1148
        %v1154 = vpop.permute.xlu0 %1153
        %1157 = vset.pattern.permute.xlu0 0
        %1158 = vperm.xlu0 %1157, %v1149
        %v1159 = vpop.permute.xlu0 %1158
        %v1161 = vperm.slane %v1150, 0
        %v1162 = vmul.f32 %v1154, %v1161
        %v1163 = vmul.f32 %v1159, %v1161
        %v1164 = vadd.f32 %v1145, %v1162
        %v1165 = vadd.f32 %v1146, %v1163
        %s1166 = scalar_lea.vmem [#allocation8], 64
        %v1167 = vld [vmem:[%s1166] sm:$0xff]
        %v1168 = vld [vmem:[%s1166 + $0x8] sm:$0xff]
        %1170 = vset.pattern.permute.xlu0 0
        %1171 = vperm.xlu0 %1170, %v1167
        %v1172 = vpop.permute.xlu0 %1171
        %1175 = vset.pattern.permute.xlu0 0
        %1176 = vperm.xlu0 %1175, %v1168
        %v1177 = vpop.permute.xlu0 %1176
        %v1179 = vmul.f32 %v1164, %v1172
        %v1180 = vmul.f32 %v1165, %v1177
        %v1181 = vsel %vm434, %v1179, 0.0
        %v1182 = vsel %vm434, %v1180, 0.0
        %v1183 = vadd.f32 %v1181, %v1182
        %v1184 = vrot.slane %v1183, 4
        %v1185 = vadd.f32 %v1183, %v1184
        %v1186 = vrot.slane %v1185, 2
        %v1187 = vadd.f32 %v1185, %v1186
        %v1188 = vrot.slane %v1187, 1
        %v1189 = vadd.f32 %v1187, %v1188
        %1190 = vst.msk [vmem:[#allocation5 + $0x4] sm:$0x1] %vm993, %v1189
        %s1191 = scalar_lea.vmem [#allocation6], 80
        %v1192 = vld [vmem:[%s1191] sm:$0xff]
        %v1193 = vld [vmem:[%s1191 + $0x8] sm:$0xff]
        %v1194 = vmul.f32 %v1192, %v1164
        %v1195 = vmul.f32 %v1193, %v1165
        %s1196 = scalar_lea.vmem [#allocation7], 80
        %v1197 = vld [vmem:[%s1196] sm:$0xff]
        %v1198 = vld [vmem:[%s1196 + $0x8] sm:$0xff]
        %v1199 = vld [vmem:[#allocation4 + $0x5] sm:$0x1]
        %1201 = vset.pattern.permute.xlu0 0
        %1202 = vperm.xlu0 %1201, %v1197
        %v1203 = vpop.permute.xlu0 %1202
        %1206 = vset.pattern.permute.xlu0 0
        %1207 = vperm.xlu0 %1206, %v1198
        %v1208 = vpop.permute.xlu0 %1207
        %v1210 = vperm.slane %v1199, 0
        %v1211 = vmul.f32 %v1203, %v1210
        %v1212 = vmul.f32 %v1208, %v1210
        %v1213 = vadd.f32 %v1194, %v1211
        %v1214 = vadd.f32 %v1195, %v1212
        %s1215 = scalar_lea.vmem [#allocation8], 80
        %v1216 = vld [vmem:[%s1215] sm:$0xff]
        %v1217 = vld [vmem:[%s1215 + $0x8] sm:$0xff]
        %1219 = vset.pattern.permute.xlu0 0
        %1220 = vperm.xlu0 %1219, %v1216
        %v1221 = vpop.permute.xlu0 %1220
        %1224 = vset.pattern.permute.xlu0 0
        %1225 = vperm.xlu0 %1224, %v1217
        %v1226 = vpop.permute.xlu0 %1225
        %v1228 = vmul.f32 %v1213, %v1221
        %v1229 = vmul.f32 %v1214, %v1226
        %v1230 = vsel %vm434, %v1228, 0.0
        %v1231 = vsel %vm434, %v1229, 0.0
        %v1232 = vadd.f32 %v1230, %v1231
        %v1233 = vrot.slane %v1232, 4
        %v1234 = vadd.f32 %v1232, %v1233
        %v1235 = vrot.slane %v1234, 2
        %v1236 = vadd.f32 %v1234, %v1235
        %v1237 = vrot.slane %v1236, 1
        %v1238 = vadd.f32 %v1236, %v1237
        %1239 = vst.msk [vmem:[#allocation5 + $0x5] sm:$0x1] %vm993, %v1238
        %s1240 = scalar_lea.vmem [#allocation6], 96
        %v1241 = vld [vmem:[%s1240] sm:$0xff]
        %v1242 = vld [vmem:[%s1240 + $0x8] sm:$0xff]
        %v1243 = vmul.f32 %v1241, %v1213
        %v1244 = vmul.f32 %v1242, %v1214
        %s1245 = scalar_lea.vmem [#allocation7], 96
        %v1246 = vld [vmem:[%s1245] sm:$0xff]
        %v1247 = vld [vmem:[%s1245 + $0x8] sm:$0xff]
        %v1248 = vld [vmem:[#allocation4 + $0x6] sm:$0x1]
        %1250 = vset.pattern.permute.xlu0 0
        %1251 = vperm.xlu0 %1250, %v1246
        %v1252 = vpop.permute.xlu0 %1251
        %1255 = vset.pattern.permute.xlu0 0
        %1256 = vperm.xlu0 %1255, %v1247
        %v1257 = vpop.permute.xlu0 %1256
        %v1259 = vperm.slane %v1248, 0
        %v1260 = vmul.f32 %v1252, %v1259
        %v1261 = vmul.f32 %v1257, %v1259
        %v1262 = vadd.f32 %v1243, %v1260
        %v1263 = vadd.f32 %v1244, %v1261
        %s1264 = scalar_lea.vmem [#allocation8], 96
        %v1265 = vld [vmem:[%s1264] sm:$0xff]
        %v1266 = vld [vmem:[%s1264 + $0x8] sm:$0xff]
        %1268 = vset.pattern.permute.xlu0 0
        %1269 = vperm.xlu0 %1268, %v1265
        %v1270 = vpop.permute.xlu0 %1269
        %1273 = vset.pattern.permute.xlu0 0
        %1274 = vperm.xlu0 %1273, %v1266
        %v1275 = vpop.permute.xlu0 %1274
        %v1277 = vmul.f32 %v1262, %v1270
        %v1278 = vmul.f32 %v1263, %v1275
        %v1279 = vsel %vm434, %v1277, 0.0
        %v1280 = vsel %vm434, %v1278, 0.0
        %v1281 = vadd.f32 %v1279, %v1280
        %v1282 = vrot.slane %v1281, 4
        %v1283 = vadd.f32 %v1281, %v1282
        %v1284 = vrot.slane %v1283, 2
        %v1285 = vadd.f32 %v1283, %v1284
        %v1286 = vrot.slane %v1285, 1
        %v1287 = vadd.f32 %v1285, %v1286
        %1288 = vst.msk [vmem:[#allocation5 + $0x6] sm:$0x1] %vm993, %v1287
        %s1289 = scalar_lea.vmem [#allocation6], 112
        %v1290 = vld [vmem:[%s1289] sm:$0xff]
        %v1291 = vld [vmem:[%s1289 + $0x8] sm:$0xff]
        %v1292 = vmul.f32 %v1290, %v1262
        %v1293 = vmul.f32 %v1291, %v1263
        %s1294 = scalar_lea.vmem [#allocation7], 112
        %v1295 = vld [vmem:[%s1294] sm:$0xff]
        %v1296 = vld [vmem:[%s1294 + $0x8] sm:$0xff]
        %v1297 = vld [vmem:[#allocation4 + $0x7] sm:$0x1]
        %1299 = vset.pattern.permute.xlu0 0
        %1300 = vperm.xlu0 %1299, %v1295
        %v1301 = vpop.permute.xlu0 %1300
        %1304 = vset.pattern.permute.xlu0 0
        %1305 = vperm.xlu0 %1304, %v1296
        %v1306 = vpop.permute.xlu0 %1305
        %v1308 = vperm.slane %v1297, 0
        %v1309 = vmul.f32 %v1301, %v1308
        %v1310 = vmul.f32 %v1306, %v1308
        %v1311 = vadd.f32 %v1292, %v1309
        %v1312 = vadd.f32 %v1293, %v1310
        %s1313 = scalar_lea.vmem [#allocation8], 112
        %v1314 = vld [vmem:[%s1313] sm:$0xff]
        %v1315 = vld [vmem:[%s1313 + $0x8] sm:$0xff]
        %1317 = vset.pattern.permute.xlu0 0
        %1318 = vperm.xlu0 %1317, %v1314
        %v1319 = vpop.permute.xlu0 %1318
        %1322 = vset.pattern.permute.xlu0 0
        %1323 = vperm.xlu0 %1322, %v1315
        %v1324 = vpop.permute.xlu0 %1323
        %v1326 = vmul.f32 %v1311, %v1319
        %v1327 = vmul.f32 %v1312, %v1324
        %v1328 = vsel %vm434, %v1326, 0.0
        %v1329 = vsel %vm434, %v1327, 0.0
        %v1330 = vadd.f32 %v1328, %v1329
        %v1331 = vrot.slane %v1330, 4
        %v1332 = vadd.f32 %v1330, %v1331
        %v1333 = vrot.slane %v1332, 2
        %v1334 = vadd.f32 %v1332, %v1333
        %v1335 = vrot.slane %v1334, 1
        %v1336 = vadd.f32 %v1334, %v1335
        %1337 = vst.msk [vmem:[#allocation5 + $0x7] sm:$0x1] %vm993, %v1336
        %v1339 = vrot.slane %v618, 1
        %v1340 = vrot.slane %v618, 2
        %v1341 = vrot.slane %v618, 3
        %v1342 = vrot.slane %v618, 4
        %v1343 = vrot.slane %v618, 5
        %v1344 = vrot.slane %v618, 6
        %v1345 = vrot.slane %v618, 7
        %v1346 = vperm.slane %v618, 0
        %v1347 = vperm.slane %v1339, 0
        %v1348 = vperm.slane %v1340, 0
        %v1349 = vperm.slane %v1341, 0
        %v1350 = vperm.slane %v1342, 0
        %v1351 = vperm.slane %v1343, 0
        %v1352 = vperm.slane %v1344, 0
        %v1353 = vperm.slane %v1345, 0
        %v1362 = vmul.f32 %v1346, %v623
        %v1363 = vmul.f32 %v1346, %v624
        %v1364 = vmul.f32 %v1347, %v623
        %v1365 = vmul.f32 %v1347, %v624
        %v1366 = vmul.f32 %v1348, %v623
        %v1367 = vmul.f32 %v1348, %v624
        %v1368 = vmul.f32 %v1349, %v623
        %v1369 = vmul.f32 %v1349, %v624
        %v1370 = vmul.f32 %v1350, %v623
        %v1371 = vmul.f32 %v1350, %v624
        %v1372 = vmul.f32 %v1351, %v623
        %v1373 = vmul.f32 %v1351, %v624
        %v1374 = vmul.f32 %v1352, %v623
        %v1375 = vmul.f32 %v1352, %v624
        %v1376 = vmul.f32 %v1353, %v623
        %v1377 = vmul.f32 %v1353, %v624
        %v1378 = vmul.f32 %v1362, 1.442695
        %v1379 = vpow.pop %v1378
        %v1380 = vmul.f32 %v1363, 1.442695
        %v1381 = vpow.pop %v1380
        %v1382 = vmul.f32 %v1364, 1.442695
        %v1383 = vpow.pop %v1382
        %v1384 = vmul.f32 %v1365, 1.442695
        %v1385 = vpow.pop %v1384
        %v1386 = vmul.f32 %v1366, 1.442695
        %v1387 = vpow.pop %v1386
        %v1388 = vmul.f32 %v1367, 1.442695
        %v1389 = vpow.pop %v1388
        %v1390 = vmul.f32 %v1368, 1.442695
        %v1391 = vpow.pop %v1390
        %v1392 = vmul.f32 %v1369, 1.442695
        %v1393 = vpow.pop %v1392
        %v1394 = vmul.f32 %v1370, 1.442695
        %v1395 = vpow.pop %v1394
        %v1396 = vmul.f32 %v1371, 1.442695
        %v1397 = vpow.pop %v1396
        %v1398 = vmul.f32 %v1372, 1.442695
        %v1399 = vpow.pop %v1398
        %v1400 = vmul.f32 %v1373, 1.442695
        %v1401 = vpow.pop %v1400
        %v1402 = vmul.f32 %v1374, 1.442695
        %v1403 = vpow.pop %v1402
        %v1404 = vmul.f32 %v1375, 1.442695
        %v1405 = vpow.pop %v1404
        %v1406 = vmul.f32 %v1376, 1.442695
        %v1407 = vpow.pop %v1406
        %v1408 = vmul.f32 %v1377, 1.442695
        %v1409 = vpow.pop %v1408
        %s1410 = scalar_lea.vmem [#allocation6], 128
        %1411 = vst.msk [vmem:[%s1410] sm:$0xff] %vm434, %v1379
        %1412 = vst.msk [vmem:[%s1410 + $0x8] sm:$0xff] %vm434, %v1381
        %1413 = vst.msk [vmem:[%s1410 + $0x10] sm:$0xff] %vm434, %v1383
        %1414 = vst.msk [vmem:[%s1410 + $0x18] sm:$0xff] %vm434, %v1385
        %1415 = vst.msk [vmem:[%s1410 + $0x20] sm:$0xff] %vm434, %v1387
        %1416 = vst.msk [vmem:[%s1410 + $0x28] sm:$0xff] %vm434, %v1389
        %1417 = vst.msk [vmem:[%s1410 + $0x30] sm:$0xff] %vm434, %v1391
        %1418 = vst.msk [vmem:[%s1410 + $0x38] sm:$0xff] %vm434, %v1393
        %1419 = vst.msk [vmem:[%s1410 + $0x40] sm:$0xff] %vm434, %v1395
        %1420 = vst.msk [vmem:[%s1410 + $0x48] sm:$0xff] %vm434, %v1397
        %1421 = vst.msk [vmem:[%s1410 + $0x50] sm:$0xff] %vm434, %v1399
        %1422 = vst.msk [vmem:[%s1410 + $0x58] sm:$0xff] %vm434, %v1401
        %1423 = vst.msk [vmem:[%s1410 + $0x60] sm:$0xff] %vm434, %v1403
        %1424 = vst.msk [vmem:[%s1410 + $0x68] sm:$0xff] %vm434, %v1405
        %1425 = vst.msk [vmem:[%s1410 + $0x70] sm:$0xff] %vm434, %v1407
        %1426 = vst.msk [vmem:[%s1410 + $0x78] sm:$0xff] %vm434, %v1409
        %v1427 = vperm.slane %v550, 0
        %v1428 = vlaneseq
        %v1429 = vshrl.u32 %v1428, 7
        %v1430 = vadd.s32 %v1429, 2
        %1431 = vset.pattern.permute.xlu0 %v1430
        %1432 = vperm.xlu0 %1431, %v1427
        %v1433 = vpop.permute.xlu0 %1432
        %v1434 = vlaneseq
        %v1435 = vshrl.u32 %v1434, 7
        %v1436 = vadd.s32 %v1435, 10
        %1437 = vset.pattern.permute.xlu0 %v1436
        %1438 = vperm.xlu0 %1437, %v1427
        %v1439 = vpop.permute.xlu0 %1438
        %v1440 = vperm.slane %v550, 1
        %v1441 = vlaneseq
        %v1442 = vshrl.u32 %v1441, 7
        %v1443 = vadd.s32 %v1442, 2
        %1444 = vset.pattern.permute.xlu0 %v1443
        %1445 = vperm.xlu0 %1444, %v1440
        %v1446 = vpop.permute.xlu0 %1445
        %v1447 = vlaneseq
        %v1448 = vshrl.u32 %v1447, 7
        %v1449 = vadd.s32 %v1448, 10
        %1450 = vset.pattern.permute.xlu0 %v1449
        %1451 = vperm.xlu0 %1450, %v1440
        %v1452 = vpop.permute.xlu0 %1451
        %v1453 = vperm.slane %v550, 2
        %v1454 = vlaneseq
        %v1455 = vshrl.u32 %v1454, 7
        %v1456 = vadd.s32 %v1455, 2
        %1457 = vset.pattern.permute.xlu0 %v1456
        %1458 = vperm.xlu0 %1457, %v1453
        %v1459 = vpop.permute.xlu0 %1458
        %v1460 = vlaneseq
        %v1461 = vshrl.u32 %v1460, 7
        %v1462 = vadd.s32 %v1461, 10
        %1463 = vset.pattern.permute.xlu0 %v1462
        %1464 = vperm.xlu0 %1463, %v1453
        %v1465 = vpop.permute.xlu0 %1464
        %v1466 = vperm.slane %v550, 3
        %v1467 = vlaneseq
        %v1468 = vshrl.u32 %v1467, 7
        %v1469 = vadd.s32 %v1468, 2
        %1470 = vset.pattern.permute.xlu0 %v1469
        %1471 = vperm.xlu0 %1470, %v1466
        %v1472 = vpop.permute.xlu0 %1471
        %v1473 = vlaneseq
        %v1474 = vshrl.u32 %v1473, 7
        %v1475 = vadd.s32 %v1474, 10
        %1476 = vset.pattern.permute.xlu0 %v1475
        %1477 = vperm.xlu0 %1476, %v1466
        %v1478 = vpop.permute.xlu0 %1477
        %v1479 = vperm.slane %v550, 4
        %v1480 = vlaneseq
        %v1481 = vshrl.u32 %v1480, 7
        %v1482 = vadd.s32 %v1481, 2
        %1483 = vset.pattern.permute.xlu0 %v1482
        %1484 = vperm.xlu0 %1483, %v1479
        %v1485 = vpop.permute.xlu0 %1484
        %v1486 = vlaneseq
        %v1487 = vshrl.u32 %v1486, 7
        %v1488 = vadd.s32 %v1487, 10
        %1489 = vset.pattern.permute.xlu0 %v1488
        %1490 = vperm.xlu0 %1489, %v1479
        %v1491 = vpop.permute.xlu0 %1490
        %v1492 = vperm.slane %v550, 5
        %v1493 = vlaneseq
        %v1494 = vshrl.u32 %v1493, 7
        %v1495 = vadd.s32 %v1494, 2
        %1496 = vset.pattern.permute.xlu0 %v1495
        %1497 = vperm.xlu0 %1496, %v1492
        %v1498 = vpop.permute.xlu0 %1497
        %v1499 = vlaneseq
        %v1500 = vshrl.u32 %v1499, 7
        %v1501 = vadd.s32 %v1500, 10
        %1502 = vset.pattern.permute.xlu0 %v1501
        %1503 = vperm.xlu0 %1502, %v1492
        %v1504 = vpop.permute.xlu0 %1503
        %v1505 = vperm.slane %v550, 6
        %v1506 = vlaneseq
        %v1507 = vshrl.u32 %v1506, 7
        %v1508 = vadd.s32 %v1507, 2
        %1509 = vset.pattern.permute.xlu0 %v1508
        %1510 = vperm.xlu0 %1509, %v1505
        %v1511 = vpop.permute.xlu0 %1510
        %v1512 = vlaneseq
        %v1513 = vshrl.u32 %v1512, 7
        %v1514 = vadd.s32 %v1513, 10
        %1515 = vset.pattern.permute.xlu0 %v1514
        %1516 = vperm.xlu0 %1515, %v1505
        %v1517 = vpop.permute.xlu0 %1516
        %v1518 = vperm.slane %v550, 7
        %v1519 = vlaneseq
        %v1520 = vshrl.u32 %v1519, 7
        %v1521 = vadd.s32 %v1520, 2
        %1522 = vset.pattern.permute.xlu0 %v1521
        %1523 = vperm.xlu0 %1522, %v1518
        %v1524 = vpop.permute.xlu0 %1523
        %v1525 = vlaneseq
        %v1526 = vshrl.u32 %v1525, 7
        %v1527 = vadd.s32 %v1526, 10
        %1528 = vset.pattern.permute.xlu0 %v1527
        %1529 = vperm.xlu0 %1528, %v1518
        %v1530 = vpop.permute.xlu0 %1529
        %s1531 = scalar_lea.vmem [#allocation7], 128
        %1532 = vst.msk [vmem:[%s1531] sm:$0xff] %vm819, %v1433
        %1533 = vst.msk [vmem:[%s1531 + $0x8] sm:$0xff] %vm819, %v1439
        %1534 = vst.msk [vmem:[%s1531 + $0x10] sm:$0xff] %vm819, %v1446
        %1535 = vst.msk [vmem:[%s1531 + $0x18] sm:$0xff] %vm819, %v1452
        %1536 = vst.msk [vmem:[%s1531 + $0x20] sm:$0xff] %vm819, %v1459
        %1537 = vst.msk [vmem:[%s1531 + $0x28] sm:$0xff] %vm819, %v1465
        %1538 = vst.msk [vmem:[%s1531 + $0x30] sm:$0xff] %vm819, %v1472
        %1539 = vst.msk [vmem:[%s1531 + $0x38] sm:$0xff] %vm819, %v1478
        %1540 = vst.msk [vmem:[%s1531 + $0x40] sm:$0xff] %vm819, %v1485
        %1541 = vst.msk [vmem:[%s1531 + $0x48] sm:$0xff] %vm819, %v1491
        %1542 = vst.msk [vmem:[%s1531 + $0x50] sm:$0xff] %vm819, %v1498
        %1543 = vst.msk [vmem:[%s1531 + $0x58] sm:$0xff] %vm819, %v1504
        %1544 = vst.msk [vmem:[%s1531 + $0x60] sm:$0xff] %vm819, %v1511
        %1545 = vst.msk [vmem:[%s1531 + $0x68] sm:$0xff] %vm819, %v1517
        %1546 = vst.msk [vmem:[%s1531 + $0x70] sm:$0xff] %vm819, %v1524
        %1547 = vst.msk [vmem:[%s1531 + $0x78] sm:$0xff] %vm819, %v1530
        %v1548 = vlaneseq
        %v1549 = vshrl.u32 %v1548, 7
        %v1550 = vadd.s32 %v1549, 18
        %1551 = vset.pattern.permute.xlu0 %v1550
        %1552 = vperm.xlu0 %1551, %v1427
        %v1553 = vpop.permute.xlu0 %1552
        %v1554 = vlaneseq
        %v1555 = vshrl.u32 %v1554, 7
        %v1556 = vadd.s32 %v1555, 26
        %1557 = vset.pattern.permute.xlu0 %v1556
        %1558 = vperm.xlu0 %1557, %v1427
        %v1559 = vpop.permute.xlu0 %1558
        %v1560 = vlaneseq
        %v1561 = vshrl.u32 %v1560, 7
        %v1562 = vadd.s32 %v1561, 18
        %1563 = vset.pattern.permute.xlu0 %v1562
        %1564 = vperm.xlu0 %1563, %v1440
        %v1565 = vpop.permute.xlu0 %1564
        %v1566 = vlaneseq
        %v1567 = vshrl.u32 %v1566, 7
        %v1568 = vadd.s32 %v1567, 26
        %1569 = vset.pattern.permute.xlu0 %v1568
        %1570 = vperm.xlu0 %1569, %v1440
        %v1571 = vpop.permute.xlu0 %1570
        %v1572 = vlaneseq
        %v1573 = vshrl.u32 %v1572, 7
        %v1574 = vadd.s32 %v1573, 18
        %1575 = vset.pattern.permute.xlu0 %v1574
        %1576 = vperm.xlu0 %1575, %v1453
        %v1577 = vpop.permute.xlu0 %1576
        %v1578 = vlaneseq
        %v1579 = vshrl.u32 %v1578, 7
        %v1580 = vadd.s32 %v1579, 26
        %1581 = vset.pattern.permute.xlu0 %v1580
        %1582 = vperm.xlu0 %1581, %v1453
        %v1583 = vpop.permute.xlu0 %1582
        %v1584 = vlaneseq
        %v1585 = vshrl.u32 %v1584, 7
        %v1586 = vadd.s32 %v1585, 18
        %1587 = vset.pattern.permute.xlu0 %v1586
        %1588 = vperm.xlu0 %1587, %v1466
        %v1589 = vpop.permute.xlu0 %1588
        %v1590 = vlaneseq
        %v1591 = vshrl.u32 %v1590, 7
        %v1592 = vadd.s32 %v1591, 26
        %1593 = vset.pattern.permute.xlu0 %v1592
        %1594 = vperm.xlu0 %1593, %v1466
        %v1595 = vpop.permute.xlu0 %1594
        %v1596 = vlaneseq
        %v1597 = vshrl.u32 %v1596, 7
        %v1598 = vadd.s32 %v1597, 18
        %1599 = vset.pattern.permute.xlu0 %v1598
        %1600 = vperm.xlu0 %1599, %v1479
        %v1601 = vpop.permute.xlu0 %1600
        %v1602 = vlaneseq
        %v1603 = vshrl.u32 %v1602, 7
        %v1604 = vadd.s32 %v1603, 26
        %1605 = vset.pattern.permute.xlu0 %v1604
        %1606 = vperm.xlu0 %1605, %v1479
        %v1607 = vpop.permute.xlu0 %1606
        %v1608 = vlaneseq
        %v1609 = vshrl.u32 %v1608, 7
        %v1610 = vadd.s32 %v1609, 18
        %1611 = vset.pattern.permute.xlu0 %v1610
        %1612 = vperm.xlu0 %1611, %v1492
        %v1613 = vpop.permute.xlu0 %1612
        %v1614 = vlaneseq
        %v1615 = vshrl.u32 %v1614, 7
        %v1616 = vadd.s32 %v1615, 26
        %1617 = vset.pattern.permute.xlu0 %v1616
        %1618 = vperm.xlu0 %1617, %v1492
        %v1619 = vpop.permute.xlu0 %1618
        %v1620 = vlaneseq
        %v1621 = vshrl.u32 %v1620, 7
        %v1622 = vadd.s32 %v1621, 18
        %1623 = vset.pattern.permute.xlu0 %v1622
        %1624 = vperm.xlu0 %1623, %v1505
        %v1625 = vpop.permute.xlu0 %1624
        %v1626 = vlaneseq
        %v1627 = vshrl.u32 %v1626, 7
        %v1628 = vadd.s32 %v1627, 26
        %1629 = vset.pattern.permute.xlu0 %v1628
        %1630 = vperm.xlu0 %1629, %v1505
        %v1631 = vpop.permute.xlu0 %1630
        %v1632 = vlaneseq
        %v1633 = vshrl.u32 %v1632, 7
        %v1634 = vadd.s32 %v1633, 18
        %1635 = vset.pattern.permute.xlu0 %v1634
        %1636 = vperm.xlu0 %1635, %v1518
        %v1637 = vpop.permute.xlu0 %1636
        %v1638 = vlaneseq
        %v1639 = vshrl.u32 %v1638, 7
        %v1640 = vadd.s32 %v1639, 26
        %1641 = vset.pattern.permute.xlu0 %v1640
        %1642 = vperm.xlu0 %1641, %v1518
        %v1643 = vpop.permute.xlu0 %1642
        %s1644 = scalar_lea.vmem [#allocation8], 128
        %1645 = vst.msk [vmem:[%s1644] sm:$0xff] %vm819, %v1553
        %1646 = vst.msk [vmem:[%s1644 + $0x8] sm:$0xff] %vm819, %v1559
        %1647 = vst.msk [vmem:[%s1644 + $0x10] sm:$0xff] %vm819, %v1565
        %1648 = vst.msk [vmem:[%s1644 + $0x18] sm:$0xff] %vm819, %v1571
        %1649 = vst.msk [vmem:[%s1644 + $0x20] sm:$0xff] %vm819, %v1577
        %1650 = vst.msk [vmem:[%s1644 + $0x28] sm:$0xff] %vm819, %v1583
        %1651 = vst.msk [vmem:[%s1644 + $0x30] sm:$0xff] %vm819, %v1589
        %1652 = vst.msk [vmem:[%s1644 + $0x38] sm:$0xff] %vm819, %v1595
        %1653 = vst.msk [vmem:[%s1644 + $0x40] sm:$0xff] %vm819, %v1601
        %1654 = vst.msk [vmem:[%s1644 + $0x48] sm:$0xff] %vm819, %v1607
        %1655 = vst.msk [vmem:[%s1644 + $0x50] sm:$0xff] %vm819, %v1613
        %1656 = vst.msk [vmem:[%s1644 + $0x58] sm:$0xff] %vm819, %v1619
        %1657 = vst.msk [vmem:[%s1644 + $0x60] sm:$0xff] %vm819, %v1625
        %1658 = vst.msk [vmem:[%s1644 + $0x68] sm:$0xff] %vm819, %v1631
        %1659 = vst.msk [vmem:[%s1644 + $0x70] sm:$0xff] %vm819, %v1637
        %1660 = vst.msk [vmem:[%s1644 + $0x78] sm:$0xff] %vm819, %v1643
        %v1661 = vld [vmem:[%s1410] sm:$0xff]
        %v1662 = vld [vmem:[%s1410 + $0x8] sm:$0xff]
        %v1663 = vmul.f32 %v1661, %v1311
        %v1664 = vmul.f32 %v1662, %v1312
        %v1665 = vld [vmem:[%s1531] sm:$0xff]
        %v1666 = vld [vmem:[%s1531 + $0x8] sm:$0xff]
        %v1667 = vld [vmem:[#allocation4 + $0x8] sm:$0x1]
        %1669 = vset.pattern.permute.xlu0 0
        %1670 = vperm.xlu0 %1669, %v1665
        %v1671 = vpop.permute.xlu0 %1670
        %1674 = vset.pattern.permute.xlu0 0
        %1675 = vperm.xlu0 %1674, %v1666
        %v1676 = vpop.permute.xlu0 %1675
        %v1678 = vperm.slane %v1667, 0
        %v1679 = vmul.f32 %v1671, %v1678
        %v1680 = vmul.f32 %v1676, %v1678
        %v1681 = vadd.f32 %v1663, %v1679
        %v1682 = vadd.f32 %v1664, %v1680
        %v1683 = vld [vmem:[%s1644] sm:$0xff]
        %v1684 = vld [vmem:[%s1644 + $0x8] sm:$0xff]
        %1686 = vset.pattern.permute.xlu0 0
        %1687 = vperm.xlu0 %1686, %v1683
        %v1688 = vpop.permute.xlu0 %1687
        %1691 = vset.pattern.permute.xlu0 0
        %1692 = vperm.xlu0 %1691, %v1684
        %v1693 = vpop.permute.xlu0 %1692
        %v1695 = vmul.f32 %v1681, %v1688
        %v1696 = vmul.f32 %v1682, %v1693
        %v1697 = vsel %vm434, %v1695, 0.0
        %v1698 = vsel %vm434, %v1696, 0.0
        %v1699 = vadd.f32 %v1697, %v1698
        %v1700 = vrot.slane %v1699, 4
        %v1701 = vadd.f32 %v1699, %v1700
        %v1702 = vrot.slane %v1701, 2
        %v1703 = vadd.f32 %v1701, %v1702
        %v1704 = vrot.slane %v1703, 1
        %v1705 = vadd.f32 %v1703, %v1704
        %1706 = vst.msk [vmem:[#allocation5 + $0x8] sm:$0x1] %vm993, %v1705
        %s1707 = scalar_lea.vmem [#allocation6], 144
        %v1708 = vld [vmem:[%s1707] sm:$0xff]
        %v1709 = vld [vmem:[%s1707 + $0x8] sm:$0xff]
        %v1710 = vmul.f32 %v1708, %v1681
        %v1711 = vmul.f32 %v1709, %v1682
        %s1712 = scalar_lea.vmem [#allocation7], 144
        %v1713 = vld [vmem:[%s1712] sm:$0xff]
        %v1714 = vld [vmem:[%s1712 + $0x8] sm:$0xff]
        %v1715 = vld [vmem:[#allocation4 + $0x9] sm:$0x1]
        %1717 = vset.pattern.permute.xlu0 0
        %1718 = vperm.xlu0 %1717, %v1713
        %v1719 = vpop.permute.xlu0 %1718
        %1722 = vset.pattern.permute.xlu0 0
        %1723 = vperm.xlu0 %1722, %v1714
        %v1724 = vpop.permute.xlu0 %1723
        %v1726 = vperm.slane %v1715, 0
        %v1727 = vmul.f32 %v1719, %v1726
        %v1728 = vmul.f32 %v1724, %v1726
        %v1729 = vadd.f32 %v1710, %v1727
        %v1730 = vadd.f32 %v1711, %v1728
        %s1731 = scalar_lea.vmem [#allocation8], 144
        %v1732 = vld [vmem:[%s1731] sm:$0xff]
        %v1733 = vld [vmem:[%s1731 + $0x8] sm:$0xff]
        %1735 = vset.pattern.permute.xlu0 0
        %1736 = vperm.xlu0 %1735, %v1732
        %v1737 = vpop.permute.xlu0 %1736
        %1740 = vset.pattern.permute.xlu0 0
        %1741 = vperm.xlu0 %1740, %v1733
        %v1742 = vpop.permute.xlu0 %1741
        %v1744 = vmul.f32 %v1729, %v1737
        %v1745 = vmul.f32 %v1730, %v1742
        %v1746 = vsel %vm434, %v1744, 0.0
        %v1747 = vsel %vm434, %v1745, 0.0
        %v1748 = vadd.f32 %v1746, %v1747
        %v1749 = vrot.slane %v1748, 4
        %v1750 = vadd.f32 %v1748, %v1749
        %v1751 = vrot.slane %v1750, 2
        %v1752 = vadd.f32 %v1750, %v1751
        %v1753 = vrot.slane %v1752, 1
        %v1754 = vadd.f32 %v1752, %v1753
        %1755 = vst.msk [vmem:[#allocation5 + $0x9] sm:$0x1] %vm993, %v1754
        %s1756 = scalar_lea.vmem [#allocation6], 160
        %v1757 = vld [vmem:[%s1756] sm:$0xff]
        %v1758 = vld [vmem:[%s1756 + $0x8] sm:$0xff]
        %v1759 = vmul.f32 %v1757, %v1729
        %v1760 = vmul.f32 %v1758, %v1730
        %s1761 = scalar_lea.vmem [#allocation7], 160
        %v1762 = vld [vmem:[%s1761] sm:$0xff]
        %v1763 = vld [vmem:[%s1761 + $0x8] sm:$0xff]
        %v1764 = vld [vmem:[#allocation4 + $0xa] sm:$0x1]
        %1766 = vset.pattern.permute.xlu0 0
        %1767 = vperm.xlu0 %1766, %v1762
        %v1768 = vpop.permute.xlu0 %1767
        %1771 = vset.pattern.permute.xlu0 0
        %1772 = vperm.xlu0 %1771, %v1763
        %v1773 = vpop.permute.xlu0 %1772
        %v1775 = vperm.slane %v1764, 0
        %v1776 = vmul.f32 %v1768, %v1775
        %v1777 = vmul.f32 %v1773, %v1775
        %v1778 = vadd.f32 %v1759, %v1776
        %v1779 = vadd.f32 %v1760, %v1777
        %s1780 = scalar_lea.vmem [#allocation8], 160
        %v1781 = vld [vmem:[%s1780] sm:$0xff]
        %v1782 = vld [vmem:[%s1780 + $0x8] sm:$0xff]
        %1784 = vset.pattern.permute.xlu0 0
        %1785 = vperm.xlu0 %1784, %v1781
        %v1786 = vpop.permute.xlu0 %1785
        %1789 = vset.pattern.permute.xlu0 0
        %1790 = vperm.xlu0 %1789, %v1782
        %v1791 = vpop.permute.xlu0 %1790
        %v1793 = vmul.f32 %v1778, %v1786
        %v1794 = vmul.f32 %v1779, %v1791
        %v1795 = vsel %vm434, %v1793, 0.0
        %v1796 = vsel %vm434, %v1794, 0.0
        %v1797 = vadd.f32 %v1795, %v1796
        %v1798 = vrot.slane %v1797, 4
        %v1799 = vadd.f32 %v1797, %v1798
        %v1800 = vrot.slane %v1799, 2
        %v1801 = vadd.f32 %v1799, %v1800
        %v1802 = vrot.slane %v1801, 1
        %v1803 = vadd.f32 %v1801, %v1802
        %1804 = vst.msk [vmem:[#allocation5 + $0xa] sm:$0x1] %vm993, %v1803
        %s1805 = scalar_lea.vmem [#allocation6], 176
        %v1806 = vld [vmem:[%s1805] sm:$0xff]
        %v1807 = vld [vmem:[%s1805 + $0x8] sm:$0xff]
        %v1808 = vmul.f32 %v1806, %v1778
        %v1809 = vmul.f32 %v1807, %v1779
        %s1810 = scalar_lea.vmem [#allocation7], 176
        %v1811 = vld [vmem:[%s1810] sm:$0xff]
        %v1812 = vld [vmem:[%s1810 + $0x8] sm:$0xff]
        %v1813 = vld [vmem:[#allocation4 + $0xb] sm:$0x1]
        %1815 = vset.pattern.permute.xlu0 0
        %1816 = vperm.xlu0 %1815, %v1811
        %v1817 = vpop.permute.xlu0 %1816
        %1820 = vset.pattern.permute.xlu0 0
        %1821 = vperm.xlu0 %1820, %v1812
        %v1822 = vpop.permute.xlu0 %1821
        %v1824 = vperm.slane %v1813, 0
        %v1825 = vmul.f32 %v1817, %v1824
        %v1826 = vmul.f32 %v1822, %v1824
        %v1827 = vadd.f32 %v1808, %v1825
        %v1828 = vadd.f32 %v1809, %v1826
        %s1829 = scalar_lea.vmem [#allocation8], 176
        %v1830 = vld [vmem:[%s1829] sm:$0xff]
        %v1831 = vld [vmem:[%s1829 + $0x8] sm:$0xff]
        %1833 = vset.pattern.permute.xlu0 0
        %1834 = vperm.xlu0 %1833, %v1830
        %v1835 = vpop.permute.xlu0 %1834
        %1838 = vset.pattern.permute.xlu0 0
        %1839 = vperm.xlu0 %1838, %v1831
        %v1840 = vpop.permute.xlu0 %1839
        %v1842 = vmul.f32 %v1827, %v1835
        %v1843 = vmul.f32 %v1828, %v1840
        %v1844 = vsel %vm434, %v1842, 0.0
        %v1845 = vsel %vm434, %v1843, 0.0
        %v1846 = vadd.f32 %v1844, %v1845
        %v1847 = vrot.slane %v1846, 4
        %v1848 = vadd.f32 %v1846, %v1847
        %v1849 = vrot.slane %v1848, 2
        %v1850 = vadd.f32 %v1848, %v1849
        %v1851 = vrot.slane %v1850, 1
        %v1852 = vadd.f32 %v1850, %v1851
        %1853 = vst.msk [vmem:[#allocation5 + $0xb] sm:$0x1] %vm993, %v1852
        %s1854 = scalar_lea.vmem [#allocation6], 192
        %v1855 = vld [vmem:[%s1854] sm:$0xff]
        %v1856 = vld [vmem:[%s1854 + $0x8] sm:$0xff]
        %v1857 = vmul.f32 %v1855, %v1827
        %v1858 = vmul.f32 %v1856, %v1828
        %s1859 = scalar_lea.vmem [#allocation7], 192
        %v1860 = vld [vmem:[%s1859] sm:$0xff]
        %v1861 = vld [vmem:[%s1859 + $0x8] sm:$0xff]
        %v1862 = vld [vmem:[#allocation4 + $0xc] sm:$0x1]
        %1864 = vset.pattern.permute.xlu0 0
        %1865 = vperm.xlu0 %1864, %v1860
        %v1866 = vpop.permute.xlu0 %1865
        %1869 = vset.pattern.permute.xlu0 0
        %1870 = vperm.xlu0 %1869, %v1861
        %v1871 = vpop.permute.xlu0 %1870
        %v1873 = vperm.slane %v1862, 0
        %v1874 = vmul.f32 %v1866, %v1873
        %v1875 = vmul.f32 %v1871, %v1873
        %v1876 = vadd.f32 %v1857, %v1874
        %v1877 = vadd.f32 %v1858, %v1875
        %s1878 = scalar_lea.vmem [#allocation8], 192
        %v1879 = vld [vmem:[%s1878] sm:$0xff]
        %v1880 = vld [vmem:[%s1878 + $0x8] sm:$0xff]
        %1882 = vset.pattern.permute.xlu0 0
        %1883 = vperm.xlu0 %1882, %v1879
        %v1884 = vpop.permute.xlu0 %1883
        %1887 = vset.pattern.permute.xlu0 0
        %1888 = vperm.xlu0 %1887, %v1880
        %v1889 = vpop.permute.xlu0 %1888
        %v1891 = vmul.f32 %v1876, %v1884
        %v1892 = vmul.f32 %v1877, %v1889
        %v1893 = vsel %vm434, %v1891, 0.0
        %v1894 = vsel %vm434, %v1892, 0.0
        %v1895 = vadd.f32 %v1893, %v1894
        %v1896 = vrot.slane %v1895, 4
        %v1897 = vadd.f32 %v1895, %v1896
        %v1898 = vrot.slane %v1897, 2
        %v1899 = vadd.f32 %v1897, %v1898
        %v1900 = vrot.slane %v1899, 1
        %v1901 = vadd.f32 %v1899, %v1900
        %1902 = vst.msk [vmem:[#allocation5 + $0xc] sm:$0x1] %vm993, %v1901
        %s1903 = scalar_lea.vmem [#allocation6], 208
        %v1904 = vld [vmem:[%s1903] sm:$0xff]
        %v1905 = vld [vmem:[%s1903 + $0x8] sm:$0xff]
        %v1906 = vmul.f32 %v1904, %v1876
        %v1907 = vmul.f32 %v1905, %v1877
        %s1908 = scalar_lea.vmem [#allocation7], 208
        %v1909 = vld [vmem:[%s1908] sm:$0xff]
        %v1910 = vld [vmem:[%s1908 + $0x8] sm:$0xff]
        %v1911 = vld [vmem:[#allocation4 + $0xd] sm:$0x1]
        %1913 = vset.pattern.permute.xlu0 0
        %1914 = vperm.xlu0 %1913, %v1909
        %v1915 = vpop.permute.xlu0 %1914
        %1918 = vset.pattern.permute.xlu0 0
        %1919 = vperm.xlu0 %1918, %v1910
        %v1920 = vpop.permute.xlu0 %1919
        %v1922 = vperm.slane %v1911, 0
        %v1923 = vmul.f32 %v1915, %v1922
        %v1924 = vmul.f32 %v1920, %v1922
        %v1925 = vadd.f32 %v1906, %v1923
        %v1926 = vadd.f32 %v1907, %v1924
        %s1927 = scalar_lea.vmem [#allocation8], 208
        %v1928 = vld [vmem:[%s1927] sm:$0xff]
        %v1929 = vld [vmem:[%s1927 + $0x8] sm:$0xff]
        %1931 = vset.pattern.permute.xlu0 0
        %1932 = vperm.xlu0 %1931, %v1928
        %v1933 = vpop.permute.xlu0 %1932
        %1936 = vset.pattern.permute.xlu0 0
        %1937 = vperm.xlu0 %1936, %v1929
        %v1938 = vpop.permute.xlu0 %1937
        %v1940 = vmul.f32 %v1925, %v1933
        %v1941 = vmul.f32 %v1926, %v1938
        %v1942 = vsel %vm434, %v1940, 0.0
        %v1943 = vsel %vm434, %v1941, 0.0
        %v1944 = vadd.f32 %v1942, %v1943
        %v1945 = vrot.slane %v1944, 4
        %v1946 = vadd.f32 %v1944, %v1945
        %v1947 = vrot.slane %v1946, 2
        %v1948 = vadd.f32 %v1946, %v1947
        %v1949 = vrot.slane %v1948, 1
        %v1950 = vadd.f32 %v1948, %v1949
        %1951 = vst.msk [vmem:[#allocation5 + $0xd] sm:$0x1] %vm993, %v1950
        %s1952 = scalar_lea.vmem [#allocation6], 224
        %v1953 = vld [vmem:[%s1952] sm:$0xff]
        %v1954 = vld [vmem:[%s1952 + $0x8] sm:$0xff]
        %v1955 = vmul.f32 %v1953, %v1925
        %v1956 = vmul.f32 %v1954, %v1926
        %s1957 = scalar_lea.vmem [#allocation7], 224
        %v1958 = vld [vmem:[%s1957] sm:$0xff]
        %v1959 = vld [vmem:[%s1957 + $0x8] sm:$0xff]
        %v1960 = vld [vmem:[#allocation4 + $0xe] sm:$0x1]
        %1962 = vset.pattern.permute.xlu0 0
        %1963 = vperm.xlu0 %1962, %v1958
        %v1964 = vpop.permute.xlu0 %1963
        %1967 = vset.pattern.permute.xlu0 0
        %1968 = vperm.xlu0 %1967, %v1959
        %v1969 = vpop.permute.xlu0 %1968
        %v1971 = vperm.slane %v1960, 0
        %v1972 = vmul.f32 %v1964, %v1971
        %v1973 = vmul.f32 %v1969, %v1971
        %v1974 = vadd.f32 %v1955, %v1972
        %v1975 = vadd.f32 %v1956, %v1973
        %s1976 = scalar_lea.vmem [#allocation8], 224
        %v1977 = vld [vmem:[%s1976] sm:$0xff]
        %v1978 = vld [vmem:[%s1976 + $0x8] sm:$0xff]
        %1980 = vset.pattern.permute.xlu0 0
        %1981 = vperm.xlu0 %1980, %v1977
        %v1982 = vpop.permute.xlu0 %1981
        %1985 = vset.pattern.permute.xlu0 0
        %1986 = vperm.xlu0 %1985, %v1978
        %v1987 = vpop.permute.xlu0 %1986
        %v1989 = vmul.f32 %v1974, %v1982
        %v1990 = vmul.f32 %v1975, %v1987
        %v1991 = vsel %vm434, %v1989, 0.0
        %v1992 = vsel %vm434, %v1990, 0.0
        %v1993 = vadd.f32 %v1991, %v1992
        %v1994 = vrot.slane %v1993, 4
        %v1995 = vadd.f32 %v1993, %v1994
        %v1996 = vrot.slane %v1995, 2
        %v1997 = vadd.f32 %v1995, %v1996
        %v1998 = vrot.slane %v1997, 1
        %v1999 = vadd.f32 %v1997, %v1998
        %2000 = vst.msk [vmem:[#allocation5 + $0xe] sm:$0x1] %vm993, %v1999
        %s2001 = scalar_lea.vmem [#allocation6], 240
        %v2002 = vld [vmem:[%s2001] sm:$0xff]
        %v2003 = vld [vmem:[%s2001 + $0x8] sm:$0xff]
        %v2004 = vmul.f32 %v2002, %v1974
        %v2005 = vmul.f32 %v2003, %v1975
        %s2006 = scalar_lea.vmem [#allocation7], 240
        %v2007 = vld [vmem:[%s2006] sm:$0xff]
        %v2008 = vld [vmem:[%s2006 + $0x8] sm:$0xff]
        %v2009 = vld [vmem:[#allocation4 + $0xf] sm:$0x1]
        %2011 = vset.pattern.permute.xlu0 0
        %2012 = vperm.xlu0 %2011, %v2007
        %v2013 = vpop.permute.xlu0 %2012
        %2016 = vset.pattern.permute.xlu0 0
        %2017 = vperm.xlu0 %2016, %v2008
        %v2018 = vpop.permute.xlu0 %2017
        %v2020 = vperm.slane %v2009, 0
        %v2021 = vmul.f32 %v2013, %v2020
        %v2022 = vmul.f32 %v2018, %v2020
        %v2023 = vadd.f32 %v2004, %v2021
        %v2024 = vadd.f32 %v2005, %v2022
        %s2025 = scalar_lea.vmem [#allocation8], 240
        %v2026 = vld [vmem:[%s2025] sm:$0xff]
        %v2027 = vld [vmem:[%s2025 + $0x8] sm:$0xff]
        %2029 = vset.pattern.permute.xlu0 0
        %2030 = vperm.xlu0 %2029, %v2026
        %v2031 = vpop.permute.xlu0 %2030
        %2034 = vset.pattern.permute.xlu0 0
        %2035 = vperm.xlu0 %2034, %v2027
        %v2036 = vpop.permute.xlu0 %2035
        %v2038 = vmul.f32 %v2023, %v2031
        %v2039 = vmul.f32 %v2024, %v2036
        %v2040 = vsel %vm434, %v2038, 0.0
        %v2041 = vsel %vm434, %v2039, 0.0
        %v2042 = vadd.f32 %v2040, %v2041
        %v2043 = vrot.slane %v2042, 4
        %v2044 = vadd.f32 %v2042, %v2043
        %v2045 = vrot.slane %v2044, 2
        %v2046 = vadd.f32 %v2044, %v2045
        %v2047 = vrot.slane %v2046, 1
        %v2048 = vadd.f32 %v2046, %v2047
        %2049 = vst.msk [vmem:[#allocation5 + $0xf] sm:$0x1] %vm993, %v2048
        %2050 = vst.msk [vmem:[#allocation2] sm:$0xff] %vm434, %v2023
        %2051 = vst.msk [vmem:[#allocation2 + $0x8] sm:$0xff] %vm434, %v2024
        %v2052 = vld [vmem:[#allocation5] sm:$0xff]
        %v2053 = vld [vmem:[#allocation5 + $0x8] sm:$0xff]
        %v2054 = vld [vmem:[%s8] sm:$0x1]
        %v2056 = vperm.slane %v2054, 0
        %v2058 = vmul.f32 %v513, %v2056
        %v2059 = vmul.f32 %v514, %v2056
        %v2060 = vadd.f32 %v2052, %v2058
        %v2061 = vadd.f32 %v2053, %v2059
        %v2062 = vsub.f32 0.0, %v429
        %v2063 = vsub.f32 0.0, %v432
        %v2064 = vmul.f32 %v2062, 1.442695
        %v2065 = vpow.pop %v2064
        %v2066 = vmul.f32 %v2063, 1.442695
        %v2067 = vpow.pop %v2066
        %v2068 = vadd.f32 %v2065, 1.0
        %v2069 = vadd.f32 %v2067, 1.0
        %v2070 = vrcp.pop %v2068
        %v2071 = vmul.f32 %v2068, %v2070
        %v2072 = vsub.f32 1.0, %v2071
        %v2073 = vmul.f32 %v2070, %v2072
        %v2074 = vadd.f32 %v2070, %v2073
        %vm2075 = vweird.f32 %v2068
        %vm2076 = vweird.f32 %v2070
        %vm2077 = vmor %vm2075, %vm2076
        %v2078 = vsel %vm2077, %v2070, %v2074
        %v2079 = vand.u32 2147483647, %v2068
        %vm2080 = vcmp.eq.f32.partialorder %v2079, 8.507059e+37
        %v2081 = vand.u32 %v2068, 2147483648
        %v2082 = vor.u32 1.1754944e-38, %v2081
        %v2083 = vsel %vm2080, %v2082, %v2078
        %v2084 = vmul.f32 1.0, %v2083
        %v2085 = vrcp.pop %v2069
        %v2086 = vmul.f32 %v2069, %v2085
        %v2087 = vsub.f32 1.0, %v2086
        %v2088 = vmul.f32 %v2085, %v2087
        %v2089 = vadd.f32 %v2085, %v2088
        %vm2090 = vweird.f32 %v2069
        %vm2091 = vweird.f32 %v2085
        %vm2092 = vmor %vm2090, %vm2091
        %v2093 = vsel %vm2092, %v2085, %v2089
        %v2094 = vand.u32 2147483647, %v2069
        %vm2095 = vcmp.eq.f32.partialorder %v2094, 8.507059e+37
        %v2096 = vand.u32 %v2069, 2147483648
        %v2097 = vor.u32 1.1754944e-38, %v2096
        %v2098 = vsel %vm2095, %v2097, %v2093
        %v2099 = vmul.f32 1.0, %v2098
        %v2100 = vmul.f32 %v429, %v2084
        %v2101 = vmul.f32 %v432, %v2099
        %2104 = vrot.lane.b32.xlu0 %v2100, 64
        %v2105 = vpop.permute.xlu0 %2104
        %2106 = vrot.lane.b32.xlu0 %v2101, 64
        %v2107 = vpop.permute.xlu0 %2106
        %v2110 = vmul.f32 %v2060, %v2105
        %v2111 = vmul.f32 %v2061, %v2107
        %v2112 = vld [vmem:[%s9] sm:$0xff]
        %v2113 = vld [vmem:[%s9 + $0x8] sm:$0xff]
        %v2114 = vld [vmem:[%s9 + $0x10] sm:$0xff]
        %v2115 = vld [vmem:[%s9 + $0x18] sm:$0xff]
        %v2116 = vld [vmem:[%s9 + $0x20] sm:$0xff]
        %v2117 = vld [vmem:[%s9 + $0x28] sm:$0xff]
        %v2118 = vld [vmem:[%s9 + $0x30] sm:$0xff]
        %v2119 = vld [vmem:[%s9 + $0x38] sm:$0xff]
        %v2121 = vsel %vm434, %v2110, 0
        %v2124 = vsel %vm434, %v2111, 0
        %2126 = vmatpush.msra.mxu0 0.0
        %2127 = vmatpush.msra.mxu0 0.0
        %2128 = vmatpush.msra.mxu0 0.0
        %2129 = vmatpush.msra.mxu0 0.0
        %2130 = vmatpush.msra.mxu0 0.0
        %2131 = vmatpush.msra.mxu0 0.0
        %2132 = vmatpush.msra.mxu0 0.0
        %2133 = vmatpush.msra.mxu0 0.0
        %2134 = vmatpush.msra.mxu0 %v2119
        %2135 = vmatpush.msra.mxu0 %v2118
        %2136 = vmatpush.msra.mxu0 %v2117
        %2137 = vmatpush.msra.mxu0 %v2116
        %2138 = vmatpush.msra.mxu0 %v2115
        %2139 = vmatpush.msra.mxu0 %v2114
        %2140 = vmatpush.msra.mxu0 %v2113
        %2141 = vmatpush.msra.mxu0 %v2112
        %2142 = vmatmul.f32.gmra.mxu0 %v2121
        %v2143 = vpop.f32.mrf.mxu0
        %v2144 = vadd.f32 0.0, %v2143
        %2145 = vmatmul.f32.gmra.mxu0 %v2124
        %v2146 = vpop.f32.mrf.mxu0
        %v2147 = vadd.f32 0.0, %v2146
        %2148 = vdwg.mxu0
        %2149 = vst.msk [vmem:[%s377] sm:$0xff] %vm404, %v2144
        %2150 = vst.msk [vmem:[%s377 + $0x8] sm:$0xff] %vm404, %v2147
        %s2151 = sand.u32 %s263, 1
        %s2152 = scalar_lea.sflag [#allocation10], %s2151
        %s2153 = sand.u32 %s263, 1
        %s2154 = smul.addr %s2153, 16
        %s2155 = scalar_lea.vmem [#allocation9], %s2154
        // Predicated region
        $region65: #{tpu_custom_call.1} parent=59 // pred_check
          %p2156 = pneg %p273
        $region66: #{tpu_custom_call.1} parent=59 // pred_check_branch
          %2158 = sbr.rel (%p2156) target = $region68
        $region67: #{tpu_custom_call.1} parent=59 // pred_region
          %s2159 = smul.u32 2, %s29
          %2161 = vsyncadd %s2152, 0
          %s2162 = smul.addr %s28, 4
          %s2163 = sadd.s32 %s2159, %s2162
          %s2164 = smul.addr %s2163, 8
          %s2165 = scalar_lea.hbm %s10, %s2164
          %s2166 = sshll.u32 %s2155, 4
          %s2167 = int_to_ptr.vmem [resolvable:$true] %s2166
          %s2168 = sshll.u32 %s2165, 4
          %s2169 = int_to_ptr.hbm [resolvable:$true] %s2168
          %2174 = dma.vmem_to_hbm [thread:$0]  %s2167, 256, %s2169, %s2152, 128, 128, 8
        $region68: #{tpu_custom_call.1} parent=59 // pred_fallthru
          _
      $region60: #{tpu_custom_call.1} parent=5 // pred_fallthru
        _
      %p2175 = scmp.le.s32.totalorder 2, %s19
      // Predicated region
      $region69: #{tpu_custom_call.1} parent=5 // pred_check
        %p2176 = pneg %p2175
      $region70: #{tpu_custom_call.1} parent=5 // pred_check_branch
        %2178 = sbr.rel (%p2176) target = $region72
      $region71: #{tpu_custom_call.1} parent=5 // pred_region
        %s2179 = ssub.s32 %s19, 2
        // Predicated region
        $region73: #{tpu_custom_call.1} parent=71 // pred_check
          %p2180 = pneg %p279
        $region74: #{tpu_custom_call.1} parent=71 // pred_check_branch
          %2182 = sbr.rel (%p2180) target = $region76
        $region75: #{tpu_custom_call.1} parent=71 // pred_region
          %s2183 = sand.u32 %s264, 1
          %s2184 = scalar_lea.sflag [#allocation10], %s2183
          %s2185 = sand.u32 %s264, 1
          %s2186 = smul.addr %s2185, 16
          %s2187 = scalar_lea.vmem [#allocation9], %s2186
          %2189 = dma.done %s2184, 256
        $region76: #{tpu_custom_call.1} parent=71 // pred_fallthru
          _
      $region72: #{tpu_custom_call.1} parent=5 // pred_fallthru
        _
    $region6: #{tpu_custom_call.1} parent=1 // loop_footer
      %s23 = sadd.s32 1, %s19
    $region7: #{tpu_custom_call.1} parent=1 // loop_footer_branch
      %18 = sbr.rel target = $region3
    $region8: #{tpu_custom_call.1} parent=1 // loop_exit
      _
    %2190 = vsyncpa [#allocation10], 1
    %s2191 = scalar_lea.sflag [#allocation10], 1
    %2192 = vsyncpa %s2191, 1

</llo_original>
